<compile_context>
chip_gen: v6e
topology: v6e:2x2x1
jax: 0.10.0
libtpu: 0.0.40
codegen_flags: <defaults>
</compile_context>

<pallas_src>
from functools import partial

import jax
import jax.numpy as jnp
from jax.experimental import pallas as pl
from jax.experimental.pallas import tpu as pltpu


_MXU_DTYPE = jnp.bfloat16   # MXU-native operand dtype (f32 accumulation kept)


# --------------------------- in-kernel helpers ------------------------------ #

def _mxu(a, b):
    """a @ b on the MXU with bf16 inputs and f32 accumulation."""
    return jnp.dot(a.astype(_MXU_DTYPE), b.astype(_MXU_DTYPE),
                   preferred_element_type=jnp.float32)


def _mxu_nt(a, b):
    """a @ b.T without materializing the transpose (contract last dims)."""
    return jax.lax.dot_general(
        a.astype(_MXU_DTYPE), b.astype(_MXU_DTYPE),
        dimension_numbers=(((1,), (1,)), ((), ())),
        preferred_element_type=jnp.float32)


def _layer_norm(x, g, b, eps=1e-5):
    mu = jnp.mean(x, axis=-1, keepdims=True)
    xc = x - mu
    var = jnp.mean(xc * xc, axis=-1, keepdims=True)
    return xc * jax.lax.rsqrt(var + eps) * g + b


def _softmax(s):
    m = jnp.max(s, axis=-1, keepdims=True)
    p = jnp.exp(s - m)
    return p * pl.reciprocal(jnp.sum(p, axis=-1, keepdims=True), approx=True)


def _encoder_layer(x, biases, get, heads, batch, seq):
    """Post-LN transformer encoder layer on a (batch*seq, D) slab.

    `get(name, *head_idx)` loads a weight block.  Q/K/V/O weights are
    pre-split per head on a leading axis, so no lane-offset slicing of
    activations and no lane-axis concatenation is needed; the output
    projection is accumulated per head.  1/sqrt(Dh) is folded into Q.
    """
    attn = None
    for h in range(heads):                               # static unroll
        q_h = _mxu(x, get("wq", h)) + get("bq", h)       # (B*L, Dh)
        k_h = _mxu(x, get("wk", h)) + get("bk", h)
        v_h = _mxu(x, get("wv", h)) + get("bv", h)
        ctx = []
        for b in range(batch):                           # per-element attention
            r0 = b * seq                                 # sublane-aligned rows
            s = _mxu_nt(q_h[r0:r0 + seq, :], k_h[r0:r0 + seq, :])   # (L, L)
            if biases is not None:
                s = s + biases[b]
            ctx.append(_mxu(_softmax(s), v_h[r0:r0 + seq, :]))      # (L, Dh)
        ctx = jnp.concatenate(ctx, axis=0)               # sublane concat (aligned)
        contrib = _mxu(ctx, get("wo", h))                # (B*L, D) per-head accum
        attn = contrib if attn is None else attn + contrib
    attn = attn + get("bo")

    h1 = _layer_norm(x + attn, get("ln1_g"), get("ln1_b"))
    f = _mxu(jnp.maximum(_mxu(h1, get("w1")) + get("b1"), 0.0),
             get("w2")) + get("b2")
    return _layer_norm(h1 + f, get("ln2_g"), get("ln2_b"))


def _make_bert_getter(bw):
    def get(name, *idx):
        return bw[name][idx] if idx else bw[name][...]
    return get


def _make_graph_getter(gw, lyr):
    def get(name, *idx):
        return gw[name][(lyr,) + idx]
    return get


# ------------------------------ fused kernel -------------------------------- #

def _double_encoder_kernel(len_ref, emb_ref, adj_ref, *rest,
                           treedef, n_leaves, B, L_bert, max_len, heads):
    prefs = jax.tree_util.tree_unflatten(treedef, rest[:n_leaves])
    graph_ref, pooled_ref, bert_ref = rest[n_leaves:]

    bw = prefs["bert"]
    gw = prefs["graph"]

    # ---- mini-BERT on the flattened (B*L_bert, H) slab ----------------------
    x = _layer_norm(emb_ref[...], bw["emb_ln_g"][...], bw["emb_ln_b"][...])
    x = _encoder_layer(x, None, _make_bert_getter(bw), heads, B, L_bert)

    # ---- BERT pooler: tanh(W @ CLS + b) over the B CLS rows ------------------
    cls = jnp.concatenate([x[b * L_bert:b * L_bert + 1, :] for b in range(B)],
                          axis=0)                                   # (B, H)
    pooled_ref[...] = jnp.tanh(_mxu(cls, bw["pool_w"][...]) + bw["pool_b"][...])

    # ---- self.dense over the first max_len rows of each element -------------
    sel = jnp.concatenate(
        [x[b * L_bert:b * L_bert + max_len, :] for b in range(B)], axis=0)
    bert_out = _mxu(sel, prefs["dense_w"][...]) + prefs["dense_b"][...]
    bert_ref[...] = bert_out                                        # (B*max_len, Dout)

    # ---- attention bias from adj + lengths (built in-kernel) -----------------
    col = jax.lax.broadcasted_iota(jnp.int32, (max_len, max_len), 1)
    biases = []
    for b in range(B):
        masked = jnp.logical_or(adj_ref[b] == 0.0, col >= len_ref[b])
        biases.append(jnp.where(masked, -1e9, 0.0).astype(jnp.float32))

    # ---- graph TransformerEncoder layers (weights stacked on layer axis) ----
    g = bert_out
    n_layers = gw["wq"].shape[0]
    for lyr in range(n_layers):                                     # static unroll
        g = _encoder_layer(g, biases, _make_graph_getter(gw, lyr),
                           heads, B, max_len)
    graph_ref[...] = g                                              # (B*max_len, Dout)


# ------------------------------- wrapper ------------------------------------- #

def _fused_forward(kparams, emb_flat, adj, lengths, *, B, L_bert, max_len, heads):
    leaves, treedef = jax.tree_util.tree_flatten(kparams)
    H = emb_flat.shape[-1]
    Dout = kparams["dense_w"].shape[1]

    kernel = partial(_double_encoder_kernel, treedef=treedef, n_leaves=len(leaves),
                     B=B, L_bert=L_bert, max_len=max_len, heads=heads)

    vmem = pl.BlockSpec(memory_space=pltpu.MemorySpace.VMEM)
    smem = pl.BlockSpec(memory_space=pltpu.MemorySpace.SMEM)

    graph_flat, pooled, bert_flat = pl.pallas_call(
        kernel,
        out_shape=(jax.ShapeDtypeStruct((B * max_len, Dout), jnp.float32),
                   jax.ShapeDtypeStruct((B, H), jnp.float32),
                   jax.ShapeDtypeStruct((B * max_len, Dout), jnp.float32)),
        in_specs=[smem, vmem, vmem] + [vmem] * len(leaves),
        out_specs=(vmem, vmem, vmem),
    )(lengths, emb_flat, adj, *leaves)

    return (graph_flat.reshape(B, max_len, Dout),
            pooled,
            bert_flat.reshape(B, max_len, Dout))


# ------------------------- parameter construction ---------------------------- #

def _dense(key, din, dout):
    k1, k2 = jax.random.split(key)
    w = 0.02 * jax.random.normal(k1, (din, dout), jnp.float32)
    b = 0.02 * jax.random.normal(k2, (dout,), jnp.float32)
    return w, b


def _encoder_layer_params(key, d_model, d_ff, heads):
    dh = d_model // heads
    scale = 1.0 / float(dh) ** 0.5
    ks = jax.random.split(key, 6)
    wq, bq = _dense(ks[0], d_model, d_model)
    wk, bk = _dense(ks[1], d_model, d_model)
    wv, bv = _dense(ks[2], d_model, d_model)
    wo, bo = _dense(ks[3], d_model, d_model)
    w1, b1 = _dense(ks[4], d_model, d_ff)
    w2, b2 = _dense(ks[5], d_ff, d_model)

    def split_cols(w, b):                 # (D,D),(D,) -> (H,D,dh),(H,1,dh)
        return (w.reshape(d_model, heads, dh).transpose(1, 0, 2),
                b.reshape(heads, 1, dh))

    wq_h, bq_h = split_cols(wq * scale, bq * scale)   # fold 1/sqrt(dh) into Q
    wk_h, bk_h = split_cols(wk, bk)
    wv_h, bv_h = split_cols(wv, bv)
    wo_h = wo.reshape(heads, dh, d_model)             # per-head output proj rows

    f = lambda a: a.astype(_MXU_DTYPE)                # matrices bf16, rest f32
    return dict(
        wq=f(wq_h), bq=bq_h, wk=f(wk_h), bk=bk_h, wv=f(wv_h), bv=bv_h,
        wo=f(wo_h), bo=bo.reshape(1, d_model),
        ln1_g=jnp.ones((1, d_model), jnp.float32),
        ln1_b=jnp.zeros((1, d_model), jnp.float32),
        w1=f(w1), b1=b1.reshape(1, d_ff),
        w2=f(w2), b2=b2.reshape(1, d_model),
        ln2_g=jnp.ones((1, d_model), jnp.float32),
        ln2_b=jnp.zeros((1, d_model), jnp.float32),
    )


def _stacked_layer_params(key, num_layers, d_model, d_ff, heads):
    keys = jax.random.split(key, num_layers)
    layers = [_encoder_layer_params(k, d_model, d_ff, heads) for k in keys]
    return {name: jnp.stack([lyr[name] for lyr in layers], axis=0)
            for name in layers[0]}


def _bert_params(key, vocab, max_pos, hidden, d_ff, heads):
    ks = jax.random.split(key, 5)
    pw, pb = _dense(ks[3], hidden, hidden)
    bert = dict(_encoder_layer_params(ks[4], hidden, d_ff, heads))
    bert.update(
        emb_ln_g=jnp.ones((1, hidden), jnp.float32),
        emb_ln_b=jnp.zeros((1, hidden), jnp.float32),
        pool_w=pw.astype(_MXU_DTYPE), pool_b=pb.reshape(1, hidden),
    )
    embed = dict(
        word_emb=0.02 * jax.random.normal(ks[0], (vocab, hidden), jnp.float32),
        pos_emb=0.02 * jax.random.normal(ks[1], (max_pos, hidden), jnp.float32),
        type_emb=0.02 * jax.random.normal(ks[2], (2, hidden), jnp.float32),
    )
    return bert, embed


# ------------------------------ full forward --------------------------------- #

@partial(jax.jit, static_argnames=("max_len",))
def double_encoder_forward(params, adj, inputs, lengths, max_len,
                           relation_matrix=None):
    (tok, asp, pos, head, deprel, post, a_mask, l,
     text_raw_bert_indices, bert_sequence, bert_segments_ids) = inputs

    # bert_sequence = bert_sequence[:, 0:bert_segments_ids.size(1)]
    bert_sequence = bert_sequence[:, 0:bert_segments_ids.shape[1]]

    # Embedding lookup (gather) stays in XLA; everything downstream is one
    # fused Pallas kernel.  in_drop / encoder dropout are identity at inference.
    et = params["embed"]
    B, Lb = bert_sequence.shape
    H = et["word_emb"].shape[1]
    emb = (et["word_emb"][bert_sequence]
           + et["type_emb"][bert_segments_ids]
           + et["pos_emb"][:Lb][None, :, :])
    emb_flat = emb.reshape(B * Lb, H)          # batch flattened into matmul M

    graph_out, bert_pool_output, bert_out = _fused_forward(
        params["kernel"], emb_flat, adj.astype(jnp.float32),
        lengths.astype(jnp.int32),
        B=B, L_bert=Lb, max_len=max_len, heads=4)

    return graph_out, bert_pool_output, bert_out


# ---------------------------------- main -------------------------------------- #

if __name__ == "__main__":
    key = jax.random.PRNGKey(0)

    # args: hidden_dim=48 (BERT hidden & d_ff), bert_out_dim=32, num_layer=2, heads=4
    B = 2
    L_BERT = 16          # BERT sequence length (padded to a sublane multiple)
    MAX_LEN = 8          # static max(l)
    HIDDEN = 48
    BERT_OUT = 32
    NUM_LAYER = 2
    HEADS = 4
    VOCAB = 30
    MAX_POS = 32

    ks = jax.random.split(key, 4)
    bert_p, embed_p = _bert_params(ks[0], VOCAB, MAX_POS, HIDDEN, HIDDEN, HEADS)
    dense_w, dense_b = _dense(ks[1], HIDDEN, BERT_OUT)
    params = {
        "embed": embed_p,
        "kernel": {
            "bert": bert_p,
            "dense_w": dense_w.astype(_MXU_DTYPE),
            "dense_b": dense_b.reshape(1, BERT_OUT),
            "graph": _stacked_layer_params(ks[2], NUM_LAYER, BERT_OUT, HIDDEN, HEADS),
        },
    }

    dk = jax.random.split(ks[3], 2)
    bert_sequence = jax.random.randint(dk[0], (B, L_BERT + 2), 1, VOCAB,
                                       dtype=jnp.int32)   # gets sliced to L_BERT
    bert_segments_ids = jnp.concatenate(
        [jnp.zeros((B, L_BERT // 2), jnp.int32),
         jnp.ones((B, L_BERT - L_BERT // 2), jnp.int32)], axis=1)
    l = jnp.array([MAX_LEN, 6], dtype=jnp.int32)
    lengths = l
    adj = (jax.random.uniform(dk[1], (B, MAX_LEN, MAX_LEN)) > 0.5).astype(jnp.float32)
    adj = jnp.minimum(adj + jnp.eye(MAX_LEN, dtype=jnp.float32)[None], 1.0)

    zeros_i = jnp.zeros((B, MAX_LEN), jnp.int32)
    inputs = (zeros_i, zeros_i, zeros_i, zeros_i, zeros_i, zeros_i, zeros_i, l,
              zeros_i, bert_sequence, bert_segments_ids)

    graph_out, bert_pool_output, bert_out = double_encoder_forward(
        params, adj, inputs, lengths, max_len=MAX_LEN)

    jax.block_until_ready((graph_out, bert_pool_output, bert_out))
    assert graph_out.shape == (B, MAX_LEN, BERT_OUT)
    assert bert_pool_output.shape == (B, HIDDEN)
    assert bert_out.shape == (B, MAX_LEN, BERT_OUT)
    assert bool(jnp.all(jnp.isfinite(graph_out)))
    print("KERNEL_OK")
</pallas_src>

<mosaic_0001>
module attributes {stable_mosaic.version = 11 : i64} {
  func.func @_double_encoder_kernel(%arg0: memref<2xi32, #tpu.memory_space<smem>>, %arg1: memref<32x48xf32, #tpu.memory_space<vmem>>, %arg2: memref<2x8x8xf32, #tpu.memory_space<vmem>>, %arg3: memref<1x48xf32, #tpu.memory_space<vmem>>, %arg4: memref<1x48xf32, #tpu.memory_space<vmem>>, %arg5: memref<4x1x12xf32, #tpu.memory_space<vmem>>, %arg6: memref<1x48xf32, #tpu.memory_space<vmem>>, %arg7: memref<4x1x12xf32, #tpu.memory_space<vmem>>, %arg8: memref<4x1x12xf32, #tpu.memory_space<vmem>>, %arg9: memref<1x48xf32, #tpu.memory_space<vmem>>, %arg10: memref<1x48xf32, #tpu.memory_space<vmem>>, %arg11: memref<1x48xf32, #tpu.memory_space<vmem>>, %arg12: memref<1x48xf32, #tpu.memory_space<vmem>>, %arg13: memref<1x48xf32, #tpu.memory_space<vmem>>, %arg14: memref<1x48xf32, #tpu.memory_space<vmem>>, %arg15: memref<1x48xf32, #tpu.memory_space<vmem>>, %arg16: memref<48x48xbf16, #tpu.memory_space<vmem>>, %arg17: memref<48x48xbf16, #tpu.memory_space<vmem>>, %arg18: memref<48x48xbf16, #tpu.memory_space<vmem>>, %arg19: memref<4x48x12xbf16, #tpu.memory_space<vmem>>, %arg20: memref<4x12x48xbf16, #tpu.memory_space<vmem>>, %arg21: memref<4x48x12xbf16, #tpu.memory_space<vmem>>, %arg22: memref<4x48x12xbf16, #tpu.memory_space<vmem>>, %arg23: memref<1x32xf32, #tpu.memory_space<vmem>>, %arg24: memref<48x32xbf16, #tpu.memory_space<vmem>>, %arg25: memref<2x1x48xf32, #tpu.memory_space<vmem>>, %arg26: memref<2x1x32xf32, #tpu.memory_space<vmem>>, %arg27: memref<2x4x1x8xf32, #tpu.memory_space<vmem>>, %arg28: memref<2x1x32xf32, #tpu.memory_space<vmem>>, %arg29: memref<2x4x1x8xf32, #tpu.memory_space<vmem>>, %arg30: memref<2x4x1x8xf32, #tpu.memory_space<vmem>>, %arg31: memref<2x1x32xf32, #tpu.memory_space<vmem>>, %arg32: memref<2x1x32xf32, #tpu.memory_space<vmem>>, %arg33: memref<2x1x32xf32, #tpu.memory_space<vmem>>, %arg34: memref<2x1x32xf32, #tpu.memory_space<vmem>>, %arg35: memref<2x32x48xbf16, #tpu.memory_space<vmem>>, %arg36: memref<2x48x32xbf16, #tpu.memory_space<vmem>>, %arg37: memref<2x4x32x8xbf16, #tpu.memory_space<vmem>>, %arg38: memref<2x4x8x32xbf16, #tpu.memory_space<vmem>>, %arg39: memref<2x4x32x8xbf16, #tpu.memory_space<vmem>>, %arg40: memref<2x4x32x8xbf16, #tpu.memory_space<vmem>>, %arg41: memref<16x32xf32, #tpu.memory_space<vmem>>, %arg42: memref<2x48xf32, #tpu.memory_space<vmem>>, %arg43: memref<16x32xf32, #tpu.memory_space<vmem>>) attributes {dimension_semantics = [], scalar_prefetch = 0 : i64, scratch_operands = 0 : i64, tpu.core_type = #tpu.core_type<tc>} {
    %c0 = arith.constant 0 : index
    %c0_0 = arith.constant 0 : index
    %0 = vector.load %arg1[%c0, %c0_0] : memref<32x48xf32, #tpu.memory_space<vmem>>, vector<32x48xf32>
    %c0_1 = arith.constant 0 : index
    %c0_2 = arith.constant 0 : index
    %1 = vector.load %arg10[%c0_1, %c0_2] : memref<1x48xf32, #tpu.memory_space<vmem>>, vector<1x48xf32>
    %c0_3 = arith.constant 0 : index
    %c0_4 = arith.constant 0 : index
    %2 = vector.load %arg9[%c0_3, %c0_4] : memref<1x48xf32, #tpu.memory_space<vmem>>, vector<1x48xf32>
    %cst = arith.constant dense<0.000000e+00> : vector<32xf32>
    %3 = vector.multi_reduction <add>, %0, %cst [1] : vector<32x48xf32> to vector<32xf32>
    %4 = vector.shape_cast %3 : vector<32xf32> to vector<32x1xf32>
    %cst_5 = arith.constant 4.800000e+01 : f32
    %5 = vector.broadcast %cst_5 : f32 to vector<32x1xf32>
    %6 = arith.divf %4, %5 : vector<32x1xf32>
    %7 = vector.broadcast %6 : vector<32x1xf32> to vector<32x48xf32>
    %8 = arith.subf %0, %7 : vector<32x48xf32>
    %9 = arith.mulf %8, %8 : vector<32x48xf32>
    %cst_6 = arith.constant dense<0.000000e+00> : vector<32xf32>
    %10 = vector.multi_reduction <add>, %9, %cst_6 [1] : vector<32x48xf32> to vector<32xf32>
    %11 = vector.shape_cast %10 : vector<32xf32> to vector<32x1xf32>
    %cst_7 = arith.constant 4.800000e+01 : f32
    %12 = vector.broadcast %cst_7 : f32 to vector<32x1xf32>
    %13 = arith.divf %11, %12 : vector<32x1xf32>
    %cst_8 = arith.constant 9.99999974E-6 : f32
    %14 = vector.broadcast %cst_8 : f32 to vector<32x1xf32>
    %15 = arith.addf %13, %14 : vector<32x1xf32>
    %16 = math.rsqrt %15 : vector<32x1xf32>
    %17 = vector.broadcast %16 : vector<32x1xf32> to vector<32x48xf32>
    %18 = arith.mulf %8, %17 : vector<32x48xf32>
    %19 = vector.broadcast %1 : vector<1x48xf32> to vector<32x48xf32>
    %20 = arith.mulf %18, %19 : vector<32x48xf32>
    %21 = vector.broadcast %2 : vector<1x48xf32> to vector<32x48xf32>
    %22 = arith.addf %20, %21 : vector<32x48xf32>
    %c0_9 = arith.constant 0 : index
    %c0_10 = arith.constant 0 : index
    %c0_11 = arith.constant 0 : index
    %23 = vector.load %arg21[%c0_9, %c0_10, %c0_11] : memref<4x48x12xbf16, #tpu.memory_space<vmem>>, vector<1x48x12xbf16>
    %24 = vector.shape_cast %23 : vector<1x48x12xbf16> to vector<48x12xbf16>
    %25 = arith.truncf %22 : vector<32x48xf32> to vector<32x48xbf16>
    %cst_12 = arith.constant dense<0.000000e+00> : vector<32x12xf32>
    %26 = tpu.matmul %25, %24, %cst_12 {dimension_numbers = #tpu.dot_dimension_numbers<[1], [0], [0], [1], [0, 0, 1, 1], [], []>} : vector<32x48xbf16>, vector<48x12xbf16>, vector<32x12xf32> -> vector<32x12xf32>
    %c0_13 = arith.constant 0 : index
    %c0_14 = arith.constant 0 : index
    %c0_15 = arith.constant 0 : index
    %27 = vector.load %arg7[%c0_13, %c0_14, %c0_15] : memref<4x1x12xf32, #tpu.memory_space<vmem>>, vector<1x1x12xf32>
    %28 = vector.shape_cast %27 : vector<1x1x12xf32> to vector<1x12xf32>
    %29 = vector.broadcast %28 : vector<1x12xf32> to vector<32x12xf32>
    %30 = arith.addf %26, %29 : vector<32x12xf32>
    %c0_16 = arith.constant 0 : index
    %c0_17 = arith.constant 0 : index
    %c0_18 = arith.constant 0 : index
    %31 = vector.load %arg19[%c0_16, %c0_17, %c0_18] : memref<4x48x12xbf16, #tpu.memory_space<vmem>>, vector<1x48x12xbf16>
    %32 = vector.shape_cast %31 : vector<1x48x12xbf16> to vector<48x12xbf16>
    %33 = arith.truncf %22 : vector<32x48xf32> to vector<32x48xbf16>
    %cst_19 = arith.constant dense<0.000000e+00> : vector<32x12xf32>
    %34 = tpu.matmul %33, %32, %cst_19 {dimension_numbers = #tpu.dot_dimension_numbers<[1], [0], [0], [1], [0, 0, 1, 1], [], []>} : vector<32x48xbf16>, vector<48x12xbf16>, vector<32x12xf32> -> vector<32x12xf32>
    %c0_20 = arith.constant 0 : index
    %c0_21 = arith.constant 0 : index
    %c0_22 = arith.constant 0 : index
    %35 = vector.load %arg5[%c0_20, %c0_21, %c0_22] : memref<4x1x12xf32, #tpu.memory_space<vmem>>, vector<1x1x12xf32>
    %36 = vector.shape_cast %35 : vector<1x1x12xf32> to vector<1x12xf32>
    %37 = vector.broadcast %36 : vector<1x12xf32> to vector<32x12xf32>
    %38 = arith.addf %34, %37 : vector<32x12xf32>
    %c0_23 = arith.constant 0 : index
    %c0_24 = arith.constant 0 : index
    %c0_25 = arith.constant 0 : index
    %39 = vector.load %arg22[%c0_23, %c0_24, %c0_25] : memref<4x48x12xbf16, #tpu.memory_space<vmem>>, vector<1x48x12xbf16>
    %40 = vector.shape_cast %39 : vector<1x48x12xbf16> to vector<48x12xbf16>
    %41 = arith.truncf %22 : vector<32x48xf32> to vector<32x48xbf16>
    %cst_26 = arith.constant dense<0.000000e+00> : vector<32x12xf32>
    %42 = tpu.matmul %41, %40, %cst_26 {dimension_numbers = #tpu.dot_dimension_numbers<[1], [0], [0], [1], [0, 0, 1, 1], [], []>} : vector<32x48xbf16>, vector<48x12xbf16>, vector<32x12xf32> -> vector<32x12xf32>
    %c0_27 = arith.constant 0 : index
    %c0_28 = arith.constant 0 : index
    %c0_29 = arith.constant 0 : index
    %43 = vector.load %arg8[%c0_27, %c0_28, %c0_29] : memref<4x1x12xf32, #tpu.memory_space<vmem>>, vector<1x1x12xf32>
    %44 = vector.shape_cast %43 : vector<1x1x12xf32> to vector<1x12xf32>
    %45 = vector.broadcast %44 : vector<1x12xf32> to vector<32x12xf32>
    %46 = arith.addf %42, %45 : vector<32x12xf32>
    %47 = vector.extract_strided_slice %30 {offsets = [0, 0], sizes = [16, 12], strides = [1, 1]} : vector<32x12xf32> to vector<16x12xf32>
    %48 = vector.extract_strided_slice %38 {offsets = [0, 0], sizes = [16, 12], strides = [1, 1]} : vector<32x12xf32> to vector<16x12xf32>
    %49 = arith.truncf %47 : vector<16x12xf32> to vector<16x12xbf16>
    %50 = arith.truncf %48 : vector<16x12xf32> to vector<16x12xbf16>
    %cst_30 = arith.constant dense<0.000000e+00> : vector<16x16xf32>
    %51 = tpu.matmul %49, %50, %cst_30 {dimension_numbers = #tpu.dot_dimension_numbers<[1], [1], [0], [0], [0, 0, 1, 0], [], []>} : vector<16x12xbf16>, vector<16x12xbf16>, vector<16x16xf32> -> vector<16x16xf32>
    %cst_31 = arith.constant dense<0xFF800000> : vector<16xf32>
    %52 = vector.multi_reduction <maximumf>, %51, %cst_31 [1] : vector<16x16xf32> to vector<16xf32>
    %53 = vector.shape_cast %52 : vector<16xf32> to vector<16x1xf32>
    %54 = vector.broadcast %53 : vector<16x1xf32> to vector<16x16xf32>
    %55 = arith.subf %51, %54 : vector<16x16xf32>
    %56 = math.exp %55 : vector<16x16xf32>
    %cst_32 = arith.constant dense<0.000000e+00> : vector<16xf32>
    %57 = vector.multi_reduction <add>, %56, %cst_32 [1] : vector<16x16xf32> to vector<16xf32>
    %58 = vector.shape_cast %57 : vector<16xf32> to vector<16x1xf32>
    %59 = tpu.reciprocal %58 {approx = true} : vector<16x1xf32> -> vector<16x1xf32>
    %60 = vector.broadcast %59 : vector<16x1xf32> to vector<16x16xf32>
    %61 = arith.mulf %56, %60 : vector<16x16xf32>
    %62 = vector.extract_strided_slice %46 {offsets = [0, 0], sizes = [16, 12], strides = [1, 1]} : vector<32x12xf32> to vector<16x12xf32>
    %63 = arith.truncf %61 : vector<16x16xf32> to vector<16x16xbf16>
    %64 = arith.truncf %62 : vector<16x12xf32> to vector<16x12xbf16>
    %cst_33 = arith.constant dense<0.000000e+00> : vector<16x12xf32>
    %65 = tpu.matmul %63, %64, %cst_33 {dimension_numbers = #tpu.dot_dimension_numbers<[1], [0], [0], [1], [0, 0, 1, 1], [], []>} : vector<16x16xbf16>, vector<16x12xbf16>, vector<16x12xf32> -> vector<16x12xf32>
    %66 = vector.extract_strided_slice %30 {offsets = [16, 0], sizes = [16, 12], strides = [1, 1]} : vector<32x12xf32> to vector<16x12xf32>
    %67 = vector.extract_strided_slice %38 {offsets = [16, 0], sizes = [16, 12], strides = [1, 1]} : vector<32x12xf32> to vector<16x12xf32>
    %68 = arith.truncf %66 : vector<16x12xf32> to vector<16x12xbf16>
    %69 = arith.truncf %67 : vector<16x12xf32> to vector<16x12xbf16>
    %cst_34 = arith.constant dense<0.000000e+00> : vector<16x16xf32>
    %70 = tpu.matmul %68, %69, %cst_34 {dimension_numbers = #tpu.dot_dimension_numbers<[1], [1], [0], [0], [0, 0, 1, 0], [], []>} : vector<16x12xbf16>, vector<16x12xbf16>, vector<16x16xf32> -> vector<16x16xf32>
    %cst_35 = arith.constant dense<0xFF800000> : vector<16xf32>
    %71 = vector.multi_reduction <maximumf>, %70, %cst_35 [1] : vector<16x16xf32> to vector<16xf32>
    %72 = vector.shape_cast %71 : vector<16xf32> to vector<16x1xf32>
    %73 = vector.broadcast %72 : vector<16x1xf32> to vector<16x16xf32>
    %74 = arith.subf %70, %73 : vector<16x16xf32>
    %75 = math.exp %74 : vector<16x16xf32>
    %cst_36 = arith.constant dense<0.000000e+00> : vector<16xf32>
    %76 = vector.multi_reduction <add>, %75, %cst_36 [1] : vector<16x16xf32> to vector<16xf32>
    %77 = vector.shape_cast %76 : vector<16xf32> to vector<16x1xf32>
    %78 = tpu.reciprocal %77 {approx = true} : vector<16x1xf32> -> vector<16x1xf32>
    %79 = vector.broadcast %78 : vector<16x1xf32> to vector<16x16xf32>
    %80 = arith.mulf %75, %79 : vector<16x16xf32>
    %81 = vector.extract_strided_slice %46 {offsets = [16, 0], sizes = [16, 12], strides = [1, 1]} : vector<32x12xf32> to vector<16x12xf32>
    %82 = arith.truncf %80 : vector<16x16xf32> to vector<16x16xbf16>
    %83 = arith.truncf %81 : vector<16x12xf32> to vector<16x12xbf16>
    %cst_37 = arith.constant dense<0.000000e+00> : vector<16x12xf32>
    %84 = tpu.matmul %82, %83, %cst_37 {dimension_numbers = #tpu.dot_dimension_numbers<[1], [0], [0], [1], [0, 0, 1, 1], [], []>} : vector<16x16xbf16>, vector<16x12xbf16>, vector<16x12xf32> -> vector<16x12xf32>
    %85 = tpu.concatenate %65, %84 in 0 : vector<16x12xf32>, vector<16x12xf32> -> vector<32x12xf32>
    %c0_38 = arith.constant 0 : index
    %c0_39 = arith.constant 0 : index
    %c0_40 = arith.constant 0 : index
    %86 = vector.load %arg20[%c0_38, %c0_39, %c0_40] : memref<4x12x48xbf16, #tpu.memory_space<vmem>>, vector<1x12x48xbf16>
    %87 = vector.shape_cast %86 : vector<1x12x48xbf16> to vector<12x48xbf16>
    %88 = arith.truncf %85 : vector<32x12xf32> to vector<32x12xbf16>
    %cst_41 = arith.constant dense<0.000000e+00> : vector<32x48xf32>
    %89 = tpu.matmul %88, %87, %cst_41 {dimension_numbers = #tpu.dot_dimension_numbers<[1], [0], [0], [1], [0, 0, 1, 1], [], []>} : vector<32x12xbf16>, vector<12x48xbf16>, vector<32x48xf32> -> vector<32x48xf32>
    %c1 = arith.constant 1 : index
    %c0_42 = arith.constant 0 : index
    %c0_43 = arith.constant 0 : index
    %90 = vector.load %arg21[%c1, %c0_42, %c0_43] : memref<4x48x12xbf16, #tpu.memory_space<vmem>>, vector<1x48x12xbf16>
    %91 = vector.shape_cast %90 : vector<1x48x12xbf16> to vector<48x12xbf16>
    %92 = arith.truncf %22 : vector<32x48xf32> to vector<32x48xbf16>
    %cst_44 = arith.constant dense<0.000000e+00> : vector<32x12xf32>
    %93 = tpu.matmul %92, %91, %cst_44 {dimension_numbers = #tpu.dot_dimension_numbers<[1], [0], [0], [1], [0, 0, 1, 1], [], []>} : vector<32x48xbf16>, vector<48x12xbf16>, vector<32x12xf32> -> vector<32x12xf32>
    %c1_45 = arith.constant 1 : index
    %c0_46 = arith.constant 0 : index
    %c0_47 = arith.constant 0 : index
    %94 = vector.load %arg7[%c1_45, %c0_46, %c0_47] : memref<4x1x12xf32, #tpu.memory_space<vmem>>, vector<1x1x12xf32>
    %95 = vector.shape_cast %94 : vector<1x1x12xf32> to vector<1x12xf32>
    %96 = vector.broadcast %95 : vector<1x12xf32> to vector<32x12xf32>
    %97 = arith.addf %93, %96 : vector<32x12xf32>
    %c1_48 = arith.constant 1 : index
    %c0_49 = arith.constant 0 : index
    %c0_50 = arith.constant 0 : index
    %98 = vector.load %arg19[%c1_48, %c0_49, %c0_50] : memref<4x48x12xbf16, #tpu.memory_space<vmem>>, vector<1x48x12xbf16>
    %99 = vector.shape_cast %98 : vector<1x48x12xbf16> to vector<48x12xbf16>
    %100 = arith.truncf %22 : vector<32x48xf32> to vector<32x48xbf16>
    %cst_51 = arith.constant dense<0.000000e+00> : vector<32x12xf32>
    %101 = tpu.matmul %100, %99, %cst_51 {dimension_numbers = #tpu.dot_dimension_numbers<[1], [0], [0], [1], [0, 0, 1, 1], [], []>} : vector<32x48xbf16>, vector<48x12xbf16>, vector<32x12xf32> -> vector<32x12xf32>
    %c1_52 = arith.constant 1 : index
    %c0_53 = arith.constant 0 : index
    %c0_54 = arith.constant 0 : index
    %102 = vector.load %arg5[%c1_52, %c0_53, %c0_54] : memref<4x1x12xf32, #tpu.memory_space<vmem>>, vector<1x1x12xf32>
    %103 = vector.shape_cast %102 : vector<1x1x12xf32> to vector<1x12xf32>
    %104 = vector.broadcast %103 : vector<1x12xf32> to vector<32x12xf32>
    %105 = arith.addf %101, %104 : vector<32x12xf32>
    %c1_55 = arith.constant 1 : index
    %c0_56 = arith.constant 0 : index
    %c0_57 = arith.constant 0 : index
    %106 = vector.load %arg22[%c1_55, %c0_56, %c0_57] : memref<4x48x12xbf16, #tpu.memory_space<vmem>>, vector<1x48x12xbf16>
    %107 = vector.shape_cast %106 : vector<1x48x12xbf16> to vector<48x12xbf16>
    %108 = arith.truncf %22 : vector<32x48xf32> to vector<32x48xbf16>
    %cst_58 = arith.constant dense<0.000000e+00> : vector<32x12xf32>
    %109 = tpu.matmul %108, %107, %cst_58 {dimension_numbers = #tpu.dot_dimension_numbers<[1], [0], [0], [1], [0, 0, 1, 1], [], []>} : vector<32x48xbf16>, vector<48x12xbf16>, vector<32x12xf32> -> vector<32x12xf32>
    %c1_59 = arith.constant 1 : index
    %c0_60 = arith.constant 0 : index
    %c0_61 = arith.constant 0 : index
    %110 = vector.load %arg8[%c1_59, %c0_60, %c0_61] : memref<4x1x12xf32, #tpu.memory_space<vmem>>, vector<1x1x12xf32>
    %111 = vector.shape_cast %110 : vector<1x1x12xf32> to vector<1x12xf32>
    %112 = vector.broadcast %111 : vector<1x12xf32> to vector<32x12xf32>
    %113 = arith.addf %109, %112 : vector<32x12xf32>
    %114 = vector.extract_strided_slice %97 {offsets = [0, 0], sizes = [16, 12], strides = [1, 1]} : vector<32x12xf32> to vector<16x12xf32>
    %115 = vector.extract_strided_slice %105 {offsets = [0, 0], sizes = [16, 12], strides = [1, 1]} : vector<32x12xf32> to vector<16x12xf32>
    %116 = arith.truncf %114 : vector<16x12xf32> to vector<16x12xbf16>
    %117 = arith.truncf %115 : vector<16x12xf32> to vector<16x12xbf16>
    %cst_62 = arith.constant dense<0.000000e+00> : vector<16x16xf32>
    %118 = tpu.matmul %116, %117, %cst_62 {dimension_numbers = #tpu.dot_dimension_numbers<[1], [1], [0], [0], [0, 0, 1, 0], [], []>} : vector<16x12xbf16>, vector<16x12xbf16>, vector<16x16xf32> -> vector<16x16xf32>
    %cst_63 = arith.constant dense<0xFF800000> : vector<16xf32>
    %119 = vector.multi_reduction <maximumf>, %118, %cst_63 [1] : vector<16x16xf32> to vector<16xf32>
    %120 = vector.shape_cast %119 : vector<16xf32> to vector<16x1xf32>
    %121 = vector.broadcast %120 : vector<16x1xf32> to vector<16x16xf32>
    %122 = arith.subf %118, %121 : vector<16x16xf32>
    %123 = math.exp %122 : vector<16x16xf32>
    %cst_64 = arith.constant dense<0.000000e+00> : vector<16xf32>
    %124 = vector.multi_reduction <add>, %123, %cst_64 [1] : vector<16x16xf32> to vector<16xf32>
    %125 = vector.shape_cast %124 : vector<16xf32> to vector<16x1xf32>
    %126 = tpu.reciprocal %125 {approx = true} : vector<16x1xf32> -> vector<16x1xf32>
    %127 = vector.broadcast %126 : vector<16x1xf32> to vector<16x16xf32>
    %128 = arith.mulf %123, %127 : vector<16x16xf32>
    %129 = vector.extract_strided_slice %113 {offsets = [0, 0], sizes = [16, 12], strides = [1, 1]} : vector<32x12xf32> to vector<16x12xf32>
    %130 = arith.truncf %128 : vector<16x16xf32> to vector<16x16xbf16>
    %131 = arith.truncf %129 : vector<16x12xf32> to vector<16x12xbf16>
    %cst_65 = arith.constant dense<0.000000e+00> : vector<16x12xf32>
    %132 = tpu.matmul %130, %131, %cst_65 {dimension_numbers = #tpu.dot_dimension_numbers<[1], [0], [0], [1], [0, 0, 1, 1], [], []>} : vector<16x16xbf16>, vector<16x12xbf16>, vector<16x12xf32> -> vector<16x12xf32>
    %133 = vector.extract_strided_slice %97 {offsets = [16, 0], sizes = [16, 12], strides = [1, 1]} : vector<32x12xf32> to vector<16x12xf32>
    %134 = vector.extract_strided_slice %105 {offsets = [16, 0], sizes = [16, 12], strides = [1, 1]} : vector<32x12xf32> to vector<16x12xf32>
    %135 = arith.truncf %133 : vector<16x12xf32> to vector<16x12xbf16>
    %136 = arith.truncf %134 : vector<16x12xf32> to vector<16x12xbf16>
    %cst_66 = arith.constant dense<0.000000e+00> : vector<16x16xf32>
    %137 = tpu.matmul %135, %136, %cst_66 {dimension_numbers = #tpu.dot_dimension_numbers<[1], [1], [0], [0], [0, 0, 1, 0], [], []>} : vector<16x12xbf16>, vector<16x12xbf16>, vector<16x16xf32> -> vector<16x16xf32>
    %cst_67 = arith.constant dense<0xFF800000> : vector<16xf32>
    %138 = vector.multi_reduction <maximumf>, %137, %cst_67 [1] : vector<16x16xf32> to vector<16xf32>
    %139 = vector.shape_cast %138 : vector<16xf32> to vector<16x1xf32>
    %140 = vector.broadcast %139 : vector<16x1xf32> to vector<16x16xf32>
    %141 = arith.subf %137, %140 : vector<16x16xf32>
    %142 = math.exp %141 : vector<16x16xf32>
    %cst_68 = arith.constant dense<0.000000e+00> : vector<16xf32>
    %143 = vector.multi_reduction <add>, %142, %cst_68 [1] : vector<16x16xf32> to vector<16xf32>
    %144 = vector.shape_cast %143 : vector<16xf32> to vector<16x1xf32>
    %145 = tpu.reciprocal %144 {approx = true} : vector<16x1xf32> -> vector<16x1xf32>
    %146 = vector.broadcast %145 : vector<16x1xf32> to vector<16x16xf32>
    %147 = arith.mulf %142, %146 : vector<16x16xf32>
    %148 = vector.extract_strided_slice %113 {offsets = [16, 0], sizes = [16, 12], strides = [1, 1]} : vector<32x12xf32> to vector<16x12xf32>
    %149 = arith.truncf %147 : vector<16x16xf32> to vector<16x16xbf16>
    %150 = arith.truncf %148 : vector<16x12xf32> to vector<16x12xbf16>
    %cst_69 = arith.constant dense<0.000000e+00> : vector<16x12xf32>
    %151 = tpu.matmul %149, %150, %cst_69 {dimension_numbers = #tpu.dot_dimension_numbers<[1], [0], [0], [1], [0, 0, 1, 1], [], []>} : vector<16x16xbf16>, vector<16x12xbf16>, vector<16x12xf32> -> vector<16x12xf32>
    %152 = tpu.concatenate %132, %151 in 0 : vector<16x12xf32>, vector<16x12xf32> -> vector<32x12xf32>
    %c1_70 = arith.constant 1 : index
    %c0_71 = arith.constant 0 : index
    %c0_72 = arith.constant 0 : index
    %153 = vector.load %arg20[%c1_70, %c0_71, %c0_72] : memref<4x12x48xbf16, #tpu.memory_space<vmem>>, vector<1x12x48xbf16>
    %154 = vector.shape_cast %153 : vector<1x12x48xbf16> to vector<12x48xbf16>
    %155 = arith.truncf %152 : vector<32x12xf32> to vector<32x12xbf16>
    %cst_73 = arith.constant dense<0.000000e+00> : vector<32x48xf32>
    %156 = tpu.matmul %155, %154, %cst_73 {dimension_numbers = #tpu.dot_dimension_numbers<[1], [0], [0], [1], [0, 0, 1, 1], [], []>} : vector<32x12xbf16>, vector<12x48xbf16>, vector<32x48xf32> -> vector<32x48xf32>
    %157 = arith.addf %89, %156 : vector<32x48xf32>
    %c2 = arith.constant 2 : index
    %c0_74 = arith.constant 0 : index
    %c0_75 = arith.constant 0 : index
    %158 = vector.load %arg21[%c2, %c0_74, %c0_75] : memref<4x48x12xbf16, #tpu.memory_space<vmem>>, vector<1x48x12xbf16>
    %159 = vector.shape_cast %158 : vector<1x48x12xbf16> to vector<48x12xbf16>
    %160 = arith.truncf %22 : vector<32x48xf32> to vector<32x48xbf16>
    %cst_76 = arith.constant dense<0.000000e+00> : vector<32x12xf32>
    %161 = tpu.matmul %160, %159, %cst_76 {dimension_numbers = #tpu.dot_dimension_numbers<[1], [0], [0], [1], [0, 0, 1, 1], [], []>} : vector<32x48xbf16>, vector<48x12xbf16>, vector<32x12xf32> -> vector<32x12xf32>
    %c2_77 = arith.constant 2 : index
    %c0_78 = arith.constant 0 : index
    %c0_79 = arith.constant 0 : index
    %162 = vector.load %arg7[%c2_77, %c0_78, %c0_79] : memref<4x1x12xf32, #tpu.memory_space<vmem>>, vector<1x1x12xf32>
    %163 = vector.shape_cast %162 : vector<1x1x12xf32> to vector<1x12xf32>
    %164 = vector.broadcast %163 : vector<1x12xf32> to vector<32x12xf32>
    %165 = arith.addf %161, %164 : vector<32x12xf32>
    %c2_80 = arith.constant 2 : index
    %c0_81 = arith.constant 0 : index
    %c0_82 = arith.constant 0 : index
    %166 = vector.load %arg19[%c2_80, %c0_81, %c0_82] : memref<4x48x12xbf16, #tpu.memory_space<vmem>>, vector<1x48x12xbf16>
    %167 = vector.shape_cast %166 : vector<1x48x12xbf16> to vector<48x12xbf16>
    %168 = arith.truncf %22 : vector<32x48xf32> to vector<32x48xbf16>
    %cst_83 = arith.constant dense<0.000000e+00> : vector<32x12xf32>
    %169 = tpu.matmul %168, %167, %cst_83 {dimension_numbers = #tpu.dot_dimension_numbers<[1], [0], [0], [1], [0, 0, 1, 1], [], []>} : vector<32x48xbf16>, vector<48x12xbf16>, vector<32x12xf32> -> vector<32x12xf32>
    %c2_84 = arith.constant 2 : index
    %c0_85 = arith.constant 0 : index
    %c0_86 = arith.constant 0 : index
    %170 = vector.load %arg5[%c2_84, %c0_85, %c0_86] : memref<4x1x12xf32, #tpu.memory_space<vmem>>, vector<1x1x12xf32>
    %171 = vector.shape_cast %170 : vector<1x1x12xf32> to vector<1x12xf32>
    %172 = vector.broadcast %171 : vector<1x12xf32> to vector<32x12xf32>
    %173 = arith.addf %169, %172 : vector<32x12xf32>
    %c2_87 = arith.constant 2 : index
    %c0_88 = arith.constant 0 : index
    %c0_89 = arith.constant 0 : index
    %174 = vector.load %arg22[%c2_87, %c0_88, %c0_89] : memref<4x48x12xbf16, #tpu.memory_space<vmem>>, vector<1x48x12xbf16>
    %175 = vector.shape_cast %174 : vector<1x48x12xbf16> to vector<48x12xbf16>
    %176 = arith.truncf %22 : vector<32x48xf32> to vector<32x48xbf16>
    %cst_90 = arith.constant dense<0.000000e+00> : vector<32x12xf32>
    %177 = tpu.matmul %176, %175, %cst_90 {dimension_numbers = #tpu.dot_dimension_numbers<[1], [0], [0], [1], [0, 0, 1, 1], [], []>} : vector<32x48xbf16>, vector<48x12xbf16>, vector<32x12xf32> -> vector<32x12xf32>
    %c2_91 = arith.constant 2 : index
    %c0_92 = arith.constant 0 : index
    %c0_93 = arith.constant 0 : index
    %178 = vector.load %arg8[%c2_91, %c0_92, %c0_93] : memref<4x1x12xf32, #tpu.memory_space<vmem>>, vector<1x1x12xf32>
    %179 = vector.shape_cast %178 : vector<1x1x12xf32> to vector<1x12xf32>
    %180 = vector.broadcast %179 : vector<1x12xf32> to vector<32x12xf32>
    %181 = arith.addf %177, %180 : vector<32x12xf32>
    %182 = vector.extract_strided_slice %165 {offsets = [0, 0], sizes = [16, 12], strides = [1, 1]} : vector<32x12xf32> to vector<16x12xf32>
    %183 = vector.extract_strided_slice %173 {offsets = [0, 0], sizes = [16, 12], strides = [1, 1]} : vector<32x12xf32> to vector<16x12xf32>
    %184 = arith.truncf %182 : vector<16x12xf32> to vector<16x12xbf16>
    %185 = arith.truncf %183 : vector<16x12xf32> to vector<16x12xbf16>
    %cst_94 = arith.constant dense<0.000000e+00> : vector<16x16xf32>
    %186 = tpu.matmul %184, %185, %cst_94 {dimension_numbers = #tpu.dot_dimension_numbers<[1], [1], [0], [0], [0, 0, 1, 0], [], []>} : vector<16x12xbf16>, vector<16x12xbf16>, vector<16x16xf32> -> vector<16x16xf32>
    %cst_95 = arith.constant dense<0xFF800000> : vector<16xf32>
    %187 = vector.multi_reduction <maximumf>, %186, %cst_95 [1] : vector<16x16xf32> to vector<16xf32>
    %188 = vector.shape_cast %187 : vector<16xf32> to vector<16x1xf32>
    %189 = vector.broadcast %188 : vector<16x1xf32> to vector<16x16xf32>
    %190 = arith.subf %186, %189 : vector<16x16xf32>
    %191 = math.exp %190 : vector<16x16xf32>
    %cst_96 = arith.constant dense<0.000000e+00> : vector<16xf32>
    %192 = vector.multi_reduction <add>, %191, %cst_96 [1] : vector<16x16xf32> to vector<16xf32>
    %193 = vector.shape_cast %192 : vector<16xf32> to vector<16x1xf32>
    %194 = tpu.reciprocal %193 {approx = true} : vector<16x1xf32> -> vector<16x1xf32>
    %195 = vector.broadcast %194 : vector<16x1xf32> to vector<16x16xf32>
    %196 = arith.mulf %191, %195 : vector<16x16xf32>
    %197 = vector.extract_strided_slice %181 {offsets = [0, 0], sizes = [16, 12], strides = [1, 1]} : vector<32x12xf32> to vector<16x12xf32>
    %198 = arith.truncf %196 : vector<16x16xf32> to vector<16x16xbf16>
    %199 = arith.truncf %197 : vector<16x12xf32> to vector<16x12xbf16>
    %cst_97 = arith.constant dense<0.000000e+00> : vector<16x12xf32>
    %200 = tpu.matmul %198, %199, %cst_97 {dimension_numbers = #tpu.dot_dimension_numbers<[1], [0], [0], [1], [0, 0, 1, 1], [], []>} : vector<16x16xbf16>, vector<16x12xbf16>, vector<16x12xf32> -> vector<16x12xf32>
    %201 = vector.extract_strided_slice %165 {offsets = [16, 0], sizes = [16, 12], strides = [1, 1]} : vector<32x12xf32> to vector<16x12xf32>
    %202 = vector.extract_strided_slice %173 {offsets = [16, 0], sizes = [16, 12], strides = [1, 1]} : vector<32x12xf32> to vector<16x12xf32>
    %203 = arith.truncf %201 : vector<16x12xf32> to vector<16x12xbf16>
    %204 = arith.truncf %202 : vector<16x12xf32> to vector<16x12xbf16>
    %cst_98 = arith.constant dense<0.000000e+00> : vector<16x16xf32>
    %205 = tpu.matmul %203, %204, %cst_98 {dimension_numbers = #tpu.dot_dimension_numbers<[1], [1], [0], [0], [0, 0, 1, 0], [], []>} : vector<16x12xbf16>, vector<16x12xbf16>, vector<16x16xf32> -> vector<16x16xf32>
    %cst_99 = arith.constant dense<0xFF800000> : vector<16xf32>
    %206 = vector.multi_reduction <maximumf>, %205, %cst_99 [1] : vector<16x16xf32> to vector<16xf32>
    %207 = vector.shape_cast %206 : vector<16xf32> to vector<16x1xf32>
    %208 = vector.broadcast %207 : vector<16x1xf32> to vector<16x16xf32>
    %209 = arith.subf %205, %208 : vector<16x16xf32>
    %210 = math.exp %209 : vector<16x16xf32>
    %cst_100 = arith.constant dense<0.000000e+00> : vector<16xf32>
    %211 = vector.multi_reduction <add>, %210, %cst_100 [1] : vector<16x16xf32> to vector<16xf32>
    %212 = vector.shape_cast %211 : vector<16xf32> to vector<16x1xf32>
    %213 = tpu.reciprocal %212 {approx = true} : vector<16x1xf32> -> vector<16x1xf32>
    %214 = vector.broadcast %213 : vector<16x1xf32> to vector<16x16xf32>
    %215 = arith.mulf %210, %214 : vector<16x16xf32>
    %216 = vector.extract_strided_slice %181 {offsets = [16, 0], sizes = [16, 12], strides = [1, 1]} : vector<32x12xf32> to vector<16x12xf32>
    %217 = arith.truncf %215 : vector<16x16xf32> to vector<16x16xbf16>
    %218 = arith.truncf %216 : vector<16x12xf32> to vector<16x12xbf16>
    %cst_101 = arith.constant dense<0.000000e+00> : vector<16x12xf32>
    %219 = tpu.matmul %217, %218, %cst_101 {dimension_numbers = #tpu.dot_dimension_numbers<[1], [0], [0], [1], [0, 0, 1, 1], [], []>} : vector<16x16xbf16>, vector<16x12xbf16>, vector<16x12xf32> -> vector<16x12xf32>
    %220 = tpu.concatenate %200, %219 in 0 : vector<16x12xf32>, vector<16x12xf32> -> vector<32x12xf32>
    %c2_102 = arith.constant 2 : index
    %c0_103 = arith.constant 0 : index
    %c0_104 = arith.constant 0 : index
    %221 = vector.load %arg20[%c2_102, %c0_103, %c0_104] : memref<4x12x48xbf16, #tpu.memory_space<vmem>>, vector<1x12x48xbf16>
    %222 = vector.shape_cast %221 : vector<1x12x48xbf16> to vector<12x48xbf16>
    %223 = arith.truncf %220 : vector<32x12xf32> to vector<32x12xbf16>
    %cst_105 = arith.constant dense<0.000000e+00> : vector<32x48xf32>
    %224 = tpu.matmul %223, %222, %cst_105 {dimension_numbers = #tpu.dot_dimension_numbers<[1], [0], [0], [1], [0, 0, 1, 1], [], []>} : vector<32x12xbf16>, vector<12x48xbf16>, vector<32x48xf32> -> vector<32x48xf32>
    %225 = arith.addf %157, %224 : vector<32x48xf32>
    %c3 = arith.constant 3 : index
    %c0_106 = arith.constant 0 : index
    %c0_107 = arith.constant 0 : index
    %226 = vector.load %arg21[%c3, %c0_106, %c0_107] : memref<4x48x12xbf16, #tpu.memory_space<vmem>>, vector<1x48x12xbf16>
    %227 = vector.shape_cast %226 : vector<1x48x12xbf16> to vector<48x12xbf16>
    %228 = arith.truncf %22 : vector<32x48xf32> to vector<32x48xbf16>
    %cst_108 = arith.constant dense<0.000000e+00> : vector<32x12xf32>
    %229 = tpu.matmul %228, %227, %cst_108 {dimension_numbers = #tpu.dot_dimension_numbers<[1], [0], [0], [1], [0, 0, 1, 1], [], []>} : vector<32x48xbf16>, vector<48x12xbf16>, vector<32x12xf32> -> vector<32x12xf32>
    %c3_109 = arith.constant 3 : index
    %c0_110 = arith.constant 0 : index
    %c0_111 = arith.constant 0 : index
    %230 = vector.load %arg7[%c3_109, %c0_110, %c0_111] : memref<4x1x12xf32, #tpu.memory_space<vmem>>, vector<1x1x12xf32>
    %231 = vector.shape_cast %230 : vector<1x1x12xf32> to vector<1x12xf32>
    %232 = vector.broadcast %231 : vector<1x12xf32> to vector<32x12xf32>
    %233 = arith.addf %229, %232 : vector<32x12xf32>
    %c3_112 = arith.constant 3 : index
    %c0_113 = arith.constant 0 : index
    %c0_114 = arith.constant 0 : index
    %234 = vector.load %arg19[%c3_112, %c0_113, %c0_114] : memref<4x48x12xbf16, #tpu.memory_space<vmem>>, vector<1x48x12xbf16>
    %235 = vector.shape_cast %234 : vector<1x48x12xbf16> to vector<48x12xbf16>
    %236 = arith.truncf %22 : vector<32x48xf32> to vector<32x48xbf16>
    %cst_115 = arith.constant dense<0.000000e+00> : vector<32x12xf32>
    %237 = tpu.matmul %236, %235, %cst_115 {dimension_numbers = #tpu.dot_dimension_numbers<[1], [0], [0], [1], [0, 0, 1, 1], [], []>} : vector<32x48xbf16>, vector<48x12xbf16>, vector<32x12xf32> -> vector<32x12xf32>
    %c3_116 = arith.constant 3 : index
    %c0_117 = arith.constant 0 : index
    %c0_118 = arith.constant 0 : index
    %238 = vector.load %arg5[%c3_116, %c0_117, %c0_118] : memref<4x1x12xf32, #tpu.memory_space<vmem>>, vector<1x1x12xf32>
    %239 = vector.shape_cast %238 : vector<1x1x12xf32> to vector<1x12xf32>
    %240 = vector.broadcast %239 : vector<1x12xf32> to vector<32x12xf32>
    %241 = arith.addf %237, %240 : vector<32x12xf32>
    %c3_119 = arith.constant 3 : index
    %c0_120 = arith.constant 0 : index
    %c0_121 = arith.constant 0 : index
    %242 = vector.load %arg22[%c3_119, %c0_120, %c0_121] : memref<4x48x12xbf16, #tpu.memory_space<vmem>>, vector<1x48x12xbf16>
    %243 = vector.shape_cast %242 : vector<1x48x12xbf16> to vector<48x12xbf16>
    %244 = arith.truncf %22 : vector<32x48xf32> to vector<32x48xbf16>
    %cst_122 = arith.constant dense<0.000000e+00> : vector<32x12xf32>
    %245 = tpu.matmul %244, %243, %cst_122 {dimension_numbers = #tpu.dot_dimension_numbers<[1], [0], [0], [1], [0, 0, 1, 1], [], []>} : vector<32x48xbf16>, vector<48x12xbf16>, vector<32x12xf32> -> vector<32x12xf32>
    %c3_123 = arith.constant 3 : index
    %c0_124 = arith.constant 0 : index
    %c0_125 = arith.constant 0 : index
    %246 = vector.load %arg8[%c3_123, %c0_124, %c0_125] : memref<4x1x12xf32, #tpu.memory_space<vmem>>, vector<1x1x12xf32>
    %247 = vector.shape_cast %246 : vector<1x1x12xf32> to vector<1x12xf32>
    %248 = vector.broadcast %247 : vector<1x12xf32> to vector<32x12xf32>
    %249 = arith.addf %245, %248 : vector<32x12xf32>
    %250 = vector.extract_strided_slice %233 {offsets = [0, 0], sizes = [16, 12], strides = [1, 1]} : vector<32x12xf32> to vector<16x12xf32>
    %251 = vector.extract_strided_slice %241 {offsets = [0, 0], sizes = [16, 12], strides = [1, 1]} : vector<32x12xf32> to vector<16x12xf32>
    %252 = arith.truncf %250 : vector<16x12xf32> to vector<16x12xbf16>
    %253 = arith.truncf %251 : vector<16x12xf32> to vector<16x12xbf16>
    %cst_126 = arith.constant dense<0.000000e+00> : vector<16x16xf32>
    %254 = tpu.matmul %252, %253, %cst_126 {dimension_numbers = #tpu.dot_dimension_numbers<[1], [1], [0], [0], [0, 0, 1, 0], [], []>} : vector<16x12xbf16>, vector<16x12xbf16>, vector<16x16xf32> -> vector<16x16xf32>
    %cst_127 = arith.constant dense<0xFF800000> : vector<16xf32>
    %255 = vector.multi_reduction <maximumf>, %254, %cst_127 [1] : vector<16x16xf32> to vector<16xf32>
    %256 = vector.shape_cast %255 : vector<16xf32> to vector<16x1xf32>
    %257 = vector.broadcast %256 : vector<16x1xf32> to vector<16x16xf32>
    %258 = arith.subf %254, %257 : vector<16x16xf32>
    %259 = math.exp %258 : vector<16x16xf32>
    %cst_128 = arith.constant dense<0.000000e+00> : vector<16xf32>
    %260 = vector.multi_reduction <add>, %259, %cst_128 [1] : vector<16x16xf32> to vector<16xf32>
    %261 = vector.shape_cast %260 : vector<16xf32> to vector<16x1xf32>
    %262 = tpu.reciprocal %261 {approx = true} : vector<16x1xf32> -> vector<16x1xf32>
    %263 = vector.broadcast %262 : vector<16x1xf32> to vector<16x16xf32>
    %264 = arith.mulf %259, %263 : vector<16x16xf32>
    %265 = vector.extract_strided_slice %249 {offsets = [0, 0], sizes = [16, 12], strides = [1, 1]} : vector<32x12xf32> to vector<16x12xf32>
    %266 = arith.truncf %264 : vector<16x16xf32> to vector<16x16xbf16>
    %267 = arith.truncf %265 : vector<16x12xf32> to vector<16x12xbf16>
    %cst_129 = arith.constant dense<0.000000e+00> : vector<16x12xf32>
    %268 = tpu.matmul %266, %267, %cst_129 {dimension_numbers = #tpu.dot_dimension_numbers<[1], [0], [0], [1], [0, 0, 1, 1], [], []>} : vector<16x16xbf16>, vector<16x12xbf16>, vector<16x12xf32> -> vector<16x12xf32>
    %269 = vector.extract_strided_slice %233 {offsets = [16, 0], sizes = [16, 12], strides = [1, 1]} : vector<32x12xf32> to vector<16x12xf32>
    %270 = vector.extract_strided_slice %241 {offsets = [16, 0], sizes = [16, 12], strides = [1, 1]} : vector<32x12xf32> to vector<16x12xf32>
    %271 = arith.truncf %269 : vector<16x12xf32> to vector<16x12xbf16>
    %272 = arith.truncf %270 : vector<16x12xf32> to vector<16x12xbf16>
    %cst_130 = arith.constant dense<0.000000e+00> : vector<16x16xf32>
    %273 = tpu.matmul %271, %272, %cst_130 {dimension_numbers = #tpu.dot_dimension_numbers<[1], [1], [0], [0], [0, 0, 1, 0], [], []>} : vector<16x12xbf16>, vector<16x12xbf16>, vector<16x16xf32> -> vector<16x16xf32>
    %cst_131 = arith.constant dense<0xFF800000> : vector<16xf32>
    %274 = vector.multi_reduction <maximumf>, %273, %cst_131 [1] : vector<16x16xf32> to vector<16xf32>
    %275 = vector.shape_cast %274 : vector<16xf32> to vector<16x1xf32>
    %276 = vector.broadcast %275 : vector<16x1xf32> to vector<16x16xf32>
    %277 = arith.subf %273, %276 : vector<16x16xf32>
    %278 = math.exp %277 : vector<16x16xf32>
    %cst_132 = arith.constant dense<0.000000e+00> : vector<16xf32>
    %279 = vector.multi_reduction <add>, %278, %cst_132 [1] : vector<16x16xf32> to vector<16xf32>
    %280 = vector.shape_cast %279 : vector<16xf32> to vector<16x1xf32>
    %281 = tpu.reciprocal %280 {approx = true} : vector<16x1xf32> -> vector<16x1xf32>
    %282 = vector.broadcast %281 : vector<16x1xf32> to vector<16x16xf32>
    %283 = arith.mulf %278, %282 : vector<16x16xf32>
    %284 = vector.extract_strided_slice %249 {offsets = [16, 0], sizes = [16, 12], strides = [1, 1]} : vector<32x12xf32> to vector<16x12xf32>
    %285 = arith.truncf %283 : vector<16x16xf32> to vector<16x16xbf16>
    %286 = arith.truncf %284 : vector<16x12xf32> to vector<16x12xbf16>
    %cst_133 = arith.constant dense<0.000000e+00> : vector<16x12xf32>
    %287 = tpu.matmul %285, %286, %cst_133 {dimension_numbers = #tpu.dot_dimension_numbers<[1], [0], [0], [1], [0, 0, 1, 1], [], []>} : vector<16x16xbf16>, vector<16x12xbf16>, vector<16x12xf32> -> vector<16x12xf32>
    %288 = tpu.concatenate %268, %287 in 0 : vector<16x12xf32>, vector<16x12xf32> -> vector<32x12xf32>
    %c3_134 = arith.constant 3 : index
    %c0_135 = arith.constant 0 : index
    %c0_136 = arith.constant 0 : index
    %289 = vector.load %arg20[%c3_134, %c0_135, %c0_136] : memref<4x12x48xbf16, #tpu.memory_space<vmem>>, vector<1x12x48xbf16>
    %290 = vector.shape_cast %289 : vector<1x12x48xbf16> to vector<12x48xbf16>
    %291 = arith.truncf %288 : vector<32x12xf32> to vector<32x12xbf16>
    %cst_137 = arith.constant dense<0.000000e+00> : vector<32x48xf32>
    %292 = tpu.matmul %291, %290, %cst_137 {dimension_numbers = #tpu.dot_dimension_numbers<[1], [0], [0], [1], [0, 0, 1, 1], [], []>} : vector<32x12xbf16>, vector<12x48xbf16>, vector<32x48xf32> -> vector<32x48xf32>
    %293 = arith.addf %225, %292 : vector<32x48xf32>
    %c0_138 = arith.constant 0 : index
    %c0_139 = arith.constant 0 : index
    %294 = vector.load %arg6[%c0_138, %c0_139] : memref<1x48xf32, #tpu.memory_space<vmem>>, vector<1x48xf32>
    %295 = vector.broadcast %294 : vector<1x48xf32> to vector<32x48xf32>
    %296 = arith.addf %293, %295 : vector<32x48xf32>
    %297 = arith.addf %22, %296 : vector<32x48xf32>
    %c0_140 = arith.constant 0 : index
    %c0_141 = arith.constant 0 : index
    %298 = vector.load %arg12[%c0_140, %c0_141] : memref<1x48xf32, #tpu.memory_space<vmem>>, vector<1x48xf32>
    %c0_142 = arith.constant 0 : index
    %c0_143 = arith.constant 0 : index
    %299 = vector.load %arg11[%c0_142, %c0_143] : memref<1x48xf32, #tpu.memory_space<vmem>>, vector<1x48xf32>
    %cst_144 = arith.constant dense<0.000000e+00> : vector<32xf32>
    %300 = vector.multi_reduction <add>, %297, %cst_144 [1] : vector<32x48xf32> to vector<32xf32>
    %301 = vector.shape_cast %300 : vector<32xf32> to vector<32x1xf32>
    %cst_145 = arith.constant 4.800000e+01 : f32
    %302 = vector.broadcast %cst_145 : f32 to vector<32x1xf32>
    %303 = arith.divf %301, %302 : vector<32x1xf32>
    %304 = vector.broadcast %303 : vector<32x1xf32> to vector<32x48xf32>
    %305 = arith.subf %297, %304 : vector<32x48xf32>
    %306 = arith.mulf %305, %305 : vector<32x48xf32>
    %cst_146 = arith.constant dense<0.000000e+00> : vector<32xf32>
    %307 = vector.multi_reduction <add>, %306, %cst_146 [1] : vector<32x48xf32> to vector<32xf32>
    %308 = vector.shape_cast %307 : vector<32xf32> to vector<32x1xf32>
    %cst_147 = arith.constant 4.800000e+01 : f32
    %309 = vector.broadcast %cst_147 : f32 to vector<32x1xf32>
    %310 = arith.divf %308, %309 : vector<32x1xf32>
    %cst_148 = arith.constant 9.99999974E-6 : f32
    %311 = vector.broadcast %cst_148 : f32 to vector<32x1xf32>
    %312 = arith.addf %310, %311 : vector<32x1xf32>
    %313 = math.rsqrt %312 : vector<32x1xf32>
    %314 = vector.broadcast %313 : vector<32x1xf32> to vector<32x48xf32>
    %315 = arith.mulf %305, %314 : vector<32x48xf32>
    %316 = vector.broadcast %298 : vector<1x48xf32> to vector<32x48xf32>
    %317 = arith.mulf %315, %316 : vector<32x48xf32>
    %318 = vector.broadcast %299 : vector<1x48xf32> to vector<32x48xf32>
    %319 = arith.addf %317, %318 : vector<32x48xf32>
    %c0_149 = arith.constant 0 : index
    %c0_150 = arith.constant 0 : index
    %320 = vector.load %arg17[%c0_149, %c0_150] : memref<48x48xbf16, #tpu.memory_space<vmem>>, vector<48x48xbf16>
    %321 = arith.truncf %319 : vector<32x48xf32> to vector<32x48xbf16>
    %cst_151 = arith.constant dense<0.000000e+00> : vector<32x48xf32>
    %322 = tpu.matmul %321, %320, %cst_151 {dimension_numbers = #tpu.dot_dimension_numbers<[1], [0], [0], [1], [0, 0, 1, 1], [], []>} : vector<32x48xbf16>, vector<48x48xbf16>, vector<32x48xf32> -> vector<32x48xf32>
    %c0_152 = arith.constant 0 : index
    %c0_153 = arith.constant 0 : index
    %323 = vector.load %arg3[%c0_152, %c0_153] : memref<1x48xf32, #tpu.memory_space<vmem>>, vector<1x48xf32>
    %324 = vector.broadcast %323 : vector<1x48xf32> to vector<32x48xf32>
    %325 = arith.addf %322, %324 : vector<32x48xf32>
    %cst_154 = arith.constant 0.000000e+00 : f32
    %326 = vector.broadcast %cst_154 : f32 to vector<32x48xf32>
    %327 = arith.maximumf %325, %326 : vector<32x48xf32>
    %c0_155 = arith.constant 0 : index
    %c0_156 = arith.constant 0 : index
    %328 = vector.load %arg18[%c0_155, %c0_156] : memref<48x48xbf16, #tpu.memory_space<vmem>>, vector<48x48xbf16>
    %329 = arith.truncf %327 : vector<32x48xf32> to vector<32x48xbf16>
    %cst_157 = arith.constant dense<0.000000e+00> : vector<32x48xf32>
    %330 = tpu.matmul %329, %328, %cst_157 {dimension_numbers = #tpu.dot_dimension_numbers<[1], [0], [0], [1], [0, 0, 1, 1], [], []>} : vector<32x48xbf16>, vector<48x48xbf16>, vector<32x48xf32> -> vector<32x48xf32>
    %c0_158 = arith.constant 0 : index
    %c0_159 = arith.constant 0 : index
    %331 = vector.load %arg4[%c0_158, %c0_159] : memref<1x48xf32, #tpu.memory_space<vmem>>, vector<1x48xf32>
    %332 = vector.broadcast %331 : vector<1x48xf32> to vector<32x48xf32>
    %333 = arith.addf %330, %332 : vector<32x48xf32>
    %334 = arith.addf %319, %333 : vector<32x48xf32>
    %c0_160 = arith.constant 0 : index
    %c0_161 = arith.constant 0 : index
    %335 = vector.load %arg14[%c0_160, %c0_161] : memref<1x48xf32, #tpu.memory_space<vmem>>, vector<1x48xf32>
    %c0_162 = arith.constant 0 : index
    %c0_163 = arith.constant 0 : index
    %336 = vector.load %arg13[%c0_162, %c0_163] : memref<1x48xf32, #tpu.memory_space<vmem>>, vector<1x48xf32>
    %cst_164 = arith.constant dense<0.000000e+00> : vector<32xf32>
    %337 = vector.multi_reduction <add>, %334, %cst_164 [1] : vector<32x48xf32> to vector<32xf32>
    %338 = vector.shape_cast %337 : vector<32xf32> to vector<32x1xf32>
    %cst_165 = arith.constant 4.800000e+01 : f32
    %339 = vector.broadcast %cst_165 : f32 to vector<32x1xf32>
    %340 = arith.divf %338, %339 : vector<32x1xf32>
    %341 = vector.broadcast %340 : vector<32x1xf32> to vector<32x48xf32>
    %342 = arith.subf %334, %341 : vector<32x48xf32>
    %343 = arith.mulf %342, %342 : vector<32x48xf32>
    %cst_166 = arith.constant dense<0.000000e+00> : vector<32xf32>
    %344 = vector.multi_reduction <add>, %343, %cst_166 [1] : vector<32x48xf32> to vector<32xf32>
    %345 = vector.shape_cast %344 : vector<32xf32> to vector<32x1xf32>
    %cst_167 = arith.constant 4.800000e+01 : f32
    %346 = vector.broadcast %cst_167 : f32 to vector<32x1xf32>
    %347 = arith.divf %345, %346 : vector<32x1xf32>
    %cst_168 = arith.constant 9.99999974E-6 : f32
    %348 = vector.broadcast %cst_168 : f32 to vector<32x1xf32>
    %349 = arith.addf %347, %348 : vector<32x1xf32>
    %350 = math.rsqrt %349 : vector<32x1xf32>
    %351 = vector.broadcast %350 : vector<32x1xf32> to vector<32x48xf32>
    %352 = arith.mulf %342, %351 : vector<32x48xf32>
    %353 = vector.broadcast %335 : vector<1x48xf32> to vector<32x48xf32>
    %354 = arith.mulf %352, %353 : vector<32x48xf32>
    %355 = vector.broadcast %336 : vector<1x48xf32> to vector<32x48xf32>
    %356 = arith.addf %354, %355 : vector<32x48xf32>
    %357 = vector.extract_strided_slice %356 {offsets = [0, 0], sizes = [1, 48], strides = [1, 1]} : vector<32x48xf32> to vector<1x48xf32>
    %358 = vector.extract_strided_slice %356 {offsets = [16, 0], sizes = [1, 48], strides = [1, 1]} : vector<32x48xf32> to vector<1x48xf32>
    %359 = tpu.concatenate %357, %358 in 0 : vector<1x48xf32>, vector<1x48xf32> -> vector<2x48xf32>
    %c0_169 = arith.constant 0 : index
    %c0_170 = arith.constant 0 : index
    %360 = vector.load %arg16[%c0_169, %c0_170] : memref<48x48xbf16, #tpu.memory_space<vmem>>, vector<48x48xbf16>
    %361 = arith.truncf %359 : vector<2x48xf32> to vector<2x48xbf16>
    %cst_171 = arith.constant dense<0.000000e+00> : vector<2x48xf32>
    %362 = tpu.matmul %361, %360, %cst_171 {dimension_numbers = #tpu.dot_dimension_numbers<[1], [0], [0], [1], [0, 0, 1, 1], [], []>} : vector<2x48xbf16>, vector<48x48xbf16>, vector<2x48xf32> -> vector<2x48xf32>
    %c0_172 = arith.constant 0 : index
    %c0_173 = arith.constant 0 : index
    %363 = vector.load %arg15[%c0_172, %c0_173] : memref<1x48xf32, #tpu.memory_space<vmem>>, vector<1x48xf32>
    %364 = vector.broadcast %363 : vector<1x48xf32> to vector<2x48xf32>
    %365 = arith.addf %362, %364 : vector<2x48xf32>
    %366 = math.tanh %365 : vector<2x48xf32>
    %c0_174 = arith.constant 0 : index
    %c0_175 = arith.constant 0 : index
    %367 = vector.load %arg42[%c0_174, %c0_175] : memref<2x48xf32, #tpu.memory_space<vmem>>, vector<2x48xf32>
    tpu.vector_store %arg42[%c0_174, %c0_175], %366 {strides = array<i32>} : memref<2x48xf32, #tpu.memory_space<vmem>>, vector<2x48xf32>,
    %368 = vector.extract_strided_slice %356 {offsets = [0, 0], sizes = [8, 48], strides = [1, 1]} : vector<32x48xf32> to vector<8x48xf32>
    %369 = vector.extract_strided_slice %356 {offsets = [16, 0], sizes = [8, 48], strides = [1, 1]} : vector<32x48xf32> to vector<8x48xf32>
    %370 = tpu.concatenate %368, %369 in 0 : vector<8x48xf32>, vector<8x48xf32> -> vector<16x48xf32>
    %c0_176 = arith.constant 0 : index
    %c0_177 = arith.constant 0 : index
    %371 = vector.load %arg24[%c0_176, %c0_177] : memref<48x32xbf16, #tpu.memory_space<vmem>>, vector<48x32xbf16>
    %372 = arith.truncf %370 : vector<16x48xf32> to vector<16x48xbf16>
    %cst_178 = arith.constant dense<0.000000e+00> : vector<16x32xf32>
    %373 = tpu.matmul %372, %371, %cst_178 {dimension_numbers = #tpu.dot_dimension_numbers<[1], [0], [0], [1], [0, 0, 1, 1], [], []>} : vector<16x48xbf16>, vector<48x32xbf16>, vector<16x32xf32> -> vector<16x32xf32>
    %c0_179 = arith.constant 0 : index
    %c0_180 = arith.constant 0 : index
    %374 = vector.load %arg23[%c0_179, %c0_180] : memref<1x32xf32, #tpu.memory_space<vmem>>, vector<1x32xf32>
    %375 = vector.broadcast %374 : vector<1x32xf32> to vector<16x32xf32>
    %376 = arith.addf %373, %375 : vector<16x32xf32>
    %c0_181 = arith.constant 0 : index
    %c0_182 = arith.constant 0 : index
    %377 = vector.load %arg43[%c0_181, %c0_182] : memref<16x32xf32, #tpu.memory_space<vmem>>, vector<16x32xf32>
    tpu.vector_store %arg43[%c0_181, %c0_182], %376 {strides = array<i32>} : memref<16x32xf32, #tpu.memory_space<vmem>>, vector<16x32xf32>,
    %378 = tpu.iota {dimensions = array<i32: 1>} : vector<8x8xi32>
    %c0_183 = arith.constant 0 : index
    %c0_184 = arith.constant 0 : index
    %c0_185 = arith.constant 0 : index
    %379 = vector.load %arg2[%c0_183, %c0_184, %c0_185] : memref<2x8x8xf32, #tpu.memory_space<vmem>>, vector<1x8x8xf32>
    %380 = vector.shape_cast %379 : vector<1x8x8xf32> to vector<8x8xf32>
    %cst_186 = arith.constant 0.000000e+00 : f32
    %381 = vector.broadcast %cst_186 : f32 to vector<8x8xf32>
    %382 = arith.cmpf oeq, %380, %381 : vector<8x8xf32>
    %c0_187 = arith.constant 0 : index
    %383 = memref.load %arg0[%c0_187] : memref<2xi32, #tpu.memory_space<smem>>
    %384 = vector.broadcast %383 : i32 to vector<8x8xi32>
    %385 = arith.cmpi sge, %378, %384 : vector<8x8xi32>
    %386 = arith.ori %382, %385 : vector<8x8xi1>
    %cst_188 = arith.constant -1.000000e+09 : f32
    %cst_189 = arith.constant 0.000000e+00 : f32
    %387 = vector.broadcast %cst_188 : f32 to vector<8x8xf32>
    %388 = vector.broadcast %cst_189 : f32 to vector<8x8xf32>
    %389 = arith.select %386, %387, %388 : vector<8x8xi1>, vector<8x8xf32>
    %c1_190 = arith.constant 1 : index
    %c0_191 = arith.constant 0 : index
    %c0_192 = arith.constant 0 : index
    %390 = vector.load %arg2[%c1_190, %c0_191, %c0_192] : memref<2x8x8xf32, #tpu.memory_space<vmem>>, vector<1x8x8xf32>
    %391 = vector.shape_cast %390 : vector<1x8x8xf32> to vector<8x8xf32>
    %cst_193 = arith.constant 0.000000e+00 : f32
    %392 = vector.broadcast %cst_193 : f32 to vector<8x8xf32>
    %393 = arith.cmpf oeq, %391, %392 : vector<8x8xf32>
    %c1_194 = arith.constant 1 : index
    %394 = memref.load %arg0[%c1_194] : memref<2xi32, #tpu.memory_space<smem>>
    %395 = vector.broadcast %394 : i32 to vector<8x8xi32>
    %396 = arith.cmpi sge, %378, %395 : vector<8x8xi32>
    %397 = arith.ori %393, %396 : vector<8x8xi1>
    %cst_195 = arith.constant -1.000000e+09 : f32
    %cst_196 = arith.constant 0.000000e+00 : f32
    %398 = vector.broadcast %cst_195 : f32 to vector<8x8xf32>
    %399 = vector.broadcast %cst_196 : f32 to vector<8x8xf32>
    %400 = arith.select %397, %398, %399 : vector<8x8xi1>, vector<8x8xf32>
    %c0_197 = arith.constant 0 : index
    %c0_198 = arith.constant 0 : index
    %c0_199 = arith.constant 0 : index
    %c0_200 = arith.constant 0 : index
    %401 = vector.load %arg39[%c0_197, %c0_198, %c0_199, %c0_200] : memref<2x4x32x8xbf16, #tpu.memory_space<vmem>>, vector<1x1x32x8xbf16>
    %402 = vector.shape_cast %401 : vector<1x1x32x8xbf16> to vector<32x8xbf16>
    %403 = arith.truncf %376 : vector<16x32xf32> to vector<16x32xbf16>
    %cst_201 = arith.constant dense<0.000000e+00> : vector<16x8xf32>
    %404 = tpu.matmul %403, %402, %cst_201 {dimension_numbers = #tpu.dot_dimension_numbers<[1], [0], [0], [1], [0, 0, 1, 1], [], []>} : vector<16x32xbf16>, vector<32x8xbf16>, vector<16x8xf32> -> vector<16x8xf32>
    %c0_202 = arith.constant 0 : index
    %c0_203 = arith.constant 0 : index
    %c0_204 = arith.constant 0 : index
    %c0_205 = arith.constant 0 : index
    %405 = vector.load %arg29[%c0_202, %c0_203, %c0_204, %c0_205] : memref<2x4x1x8xf32, #tpu.memory_space<vmem>>, vector<1x1x1x8xf32>
    %406 = vector.shape_cast %405 : vector<1x1x1x8xf32> to vector<1x8xf32>
    %407 = vector.broadcast %406 : vector<1x8xf32> to vector<16x8xf32>
    %408 = arith.addf %404, %407 : vector<16x8xf32>
    %c0_206 = arith.constant 0 : index
    %c0_207 = arith.constant 0 : index
    %c0_208 = arith.constant 0 : index
    %c0_209 = arith.constant 0 : index
    %409 = vector.load %arg37[%c0_206, %c0_207, %c0_208, %c0_209] : memref<2x4x32x8xbf16, #tpu.memory_space<vmem>>, vector<1x1x32x8xbf16>
    %410 = vector.shape_cast %409 : vector<1x1x32x8xbf16> to vector<32x8xbf16>
    %411 = arith.truncf %376 : vector<16x32xf32> to vector<16x32xbf16>
    %cst_210 = arith.constant dense<0.000000e+00> : vector<16x8xf32>
    %412 = tpu.matmul %411, %410, %cst_210 {dimension_numbers = #tpu.dot_dimension_numbers<[1], [0], [0], [1], [0, 0, 1, 1], [], []>} : vector<16x32xbf16>, vector<32x8xbf16>, vector<16x8xf32> -> vector<16x8xf32>
    %c0_211 = arith.constant 0 : index
    %c0_212 = arith.constant 0 : index
    %c0_213 = arith.constant 0 : index
    %c0_214 = arith.constant 0 : index
    %413 = vector.load %arg27[%c0_211, %c0_212, %c0_213, %c0_214] : memref<2x4x1x8xf32, #tpu.memory_space<vmem>>, vector<1x1x1x8xf32>
    %414 = vector.shape_cast %413 : vector<1x1x1x8xf32> to vector<1x8xf32>
    %415 = vector.broadcast %414 : vector<1x8xf32> to vector<16x8xf32>
    %416 = arith.addf %412, %415 : vector<16x8xf32>
    %c0_215 = arith.constant 0 : index
    %c0_216 = arith.constant 0 : index
    %c0_217 = arith.constant 0 : index
    %c0_218 = arith.constant 0 : index
    %417 = vector.load %arg40[%c0_215, %c0_216, %c0_217, %c0_218] : memref<2x4x32x8xbf16, #tpu.memory_space<vmem>>, vector<1x1x32x8xbf16>
    %418 = vector.shape_cast %417 : vector<1x1x32x8xbf16> to vector<32x8xbf16>
    %419 = arith.truncf %376 : vector<16x32xf32> to vector<16x32xbf16>
    %cst_219 = arith.constant dense<0.000000e+00> : vector<16x8xf32>
    %420 = tpu.matmul %419, %418, %cst_219 {dimension_numbers = #tpu.dot_dimension_numbers<[1], [0], [0], [1], [0, 0, 1, 1], [], []>} : vector<16x32xbf16>, vector<32x8xbf16>, vector<16x8xf32> -> vector<16x8xf32>
    %c0_220 = arith.constant 0 : index
    %c0_221 = arith.constant 0 : index
    %c0_222 = arith.constant 0 : index
    %c0_223 = arith.constant 0 : index
    %421 = vector.load %arg30[%c0_220, %c0_221, %c0_222, %c0_223] : memref<2x4x1x8xf32, #tpu.memory_space<vmem>>, vector<1x1x1x8xf32>
    %422 = vector.shape_cast %421 : vector<1x1x1x8xf32> to vector<1x8xf32>
    %423 = vector.broadcast %422 : vector<1x8xf32> to vector<16x8xf32>
    %424 = arith.addf %420, %423 : vector<16x8xf32>
    %425 = vector.extract_strided_slice %408 {offsets = [0, 0], sizes = [8, 8], strides = [1, 1]} : vector<16x8xf32> to vector<8x8xf32>
    %426 = vector.extract_strided_slice %416 {offsets = [0, 0], sizes = [8, 8], strides = [1, 1]} : vector<16x8xf32> to vector<8x8xf32>
    %427 = arith.truncf %425 : vector<8x8xf32> to vector<8x8xbf16>
    %428 = arith.truncf %426 : vector<8x8xf32> to vector<8x8xbf16>
    %cst_224 = arith.constant dense<0.000000e+00> : vector<8x8xf32>
    %429 = tpu.matmul %427, %428, %cst_224 {dimension_numbers = #tpu.dot_dimension_numbers<[1], [1], [0], [0], [0, 0, 1, 0], [], []>} : vector<8x8xbf16>, vector<8x8xbf16>, vector<8x8xf32> -> vector<8x8xf32>
    %430 = arith.addf %429, %389 : vector<8x8xf32>
    %cst_225 = arith.constant dense<0xFF800000> : vector<8xf32>
    %431 = vector.multi_reduction <maximumf>, %430, %cst_225 [1] : vector<8x8xf32> to vector<8xf32>
    %432 = vector.shape_cast %431 : vector<8xf32> to vector<8x1xf32>
    %433 = vector.broadcast %432 : vector<8x1xf32> to vector<8x8xf32>
    %434 = arith.subf %430, %433 : vector<8x8xf32>
    %435 = math.exp %434 : vector<8x8xf32>
    %cst_226 = arith.constant dense<0.000000e+00> : vector<8xf32>
    %436 = vector.multi_reduction <add>, %435, %cst_226 [1] : vector<8x8xf32> to vector<8xf32>
    %437 = vector.shape_cast %436 : vector<8xf32> to vector<8x1xf32>
    %438 = tpu.reciprocal %437 {approx = true} : vector<8x1xf32> -> vector<8x1xf32>
    %439 = vector.broadcast %438 : vector<8x1xf32> to vector<8x8xf32>
    %440 = arith.mulf %435, %439 : vector<8x8xf32>
    %441 = vector.extract_strided_slice %424 {offsets = [0, 0], sizes = [8, 8], strides = [1, 1]} : vector<16x8xf32> to vector<8x8xf32>
    %442 = arith.truncf %440 : vector<8x8xf32> to vector<8x8xbf16>
    %443 = arith.truncf %441 : vector<8x8xf32> to vector<8x8xbf16>
    %cst_227 = arith.constant dense<0.000000e+00> : vector<8x8xf32>
    %444 = tpu.matmul %442, %443, %cst_227 {dimension_numbers = #tpu.dot_dimension_numbers<[1], [0], [0], [1], [0, 0, 1, 1], [], []>} : vector<8x8xbf16>, vector<8x8xbf16>, vector<8x8xf32> -> vector<8x8xf32>
    %445 = vector.extract_strided_slice %408 {offsets = [8, 0], sizes = [8, 8], strides = [1, 1]} : vector<16x8xf32> to vector<8x8xf32>
    %446 = vector.extract_strided_slice %416 {offsets = [8, 0], sizes = [8, 8], strides = [1, 1]} : vector<16x8xf32> to vector<8x8xf32>
    %447 = arith.truncf %445 : vector<8x8xf32> to vector<8x8xbf16>
    %448 = arith.truncf %446 : vector<8x8xf32> to vector<8x8xbf16>
    %cst_228 = arith.constant dense<0.000000e+00> : vector<8x8xf32>
    %449 = tpu.matmul %447, %448, %cst_228 {dimension_numbers = #tpu.dot_dimension_numbers<[1], [1], [0], [0], [0, 0, 1, 0], [], []>} : vector<8x8xbf16>, vector<8x8xbf16>, vector<8x8xf32> -> vector<8x8xf32>
    %450 = arith.addf %449, %400 : vector<8x8xf32>
    %cst_229 = arith.constant dense<0xFF800000> : vector<8xf32>
    %451 = vector.multi_reduction <maximumf>, %450, %cst_229 [1] : vector<8x8xf32> to vector<8xf32>
    %452 = vector.shape_cast %451 : vector<8xf32> to vector<8x1xf32>
    %453 = vector.broadcast %452 : vector<8x1xf32> to vector<8x8xf32>
    %454 = arith.subf %450, %453 : vector<8x8xf32>
    %455 = math.exp %454 : vector<8x8xf32>
    %cst_230 = arith.constant dense<0.000000e+00> : vector<8xf32>
    %456 = vector.multi_reduction <add>, %455, %cst_230 [1] : vector<8x8xf32> to vector<8xf32>
    %457 = vector.shape_cast %456 : vector<8xf32> to vector<8x1xf32>
    %458 = tpu.reciprocal %457 {approx = true} : vector<8x1xf32> -> vector<8x1xf32>
    %459 = vector.broadcast %458 : vector<8x1xf32> to vector<8x8xf32>
    %460 = arith.mulf %455, %459 : vector<8x8xf32>
    %461 = vector.extract_strided_slice %424 {offsets = [8, 0], sizes = [8, 8], strides = [1, 1]} : vector<16x8xf32> to vector<8x8xf32>
    %462 = arith.truncf %460 : vector<8x8xf32> to vector<8x8xbf16>
    %463 = arith.truncf %461 : vector<8x8xf32> to vector<8x8xbf16>
    %cst_231 = arith.constant dense<0.000000e+00> : vector<8x8xf32>
    %464 = tpu.matmul %462, %463, %cst_231 {dimension_numbers = #tpu.dot_dimension_numbers<[1], [0], [0], [1], [0, 0, 1, 1], [], []>} : vector<8x8xbf16>, vector<8x8xbf16>, vector<8x8xf32> -> vector<8x8xf32>
    %465 = tpu.concatenate %444, %464 in 0 : vector<8x8xf32>, vector<8x8xf32> -> vector<16x8xf32>
    %c0_232 = arith.constant 0 : index
    %c0_233 = arith.constant 0 : index
    %c0_234 = arith.constant 0 : index
    %c0_235 = arith.constant 0 : index
    %466 = vector.load %arg38[%c0_232, %c0_233, %c0_234, %c0_235] : memref<2x4x8x32xbf16, #tpu.memory_space<vmem>>, vector<1x1x8x32xbf16>
    %467 = vector.shape_cast %466 : vector<1x1x8x32xbf16> to vector<8x32xbf16>
    %468 = arith.truncf %465 : vector<16x8xf32> to vector<16x8xbf16>
    %cst_236 = arith.constant dense<0.000000e+00> : vector<16x32xf32>
    %469 = tpu.matmul %468, %467, %cst_236 {dimension_numbers = #tpu.dot_dimension_numbers<[1], [0], [0], [1], [0, 0, 1, 1], [], []>} : vector<16x8xbf16>, vector<8x32xbf16>, vector<16x32xf32> -> vector<16x32xf32>
    %c0_237 = arith.constant 0 : index
    %c1_238 = arith.constant 1 : index
    %c0_239 = arith.constant 0 : index
    %c0_240 = arith.constant 0 : index
    %470 = vector.load %arg39[%c0_237, %c1_238, %c0_239, %c0_240] : memref<2x4x32x8xbf16, #tpu.memory_space<vmem>>, vector<1x1x32x8xbf16>
    %471 = vector.shape_cast %470 : vector<1x1x32x8xbf16> to vector<32x8xbf16>
    %472 = arith.truncf %376 : vector<16x32xf32> to vector<16x32xbf16>
    %cst_241 = arith.constant dense<0.000000e+00> : vector<16x8xf32>
    %473 = tpu.matmul %472, %471, %cst_241 {dimension_numbers = #tpu.dot_dimension_numbers<[1], [0], [0], [1], [0, 0, 1, 1], [], []>} : vector<16x32xbf16>, vector<32x8xbf16>, vector<16x8xf32> -> vector<16x8xf32>
    %c0_242 = arith.constant 0 : index
    %c1_243 = arith.constant 1 : index
    %c0_244 = arith.constant 0 : index
    %c0_245 = arith.constant 0 : index
    %474 = vector.load %arg29[%c0_242, %c1_243, %c0_244, %c0_245] : memref<2x4x1x8xf32, #tpu.memory_space<vmem>>, vector<1x1x1x8xf32>
    %475 = vector.shape_cast %474 : vector<1x1x1x8xf32> to vector<1x8xf32>
    %476 = vector.broadcast %475 : vector<1x8xf32> to vector<16x8xf32>
    %477 = arith.addf %473, %476 : vector<16x8xf32>
    %c0_246 = arith.constant 0 : index
    %c1_247 = arith.constant 1 : index
    %c0_248 = arith.constant 0 : index
    %c0_249 = arith.constant 0 : index
    %478 = vector.load %arg37[%c0_246, %c1_247, %c0_248, %c0_249] : memref<2x4x32x8xbf16, #tpu.memory_space<vmem>>, vector<1x1x32x8xbf16>
    %479 = vector.shape_cast %478 : vector<1x1x32x8xbf16> to vector<32x8xbf16>
    %480 = arith.truncf %376 : vector<16x32xf32> to vector<16x32xbf16>
    %cst_250 = arith.constant dense<0.000000e+00> : vector<16x8xf32>
    %481 = tpu.matmul %480, %479, %cst_250 {dimension_numbers = #tpu.dot_dimension_numbers<[1], [0], [0], [1], [0, 0, 1, 1], [], []>} : vector<16x32xbf16>, vector<32x8xbf16>, vector<16x8xf32> -> vector<16x8xf32>
    %c0_251 = arith.constant 0 : index
    %c1_252 = arith.constant 1 : index
    %c0_253 = arith.constant 0 : index
    %c0_254 = arith.constant 0 : index
    %482 = vector.load %arg27[%c0_251, %c1_252, %c0_253, %c0_254] : memref<2x4x1x8xf32, #tpu.memory_space<vmem>>, vector<1x1x1x8xf32>
    %483 = vector.shape_cast %482 : vector<1x1x1x8xf32> to vector<1x8xf32>
    %484 = vector.broadcast %483 : vector<1x8xf32> to vector<16x8xf32>
    %485 = arith.addf %481, %484 : vector<16x8xf32>
    %c0_255 = arith.constant 0 : index
    %c1_256 = arith.constant 1 : index
    %c0_257 = arith.constant 0 : index
    %c0_258 = arith.constant 0 : index
    %486 = vector.load %arg40[%c0_255, %c1_256, %c0_257, %c0_258] : memref<2x4x32x8xbf16, #tpu.memory_space<vmem>>, vector<1x1x32x8xbf16>
    %487 = vector.shape_cast %486 : vector<1x1x32x8xbf16> to vector<32x8xbf16>
    %488 = arith.truncf %376 : vector<16x32xf32> to vector<16x32xbf16>
    %cst_259 = arith.constant dense<0.000000e+00> : vector<16x8xf32>
    %489 = tpu.matmul %488, %487, %cst_259 {dimension_numbers = #tpu.dot_dimension_numbers<[1], [0], [0], [1], [0, 0, 1, 1], [], []>} : vector<16x32xbf16>, vector<32x8xbf16>, vector<16x8xf32> -> vector<16x8xf32>
    %c0_260 = arith.constant 0 : index
    %c1_261 = arith.constant 1 : index
    %c0_262 = arith.constant 0 : index
    %c0_263 = arith.constant 0 : index
    %490 = vector.load %arg30[%c0_260, %c1_261, %c0_262, %c0_263] : memref<2x4x1x8xf32, #tpu.memory_space<vmem>>, vector<1x1x1x8xf32>
    %491 = vector.shape_cast %490 : vector<1x1x1x8xf32> to vector<1x8xf32>
    %492 = vector.broadcast %491 : vector<1x8xf32> to vector<16x8xf32>
    %493 = arith.addf %489, %492 : vector<16x8xf32>
    %494 = vector.extract_strided_slice %477 {offsets = [0, 0], sizes = [8, 8], strides = [1, 1]} : vector<16x8xf32> to vector<8x8xf32>
    %495 = vector.extract_strided_slice %485 {offsets = [0, 0], sizes = [8, 8], strides = [1, 1]} : vector<16x8xf32> to vector<8x8xf32>
    %496 = arith.truncf %494 : vector<8x8xf32> to vector<8x8xbf16>
    %497 = arith.truncf %495 : vector<8x8xf32> to vector<8x8xbf16>
    %cst_264 = arith.constant dense<0.000000e+00> : vector<8x8xf32>
    %498 = tpu.matmul %496, %497, %cst_264 {dimension_numbers = #tpu.dot_dimension_numbers<[1], [1], [0], [0], [0, 0, 1, 0], [], []>} : vector<8x8xbf16>, vector<8x8xbf16>, vector<8x8xf32> -> vector<8x8xf32>
    %499 = arith.addf %498, %389 : vector<8x8xf32>
    %cst_265 = arith.constant dense<0xFF800000> : vector<8xf32>
    %500 = vector.multi_reduction <maximumf>, %499, %cst_265 [1] : vector<8x8xf32> to vector<8xf32>
    %501 = vector.shape_cast %500 : vector<8xf32> to vector<8x1xf32>
    %502 = vector.broadcast %501 : vector<8x1xf32> to vector<8x8xf32>
    %503 = arith.subf %499, %502 : vector<8x8xf32>
    %504 = math.exp %503 : vector<8x8xf32>
    %cst_266 = arith.constant dense<0.000000e+00> : vector<8xf32>
    %505 = vector.multi_reduction <add>, %504, %cst_266 [1] : vector<8x8xf32> to vector<8xf32>
    %506 = vector.shape_cast %505 : vector<8xf32> to vector<8x1xf32>
    %507 = tpu.reciprocal %506 {approx = true} : vector<8x1xf32> -> vector<8x1xf32>
    %508 = vector.broadcast %507 : vector<8x1xf32> to vector<8x8xf32>
    %509 = arith.mulf %504, %508 : vector<8x8xf32>
    %510 = vector.extract_strided_slice %493 {offsets = [0, 0], sizes = [8, 8], strides = [1, 1]} : vector<16x8xf32> to vector<8x8xf32>
    %511 = arith.truncf %509 : vector<8x8xf32> to vector<8x8xbf16>
    %512 = arith.truncf %510 : vector<8x8xf32> to vector<8x8xbf16>
    %cst_267 = arith.constant dense<0.000000e+00> : vector<8x8xf32>
    %513 = tpu.matmul %511, %512, %cst_267 {dimension_numbers = #tpu.dot_dimension_numbers<[1], [0], [0], [1], [0, 0, 1, 1], [], []>} : vector<8x8xbf16>, vector<8x8xbf16>, vector<8x8xf32> -> vector<8x8xf32>
    %514 = vector.extract_strided_slice %477 {offsets = [8, 0], sizes = [8, 8], strides = [1, 1]} : vector<16x8xf32> to vector<8x8xf32>
    %515 = vector.extract_strided_slice %485 {offsets = [8, 0], sizes = [8, 8], strides = [1, 1]} : vector<16x8xf32> to vector<8x8xf32>
    %516 = arith.truncf %514 : vector<8x8xf32> to vector<8x8xbf16>
    %517 = arith.truncf %515 : vector<8x8xf32> to vector<8x8xbf16>
    %cst_268 = arith.constant dense<0.000000e+00> : vector<8x8xf32>
    %518 = tpu.matmul %516, %517, %cst_268 {dimension_numbers = #tpu.dot_dimension_numbers<[1], [1], [0], [0], [0, 0, 1, 0], [], []>} : vector<8x8xbf16>, vector<8x8xbf16>, vector<8x8xf32> -> vector<8x8xf32>
    %519 = arith.addf %518, %400 : vector<8x8xf32>
    %cst_269 = arith.constant dense<0xFF800000> : vector<8xf32>
    %520 = vector.multi_reduction <maximumf>, %519, %cst_269 [1] : vector<8x8xf32> to vector<8xf32>
    %521 = vector.shape_cast %520 : vector<8xf32> to vector<8x1xf32>
    %522 = vector.broadcast %521 : vector<8x1xf32> to vector<8x8xf32>
    %523 = arith.subf %519, %522 : vector<8x8xf32>
    %524 = math.exp %523 : vector<8x8xf32>
    %cst_270 = arith.constant dense<0.000000e+00> : vector<8xf32>
    %525 = vector.multi_reduction <add>, %524, %cst_270 [1] : vector<8x8xf32> to vector<8xf32>
    %526 = vector.shape_cast %525 : vector<8xf32> to vector<8x1xf32>
    %527 = tpu.reciprocal %526 {approx = true} : vector<8x1xf32> -> vector<8x1xf32>
    %528 = vector.broadcast %527 : vector<8x1xf32> to vector<8x8xf32>
    %529 = arith.mulf %524, %528 : vector<8x8xf32>
    %530 = vector.extract_strided_slice %493 {offsets = [8, 0], sizes = [8, 8], strides = [1, 1]} : vector<16x8xf32> to vector<8x8xf32>
    %531 = arith.truncf %529 : vector<8x8xf32> to vector<8x8xbf16>
    %532 = arith.truncf %530 : vector<8x8xf32> to vector<8x8xbf16>
    %cst_271 = arith.constant dense<0.000000e+00> : vector<8x8xf32>
    %533 = tpu.matmul %531, %532, %cst_271 {dimension_numbers = #tpu.dot_dimension_numbers<[1], [0], [0], [1], [0, 0, 1, 1], [], []>} : vector<8x8xbf16>, vector<8x8xbf16>, vector<8x8xf32> -> vector<8x8xf32>
    %534 = tpu.concatenate %513, %533 in 0 : vector<8x8xf32>, vector<8x8xf32> -> vector<16x8xf32>
    %c0_272 = arith.constant 0 : index
    %c1_273 = arith.constant 1 : index
    %c0_274 = arith.constant 0 : index
    %c0_275 = arith.constant 0 : index
    %535 = vector.load %arg38[%c0_272, %c1_273, %c0_274, %c0_275] : memref<2x4x8x32xbf16, #tpu.memory_space<vmem>>, vector<1x1x8x32xbf16>
    %536 = vector.shape_cast %535 : vector<1x1x8x32xbf16> to vector<8x32xbf16>
    %537 = arith.truncf %534 : vector<16x8xf32> to vector<16x8xbf16>
    %cst_276 = arith.constant dense<0.000000e+00> : vector<16x32xf32>
    %538 = tpu.matmul %537, %536, %cst_276 {dimension_numbers = #tpu.dot_dimension_numbers<[1], [0], [0], [1], [0, 0, 1, 1], [], []>} : vector<16x8xbf16>, vector<8x32xbf16>, vector<16x32xf32> -> vector<16x32xf32>
    %539 = arith.addf %469, %538 : vector<16x32xf32>
    %c0_277 = arith.constant 0 : index
    %c2_278 = arith.constant 2 : index
    %c0_279 = arith.constant 0 : index
    %c0_280 = arith.constant 0 : index
    %540 = vector.load %arg39[%c0_277, %c2_278, %c0_279, %c0_280] : memref<2x4x32x8xbf16, #tpu.memory_space<vmem>>, vector<1x1x32x8xbf16>
    %541 = vector.shape_cast %540 : vector<1x1x32x8xbf16> to vector<32x8xbf16>
    %542 = arith.truncf %376 : vector<16x32xf32> to vector<16x32xbf16>
    %cst_281 = arith.constant dense<0.000000e+00> : vector<16x8xf32>
    %543 = tpu.matmul %542, %541, %cst_281 {dimension_numbers = #tpu.dot_dimension_numbers<[1], [0], [0], [1], [0, 0, 1, 1], [], []>} : vector<16x32xbf16>, vector<32x8xbf16>, vector<16x8xf32> -> vector<16x8xf32>
    %c0_282 = arith.constant 0 : index
    %c2_283 = arith.constant 2 : index
    %c0_284 = arith.constant 0 : index
    %c0_285 = arith.constant 0 : index
    %544 = vector.load %arg29[%c0_282, %c2_283, %c0_284, %c0_285] : memref<2x4x1x8xf32, #tpu.memory_space<vmem>>, vector<1x1x1x8xf32>
    %545 = vector.shape_cast %544 : vector<1x1x1x8xf32> to vector<1x8xf32>
    %546 = vector.broadcast %545 : vector<1x8xf32> to vector<16x8xf32>
    %547 = arith.addf %543, %546 : vector<16x8xf32>
    %c0_286 = arith.constant 0 : index
    %c2_287 = arith.constant 2 : index
    %c0_288 = arith.constant 0 : index
    %c0_289 = arith.constant 0 : index
    %548 = vector.load %arg37[%c0_286, %c2_287, %c0_288, %c0_289] : memref<2x4x32x8xbf16, #tpu.memory_space<vmem>>, vector<1x1x32x8xbf16>
    %549 = vector.shape_cast %548 : vector<1x1x32x8xbf16> to vector<32x8xbf16>
    %550 = arith.truncf %376 : vector<16x32xf32> to vector<16x32xbf16>
    %cst_290 = arith.constant dense<0.000000e+00> : vector<16x8xf32>
    %551 = tpu.matmul %550, %549, %cst_290 {dimension_numbers = #tpu.dot_dimension_numbers<[1], [0], [0], [1], [0, 0, 1, 1], [], []>} : vector<16x32xbf16>, vector<32x8xbf16>, vector<16x8xf32> -> vector<16x8xf32>
    %c0_291 = arith.constant 0 : index
    %c2_292 = arith.constant 2 : index
    %c0_293 = arith.constant 0 : index
    %c0_294 = arith.constant 0 : index
    %552 = vector.load %arg27[%c0_291, %c2_292, %c0_293, %c0_294] : memref<2x4x1x8xf32, #tpu.memory_space<vmem>>, vector<1x1x1x8xf32>
    %553 = vector.shape_cast %552 : vector<1x1x1x8xf32> to vector<1x8xf32>
    %554 = vector.broadcast %553 : vector<1x8xf32> to vector<16x8xf32>
    %555 = arith.addf %551, %554 : vector<16x8xf32>
    %c0_295 = arith.constant 0 : index
    %c2_296 = arith.constant 2 : index
    %c0_297 = arith.constant 0 : index
    %c0_298 = arith.constant 0 : index
    %556 = vector.load %arg40[%c0_295, %c2_296, %c0_297, %c0_298] : memref<2x4x32x8xbf16, #tpu.memory_space<vmem>>, vector<1x1x32x8xbf16>
    %557 = vector.shape_cast %556 : vector<1x1x32x8xbf16> to vector<32x8xbf16>
    %558 = arith.truncf %376 : vector<16x32xf32> to vector<16x32xbf16>
    %cst_299 = arith.constant dense<0.000000e+00> : vector<16x8xf32>
    %559 = tpu.matmul %558, %557, %cst_299 {dimension_numbers = #tpu.dot_dimension_numbers<[1], [0], [0], [1], [0, 0, 1, 1], [], []>} : vector<16x32xbf16>, vector<32x8xbf16>, vector<16x8xf32> -> vector<16x8xf32>
    %c0_300 = arith.constant 0 : index
    %c2_301 = arith.constant 2 : index
    %c0_302 = arith.constant 0 : index
    %c0_303 = arith.constant 0 : index
    %560 = vector.load %arg30[%c0_300, %c2_301, %c0_302, %c0_303] : memref<2x4x1x8xf32, #tpu.memory_space<vmem>>, vector<1x1x1x8xf32>
    %561 = vector.shape_cast %560 : vector<1x1x1x8xf32> to vector<1x8xf32>
    %562 = vector.broadcast %561 : vector<1x8xf32> to vector<16x8xf32>
    %563 = arith.addf %559, %562 : vector<16x8xf32>
    %564 = vector.extract_strided_slice %547 {offsets = [0, 0], sizes = [8, 8], strides = [1, 1]} : vector<16x8xf32> to vector<8x8xf32>
    %565 = vector.extract_strided_slice %555 {offsets = [0, 0], sizes = [8, 8], strides = [1, 1]} : vector<16x8xf32> to vector<8x8xf32>
    %566 = arith.truncf %564 : vector<8x8xf32> to vector<8x8xbf16>
    %567 = arith.truncf %565 : vector<8x8xf32> to vector<8x8xbf16>
    %cst_304 = arith.constant dense<0.000000e+00> : vector<8x8xf32>
    %568 = tpu.matmul %566, %567, %cst_304 {dimension_numbers = #tpu.dot_dimension_numbers<[1], [1], [0], [0], [0, 0, 1, 0], [], []>} : vector<8x8xbf16>, vector<8x8xbf16>, vector<8x8xf32> -> vector<8x8xf32>
    %569 = arith.addf %568, %389 : vector<8x8xf32>
    %cst_305 = arith.constant dense<0xFF800000> : vector<8xf32>
    %570 = vector.multi_reduction <maximumf>, %569, %cst_305 [1] : vector<8x8xf32> to vector<8xf32>
    %571 = vector.shape_cast %570 : vector<8xf32> to vector<8x1xf32>
    %572 = vector.broadcast %571 : vector<8x1xf32> to vector<8x8xf32>
    %573 = arith.subf %569, %572 : vector<8x8xf32>
    %574 = math.exp %573 : vector<8x8xf32>
    %cst_306 = arith.constant dense<0.000000e+00> : vector<8xf32>
    %575 = vector.multi_reduction <add>, %574, %cst_306 [1] : vector<8x8xf32> to vector<8xf32>
    %576 = vector.shape_cast %575 : vector<8xf32> to vector<8x1xf32>
    %577 = tpu.reciprocal %576 {approx = true} : vector<8x1xf32> -> vector<8x1xf32>
    %578 = vector.broadcast %577 : vector<8x1xf32> to vector<8x8xf32>
    %579 = arith.mulf %574, %578 : vector<8x8xf32>
    %580 = vector.extract_strided_slice %563 {offsets = [0, 0], sizes = [8, 8], strides = [1, 1]} : vector<16x8xf32> to vector<8x8xf32>
    %581 = arith.truncf %579 : vector<8x8xf32> to vector<8x8xbf16>
    %582 = arith.truncf %580 : vector<8x8xf32> to vector<8x8xbf16>
    %cst_307 = arith.constant dense<0.000000e+00> : vector<8x8xf32>
    %583 = tpu.matmul %581, %582, %cst_307 {dimension_numbers = #tpu.dot_dimension_numbers<[1], [0], [0], [1], [0, 0, 1, 1], [], []>} : vector<8x8xbf16>, vector<8x8xbf16>, vector<8x8xf32> -> vector<8x8xf32>
    %584 = vector.extract_strided_slice %547 {offsets = [8, 0], sizes = [8, 8], strides = [1, 1]} : vector<16x8xf32> to vector<8x8xf32>
    %585 = vector.extract_strided_slice %555 {offsets = [8, 0], sizes = [8, 8], strides = [1, 1]} : vector<16x8xf32> to vector<8x8xf32>
    %586 = arith.truncf %584 : vector<8x8xf32> to vector<8x8xbf16>
    %587 = arith.truncf %585 : vector<8x8xf32> to vector<8x8xbf16>
    %cst_308 = arith.constant dense<0.000000e+00> : vector<8x8xf32>
    %588 = tpu.matmul %586, %587, %cst_308 {dimension_numbers = #tpu.dot_dimension_numbers<[1], [1], [0], [0], [0, 0, 1, 0], [], []>} : vector<8x8xbf16>, vector<8x8xbf16>, vector<8x8xf32> -> vector<8x8xf32>
    %589 = arith.addf %588, %400 : vector<8x8xf32>
    %cst_309 = arith.constant dense<0xFF800000> : vector<8xf32>
    %590 = vector.multi_reduction <maximumf>, %589, %cst_309 [1] : vector<8x8xf32> to vector<8xf32>
    %591 = vector.shape_cast %590 : vector<8xf32> to vector<8x1xf32>
    %592 = vector.broadcast %591 : vector<8x1xf32> to vector<8x8xf32>
    %593 = arith.subf %589, %592 : vector<8x8xf32>
    %594 = math.exp %593 : vector<8x8xf32>
    %cst_310 = arith.constant dense<0.000000e+00> : vector<8xf32>
    %595 = vector.multi_reduction <add>, %594, %cst_310 [1] : vector<8x8xf32> to vector<8xf32>
    %596 = vector.shape_cast %595 : vector<8xf32> to vector<8x1xf32>
    %597 = tpu.reciprocal %596 {approx = true} : vector<8x1xf32> -> vector<8x1xf32>
    %598 = vector.broadcast %597 : vector<8x1xf32> to vector<8x8xf32>
    %599 = arith.mulf %594, %598 : vector<8x8xf32>
    %600 = vector.extract_strided_slice %563 {offsets = [8, 0], sizes = [8, 8], strides = [1, 1]} : vector<16x8xf32> to vector<8x8xf32>
    %601 = arith.truncf %599 : vector<8x8xf32> to vector<8x8xbf16>
    %602 = arith.truncf %600 : vector<8x8xf32> to vector<8x8xbf16>
    %cst_311 = arith.constant dense<0.000000e+00> : vector<8x8xf32>
    %603 = tpu.matmul %601, %602, %cst_311 {dimension_numbers = #tpu.dot_dimension_numbers<[1], [0], [0], [1], [0, 0, 1, 1], [], []>} : vector<8x8xbf16>, vector<8x8xbf16>, vector<8x8xf32> -> vector<8x8xf32>
    %604 = tpu.concatenate %583, %603 in 0 : vector<8x8xf32>, vector<8x8xf32> -> vector<16x8xf32>
    %c0_312 = arith.constant 0 : index
    %c2_313 = arith.constant 2 : index
    %c0_314 = arith.constant 0 : index
    %c0_315 = arith.constant 0 : index
    %605 = vector.load %arg38[%c0_312, %c2_313, %c0_314, %c0_315] : memref<2x4x8x32xbf16, #tpu.memory_space<vmem>>, vector<1x1x8x32xbf16>
    %606 = vector.shape_cast %605 : vector<1x1x8x32xbf16> to vector<8x32xbf16>
    %607 = arith.truncf %604 : vector<16x8xf32> to vector<16x8xbf16>
    %cst_316 = arith.constant dense<0.000000e+00> : vector<16x32xf32>
    %608 = tpu.matmul %607, %606, %cst_316 {dimension_numbers = #tpu.dot_dimension_numbers<[1], [0], [0], [1], [0, 0, 1, 1], [], []>} : vector<16x8xbf16>, vector<8x32xbf16>, vector<16x32xf32> -> vector<16x32xf32>
    %609 = arith.addf %539, %608 : vector<16x32xf32>
    %c0_317 = arith.constant 0 : index
    %c3_318 = arith.constant 3 : index
    %c0_319 = arith.constant 0 : index
    %c0_320 = arith.constant 0 : index
    %610 = vector.load %arg39[%c0_317, %c3_318, %c0_319, %c0_320] : memref<2x4x32x8xbf16, #tpu.memory_space<vmem>>, vector<1x1x32x8xbf16>
    %611 = vector.shape_cast %610 : vector<1x1x32x8xbf16> to vector<32x8xbf16>
    %612 = arith.truncf %376 : vector<16x32xf32> to vector<16x32xbf16>
    %cst_321 = arith.constant dense<0.000000e+00> : vector<16x8xf32>
    %613 = tpu.matmul %612, %611, %cst_321 {dimension_numbers = #tpu.dot_dimension_numbers<[1], [0], [0], [1], [0, 0, 1, 1], [], []>} : vector<16x32xbf16>, vector<32x8xbf16>, vector<16x8xf32> -> vector<16x8xf32>
    %c0_322 = arith.constant 0 : index
    %c3_323 = arith.constant 3 : index
    %c0_324 = arith.constant 0 : index
    %c0_325 = arith.constant 0 : index
    %614 = vector.load %arg29[%c0_322, %c3_323, %c0_324, %c0_325] : memref<2x4x1x8xf32, #tpu.memory_space<vmem>>, vector<1x1x1x8xf32>
    %615 = vector.shape_cast %614 : vector<1x1x1x8xf32> to vector<1x8xf32>
    %616 = vector.broadcast %615 : vector<1x8xf32> to vector<16x8xf32>
    %617 = arith.addf %613, %616 : vector<16x8xf32>
    %c0_326 = arith.constant 0 : index
    %c3_327 = arith.constant 3 : index
    %c0_328 = arith.constant 0 : index
    %c0_329 = arith.constant 0 : index
    %618 = vector.load %arg37[%c0_326, %c3_327, %c0_328, %c0_329] : memref<2x4x32x8xbf16, #tpu.memory_space<vmem>>, vector<1x1x32x8xbf16>
    %619 = vector.shape_cast %618 : vector<1x1x32x8xbf16> to vector<32x8xbf16>
    %620 = arith.truncf %376 : vector<16x32xf32> to vector<16x32xbf16>
    %cst_330 = arith.constant dense<0.000000e+00> : vector<16x8xf32>
    %621 = tpu.matmul %620, %619, %cst_330 {dimension_numbers = #tpu.dot_dimension_numbers<[1], [0], [0], [1], [0, 0, 1, 1], [], []>} : vector<16x32xbf16>, vector<32x8xbf16>, vector<16x8xf32> -> vector<16x8xf32>
    %c0_331 = arith.constant 0 : index
    %c3_332 = arith.constant 3 : index
    %c0_333 = arith.constant 0 : index
    %c0_334 = arith.constant 0 : index
    %622 = vector.load %arg27[%c0_331, %c3_332, %c0_333, %c0_334] : memref<2x4x1x8xf32, #tpu.memory_space<vmem>>, vector<1x1x1x8xf32>
    %623 = vector.shape_cast %622 : vector<1x1x1x8xf32> to vector<1x8xf32>
    %624 = vector.broadcast %623 : vector<1x8xf32> to vector<16x8xf32>
    %625 = arith.addf %621, %624 : vector<16x8xf32>
    %c0_335 = arith.constant 0 : index
    %c3_336 = arith.constant 3 : index
    %c0_337 = arith.constant 0 : index
    %c0_338 = arith.constant 0 : index
    %626 = vector.load %arg40[%c0_335, %c3_336, %c0_337, %c0_338] : memref<2x4x32x8xbf16, #tpu.memory_space<vmem>>, vector<1x1x32x8xbf16>
    %627 = vector.shape_cast %626 : vector<1x1x32x8xbf16> to vector<32x8xbf16>
    %628 = arith.truncf %376 : vector<16x32xf32> to vector<16x32xbf16>
    %cst_339 = arith.constant dense<0.000000e+00> : vector<16x8xf32>
    %629 = tpu.matmul %628, %627, %cst_339 {dimension_numbers = #tpu.dot_dimension_numbers<[1], [0], [0], [1], [0, 0, 1, 1], [], []>} : vector<16x32xbf16>, vector<32x8xbf16>, vector<16x8xf32> -> vector<16x8xf32>
    %c0_340 = arith.constant 0 : index
    %c3_341 = arith.constant 3 : index
    %c0_342 = arith.constant 0 : index
    %c0_343 = arith.constant 0 : index
    %630 = vector.load %arg30[%c0_340, %c3_341, %c0_342, %c0_343] : memref<2x4x1x8xf32, #tpu.memory_space<vmem>>, vector<1x1x1x8xf32>
    %631 = vector.shape_cast %630 : vector<1x1x1x8xf32> to vector<1x8xf32>
    %632 = vector.broadcast %631 : vector<1x8xf32> to vector<16x8xf32>
    %633 = arith.addf %629, %632 : vector<16x8xf32>
    %634 = vector.extract_strided_slice %617 {offsets = [0, 0], sizes = [8, 8], strides = [1, 1]} : vector<16x8xf32> to vector<8x8xf32>
    %635 = vector.extract_strided_slice %625 {offsets = [0, 0], sizes = [8, 8], strides = [1, 1]} : vector<16x8xf32> to vector<8x8xf32>
    %636 = arith.truncf %634 : vector<8x8xf32> to vector<8x8xbf16>
    %637 = arith.truncf %635 : vector<8x8xf32> to vector<8x8xbf16>
    %cst_344 = arith.constant dense<0.000000e+00> : vector<8x8xf32>
    %638 = tpu.matmul %636, %637, %cst_344 {dimension_numbers = #tpu.dot_dimension_numbers<[1], [1], [0], [0], [0, 0, 1, 0], [], []>} : vector<8x8xbf16>, vector<8x8xbf16>, vector<8x8xf32> -> vector<8x8xf32>
    %639 = arith.addf %638, %389 : vector<8x8xf32>
    %cst_345 = arith.constant dense<0xFF800000> : vector<8xf32>
    %640 = vector.multi_reduction <maximumf>, %639, %cst_345 [1] : vector<8x8xf32> to vector<8xf32>
    %641 = vector.shape_cast %640 : vector<8xf32> to vector<8x1xf32>
    %642 = vector.broadcast %641 : vector<8x1xf32> to vector<8x8xf32>
    %643 = arith.subf %639, %642 : vector<8x8xf32>
    %644 = math.exp %643 : vector<8x8xf32>
    %cst_346 = arith.constant dense<0.000000e+00> : vector<8xf32>
    %645 = vector.multi_reduction <add>, %644, %cst_346 [1] : vector<8x8xf32> to vector<8xf32>
    %646 = vector.shape_cast %645 : vector<8xf32> to vector<8x1xf32>
    %647 = tpu.reciprocal %646 {approx = true} : vector<8x1xf32> -> vector<8x1xf32>
    %648 = vector.broadcast %647 : vector<8x1xf32> to vector<8x8xf32>
    %649 = arith.mulf %644, %648 : vector<8x8xf32>
    %650 = vector.extract_strided_slice %633 {offsets = [0, 0], sizes = [8, 8], strides = [1, 1]} : vector<16x8xf32> to vector<8x8xf32>
    %651 = arith.truncf %649 : vector<8x8xf32> to vector<8x8xbf16>
    %652 = arith.truncf %650 : vector<8x8xf32> to vector<8x8xbf16>
    %cst_347 = arith.constant dense<0.000000e+00> : vector<8x8xf32>
    %653 = tpu.matmul %651, %652, %cst_347 {dimension_numbers = #tpu.dot_dimension_numbers<[1], [0], [0], [1], [0, 0, 1, 1], [], []>} : vector<8x8xbf16>, vector<8x8xbf16>, vector<8x8xf32> -> vector<8x8xf32>
    %654 = vector.extract_strided_slice %617 {offsets = [8, 0], sizes = [8, 8], strides = [1, 1]} : vector<16x8xf32> to vector<8x8xf32>
    %655 = vector.extract_strided_slice %625 {offsets = [8, 0], sizes = [8, 8], strides = [1, 1]} : vector<16x8xf32> to vector<8x8xf32>
    %656 = arith.truncf %654 : vector<8x8xf32> to vector<8x8xbf16>
    %657 = arith.truncf %655 : vector<8x8xf32> to vector<8x8xbf16>
    %cst_348 = arith.constant dense<0.000000e+00> : vector<8x8xf32>
    %658 = tpu.matmul %656, %657, %cst_348 {dimension_numbers = #tpu.dot_dimension_numbers<[1], [1], [0], [0], [0, 0, 1, 0], [], []>} : vector<8x8xbf16>, vector<8x8xbf16>, vector<8x8xf32> -> vector<8x8xf32>
    %659 = arith.addf %658, %400 : vector<8x8xf32>
    %cst_349 = arith.constant dense<0xFF800000> : vector<8xf32>
    %660 = vector.multi_reduction <maximumf>, %659, %cst_349 [1] : vector<8x8xf32> to vector<8xf32>
    %661 = vector.shape_cast %660 : vector<8xf32> to vector<8x1xf32>
    %662 = vector.broadcast %661 : vector<8x1xf32> to vector<8x8xf32>
    %663 = arith.subf %659, %662 : vector<8x8xf32>
    %664 = math.exp %663 : vector<8x8xf32>
    %cst_350 = arith.constant dense<0.000000e+00> : vector<8xf32>
    %665 = vector.multi_reduction <add>, %664, %cst_350 [1] : vector<8x8xf32> to vector<8xf32>
    %666 = vector.shape_cast %665 : vector<8xf32> to vector<8x1xf32>
    %667 = tpu.reciprocal %666 {approx = true} : vector<8x1xf32> -> vector<8x1xf32>
    %668 = vector.broadcast %667 : vector<8x1xf32> to vector<8x8xf32>
    %669 = arith.mulf %664, %668 : vector<8x8xf32>
    %670 = vector.extract_strided_slice %633 {offsets = [8, 0], sizes = [8, 8], strides = [1, 1]} : vector<16x8xf32> to vector<8x8xf32>
    %671 = arith.truncf %669 : vector<8x8xf32> to vector<8x8xbf16>
    %672 = arith.truncf %670 : vector<8x8xf32> to vector<8x8xbf16>
    %cst_351 = arith.constant dense<0.000000e+00> : vector<8x8xf32>
    %673 = tpu.matmul %671, %672, %cst_351 {dimension_numbers = #tpu.dot_dimension_numbers<[1], [0], [0], [1], [0, 0, 1, 1], [], []>} : vector<8x8xbf16>, vector<8x8xbf16>, vector<8x8xf32> -> vector<8x8xf32>
    %674 = tpu.concatenate %653, %673 in 0 : vector<8x8xf32>, vector<8x8xf32> -> vector<16x8xf32>
    %c0_352 = arith.constant 0 : index
    %c3_353 = arith.constant 3 : index
    %c0_354 = arith.constant 0 : index
    %c0_355 = arith.constant 0 : index
    %675 = vector.load %arg38[%c0_352, %c3_353, %c0_354, %c0_355] : memref<2x4x8x32xbf16, #tpu.memory_space<vmem>>, vector<1x1x8x32xbf16>
    %676 = vector.shape_cast %675 : vector<1x1x8x32xbf16> to vector<8x32xbf16>
    %677 = arith.truncf %674 : vector<16x8xf32> to vector<16x8xbf16>
    %cst_356 = arith.constant dense<0.000000e+00> : vector<16x32xf32>
    %678 = tpu.matmul %677, %676, %cst_356 {dimension_numbers = #tpu.dot_dimension_numbers<[1], [0], [0], [1], [0, 0, 1, 1], [], []>} : vector<16x8xbf16>, vector<8x32xbf16>, vector<16x32xf32> -> vector<16x32xf32>
    %679 = arith.addf %609, %678 : vector<16x32xf32>
    %c0_357 = arith.constant 0 : index
    %c0_358 = arith.constant 0 : index
    %c0_359 = arith.constant 0 : index
    %680 = vector.load %arg28[%c0_357, %c0_358, %c0_359] : memref<2x1x32xf32, #tpu.memory_space<vmem>>, vector<1x1x32xf32>
    %681 = vector.shape_cast %680 : vector<1x1x32xf32> to vector<1x32xf32>
    %682 = vector.broadcast %681 : vector<1x32xf32> to vector<16x32xf32>
    %683 = arith.addf %679, %682 : vector<16x32xf32>
    %684 = arith.addf %376, %683 : vector<16x32xf32>
    %c0_360 = arith.constant 0 : index
    %c0_361 = arith.constant 0 : index
    %c0_362 = arith.constant 0 : index
    %685 = vector.load %arg32[%c0_360, %c0_361, %c0_362] : memref<2x1x32xf32, #tpu.memory_space<vmem>>, vector<1x1x32xf32>
    %686 = vector.shape_cast %685 : vector<1x1x32xf32> to vector<1x32xf32>
    %c0_363 = arith.constant 0 : index
    %c0_364 = arith.constant 0 : index
    %c0_365 = arith.constant 0 : index
    %687 = vector.load %arg31[%c0_363, %c0_364, %c0_365] : memref<2x1x32xf32, #tpu.memory_space<vmem>>, vector<1x1x32xf32>
    %688 = vector.shape_cast %687 : vector<1x1x32xf32> to vector<1x32xf32>
    %cst_366 = arith.constant dense<0.000000e+00> : vector<16xf32>
    %689 = vector.multi_reduction <add>, %684, %cst_366 [1] : vector<16x32xf32> to vector<16xf32>
    %690 = vector.shape_cast %689 : vector<16xf32> to vector<16x1xf32>
    %cst_367 = arith.constant 3.200000e+01 : f32
    %691 = vector.broadcast %cst_367 : f32 to vector<16x1xf32>
    %692 = arith.divf %690, %691 : vector<16x1xf32>
    %693 = vector.broadcast %692 : vector<16x1xf32> to vector<16x32xf32>
    %694 = arith.subf %684, %693 : vector<16x32xf32>
    %695 = arith.mulf %694, %694 : vector<16x32xf32>
    %cst_368 = arith.constant dense<0.000000e+00> : vector<16xf32>
    %696 = vector.multi_reduction <add>, %695, %cst_368 [1] : vector<16x32xf32> to vector<16xf32>
    %697 = vector.shape_cast %696 : vector<16xf32> to vector<16x1xf32>
    %cst_369 = arith.constant 3.200000e+01 : f32
    %698 = vector.broadcast %cst_369 : f32 to vector<16x1xf32>
    %699 = arith.divf %697, %698 : vector<16x1xf32>
    %cst_370 = arith.constant 9.99999974E-6 : f32
    %700 = vector.broadcast %cst_370 : f32 to vector<16x1xf32>
    %701 = arith.addf %699, %700 : vector<16x1xf32>
    %702 = math.rsqrt %701 : vector<16x1xf32>
    %703 = vector.broadcast %702 : vector<16x1xf32> to vector<16x32xf32>
    %704 = arith.mulf %694, %703 : vector<16x32xf32>
    %705 = vector.broadcast %686 : vector<1x32xf32> to vector<16x32xf32>
    %706 = arith.mulf %704, %705 : vector<16x32xf32>
    %707 = vector.broadcast %688 : vector<1x32xf32> to vector<16x32xf32>
    %708 = arith.addf %706, %707 : vector<16x32xf32>
    %c0_371 = arith.constant 0 : index
    %c0_372 = arith.constant 0 : index
    %c0_373 = arith.constant 0 : index
    %709 = vector.load %arg35[%c0_371, %c0_372, %c0_373] : memref<2x32x48xbf16, #tpu.memory_space<vmem>>, vector<1x32x48xbf16>
    %710 = vector.shape_cast %709 : vector<1x32x48xbf16> to vector<32x48xbf16>
    %711 = arith.truncf %708 : vector<16x32xf32> to vector<16x32xbf16>
    %cst_374 = arith.constant dense<0.000000e+00> : vector<16x48xf32>
    %712 = tpu.matmul %711, %710, %cst_374 {dimension_numbers = #tpu.dot_dimension_numbers<[1], [0], [0], [1], [0, 0, 1, 1], [], []>} : vector<16x32xbf16>, vector<32x48xbf16>, vector<16x48xf32> -> vector<16x48xf32>
    %c0_375 = arith.constant 0 : index
    %c0_376 = arith.constant 0 : index
    %c0_377 = arith.constant 0 : index
    %713 = vector.load %arg25[%c0_375, %c0_376, %c0_377] : memref<2x1x48xf32, #tpu.memory_space<vmem>>, vector<1x1x48xf32>
    %714 = vector.shape_cast %713 : vector<1x1x48xf32> to vector<1x48xf32>
    %715 = vector.broadcast %714 : vector<1x48xf32> to vector<16x48xf32>
    %716 = arith.addf %712, %715 : vector<16x48xf32>
    %cst_378 = arith.constant 0.000000e+00 : f32
    %717 = vector.broadcast %cst_378 : f32 to vector<16x48xf32>
    %718 = arith.maximumf %716, %717 : vector<16x48xf32>
    %c0_379 = arith.constant 0 : index
    %c0_380 = arith.constant 0 : index
    %c0_381 = arith.constant 0 : index
    %719 = vector.load %arg36[%c0_379, %c0_380, %c0_381] : memref<2x48x32xbf16, #tpu.memory_space<vmem>>, vector<1x48x32xbf16>
    %720 = vector.shape_cast %719 : vector<1x48x32xbf16> to vector<48x32xbf16>
    %721 = arith.truncf %718 : vector<16x48xf32> to vector<16x48xbf16>
    %cst_382 = arith.constant dense<0.000000e+00> : vector<16x32xf32>
    %722 = tpu.matmul %721, %720, %cst_382 {dimension_numbers = #tpu.dot_dimension_numbers<[1], [0], [0], [1], [0, 0, 1, 1], [], []>} : vector<16x48xbf16>, vector<48x32xbf16>, vector<16x32xf32> -> vector<16x32xf32>
    %c0_383 = arith.constant 0 : index
    %c0_384 = arith.constant 0 : index
    %c0_385 = arith.constant 0 : index
    %723 = vector.load %arg26[%c0_383, %c0_384, %c0_385] : memref<2x1x32xf32, #tpu.memory_space<vmem>>, vector<1x1x32xf32>
    %724 = vector.shape_cast %723 : vector<1x1x32xf32> to vector<1x32xf32>
    %725 = vector.broadcast %724 : vector<1x32xf32> to vector<16x32xf32>
    %726 = arith.addf %722, %725 : vector<16x32xf32>
    %727 = arith.addf %708, %726 : vector<16x32xf32>
    %c0_386 = arith.constant 0 : index
    %c0_387 = arith.constant 0 : index
    %c0_388 = arith.constant 0 : index
    %728 = vector.load %arg34[%c0_386, %c0_387, %c0_388] : memref<2x1x32xf32, #tpu.memory_space<vmem>>, vector<1x1x32xf32>
    %729 = vector.shape_cast %728 : vector<1x1x32xf32> to vector<1x32xf32>
    %c0_389 = arith.constant 0 : index
    %c0_390 = arith.constant 0 : index
    %c0_391 = arith.constant 0 : index
    %730 = vector.load %arg33[%c0_389, %c0_390, %c0_391] : memref<2x1x32xf32, #tpu.memory_space<vmem>>, vector<1x1x32xf32>
    %731 = vector.shape_cast %730 : vector<1x1x32xf32> to vector<1x32xf32>
    %cst_392 = arith.constant dense<0.000000e+00> : vector<16xf32>
    %732 = vector.multi_reduction <add>, %727, %cst_392 [1] : vector<16x32xf32> to vector<16xf32>
    %733 = vector.shape_cast %732 : vector<16xf32> to vector<16x1xf32>
    %cst_393 = arith.constant 3.200000e+01 : f32
    %734 = vector.broadcast %cst_393 : f32 to vector<16x1xf32>
    %735 = arith.divf %733, %734 : vector<16x1xf32>
    %736 = vector.broadcast %735 : vector<16x1xf32> to vector<16x32xf32>
    %737 = arith.subf %727, %736 : vector<16x32xf32>
    %738 = arith.mulf %737, %737 : vector<16x32xf32>
    %cst_394 = arith.constant dense<0.000000e+00> : vector<16xf32>
    %739 = vector.multi_reduction <add>, %738, %cst_394 [1] : vector<16x32xf32> to vector<16xf32>
    %740 = vector.shape_cast %739 : vector<16xf32> to vector<16x1xf32>
    %cst_395 = arith.constant 3.200000e+01 : f32
    %741 = vector.broadcast %cst_395 : f32 to vector<16x1xf32>
    %742 = arith.divf %740, %741 : vector<16x1xf32>
    %cst_396 = arith.constant 9.99999974E-6 : f32
    %743 = vector.broadcast %cst_396 : f32 to vector<16x1xf32>
    %744 = arith.addf %742, %743 : vector<16x1xf32>
    %745 = math.rsqrt %744 : vector<16x1xf32>
    %746 = vector.broadcast %745 : vector<16x1xf32> to vector<16x32xf32>
    %747 = arith.mulf %737, %746 : vector<16x32xf32>
    %748 = vector.broadcast %729 : vector<1x32xf32> to vector<16x32xf32>
    %749 = arith.mulf %747, %748 : vector<16x32xf32>
    %750 = vector.broadcast %731 : vector<1x32xf32> to vector<16x32xf32>
    %751 = arith.addf %749, %750 : vector<16x32xf32>
    %c1_397 = arith.constant 1 : index
    %c0_398 = arith.constant 0 : index
    %c0_399 = arith.constant 0 : index
    %c0_400 = arith.constant 0 : index
    %752 = vector.load %arg39[%c1_397, %c0_398, %c0_399, %c0_400] : memref<2x4x32x8xbf16, #tpu.memory_space<vmem>>, vector<1x1x32x8xbf16>
    %753 = vector.shape_cast %752 : vector<1x1x32x8xbf16> to vector<32x8xbf16>
    %754 = arith.truncf %751 : vector<16x32xf32> to vector<16x32xbf16>
    %cst_401 = arith.constant dense<0.000000e+00> : vector<16x8xf32>
    %755 = tpu.matmul %754, %753, %cst_401 {dimension_numbers = #tpu.dot_dimension_numbers<[1], [0], [0], [1], [0, 0, 1, 1], [], []>} : vector<16x32xbf16>, vector<32x8xbf16>, vector<16x8xf32> -> vector<16x8xf32>
    %c1_402 = arith.constant 1 : index
    %c0_403 = arith.constant 0 : index
    %c0_404 = arith.constant 0 : index
    %c0_405 = arith.constant 0 : index
    %756 = vector.load %arg29[%c1_402, %c0_403, %c0_404, %c0_405] : memref<2x4x1x8xf32, #tpu.memory_space<vmem>>, vector<1x1x1x8xf32>
    %757 = vector.shape_cast %756 : vector<1x1x1x8xf32> to vector<1x8xf32>
    %758 = vector.broadcast %757 : vector<1x8xf32> to vector<16x8xf32>
    %759 = arith.addf %755, %758 : vector<16x8xf32>
    %c1_406 = arith.constant 1 : index
    %c0_407 = arith.constant 0 : index
    %c0_408 = arith.constant 0 : index
    %c0_409 = arith.constant 0 : index
    %760 = vector.load %arg37[%c1_406, %c0_407, %c0_408, %c0_409] : memref<2x4x32x8xbf16, #tpu.memory_space<vmem>>, vector<1x1x32x8xbf16>
    %761 = vector.shape_cast %760 : vector<1x1x32x8xbf16> to vector<32x8xbf16>
    %762 = arith.truncf %751 : vector<16x32xf32> to vector<16x32xbf16>
    %cst_410 = arith.constant dense<0.000000e+00> : vector<16x8xf32>
    %763 = tpu.matmul %762, %761, %cst_410 {dimension_numbers = #tpu.dot_dimension_numbers<[1], [0], [0], [1], [0, 0, 1, 1], [], []>} : vector<16x32xbf16>, vector<32x8xbf16>, vector<16x8xf32> -> vector<16x8xf32>
    %c1_411 = arith.constant 1 : index
    %c0_412 = arith.constant 0 : index
    %c0_413 = arith.constant 0 : index
    %c0_414 = arith.constant 0 : index
    %764 = vector.load %arg27[%c1_411, %c0_412, %c0_413, %c0_414] : memref<2x4x1x8xf32, #tpu.memory_space<vmem>>, vector<1x1x1x8xf32>
    %765 = vector.shape_cast %764 : vector<1x1x1x8xf32> to vector<1x8xf32>
    %766 = vector.broadcast %765 : vector<1x8xf32> to vector<16x8xf32>
    %767 = arith.addf %763, %766 : vector<16x8xf32>
    %c1_415 = arith.constant 1 : index
    %c0_416 = arith.constant 0 : index
    %c0_417 = arith.constant 0 : index
    %c0_418 = arith.constant 0 : index
    %768 = vector.load %arg40[%c1_415, %c0_416, %c0_417, %c0_418] : memref<2x4x32x8xbf16, #tpu.memory_space<vmem>>, vector<1x1x32x8xbf16>
    %769 = vector.shape_cast %768 : vector<1x1x32x8xbf16> to vector<32x8xbf16>
    %770 = arith.truncf %751 : vector<16x32xf32> to vector<16x32xbf16>
    %cst_419 = arith.constant dense<0.000000e+00> : vector<16x8xf32>
    %771 = tpu.matmul %770, %769, %cst_419 {dimension_numbers = #tpu.dot_dimension_numbers<[1], [0], [0], [1], [0, 0, 1, 1], [], []>} : vector<16x32xbf16>, vector<32x8xbf16>, vector<16x8xf32> -> vector<16x8xf32>
    %c1_420 = arith.constant 1 : index
    %c0_421 = arith.constant 0 : index
    %c0_422 = arith.constant 0 : index
    %c0_423 = arith.constant 0 : index
    %772 = vector.load %arg30[%c1_420, %c0_421, %c0_422, %c0_423] : memref<2x4x1x8xf32, #tpu.memory_space<vmem>>, vector<1x1x1x8xf32>
    %773 = vector.shape_cast %772 : vector<1x1x1x8xf32> to vector<1x8xf32>
    %774 = vector.broadcast %773 : vector<1x8xf32> to vector<16x8xf32>
    %775 = arith.addf %771, %774 : vector<16x8xf32>
    %776 = vector.extract_strided_slice %759 {offsets = [0, 0], sizes = [8, 8], strides = [1, 1]} : vector<16x8xf32> to vector<8x8xf32>
    %777 = vector.extract_strided_slice %767 {offsets = [0, 0], sizes = [8, 8], strides = [1, 1]} : vector<16x8xf32> to vector<8x8xf32>
    %778 = arith.truncf %776 : vector<8x8xf32> to vector<8x8xbf16>
    %779 = arith.truncf %777 : vector<8x8xf32> to vector<8x8xbf16>
    %cst_424 = arith.constant dense<0.000000e+00> : vector<8x8xf32>
    %780 = tpu.matmul %778, %779, %cst_424 {dimension_numbers = #tpu.dot_dimension_numbers<[1], [1], [0], [0], [0, 0, 1, 0], [], []>} : vector<8x8xbf16>, vector<8x8xbf16>, vector<8x8xf32> -> vector<8x8xf32>
    %781 = arith.addf %780, %389 : vector<8x8xf32>
    %cst_425 = arith.constant dense<0xFF800000> : vector<8xf32>
    %782 = vector.multi_reduction <maximumf>, %781, %cst_425 [1] : vector<8x8xf32> to vector<8xf32>
    %783 = vector.shape_cast %782 : vector<8xf32> to vector<8x1xf32>
    %784 = vector.broadcast %783 : vector<8x1xf32> to vector<8x8xf32>
    %785 = arith.subf %781, %784 : vector<8x8xf32>
    %786 = math.exp %785 : vector<8x8xf32>
    %cst_426 = arith.constant dense<0.000000e+00> : vector<8xf32>
    %787 = vector.multi_reduction <add>, %786, %cst_426 [1] : vector<8x8xf32> to vector<8xf32>
    %788 = vector.shape_cast %787 : vector<8xf32> to vector<8x1xf32>
    %789 = tpu.reciprocal %788 {approx = true} : vector<8x1xf32> -> vector<8x1xf32>
    %790 = vector.broadcast %789 : vector<8x1xf32> to vector<8x8xf32>
    %791 = arith.mulf %786, %790 : vector<8x8xf32>
    %792 = vector.extract_strided_slice %775 {offsets = [0, 0], sizes = [8, 8], strides = [1, 1]} : vector<16x8xf32> to vector<8x8xf32>
    %793 = arith.truncf %791 : vector<8x8xf32> to vector<8x8xbf16>
    %794 = arith.truncf %792 : vector<8x8xf32> to vector<8x8xbf16>
    %cst_427 = arith.constant dense<0.000000e+00> : vector<8x8xf32>
    %795 = tpu.matmul %793, %794, %cst_427 {dimension_numbers = #tpu.dot_dimension_numbers<[1], [0], [0], [1], [0, 0, 1, 1], [], []>} : vector<8x8xbf16>, vector<8x8xbf16>, vector<8x8xf32> -> vector<8x8xf32>
    %796 = vector.extract_strided_slice %759 {offsets = [8, 0], sizes = [8, 8], strides = [1, 1]} : vector<16x8xf32> to vector<8x8xf32>
    %797 = vector.extract_strided_slice %767 {offsets = [8, 0], sizes = [8, 8], strides = [1, 1]} : vector<16x8xf32> to vector<8x8xf32>
    %798 = arith.truncf %796 : vector<8x8xf32> to vector<8x8xbf16>
    %799 = arith.truncf %797 : vector<8x8xf32> to vector<8x8xbf16>
    %cst_428 = arith.constant dense<0.000000e+00> : vector<8x8xf32>
    %800 = tpu.matmul %798, %799, %cst_428 {dimension_numbers = #tpu.dot_dimension_numbers<[1], [1], [0], [0], [0, 0, 1, 0], [], []>} : vector<8x8xbf16>, vector<8x8xbf16>, vector<8x8xf32> -> vector<8x8xf32>
    %801 = arith.addf %800, %400 : vector<8x8xf32>
    %cst_429 = arith.constant dense<0xFF800000> : vector<8xf32>
    %802 = vector.multi_reduction <maximumf>, %801, %cst_429 [1] : vector<8x8xf32> to vector<8xf32>
    %803 = vector.shape_cast %802 : vector<8xf32> to vector<8x1xf32>
    %804 = vector.broadcast %803 : vector<8x1xf32> to vector<8x8xf32>
    %805 = arith.subf %801, %804 : vector<8x8xf32>
    %806 = math.exp %805 : vector<8x8xf32>
    %cst_430 = arith.constant dense<0.000000e+00> : vector<8xf32>
    %807 = vector.multi_reduction <add>, %806, %cst_430 [1] : vector<8x8xf32> to vector<8xf32>
    %808 = vector.shape_cast %807 : vector<8xf32> to vector<8x1xf32>
    %809 = tpu.reciprocal %808 {approx = true} : vector<8x1xf32> -> vector<8x1xf32>
    %810 = vector.broadcast %809 : vector<8x1xf32> to vector<8x8xf32>
    %811 = arith.mulf %806, %810 : vector<8x8xf32>
    %812 = vector.extract_strided_slice %775 {offsets = [8, 0], sizes = [8, 8], strides = [1, 1]} : vector<16x8xf32> to vector<8x8xf32>
    %813 = arith.truncf %811 : vector<8x8xf32> to vector<8x8xbf16>
    %814 = arith.truncf %812 : vector<8x8xf32> to vector<8x8xbf16>
    %cst_431 = arith.constant dense<0.000000e+00> : vector<8x8xf32>
    %815 = tpu.matmul %813, %814, %cst_431 {dimension_numbers = #tpu.dot_dimension_numbers<[1], [0], [0], [1], [0, 0, 1, 1], [], []>} : vector<8x8xbf16>, vector<8x8xbf16>, vector<8x8xf32> -> vector<8x8xf32>
    %816 = tpu.concatenate %795, %815 in 0 : vector<8x8xf32>, vector<8x8xf32> -> vector<16x8xf32>
    %c1_432 = arith.constant 1 : index
    %c0_433 = arith.constant 0 : index
    %c0_434 = arith.constant 0 : index
    %c0_435 = arith.constant 0 : index
    %817 = vector.load %arg38[%c1_432, %c0_433, %c0_434, %c0_435] : memref<2x4x8x32xbf16, #tpu.memory_space<vmem>>, vector<1x1x8x32xbf16>
    %818 = vector.shape_cast %817 : vector<1x1x8x32xbf16> to vector<8x32xbf16>
    %819 = arith.truncf %816 : vector<16x8xf32> to vector<16x8xbf16>
    %cst_436 = arith.constant dense<0.000000e+00> : vector<16x32xf32>
    %820 = tpu.matmul %819, %818, %cst_436 {dimension_numbers = #tpu.dot_dimension_numbers<[1], [0], [0], [1], [0, 0, 1, 1], [], []>} : vector<16x8xbf16>, vector<8x32xbf16>, vector<16x32xf32> -> vector<16x32xf32>
    %c1_437 = arith.constant 1 : index
    %c1_438 = arith.constant 1 : index
    %c0_439 = arith.constant 0 : index
    %c0_440 = arith.constant 0 : index
    %821 = vector.load %arg39[%c1_437, %c1_438, %c0_439, %c0_440] : memref<2x4x32x8xbf16, #tpu.memory_space<vmem>>, vector<1x1x32x8xbf16>
    %822 = vector.shape_cast %821 : vector<1x1x32x8xbf16> to vector<32x8xbf16>
    %823 = arith.truncf %751 : vector<16x32xf32> to vector<16x32xbf16>
    %cst_441 = arith.constant dense<0.000000e+00> : vector<16x8xf32>
    %824 = tpu.matmul %823, %822, %cst_441 {dimension_numbers = #tpu.dot_dimension_numbers<[1], [0], [0], [1], [0, 0, 1, 1], [], []>} : vector<16x32xbf16>, vector<32x8xbf16>, vector<16x8xf32> -> vector<16x8xf32>
    %c1_442 = arith.constant 1 : index
    %c1_443 = arith.constant 1 : index
    %c0_444 = arith.constant 0 : index
    %c0_445 = arith.constant 0 : index
    %825 = vector.load %arg29[%c1_442, %c1_443, %c0_444, %c0_445] : memref<2x4x1x8xf32, #tpu.memory_space<vmem>>, vector<1x1x1x8xf32>
    %826 = vector.shape_cast %825 : vector<1x1x1x8xf32> to vector<1x8xf32>
    %827 = vector.broadcast %826 : vector<1x8xf32> to vector<16x8xf32>
    %828 = arith.addf %824, %827 : vector<16x8xf32>
    %c1_446 = arith.constant 1 : index
    %c1_447 = arith.constant 1 : index
    %c0_448 = arith.constant 0 : index
    %c0_449 = arith.constant 0 : index
    %829 = vector.load %arg37[%c1_446, %c1_447, %c0_448, %c0_449] : memref<2x4x32x8xbf16, #tpu.memory_space<vmem>>, vector<1x1x32x8xbf16>
    %830 = vector.shape_cast %829 : vector<1x1x32x8xbf16> to vector<32x8xbf16>
    %831 = arith.truncf %751 : vector<16x32xf32> to vector<16x32xbf16>
    %cst_450 = arith.constant dense<0.000000e+00> : vector<16x8xf32>
    %832 = tpu.matmul %831, %830, %cst_450 {dimension_numbers = #tpu.dot_dimension_numbers<[1], [0], [0], [1], [0, 0, 1, 1], [], []>} : vector<16x32xbf16>, vector<32x8xbf16>, vector<16x8xf32> -> vector<16x8xf32>
    %c1_451 = arith.constant 1 : index
    %c1_452 = arith.constant 1 : index
    %c0_453 = arith.constant 0 : index
    %c0_454 = arith.constant 0 : index
    %833 = vector.load %arg27[%c1_451, %c1_452, %c0_453, %c0_454] : memref<2x4x1x8xf32, #tpu.memory_space<vmem>>, vector<1x1x1x8xf32>
    %834 = vector.shape_cast %833 : vector<1x1x1x8xf32> to vector<1x8xf32>
    %835 = vector.broadcast %834 : vector<1x8xf32> to vector<16x8xf32>
    %836 = arith.addf %832, %835 : vector<16x8xf32>
    %c1_455 = arith.constant 1 : index
    %c1_456 = arith.constant 1 : index
    %c0_457 = arith.constant 0 : index
    %c0_458 = arith.constant 0 : index
    %837 = vector.load %arg40[%c1_455, %c1_456, %c0_457, %c0_458] : memref<2x4x32x8xbf16, #tpu.memory_space<vmem>>, vector<1x1x32x8xbf16>
    %838 = vector.shape_cast %837 : vector<1x1x32x8xbf16> to vector<32x8xbf16>
    %839 = arith.truncf %751 : vector<16x32xf32> to vector<16x32xbf16>
    %cst_459 = arith.constant dense<0.000000e+00> : vector<16x8xf32>
    %840 = tpu.matmul %839, %838, %cst_459 {dimension_numbers = #tpu.dot_dimension_numbers<[1], [0], [0], [1], [0, 0, 1, 1], [], []>} : vector<16x32xbf16>, vector<32x8xbf16>, vector<16x8xf32> -> vector<16x8xf32>
    %c1_460 = arith.constant 1 : index
    %c1_461 = arith.constant 1 : index
    %c0_462 = arith.constant 0 : index
    %c0_463 = arith.constant 0 : index
    %841 = vector.load %arg30[%c1_460, %c1_461, %c0_462, %c0_463] : memref<2x4x1x8xf32, #tpu.memory_space<vmem>>, vector<1x1x1x8xf32>
    %842 = vector.shape_cast %841 : vector<1x1x1x8xf32> to vector<1x8xf32>
    %843 = vector.broadcast %842 : vector<1x8xf32> to vector<16x8xf32>
    %844 = arith.addf %840, %843 : vector<16x8xf32>
    %845 = vector.extract_strided_slice %828 {offsets = [0, 0], sizes = [8, 8], strides = [1, 1]} : vector<16x8xf32> to vector<8x8xf32>
    %846 = vector.extract_strided_slice %836 {offsets = [0, 0], sizes = [8, 8], strides = [1, 1]} : vector<16x8xf32> to vector<8x8xf32>
    %847 = arith.truncf %845 : vector<8x8xf32> to vector<8x8xbf16>
    %848 = arith.truncf %846 : vector<8x8xf32> to vector<8x8xbf16>
    %cst_464 = arith.constant dense<0.000000e+00> : vector<8x8xf32>
    %849 = tpu.matmul %847, %848, %cst_464 {dimension_numbers = #tpu.dot_dimension_numbers<[1], [1], [0], [0], [0, 0, 1, 0], [], []>} : vector<8x8xbf16>, vector<8x8xbf16>, vector<8x8xf32> -> vector<8x8xf32>
    %850 = arith.addf %849, %389 : vector<8x8xf32>
    %cst_465 = arith.constant dense<0xFF800000> : vector<8xf32>
    %851 = vector.multi_reduction <maximumf>, %850, %cst_465 [1] : vector<8x8xf32> to vector<8xf32>
    %852 = vector.shape_cast %851 : vector<8xf32> to vector<8x1xf32>
    %853 = vector.broadcast %852 : vector<8x1xf32> to vector<8x8xf32>
    %854 = arith.subf %850, %853 : vector<8x8xf32>
    %855 = math.exp %854 : vector<8x8xf32>
    %cst_466 = arith.constant dense<0.000000e+00> : vector<8xf32>
    %856 = vector.multi_reduction <add>, %855, %cst_466 [1] : vector<8x8xf32> to vector<8xf32>
    %857 = vector.shape_cast %856 : vector<8xf32> to vector<8x1xf32>
    %858 = tpu.reciprocal %857 {approx = true} : vector<8x1xf32> -> vector<8x1xf32>
    %859 = vector.broadcast %858 : vector<8x1xf32> to vector<8x8xf32>
    %860 = arith.mulf %855, %859 : vector<8x8xf32>
    %861 = vector.extract_strided_slice %844 {offsets = [0, 0], sizes = [8, 8], strides = [1, 1]} : vector<16x8xf32> to vector<8x8xf32>
    %862 = arith.truncf %860 : vector<8x8xf32> to vector<8x8xbf16>
    %863 = arith.truncf %861 : vector<8x8xf32> to vector<8x8xbf16>
    %cst_467 = arith.constant dense<0.000000e+00> : vector<8x8xf32>
    %864 = tpu.matmul %862, %863, %cst_467 {dimension_numbers = #tpu.dot_dimension_numbers<[1], [0], [0], [1], [0, 0, 1, 1], [], []>} : vector<8x8xbf16>, vector<8x8xbf16>, vector<8x8xf32> -> vector<8x8xf32>
    %865 = vector.extract_strided_slice %828 {offsets = [8, 0], sizes = [8, 8], strides = [1, 1]} : vector<16x8xf32> to vector<8x8xf32>
    %866 = vector.extract_strided_slice %836 {offsets = [8, 0], sizes = [8, 8], strides = [1, 1]} : vector<16x8xf32> to vector<8x8xf32>
    %867 = arith.truncf %865 : vector<8x8xf32> to vector<8x8xbf16>
    %868 = arith.truncf %866 : vector<8x8xf32> to vector<8x8xbf16>
    %cst_468 = arith.constant dense<0.000000e+00> : vector<8x8xf32>
    %869 = tpu.matmul %867, %868, %cst_468 {dimension_numbers = #tpu.dot_dimension_numbers<[1], [1], [0], [0], [0, 0, 1, 0], [], []>} : vector<8x8xbf16>, vector<8x8xbf16>, vector<8x8xf32> -> vector<8x8xf32>
    %870 = arith.addf %869, %400 : vector<8x8xf32>
    %cst_469 = arith.constant dense<0xFF800000> : vector<8xf32>
    %871 = vector.multi_reduction <maximumf>, %870, %cst_469 [1] : vector<8x8xf32> to vector<8xf32>
    %872 = vector.shape_cast %871 : vector<8xf32> to vector<8x1xf32>
    %873 = vector.broadcast %872 : vector<8x1xf32> to vector<8x8xf32>
    %874 = arith.subf %870, %873 : vector<8x8xf32>
    %875 = math.exp %874 : vector<8x8xf32>
    %cst_470 = arith.constant dense<0.000000e+00> : vector<8xf32>
    %876 = vector.multi_reduction <add>, %875, %cst_470 [1] : vector<8x8xf32> to vector<8xf32>
    %877 = vector.shape_cast %876 : vector<8xf32> to vector<8x1xf32>
    %878 = tpu.reciprocal %877 {approx = true} : vector<8x1xf32> -> vector<8x1xf32>
    %879 = vector.broadcast %878 : vector<8x1xf32> to vector<8x8xf32>
    %880 = arith.mulf %875, %879 : vector<8x8xf32>
    %881 = vector.extract_strided_slice %844 {offsets = [8, 0], sizes = [8, 8], strides = [1, 1]} : vector<16x8xf32> to vector<8x8xf32>
    %882 = arith.truncf %880 : vector<8x8xf32> to vector<8x8xbf16>
    %883 = arith.truncf %881 : vector<8x8xf32> to vector<8x8xbf16>
    %cst_471 = arith.constant dense<0.000000e+00> : vector<8x8xf32>
    %884 = tpu.matmul %882, %883, %cst_471 {dimension_numbers = #tpu.dot_dimension_numbers<[1], [0], [0], [1], [0, 0, 1, 1], [], []>} : vector<8x8xbf16>, vector<8x8xbf16>, vector<8x8xf32> -> vector<8x8xf32>
    %885 = tpu.concatenate %864, %884 in 0 : vector<8x8xf32>, vector<8x8xf32> -> vector<16x8xf32>
    %c1_472 = arith.constant 1 : index
    %c1_473 = arith.constant 1 : index
    %c0_474 = arith.constant 0 : index
    %c0_475 = arith.constant 0 : index
    %886 = vector.load %arg38[%c1_472, %c1_473, %c0_474, %c0_475] : memref<2x4x8x32xbf16, #tpu.memory_space<vmem>>, vector<1x1x8x32xbf16>
    %887 = vector.shape_cast %886 : vector<1x1x8x32xbf16> to vector<8x32xbf16>
    %888 = arith.truncf %885 : vector<16x8xf32> to vector<16x8xbf16>
    %cst_476 = arith.constant dense<0.000000e+00> : vector<16x32xf32>
    %889 = tpu.matmul %888, %887, %cst_476 {dimension_numbers = #tpu.dot_dimension_numbers<[1], [0], [0], [1], [0, 0, 1, 1], [], []>} : vector<16x8xbf16>, vector<8x32xbf16>, vector<16x32xf32> -> vector<16x32xf32>
    %890 = arith.addf %820, %889 : vector<16x32xf32>
    %c1_477 = arith.constant 1 : index
    %c2_478 = arith.constant 2 : index
    %c0_479 = arith.constant 0 : index
    %c0_480 = arith.constant 0 : index
    %891 = vector.load %arg39[%c1_477, %c2_478, %c0_479, %c0_480] : memref<2x4x32x8xbf16, #tpu.memory_space<vmem>>, vector<1x1x32x8xbf16>
    %892 = vector.shape_cast %891 : vector<1x1x32x8xbf16> to vector<32x8xbf16>
    %893 = arith.truncf %751 : vector<16x32xf32> to vector<16x32xbf16>
    %cst_481 = arith.constant dense<0.000000e+00> : vector<16x8xf32>
    %894 = tpu.matmul %893, %892, %cst_481 {dimension_numbers = #tpu.dot_dimension_numbers<[1], [0], [0], [1], [0, 0, 1, 1], [], []>} : vector<16x32xbf16>, vector<32x8xbf16>, vector<16x8xf32> -> vector<16x8xf32>
    %c1_482 = arith.constant 1 : index
    %c2_483 = arith.constant 2 : index
    %c0_484 = arith.constant 0 : index
    %c0_485 = arith.constant 0 : index
    %895 = vector.load %arg29[%c1_482, %c2_483, %c0_484, %c0_485] : memref<2x4x1x8xf32, #tpu.memory_space<vmem>>, vector<1x1x1x8xf32>
    %896 = vector.shape_cast %895 : vector<1x1x1x8xf32> to vector<1x8xf32>
    %897 = vector.broadcast %896 : vector<1x8xf32> to vector<16x8xf32>
    %898 = arith.addf %894, %897 : vector<16x8xf32>
    %c1_486 = arith.constant 1 : index
    %c2_487 = arith.constant 2 : index
    %c0_488 = arith.constant 0 : index
    %c0_489 = arith.constant 0 : index
    %899 = vector.load %arg37[%c1_486, %c2_487, %c0_488, %c0_489] : memref<2x4x32x8xbf16, #tpu.memory_space<vmem>>, vector<1x1x32x8xbf16>
    %900 = vector.shape_cast %899 : vector<1x1x32x8xbf16> to vector<32x8xbf16>
    %901 = arith.truncf %751 : vector<16x32xf32> to vector<16x32xbf16>
    %cst_490 = arith.constant dense<0.000000e+00> : vector<16x8xf32>
    %902 = tpu.matmul %901, %900, %cst_490 {dimension_numbers = #tpu.dot_dimension_numbers<[1], [0], [0], [1], [0, 0, 1, 1], [], []>} : vector<16x32xbf16>, vector<32x8xbf16>, vector<16x8xf32> -> vector<16x8xf32>
    %c1_491 = arith.constant 1 : index
    %c2_492 = arith.constant 2 : index
    %c0_493 = arith.constant 0 : index
    %c0_494 = arith.constant 0 : index
    %903 = vector.load %arg27[%c1_491, %c2_492, %c0_493, %c0_494] : memref<2x4x1x8xf32, #tpu.memory_space<vmem>>, vector<1x1x1x8xf32>
    %904 = vector.shape_cast %903 : vector<1x1x1x8xf32> to vector<1x8xf32>
    %905 = vector.broadcast %904 : vector<1x8xf32> to vector<16x8xf32>
    %906 = arith.addf %902, %905 : vector<16x8xf32>
    %c1_495 = arith.constant 1 : index
    %c2_496 = arith.constant 2 : index
    %c0_497 = arith.constant 0 : index
    %c0_498 = arith.constant 0 : index
    %907 = vector.load %arg40[%c1_495, %c2_496, %c0_497, %c0_498] : memref<2x4x32x8xbf16, #tpu.memory_space<vmem>>, vector<1x1x32x8xbf16>
    %908 = vector.shape_cast %907 : vector<1x1x32x8xbf16> to vector<32x8xbf16>
    %909 = arith.truncf %751 : vector<16x32xf32> to vector<16x32xbf16>
    %cst_499 = arith.constant dense<0.000000e+00> : vector<16x8xf32>
    %910 = tpu.matmul %909, %908, %cst_499 {dimension_numbers = #tpu.dot_dimension_numbers<[1], [0], [0], [1], [0, 0, 1, 1], [], []>} : vector<16x32xbf16>, vector<32x8xbf16>, vector<16x8xf32> -> vector<16x8xf32>
    %c1_500 = arith.constant 1 : index
    %c2_501 = arith.constant 2 : index
    %c0_502 = arith.constant 0 : index
    %c0_503 = arith.constant 0 : index
    %911 = vector.load %arg30[%c1_500, %c2_501, %c0_502, %c0_503] : memref<2x4x1x8xf32, #tpu.memory_space<vmem>>, vector<1x1x1x8xf32>
    %912 = vector.shape_cast %911 : vector<1x1x1x8xf32> to vector<1x8xf32>
    %913 = vector.broadcast %912 : vector<1x8xf32> to vector<16x8xf32>
    %914 = arith.addf %910, %913 : vector<16x8xf32>
    %915 = vector.extract_strided_slice %898 {offsets = [0, 0], sizes = [8, 8], strides = [1, 1]} : vector<16x8xf32> to vector<8x8xf32>
    %916 = vector.extract_strided_slice %906 {offsets = [0, 0], sizes = [8, 8], strides = [1, 1]} : vector<16x8xf32> to vector<8x8xf32>
    %917 = arith.truncf %915 : vector<8x8xf32> to vector<8x8xbf16>
    %918 = arith.truncf %916 : vector<8x8xf32> to vector<8x8xbf16>
    %cst_504 = arith.constant dense<0.000000e+00> : vector<8x8xf32>
    %919 = tpu.matmul %917, %918, %cst_504 {dimension_numbers = #tpu.dot_dimension_numbers<[1], [1], [0], [0], [0, 0, 1, 0], [], []>} : vector<8x8xbf16>, vector<8x8xbf16>, vector<8x8xf32> -> vector<8x8xf32>
    %920 = arith.addf %919, %389 : vector<8x8xf32>
    %cst_505 = arith.constant dense<0xFF800000> : vector<8xf32>
    %921 = vector.multi_reduction <maximumf>, %920, %cst_505 [1] : vector<8x8xf32> to vector<8xf32>
    %922 = vector.shape_cast %921 : vector<8xf32> to vector<8x1xf32>
    %923 = vector.broadcast %922 : vector<8x1xf32> to vector<8x8xf32>
    %924 = arith.subf %920, %923 : vector<8x8xf32>
    %925 = math.exp %924 : vector<8x8xf32>
    %cst_506 = arith.constant dense<0.000000e+00> : vector<8xf32>
    %926 = vector.multi_reduction <add>, %925, %cst_506 [1] : vector<8x8xf32> to vector<8xf32>
    %927 = vector.shape_cast %926 : vector<8xf32> to vector<8x1xf32>
    %928 = tpu.reciprocal %927 {approx = true} : vector<8x1xf32> -> vector<8x1xf32>
    %929 = vector.broadcast %928 : vector<8x1xf32> to vector<8x8xf32>
    %930 = arith.mulf %925, %929 : vector<8x8xf32>
    %931 = vector.extract_strided_slice %914 {offsets = [0, 0], sizes = [8, 8], strides = [1, 1]} : vector<16x8xf32> to vector<8x8xf32>
    %932 = arith.truncf %930 : vector<8x8xf32> to vector<8x8xbf16>
    %933 = arith.truncf %931 : vector<8x8xf32> to vector<8x8xbf16>
    %cst_507 = arith.constant dense<0.000000e+00> : vector<8x8xf32>
    %934 = tpu.matmul %932, %933, %cst_507 {dimension_numbers = #tpu.dot_dimension_numbers<[1], [0], [0], [1], [0, 0, 1, 1], [], []>} : vector<8x8xbf16>, vector<8x8xbf16>, vector<8x8xf32> -> vector<8x8xf32>
    %935 = vector.extract_strided_slice %898 {offsets = [8, 0], sizes = [8, 8], strides = [1, 1]} : vector<16x8xf32> to vector<8x8xf32>
    %936 = vector.extract_strided_slice %906 {offsets = [8, 0], sizes = [8, 8], strides = [1, 1]} : vector<16x8xf32> to vector<8x8xf32>
    %937 = arith.truncf %935 : vector<8x8xf32> to vector<8x8xbf16>
    %938 = arith.truncf %936 : vector<8x8xf32> to vector<8x8xbf16>
    %cst_508 = arith.constant dense<0.000000e+00> : vector<8x8xf32>
    %939 = tpu.matmul %937, %938, %cst_508 {dimension_numbers = #tpu.dot_dimension_numbers<[1], [1], [0], [0], [0, 0, 1, 0], [], []>} : vector<8x8xbf16>, vector<8x8xbf16>, vector<8x8xf32> -> vector<8x8xf32>
    %940 = arith.addf %939, %400 : vector<8x8xf32>
    %cst_509 = arith.constant dense<0xFF800000> : vector<8xf32>
    %941 = vector.multi_reduction <maximumf>, %940, %cst_509 [1] : vector<8x8xf32> to vector<8xf32>
    %942 = vector.shape_cast %941 : vector<8xf32> to vector<8x1xf32>
    %943 = vector.broadcast %942 : vector<8x1xf32> to vector<8x8xf32>
    %944 = arith.subf %940, %943 : vector<8x8xf32>
    %945 = math.exp %944 : vector<8x8xf32>
    %cst_510 = arith.constant dense<0.000000e+00> : vector<8xf32>
    %946 = vector.multi_reduction <add>, %945, %cst_510 [1] : vector<8x8xf32> to vector<8xf32>
    %947 = vector.shape_cast %946 : vector<8xf32> to vector<8x1xf32>
    %948 = tpu.reciprocal %947 {approx = true} : vector<8x1xf32> -> vector<8x1xf32>
    %949 = vector.broadcast %948 : vector<8x1xf32> to vector<8x8xf32>
    %950 = arith.mulf %945, %949 : vector<8x8xf32>
    %951 = vector.extract_strided_slice %914 {offsets = [8, 0], sizes = [8, 8], strides = [1, 1]} : vector<16x8xf32> to vector<8x8xf32>
    %952 = arith.truncf %950 : vector<8x8xf32> to vector<8x8xbf16>
    %953 = arith.truncf %951 : vector<8x8xf32> to vector<8x8xbf16>
    %cst_511 = arith.constant dense<0.000000e+00> : vector<8x8xf32>
    %954 = tpu.matmul %952, %953, %cst_511 {dimension_numbers = #tpu.dot_dimension_numbers<[1], [0], [0], [1], [0, 0, 1, 1], [], []>} : vector<8x8xbf16>, vector<8x8xbf16>, vector<8x8xf32> -> vector<8x8xf32>
    %955 = tpu.concatenate %934, %954 in 0 : vector<8x8xf32>, vector<8x8xf32> -> vector<16x8xf32>
    %c1_512 = arith.constant 1 : index
    %c2_513 = arith.constant 2 : index
    %c0_514 = arith.constant 0 : index
    %c0_515 = arith.constant 0 : index
    %956 = vector.load %arg38[%c1_512, %c2_513, %c0_514, %c0_515] : memref<2x4x8x32xbf16, #tpu.memory_space<vmem>>, vector<1x1x8x32xbf16>
    %957 = vector.shape_cast %956 : vector<1x1x8x32xbf16> to vector<8x32xbf16>
    %958 = arith.truncf %955 : vector<16x8xf32> to vector<16x8xbf16>
    %cst_516 = arith.constant dense<0.000000e+00> : vector<16x32xf32>
    %959 = tpu.matmul %958, %957, %cst_516 {dimension_numbers = #tpu.dot_dimension_numbers<[1], [0], [0], [1], [0, 0, 1, 1], [], []>} : vector<16x8xbf16>, vector<8x32xbf16>, vector<16x32xf32> -> vector<16x32xf32>
    %960 = arith.addf %890, %959 : vector<16x32xf32>
    %c1_517 = arith.constant 1 : index
    %c3_518 = arith.constant 3 : index
    %c0_519 = arith.constant 0 : index
    %c0_520 = arith.constant 0 : index
    %961 = vector.load %arg39[%c1_517, %c3_518, %c0_519, %c0_520] : memref<2x4x32x8xbf16, #tpu.memory_space<vmem>>, vector<1x1x32x8xbf16>
    %962 = vector.shape_cast %961 : vector<1x1x32x8xbf16> to vector<32x8xbf16>
    %963 = arith.truncf %751 : vector<16x32xf32> to vector<16x32xbf16>
    %cst_521 = arith.constant dense<0.000000e+00> : vector<16x8xf32>
    %964 = tpu.matmul %963, %962, %cst_521 {dimension_numbers = #tpu.dot_dimension_numbers<[1], [0], [0], [1], [0, 0, 1, 1], [], []>} : vector<16x32xbf16>, vector<32x8xbf16>, vector<16x8xf32> -> vector<16x8xf32>
    %c1_522 = arith.constant 1 : index
    %c3_523 = arith.constant 3 : index
    %c0_524 = arith.constant 0 : index
    %c0_525 = arith.constant 0 : index
    %965 = vector.load %arg29[%c1_522, %c3_523, %c0_524, %c0_525] : memref<2x4x1x8xf32, #tpu.memory_space<vmem>>, vector<1x1x1x8xf32>
    %966 = vector.shape_cast %965 : vector<1x1x1x8xf32> to vector<1x8xf32>
    %967 = vector.broadcast %966 : vector<1x8xf32> to vector<16x8xf32>
    %968 = arith.addf %964, %967 : vector<16x8xf32>
    %c1_526 = arith.constant 1 : index
    %c3_527 = arith.constant 3 : index
    %c0_528 = arith.constant 0 : index
    %c0_529 = arith.constant 0 : index
    %969 = vector.load %arg37[%c1_526, %c3_527, %c0_528, %c0_529] : memref<2x4x32x8xbf16, #tpu.memory_space<vmem>>, vector<1x1x32x8xbf16>
    %970 = vector.shape_cast %969 : vector<1x1x32x8xbf16> to vector<32x8xbf16>
    %971 = arith.truncf %751 : vector<16x32xf32> to vector<16x32xbf16>
    %cst_530 = arith.constant dense<0.000000e+00> : vector<16x8xf32>
    %972 = tpu.matmul %971, %970, %cst_530 {dimension_numbers = #tpu.dot_dimension_numbers<[1], [0], [0], [1], [0, 0, 1, 1], [], []>} : vector<16x32xbf16>, vector<32x8xbf16>, vector<16x8xf32> -> vector<16x8xf32>
    %c1_531 = arith.constant 1 : index
    %c3_532 = arith.constant 3 : index
    %c0_533 = arith.constant 0 : index
    %c0_534 = arith.constant 0 : index
    %973 = vector.load %arg27[%c1_531, %c3_532, %c0_533, %c0_534] : memref<2x4x1x8xf32, #tpu.memory_space<vmem>>, vector<1x1x1x8xf32>
    %974 = vector.shape_cast %973 : vector<1x1x1x8xf32> to vector<1x8xf32>
    %975 = vector.broadcast %974 : vector<1x8xf32> to vector<16x8xf32>
    %976 = arith.addf %972, %975 : vector<16x8xf32>
    %c1_535 = arith.constant 1 : index
    %c3_536 = arith.constant 3 : index
    %c0_537 = arith.constant 0 : index
    %c0_538 = arith.constant 0 : index
    %977 = vector.load %arg40[%c1_535, %c3_536, %c0_537, %c0_538] : memref<2x4x32x8xbf16, #tpu.memory_space<vmem>>, vector<1x1x32x8xbf16>
    %978 = vector.shape_cast %977 : vector<1x1x32x8xbf16> to vector<32x8xbf16>
    %979 = arith.truncf %751 : vector<16x32xf32> to vector<16x32xbf16>
    %cst_539 = arith.constant dense<0.000000e+00> : vector<16x8xf32>
    %980 = tpu.matmul %979, %978, %cst_539 {dimension_numbers = #tpu.dot_dimension_numbers<[1], [0], [0], [1], [0, 0, 1, 1], [], []>} : vector<16x32xbf16>, vector<32x8xbf16>, vector<16x8xf32> -> vector<16x8xf32>
    %c1_540 = arith.constant 1 : index
    %c3_541 = arith.constant 3 : index
    %c0_542 = arith.constant 0 : index
    %c0_543 = arith.constant 0 : index
    %981 = vector.load %arg30[%c1_540, %c3_541, %c0_542, %c0_543] : memref<2x4x1x8xf32, #tpu.memory_space<vmem>>, vector<1x1x1x8xf32>
    %982 = vector.shape_cast %981 : vector<1x1x1x8xf32> to vector<1x8xf32>
    %983 = vector.broadcast %982 : vector<1x8xf32> to vector<16x8xf32>
    %984 = arith.addf %980, %983 : vector<16x8xf32>
    %985 = vector.extract_strided_slice %968 {offsets = [0, 0], sizes = [8, 8], strides = [1, 1]} : vector<16x8xf32> to vector<8x8xf32>
    %986 = vector.extract_strided_slice %976 {offsets = [0, 0], sizes = [8, 8], strides = [1, 1]} : vector<16x8xf32> to vector<8x8xf32>
    %987 = arith.truncf %985 : vector<8x8xf32> to vector<8x8xbf16>
    %988 = arith.truncf %986 : vector<8x8xf32> to vector<8x8xbf16>
    %cst_544 = arith.constant dense<0.000000e+00> : vector<8x8xf32>
    %989 = tpu.matmul %987, %988, %cst_544 {dimension_numbers = #tpu.dot_dimension_numbers<[1], [1], [0], [0], [0, 0, 1, 0], [], []>} : vector<8x8xbf16>, vector<8x8xbf16>, vector<8x8xf32> -> vector<8x8xf32>
    %990 = arith.addf %989, %389 : vector<8x8xf32>
    %cst_545 = arith.constant dense<0xFF800000> : vector<8xf32>
    %991 = vector.multi_reduction <maximumf>, %990, %cst_545 [1] : vector<8x8xf32> to vector<8xf32>
    %992 = vector.shape_cast %991 : vector<8xf32> to vector<8x1xf32>
    %993 = vector.broadcast %992 : vector<8x1xf32> to vector<8x8xf32>
    %994 = arith.subf %990, %993 : vector<8x8xf32>
    %995 = math.exp %994 : vector<8x8xf32>
    %cst_546 = arith.constant dense<0.000000e+00> : vector<8xf32>
    %996 = vector.multi_reduction <add>, %995, %cst_546 [1] : vector<8x8xf32> to vector<8xf32>
    %997 = vector.shape_cast %996 : vector<8xf32> to vector<8x1xf32>
    %998 = tpu.reciprocal %997 {approx = true} : vector<8x1xf32> -> vector<8x1xf32>
    %999 = vector.broadcast %998 : vector<8x1xf32> to vector<8x8xf32>
    %1000 = arith.mulf %995, %999 : vector<8x8xf32>
    %1001 = vector.extract_strided_slice %984 {offsets = [0, 0], sizes = [8, 8], strides = [1, 1]} : vector<16x8xf32> to vector<8x8xf32>
    %1002 = arith.truncf %1000 : vector<8x8xf32> to vector<8x8xbf16>
    %1003 = arith.truncf %1001 : vector<8x8xf32> to vector<8x8xbf16>
    %cst_547 = arith.constant dense<0.000000e+00> : vector<8x8xf32>
    %1004 = tpu.matmul %1002, %1003, %cst_547 {dimension_numbers = #tpu.dot_dimension_numbers<[1], [0], [0], [1], [0, 0, 1, 1], [], []>} : vector<8x8xbf16>, vector<8x8xbf16>, vector<8x8xf32> -> vector<8x8xf32>
    %1005 = vector.extract_strided_slice %968 {offsets = [8, 0], sizes = [8, 8], strides = [1, 1]} : vector<16x8xf32> to vector<8x8xf32>
    %1006 = vector.extract_strided_slice %976 {offsets = [8, 0], sizes = [8, 8], strides = [1, 1]} : vector<16x8xf32> to vector<8x8xf32>
    %1007 = arith.truncf %1005 : vector<8x8xf32> to vector<8x8xbf16>
    %1008 = arith.truncf %1006 : vector<8x8xf32> to vector<8x8xbf16>
    %cst_548 = arith.constant dense<0.000000e+00> : vector<8x8xf32>
    %1009 = tpu.matmul %1007, %1008, %cst_548 {dimension_numbers = #tpu.dot_dimension_numbers<[1], [1], [0], [0], [0, 0, 1, 0], [], []>} : vector<8x8xbf16>, vector<8x8xbf16>, vector<8x8xf32> -> vector<8x8xf32>
    %1010 = arith.addf %1009, %400 : vector<8x8xf32>
    %cst_549 = arith.constant dense<0xFF800000> : vector<8xf32>
    %1011 = vector.multi_reduction <maximumf>, %1010, %cst_549 [1] : vector<8x8xf32> to vector<8xf32>
    %1012 = vector.shape_cast %1011 : vector<8xf32> to vector<8x1xf32>
    %1013 = vector.broadcast %1012 : vector<8x1xf32> to vector<8x8xf32>
    %1014 = arith.subf %1010, %1013 : vector<8x8xf32>
    %1015 = math.exp %1014 : vector<8x8xf32>
    %cst_550 = arith.constant dense<0.000000e+00> : vector<8xf32>
    %1016 = vector.multi_reduction <add>, %1015, %cst_550 [1] : vector<8x8xf32> to vector<8xf32>
    %1017 = vector.shape_cast %1016 : vector<8xf32> to vector<8x1xf32>
    %1018 = tpu.reciprocal %1017 {approx = true} : vector<8x1xf32> -> vector<8x1xf32>
    %1019 = vector.broadcast %1018 : vector<8x1xf32> to vector<8x8xf32>
    %1020 = arith.mulf %1015, %1019 : vector<8x8xf32>
    %1021 = vector.extract_strided_slice %984 {offsets = [8, 0], sizes = [8, 8], strides = [1, 1]} : vector<16x8xf32> to vector<8x8xf32>
    %1022 = arith.truncf %1020 : vector<8x8xf32> to vector<8x8xbf16>
    %1023 = arith.truncf %1021 : vector<8x8xf32> to vector<8x8xbf16>
    %cst_551 = arith.constant dense<0.000000e+00> : vector<8x8xf32>
    %1024 = tpu.matmul %1022, %1023, %cst_551 {dimension_numbers = #tpu.dot_dimension_numbers<[1], [0], [0], [1], [0, 0, 1, 1], [], []>} : vector<8x8xbf16>, vector<8x8xbf16>, vector<8x8xf32> -> vector<8x8xf32>
    %1025 = tpu.concatenate %1004, %1024 in 0 : vector<8x8xf32>, vector<8x8xf32> -> vector<16x8xf32>
    %c1_552 = arith.constant 1 : index
    %c3_553 = arith.constant 3 : index
    %c0_554 = arith.constant 0 : index
    %c0_555 = arith.constant 0 : index
    %1026 = vector.load %arg38[%c1_552, %c3_553, %c0_554, %c0_555] : memref<2x4x8x32xbf16, #tpu.memory_space<vmem>>, vector<1x1x8x32xbf16>
    %1027 = vector.shape_cast %1026 : vector<1x1x8x32xbf16> to vector<8x32xbf16>
    %1028 = arith.truncf %1025 : vector<16x8xf32> to vector<16x8xbf16>
    %cst_556 = arith.constant dense<0.000000e+00> : vector<16x32xf32>
    %1029 = tpu.matmul %1028, %1027, %cst_556 {dimension_numbers = #tpu.dot_dimension_numbers<[1], [0], [0], [1], [0, 0, 1, 1], [], []>} : vector<16x8xbf16>, vector<8x32xbf16>, vector<16x32xf32> -> vector<16x32xf32>
    %1030 = arith.addf %960, %1029 : vector<16x32xf32>
    %c1_557 = arith.constant 1 : index
    %c0_558 = arith.constant 0 : index
    %c0_559 = arith.constant 0 : index
    %1031 = vector.load %arg28[%c1_557, %c0_558, %c0_559] : memref<2x1x32xf32, #tpu.memory_space<vmem>>, vector<1x1x32xf32>
    %1032 = vector.shape_cast %1031 : vector<1x1x32xf32> to vector<1x32xf32>
    %1033 = vector.broadcast %1032 : vector<1x32xf32> to vector<16x32xf32>
    %1034 = arith.addf %1030, %1033 : vector<16x32xf32>
    %1035 = arith.addf %751, %1034 : vector<16x32xf32>
    %c1_560 = arith.constant 1 : index
    %c0_561 = arith.constant 0 : index
    %c0_562 = arith.constant 0 : index
    %1036 = vector.load %arg32[%c1_560, %c0_561, %c0_562] : memref<2x1x32xf32, #tpu.memory_space<vmem>>, vector<1x1x32xf32>
    %1037 = vector.shape_cast %1036 : vector<1x1x32xf32> to vector<1x32xf32>
    %c1_563 = arith.constant 1 : index
    %c0_564 = arith.constant 0 : index
    %c0_565 = arith.constant 0 : index
    %1038 = vector.load %arg31[%c1_563, %c0_564, %c0_565] : memref<2x1x32xf32, #tpu.memory_space<vmem>>, vector<1x1x32xf32>
    %1039 = vector.shape_cast %1038 : vector<1x1x32xf32> to vector<1x32xf32>
    %cst_566 = arith.constant dense<0.000000e+00> : vector<16xf32>
    %1040 = vector.multi_reduction <add>, %1035, %cst_566 [1] : vector<16x32xf32> to vector<16xf32>
    %1041 = vector.shape_cast %1040 : vector<16xf32> to vector<16x1xf32>
    %cst_567 = arith.constant 3.200000e+01 : f32
    %1042 = vector.broadcast %cst_567 : f32 to vector<16x1xf32>
    %1043 = arith.divf %1041, %1042 : vector<16x1xf32>
    %1044 = vector.broadcast %1043 : vector<16x1xf32> to vector<16x32xf32>
    %1045 = arith.subf %1035, %1044 : vector<16x32xf32>
    %1046 = arith.mulf %1045, %1045 : vector<16x32xf32>
    %cst_568 = arith.constant dense<0.000000e+00> : vector<16xf32>
    %1047 = vector.multi_reduction <add>, %1046, %cst_568 [1] : vector<16x32xf32> to vector<16xf32>
    %1048 = vector.shape_cast %1047 : vector<16xf32> to vector<16x1xf32>
    %cst_569 = arith.constant 3.200000e+01 : f32
    %1049 = vector.broadcast %cst_569 : f32 to vector<16x1xf32>
    %1050 = arith.divf %1048, %1049 : vector<16x1xf32>
    %cst_570 = arith.constant 9.99999974E-6 : f32
    %1051 = vector.broadcast %cst_570 : f32 to vector<16x1xf32>
    %1052 = arith.addf %1050, %1051 : vector<16x1xf32>
    %1053 = math.rsqrt %1052 : vector<16x1xf32>
    %1054 = vector.broadcast %1053 : vector<16x1xf32> to vector<16x32xf32>
    %1055 = arith.mulf %1045, %1054 : vector<16x32xf32>
    %1056 = vector.broadcast %1037 : vector<1x32xf32> to vector<16x32xf32>
    %1057 = arith.mulf %1055, %1056 : vector<16x32xf32>
    %1058 = vector.broadcast %1039 : vector<1x32xf32> to vector<16x32xf32>
    %1059 = arith.addf %1057, %1058 : vector<16x32xf32>
    %c1_571 = arith.constant 1 : index
    %c0_572 = arith.constant 0 : index
    %c0_573 = arith.constant 0 : index
    %1060 = vector.load %arg35[%c1_571, %c0_572, %c0_573] : memref<2x32x48xbf16, #tpu.memory_space<vmem>>, vector<1x32x48xbf16>
    %1061 = vector.shape_cast %1060 : vector<1x32x48xbf16> to vector<32x48xbf16>
    %1062 = arith.truncf %1059 : vector<16x32xf32> to vector<16x32xbf16>
    %cst_574 = arith.constant dense<0.000000e+00> : vector<16x48xf32>
    %1063 = tpu.matmul %1062, %1061, %cst_574 {dimension_numbers = #tpu.dot_dimension_numbers<[1], [0], [0], [1], [0, 0, 1, 1], [], []>} : vector<16x32xbf16>, vector<32x48xbf16>, vector<16x48xf32> -> vector<16x48xf32>
    %c1_575 = arith.constant 1 : index
    %c0_576 = arith.constant 0 : index
    %c0_577 = arith.constant 0 : index
    %1064 = vector.load %arg25[%c1_575, %c0_576, %c0_577] : memref<2x1x48xf32, #tpu.memory_space<vmem>>, vector<1x1x48xf32>
    %1065 = vector.shape_cast %1064 : vector<1x1x48xf32> to vector<1x48xf32>
    %1066 = vector.broadcast %1065 : vector<1x48xf32> to vector<16x48xf32>
    %1067 = arith.addf %1063, %1066 : vector<16x48xf32>
    %cst_578 = arith.constant 0.000000e+00 : f32
    %1068 = vector.broadcast %cst_578 : f32 to vector<16x48xf32>
    %1069 = arith.maximumf %1067, %1068 : vector<16x48xf32>
    %c1_579 = arith.constant 1 : index
    %c0_580 = arith.constant 0 : index
    %c0_581 = arith.constant 0 : index
    %1070 = vector.load %arg36[%c1_579, %c0_580, %c0_581] : memref<2x48x32xbf16, #tpu.memory_space<vmem>>, vector<1x48x32xbf16>
    %1071 = vector.shape_cast %1070 : vector<1x48x32xbf16> to vector<48x32xbf16>
    %1072 = arith.truncf %1069 : vector<16x48xf32> to vector<16x48xbf16>
    %cst_582 = arith.constant dense<0.000000e+00> : vector<16x32xf32>
    %1073 = tpu.matmul %1072, %1071, %cst_582 {dimension_numbers = #tpu.dot_dimension_numbers<[1], [0], [0], [1], [0, 0, 1, 1], [], []>} : vector<16x48xbf16>, vector<48x32xbf16>, vector<16x32xf32> -> vector<16x32xf32>
    %c1_583 = arith.constant 1 : index
    %c0_584 = arith.constant 0 : index
    %c0_585 = arith.constant 0 : index
    %1074 = vector.load %arg26[%c1_583, %c0_584, %c0_585] : memref<2x1x32xf32, #tpu.memory_space<vmem>>, vector<1x1x32xf32>
    %1075 = vector.shape_cast %1074 : vector<1x1x32xf32> to vector<1x32xf32>
    %1076 = vector.broadcast %1075 : vector<1x32xf32> to vector<16x32xf32>
    %1077 = arith.addf %1073, %1076 : vector<16x32xf32>
    %1078 = arith.addf %1059, %1077 : vector<16x32xf32>
    %c1_586 = arith.constant 1 : index
    %c0_587 = arith.constant 0 : index
    %c0_588 = arith.constant 0 : index
    %1079 = vector.load %arg34[%c1_586, %c0_587, %c0_588] : memref<2x1x32xf32, #tpu.memory_space<vmem>>, vector<1x1x32xf32>
    %1080 = vector.shape_cast %1079 : vector<1x1x32xf32> to vector<1x32xf32>
    %c1_589 = arith.constant 1 : index
    %c0_590 = arith.constant 0 : index
    %c0_591 = arith.constant 0 : index
    %1081 = vector.load %arg33[%c1_589, %c0_590, %c0_591] : memref<2x1x32xf32, #tpu.memory_space<vmem>>, vector<1x1x32xf32>
    %1082 = vector.shape_cast %1081 : vector<1x1x32xf32> to vector<1x32xf32>
    %cst_592 = arith.constant dense<0.000000e+00> : vector<16xf32>
    %1083 = vector.multi_reduction <add>, %1078, %cst_592 [1] : vector<16x32xf32> to vector<16xf32>
    %1084 = vector.shape_cast %1083 : vector<16xf32> to vector<16x1xf32>
    %cst_593 = arith.constant 3.200000e+01 : f32
    %1085 = vector.broadcast %cst_593 : f32 to vector<16x1xf32>
    %1086 = arith.divf %1084, %1085 : vector<16x1xf32>
    %1087 = vector.broadcast %1086 : vector<16x1xf32> to vector<16x32xf32>
    %1088 = arith.subf %1078, %1087 : vector<16x32xf32>
    %1089 = arith.mulf %1088, %1088 : vector<16x32xf32>
    %cst_594 = arith.constant dense<0.000000e+00> : vector<16xf32>
    %1090 = vector.multi_reduction <add>, %1089, %cst_594 [1] : vector<16x32xf32> to vector<16xf32>
    %1091 = vector.shape_cast %1090 : vector<16xf32> to vector<16x1xf32>
    %cst_595 = arith.constant 3.200000e+01 : f32
    %1092 = vector.broadcast %cst_595 : f32 to vector<16x1xf32>
    %1093 = arith.divf %1091, %1092 : vector<16x1xf32>
    %cst_596 = arith.constant 9.99999974E-6 : f32
    %1094 = vector.broadcast %cst_596 : f32 to vector<16x1xf32>
    %1095 = arith.addf %1093, %1094 : vector<16x1xf32>
    %1096 = math.rsqrt %1095 : vector<16x1xf32>
    %1097 = vector.broadcast %1096 : vector<16x1xf32> to vector<16x32xf32>
    %1098 = arith.mulf %1088, %1097 : vector<16x32xf32>
    %1099 = vector.broadcast %1080 : vector<1x32xf32> to vector<16x32xf32>
    %1100 = arith.mulf %1098, %1099 : vector<16x32xf32>
    %1101 = vector.broadcast %1082 : vector<1x32xf32> to vector<16x32xf32>
    %1102 = arith.addf %1100, %1101 : vector<16x32xf32>
    %c0_597 = arith.constant 0 : index
    %c0_598 = arith.constant 0 : index
    %1103 = vector.load %arg41[%c0_597, %c0_598] : memref<16x32xf32, #tpu.memory_space<vmem>>, vector<16x32xf32>
    tpu.vector_store %arg41[%c0_597, %c0_598], %1102 {strides = array<i32>} : memref<16x32xf32, #tpu.memory_space<vmem>>, vector<16x32xf32>,
    return
  }
}

</mosaic_0001>

<llo_original>
// kernel: double_encoder_forward.1
$region0: #{double_encoder_forward.1}
  #allocation0 [shape = 'u32[]', space=smem, size = 0x4, offset = 0x4, fixed_abs, tag = 'smem constant byte address 0x4 - core index']
  #allocation1 [shape = 'u32[144,128]{1,0:T(1,128)}', space=vmem, size = 0x12000, scoped, tag = 'internal scratch']
  %s0 = inlined_call_operand.smem [shape: u32[44], index: -1, kind: input, shape index: {}]
  %s1 = sld [smem:[%s0]]
  %s2 = scalar_lea.smem %s0, 1
  %s3 = sld [smem:[%s2]]
  %s4 = scalar_lea.smem %s0, 2
  %s5 = sld [smem:[%s4]]
  %s6 = scalar_lea.smem %s0, 3
  %s7 = sld [smem:[%s6]]
  %s8 = scalar_lea.smem %s0, 4
  %s9 = sld [smem:[%s8]]
  %s10 = scalar_lea.smem %s0, 5
  %s11 = sld [smem:[%s10]]
  %s12 = scalar_lea.smem %s0, 6
  %s13 = sld [smem:[%s12]]
  %s14 = scalar_lea.smem %s0, 7
  %s15 = sld [smem:[%s14]]
  %s16 = scalar_lea.smem %s0, 8
  %s17 = sld [smem:[%s16]]
  %s18 = scalar_lea.smem %s0, 9
  %s19 = sld [smem:[%s18]]
  %s20 = scalar_lea.smem %s0, 10
  %s21 = sld [smem:[%s20]]
  %s22 = scalar_lea.smem %s0, 11
  %s23 = sld [smem:[%s22]]
  %s24 = scalar_lea.smem %s0, 12
  %s25 = sld [smem:[%s24]]
  %s26 = scalar_lea.smem %s0, 13
  %s27 = sld [smem:[%s26]]
  %s28 = scalar_lea.smem %s0, 14
  %s29 = sld [smem:[%s28]]
  %s30 = scalar_lea.smem %s0, 15
  %s31 = sld [smem:[%s30]]
  %s32 = scalar_lea.smem %s0, 16
  %s33 = sld [smem:[%s32]]
  %s34 = scalar_lea.smem %s0, 17
  %s35 = sld [smem:[%s34]]
  %s36 = scalar_lea.smem %s0, 18
  %s37 = sld [smem:[%s36]]
  %s38 = scalar_lea.smem %s0, 19
  %s39 = sld [smem:[%s38]]
  %s40 = scalar_lea.smem %s0, 20
  %s41 = sld [smem:[%s40]]
  %s42 = scalar_lea.smem %s0, 21
  %s43 = sld [smem:[%s42]]
  %s44 = scalar_lea.smem %s0, 22
  %s45 = sld [smem:[%s44]]
  %s46 = scalar_lea.smem %s0, 23
  %s47 = sld [smem:[%s46]]
  %s48 = scalar_lea.smem %s0, 24
  %s49 = sld [smem:[%s48]]
  %s50 = scalar_lea.smem %s0, 25
  %s51 = sld [smem:[%s50]]
  %s52 = scalar_lea.smem %s0, 26
  %s53 = sld [smem:[%s52]]
  %s54 = scalar_lea.smem %s0, 27
  %s55 = sld [smem:[%s54]]
  %s56 = scalar_lea.smem %s0, 28
  %s57 = sld [smem:[%s56]]
  %s58 = scalar_lea.smem %s0, 29
  %s59 = sld [smem:[%s58]]
  %s60 = scalar_lea.smem %s0, 30
  %s61 = sld [smem:[%s60]]
  %s62 = scalar_lea.smem %s0, 31
  %s63 = sld [smem:[%s62]]
  %s64 = scalar_lea.smem %s0, 32
  %s65 = sld [smem:[%s64]]
  %s66 = scalar_lea.smem %s0, 33
  %s67 = sld [smem:[%s66]]
  %s68 = scalar_lea.smem %s0, 34
  %s69 = sld [smem:[%s68]]
  %s70 = scalar_lea.smem %s0, 35
  %s71 = sld [smem:[%s70]]
  %s72 = scalar_lea.smem %s0, 36
  %s73 = sld [smem:[%s72]]
  %s74 = scalar_lea.smem %s0, 37
  %s75 = sld [smem:[%s74]]
  %s76 = scalar_lea.smem %s0, 38
  %s77 = sld [smem:[%s76]]
  %s78 = scalar_lea.smem %s0, 39
  %s79 = sld [smem:[%s78]]
  %s80 = scalar_lea.smem %s0, 40
  %s81 = sld [smem:[%s80]]
  %s82 = scalar_lea.smem %s0, 41
  %s83 = sld [smem:[%s82]]
  %s84 = scalar_lea.smem %s0, 42
  %s85 = sld [smem:[%s84]]
  %s86 = scalar_lea.smem %s0, 43
  %s87 = sld [smem:[%s86]]
  %88 = xla_tuple %s83, %s85, %s87
  %s89 = sld [smem:[#allocation0]]
  $region194: #{double_encoder_forward.1} parent=0
    _
  %s91 = ssub.s32 1, %s89
  %s92 = scalar_select 0, %s91, %s89
  $region1: #{double_encoder_forward.1} parent=0
    #allocation2 [shape = 'u8[512]{0}', space=smem, size = 0x200, scoped, tag = 'input window, operand 0, single buffered']
    #allocation3 [shape = 's32[1]{0}', space=sflag, size = 0x4, scoped, tag = 'scoped memory for double_encoder_forward.1']
    #allocation4 [shape = 's32[1]{0}', space=sflag, size = 0x4, scoped, tag = 'scoped memory for double_encoder_forward.1']
    #allocation5 [shape = 'u8[8192]{0}', space=vmem, size = 0x2000, scoped, tag = 'output window, operand 0, single buffered']
    #allocation6 [shape = 'u8[1024]{0}', space=vmem, size = 0x400, scoped, tag = 'output window, operand 1, single buffered']
    #allocation7 [shape = 's32[1]{0}', space=sflag, size = 0x4, scoped, tag = 'scoped memory for double_encoder_forward.1']
    #allocation8 [shape = 'u8[8192]{0}', space=vmem, size = 0x2000, scoped, tag = 'output window, operand 2, single buffered']
    %93 = vsyncpa [#allocation4], 0
    %94 = vsyncpa [#allocation3], 0
    %95 = vsyncpa [#allocation7], 0
    // Predicated region
    $region2: #{double_encoder_forward.1} parent=1 // pred_check
      _
    $region3: #{double_encoder_forward.1} parent=1 // pred_check_branch
      %97 = sbr.rel (0) target = $region5
    $region4: #{double_encoder_forward.1} parent=1 // pred_region
      %s99 = ssub.s32 16, 16
      %100 = vsyncadd [#allocation4], %s99
      %s102 = sshll.u32 %s1, 4
      %s103 = int_to_ptr.vmem [resolvable:$true] %s102
      %105 = dma.vmem_to_smem %s103, 16, [#allocation2], [#allocation4]
    $region5: #{double_encoder_forward.1} parent=1 // pred_fallthru
      _
    // Predicated region
    $region6: #{double_encoder_forward.1} parent=1 // pred_check
      _
    $region7: #{double_encoder_forward.1} parent=1 // pred_check_branch
      %107 = sbr.rel (0) target = $region9
    $region8: #{double_encoder_forward.1} parent=1 // pred_region
      _
    $region9: #{double_encoder_forward.1} parent=1 // pred_fallthru
      _
    // Predicated region
    $region10: #{double_encoder_forward.1} parent=1 // pred_check
      _
    $region11: #{double_encoder_forward.1} parent=1 // pred_check_branch
      %109 = sbr.rel (0) target = $region13
    $region12: #{double_encoder_forward.1} parent=1 // pred_region
      _
    $region13: #{double_encoder_forward.1} parent=1 // pred_fallthru
      _
    // Predicated region
    $region14: #{double_encoder_forward.1} parent=1 // pred_check
      _
    $region15: #{double_encoder_forward.1} parent=1 // pred_check_branch
      %111 = sbr.rel (0) target = $region17
    $region16: #{double_encoder_forward.1} parent=1 // pred_region
      _
    $region17: #{double_encoder_forward.1} parent=1 // pred_fallthru
      _
    // Predicated region
    $region18: #{double_encoder_forward.1} parent=1 // pred_check
      _
    $region19: #{double_encoder_forward.1} parent=1 // pred_check_branch
      %113 = sbr.rel (0) target = $region21
    $region20: #{double_encoder_forward.1} parent=1 // pred_region
      _
    $region21: #{double_encoder_forward.1} parent=1 // pred_fallthru
      _
    // Predicated region
    $region22: #{double_encoder_forward.1} parent=1 // pred_check
      _
    $region23: #{double_encoder_forward.1} parent=1 // pred_check_branch
      %115 = sbr.rel (0) target = $region25
    $region24: #{double_encoder_forward.1} parent=1 // pred_region
      _
    $region25: #{double_encoder_forward.1} parent=1 // pred_fallthru
      _
    // Predicated region
    $region26: #{double_encoder_forward.1} parent=1 // pred_check
      _
    $region27: #{double_encoder_forward.1} parent=1 // pred_check_branch
      %117 = sbr.rel (0) target = $region29
    $region28: #{double_encoder_forward.1} parent=1 // pred_region
      _
    $region29: #{double_encoder_forward.1} parent=1 // pred_fallthru
      _
    // Predicated region
    $region30: #{double_encoder_forward.1} parent=1 // pred_check
      _
    $region31: #{double_encoder_forward.1} parent=1 // pred_check_branch
      %119 = sbr.rel (0) target = $region33
    $region32: #{double_encoder_forward.1} parent=1 // pred_region
      _
    $region33: #{double_encoder_forward.1} parent=1 // pred_fallthru
      _
    // Predicated region
    $region34: #{double_encoder_forward.1} parent=1 // pred_check
      _
    $region35: #{double_encoder_forward.1} parent=1 // pred_check_branch
      %121 = sbr.rel (0) target = $region37
    $region36: #{double_encoder_forward.1} parent=1 // pred_region
      _
    $region37: #{double_encoder_forward.1} parent=1 // pred_fallthru
      _
    // Predicated region
    $region38: #{double_encoder_forward.1} parent=1 // pred_check
      _
    $region39: #{double_encoder_forward.1} parent=1 // pred_check_branch
      %123 = sbr.rel (0) target = $region41
    $region40: #{double_encoder_forward.1} parent=1 // pred_region
      _
    $region41: #{double_encoder_forward.1} parent=1 // pred_fallthru
      _
    // Predicated region
    $region42: #{double_encoder_forward.1} parent=1 // pred_check
      _
    $region43: #{double_encoder_forward.1} parent=1 // pred_check_branch
      %125 = sbr.rel (0) target = $region45
    $region44: #{double_encoder_forward.1} parent=1 // pred_region
      _
    $region45: #{double_encoder_forward.1} parent=1 // pred_fallthru
      _
    // Predicated region
    $region46: #{double_encoder_forward.1} parent=1 // pred_check
      _
    $region47: #{double_encoder_forward.1} parent=1 // pred_check_branch
      %127 = sbr.rel (0) target = $region49
    $region48: #{double_encoder_forward.1} parent=1 // pred_region
      _
    $region49: #{double_encoder_forward.1} parent=1 // pred_fallthru
      _
    // Predicated region
    $region50: #{double_encoder_forward.1} parent=1 // pred_check
      _
    $region51: #{double_encoder_forward.1} parent=1 // pred_check_branch
      %129 = sbr.rel (0) target = $region53
    $region52: #{double_encoder_forward.1} parent=1 // pred_region
      _
    $region53: #{double_encoder_forward.1} parent=1 // pred_fallthru
      _
    // Predicated region
    $region54: #{double_encoder_forward.1} parent=1 // pred_check
      _
    $region55: #{double_encoder_forward.1} parent=1 // pred_check_branch
      %131 = sbr.rel (0) target = $region57
    $region56: #{double_encoder_forward.1} parent=1 // pred_region
      _
    $region57: #{double_encoder_forward.1} parent=1 // pred_fallthru
      _
    // Predicated region
    $region58: #{double_encoder_forward.1} parent=1 // pred_check
      _
    $region59: #{double_encoder_forward.1} parent=1 // pred_check_branch
      %133 = sbr.rel (0) target = $region61
    $region60: #{double_encoder_forward.1} parent=1 // pred_region
      _
    $region61: #{double_encoder_forward.1} parent=1 // pred_fallthru
      _
    // Predicated region
    $region62: #{double_encoder_forward.1} parent=1 // pred_check
      _
    $region63: #{double_encoder_forward.1} parent=1 // pred_check_branch
      %135 = sbr.rel (0) target = $region65
    $region64: #{double_encoder_forward.1} parent=1 // pred_region
      _
    $region65: #{double_encoder_forward.1} parent=1 // pred_fallthru
      _
    // Predicated region
    $region66: #{double_encoder_forward.1} parent=1 // pred_check
      _
    $region67: #{double_encoder_forward.1} parent=1 // pred_check_branch
      %137 = sbr.rel (0) target = $region69
    $region68: #{double_encoder_forward.1} parent=1 // pred_region
      _
    $region69: #{double_encoder_forward.1} parent=1 // pred_fallthru
      _
    // Predicated region
    $region70: #{double_encoder_forward.1} parent=1 // pred_check
      _
    $region71: #{double_encoder_forward.1} parent=1 // pred_check_branch
      %139 = sbr.rel (0) target = $region73
    $region72: #{double_encoder_forward.1} parent=1 // pred_region
      _
    $region73: #{double_encoder_forward.1} parent=1 // pred_fallthru
      _
    // Predicated region
    $region74: #{double_encoder_forward.1} parent=1 // pred_check
      _
    $region75: #{double_encoder_forward.1} parent=1 // pred_check_branch
      %141 = sbr.rel (0) target = $region77
    $region76: #{double_encoder_forward.1} parent=1 // pred_region
      _
    $region77: #{double_encoder_forward.1} parent=1 // pred_fallthru
      _
    // Predicated region
    $region78: #{double_encoder_forward.1} parent=1 // pred_check
      _
    $region79: #{double_encoder_forward.1} parent=1 // pred_check_branch
      %143 = sbr.rel (0) target = $region81
    $region80: #{double_encoder_forward.1} parent=1 // pred_region
      _
    $region81: #{double_encoder_forward.1} parent=1 // pred_fallthru
      _
    // Predicated region
    $region82: #{double_encoder_forward.1} parent=1 // pred_check
      _
    $region83: #{double_encoder_forward.1} parent=1 // pred_check_branch
      %145 = sbr.rel (0) target = $region85
    $region84: #{double_encoder_forward.1} parent=1 // pred_region
      _
    $region85: #{double_encoder_forward.1} parent=1 // pred_fallthru
      _
    // Predicated region
    $region86: #{double_encoder_forward.1} parent=1 // pred_check
      _
    $region87: #{double_encoder_forward.1} parent=1 // pred_check_branch
      %147 = sbr.rel (0) target = $region89
    $region88: #{double_encoder_forward.1} parent=1 // pred_region
      _
    $region89: #{double_encoder_forward.1} parent=1 // pred_fallthru
      _
    // Predicated region
    $region90: #{double_encoder_forward.1} parent=1 // pred_check
      _
    $region91: #{double_encoder_forward.1} parent=1 // pred_check_branch
      %149 = sbr.rel (0) target = $region93
    $region92: #{double_encoder_forward.1} parent=1 // pred_region
      _
    $region93: #{double_encoder_forward.1} parent=1 // pred_fallthru
      _
    // Predicated region
    $region94: #{double_encoder_forward.1} parent=1 // pred_check
      _
    $region95: #{double_encoder_forward.1} parent=1 // pred_check_branch
      %151 = sbr.rel (0) target = $region97
    $region96: #{double_encoder_forward.1} parent=1 // pred_region
      _
    $region97: #{double_encoder_forward.1} parent=1 // pred_fallthru
      _
    // Predicated region
    $region98: #{double_encoder_forward.1} parent=1 // pred_check
      _
    $region99: #{double_encoder_forward.1} parent=1 // pred_check_branch
      %153 = sbr.rel (0) target = $region101
    $region100: #{double_encoder_forward.1} parent=1 // pred_region
      _
    $region101: #{double_encoder_forward.1} parent=1 // pred_fallthru
      _
    // Predicated region
    $region102: #{double_encoder_forward.1} parent=1 // pred_check
      _
    $region103: #{double_encoder_forward.1} parent=1 // pred_check_branch
      %155 = sbr.rel (0) target = $region105
    $region104: #{double_encoder_forward.1} parent=1 // pred_region
      _
    $region105: #{double_encoder_forward.1} parent=1 // pred_fallthru
      _
    // Predicated region
    $region106: #{double_encoder_forward.1} parent=1 // pred_check
      _
    $region107: #{double_encoder_forward.1} parent=1 // pred_check_branch
      %157 = sbr.rel (0) target = $region109
    $region108: #{double_encoder_forward.1} parent=1 // pred_region
      _
    $region109: #{double_encoder_forward.1} parent=1 // pred_fallthru
      _
    // Predicated region
    $region110: #{double_encoder_forward.1} parent=1 // pred_check
      _
    $region111: #{double_encoder_forward.1} parent=1 // pred_check_branch
      %159 = sbr.rel (0) target = $region113
    $region112: #{double_encoder_forward.1} parent=1 // pred_region
      _
    $region113: #{double_encoder_forward.1} parent=1 // pred_fallthru
      _
    // Predicated region
    $region114: #{double_encoder_forward.1} parent=1 // pred_check
      _
    $region115: #{double_encoder_forward.1} parent=1 // pred_check_branch
      %161 = sbr.rel (0) target = $region117
    $region116: #{double_encoder_forward.1} parent=1 // pred_region
      _
    $region117: #{double_encoder_forward.1} parent=1 // pred_fallthru
      _
    // Predicated region
    $region118: #{double_encoder_forward.1} parent=1 // pred_check
      _
    $region119: #{double_encoder_forward.1} parent=1 // pred_check_branch
      %163 = sbr.rel (0) target = $region121
    $region120: #{double_encoder_forward.1} parent=1 // pred_region
      _
    $region121: #{double_encoder_forward.1} parent=1 // pred_fallthru
      _
    // Predicated region
    $region122: #{double_encoder_forward.1} parent=1 // pred_check
      _
    $region123: #{double_encoder_forward.1} parent=1 // pred_check_branch
      %165 = sbr.rel (0) target = $region125
    $region124: #{double_encoder_forward.1} parent=1 // pred_region
      _
    $region125: #{double_encoder_forward.1} parent=1 // pred_fallthru
      _
    // Predicated region
    $region126: #{double_encoder_forward.1} parent=1 // pred_check
      _
    $region127: #{double_encoder_forward.1} parent=1 // pred_check_branch
      %167 = sbr.rel (0) target = $region129
    $region128: #{double_encoder_forward.1} parent=1 // pred_region
      _
    $region129: #{double_encoder_forward.1} parent=1 // pred_fallthru
      _
    // Predicated region
    $region130: #{double_encoder_forward.1} parent=1 // pred_check
      _
    $region131: #{double_encoder_forward.1} parent=1 // pred_check_branch
      %169 = sbr.rel (0) target = $region133
    $region132: #{double_encoder_forward.1} parent=1 // pred_region
      _
    $region133: #{double_encoder_forward.1} parent=1 // pred_fallthru
      _
    // Predicated region
    $region134: #{double_encoder_forward.1} parent=1 // pred_check
      _
    $region135: #{double_encoder_forward.1} parent=1 // pred_check_branch
      %171 = sbr.rel (0) target = $region137
    $region136: #{double_encoder_forward.1} parent=1 // pred_region
      _
    $region137: #{double_encoder_forward.1} parent=1 // pred_fallthru
      _
    // Predicated region
    $region138: #{double_encoder_forward.1} parent=1 // pred_check
      _
    $region139: #{double_encoder_forward.1} parent=1 // pred_check_branch
      %173 = sbr.rel (0) target = $region141
    $region140: #{double_encoder_forward.1} parent=1 // pred_region
      _
    $region141: #{double_encoder_forward.1} parent=1 // pred_fallthru
      _
    // Predicated region
    $region142: #{double_encoder_forward.1} parent=1 // pred_check
      _
    $region143: #{double_encoder_forward.1} parent=1 // pred_check_branch
      %175 = sbr.rel (0) target = $region145
    $region144: #{double_encoder_forward.1} parent=1 // pred_region
      _
    $region145: #{double_encoder_forward.1} parent=1 // pred_fallthru
      _
    // Predicated region
    $region146: #{double_encoder_forward.1} parent=1 // pred_check
      _
    $region147: #{double_encoder_forward.1} parent=1 // pred_check_branch
      %177 = sbr.rel (0) target = $region149
    $region148: #{double_encoder_forward.1} parent=1 // pred_region
      _
    $region149: #{double_encoder_forward.1} parent=1 // pred_fallthru
      _
    // Predicated region
    $region150: #{double_encoder_forward.1} parent=1 // pred_check
      _
    $region151: #{double_encoder_forward.1} parent=1 // pred_check_branch
      %179 = sbr.rel (0) target = $region153
    $region152: #{double_encoder_forward.1} parent=1 // pred_region
      _
    $region153: #{double_encoder_forward.1} parent=1 // pred_fallthru
      _
    // Predicated region
    $region154: #{double_encoder_forward.1} parent=1 // pred_check
      _
    $region155: #{double_encoder_forward.1} parent=1 // pred_check_branch
      %181 = sbr.rel (0) target = $region157
    $region156: #{double_encoder_forward.1} parent=1 // pred_region
      _
    $region157: #{double_encoder_forward.1} parent=1 // pred_fallthru
      _
    // Predicated region
    $region158: #{double_encoder_forward.1} parent=1 // pred_check
      _
    $region159: #{double_encoder_forward.1} parent=1 // pred_check_branch
      %183 = sbr.rel (0) target = $region161
    $region160: #{double_encoder_forward.1} parent=1 // pred_region
      _
    $region161: #{double_encoder_forward.1} parent=1 // pred_fallthru
      _
    // Predicated region
    $region162: #{double_encoder_forward.1} parent=1 // pred_check
      _
    $region163: #{double_encoder_forward.1} parent=1 // pred_check_branch
      %185 = sbr.rel (0) target = $region165
    $region164: #{double_encoder_forward.1} parent=1 // pred_region
      _
    $region165: #{double_encoder_forward.1} parent=1 // pred_fallthru
      _
    // Predicated region
    $region166: #{double_encoder_forward.1} parent=1 // pred_check
      _
    $region167: #{double_encoder_forward.1} parent=1 // pred_check_branch
      %187 = sbr.rel (0) target = $region169
    $region168: #{double_encoder_forward.1} parent=1 // pred_region
      %188 = dma.done [#allocation4], 16
    $region169: #{double_encoder_forward.1} parent=1 // pred_fallthru
      _
    %189 = sfence
    %v191 = vld [vmem:[%s3] sm:$0xff]
    %v192 = vld [vmem:[%s3 + $0x8] sm:$0xff]
    %v193 = vld [vmem:[%s3 + $0x10] sm:$0xff]
    %v194 = vld [vmem:[%s3 + $0x18] sm:$0xff]
    %v195 = vld [vmem:[%s21] sm:$0x1]
    %v196 = vld [vmem:[%s19] sm:$0x1]
    %vm197 = vcmask 392192
    %v198 = vsel %vm197, %v191, 0.0
    %199 = vadd.xlane.f32.xlu0 %v198
    %v200 = vpop.xlane.xlu0 %199
    %v201 = vsel %vm197, %v192, 0.0
    %202 = vadd.xlane.f32.xlu0 %v201
    %v203 = vpop.xlane.xlu0 %202
    %v204 = vsel %vm197, %v193, 0.0
    %205 = vadd.xlane.f32.xlu0 %v204
    %v206 = vpop.xlane.xlu0 %205
    %v207 = vsel %vm197, %v194, 0.0
    %208 = vadd.xlane.f32.xlu0 %v207
    %v209 = vpop.xlane.xlu0 %208
    %v210 = vrcp.pop 48.0
    %v211 = vmul.f32 %v200, %v210
    %v212 = vmul.f32 %v203, %v210
    %v213 = vmul.f32 %v206, %v210
    %v214 = vmul.f32 %v209, %v210
    %v215 = vsub.f32 %v191, %v211
    %v216 = vsub.f32 %v192, %v212
    %v217 = vsub.f32 %v193, %v213
    %v218 = vsub.f32 %v194, %v214
    %v219 = vmul.f32 %v215, %v215
    %v220 = vmul.f32 %v216, %v216
    %v221 = vmul.f32 %v217, %v217
    %v222 = vmul.f32 %v218, %v218
    %v223 = vsel %vm197, %v219, 0.0
    %224 = vadd.xlane.f32.xlu0 %v223
    %v225 = vpop.xlane.xlu0 %224
    %v226 = vsel %vm197, %v220, 0.0
    %227 = vadd.xlane.f32.xlu0 %v226
    %v228 = vpop.xlane.xlu0 %227
    %v229 = vsel %vm197, %v221, 0.0
    %230 = vadd.xlane.f32.xlu0 %v229
    %v231 = vpop.xlane.xlu0 %230
    %v232 = vsel %vm197, %v222, 0.0
    %233 = vadd.xlane.f32.xlu0 %v232
    %v234 = vpop.xlane.xlu0 %233
    %v235 = vmul.f32 %v225, %v210
    %v236 = vmul.f32 %v228, %v210
    %v237 = vmul.f32 %v231, %v210
    %v238 = vmul.f32 %v234, %v210
    %v239 = vadd.f32 %v235, 1e-05
    %v240 = vadd.f32 %v236, 1e-05
    %v241 = vadd.f32 %v237, 1e-05
    %v242 = vadd.f32 %v238, 1e-05
    %v243 = vrsqrt.pop %v239
    %v244 = vrsqrt.pop %v240
    %v245 = vrsqrt.pop %v241
    %v246 = vrsqrt.pop %v242
    %v247 = vmul.f32 %v215, %v243
    %v248 = vmul.f32 %v216, %v244
    %v249 = vmul.f32 %v217, %v245
    %v250 = vmul.f32 %v218, %v246
    %v252 = vlaneseq
    %v253 = vshrl.u32 %v252, 7
    %v254 = vsub.s32 0, %v253
    %v255 = vrot.slane %v195, %v254
    %v257 = vmul.f32 %v247, %v255
    %v258 = vmul.f32 %v248, %v255
    %v259 = vmul.f32 %v249, %v255
    %v260 = vmul.f32 %v250, %v255
    %v262 = vlaneseq
    %v263 = vshrl.u32 %v262, 7
    %v264 = vsub.s32 0, %v263
    %v265 = vrot.slane %v196, %v264
    %v267 = vadd.f32 %v257, %v265
    %v268 = vadd.f32 %v258, %v265
    %v269 = vadd.f32 %v259, %v265
    %v270 = vadd.f32 %v260, %v265
    %v271 = vld [vmem:[%s43] sm:$0xf]
    %v272 = vld [vmem:[%s43 + $0x4] sm:$0xf]
    %v273 = vld [vmem:[%s43 + $0x8] sm:$0xf]
    %v274 = vld [vmem:[%s43 + $0xc] sm:$0xf]
    %v275 = vld [vmem:[%s43 + $0x10] sm:$0xf]
    %v276 = vld [vmem:[%s43 + $0x14] sm:$0xf]
    %v277 = vpack.c.bf16 %v268, %v267
    %v278 = vpack.c.bf16 %v270, %v269
    %v279 = vld [vmem:[%s15] sm:$0x1]
    %v281 = vlaneseq
    %v282 = vshrl.u32 %v281, 7
    %v283 = vsub.s32 0, %v282
    %v284 = vrot.slane %v279, %v283
    %v292 = vunpack.c.l.b16 %v271
    %v293 = vunpack.c.l.b16 %v272
    %v294 = vunpack.c.l.b16 %v273
    %v295 = vunpack.c.l.b16 %v274
    %v296 = vunpack.c.l.b16 %v275
    %v297 = vunpack.c.l.b16 %v276
    %v298 = vpack.c.b16 %v293, %v292
    %v299 = vpack.c.b16 %v295, %v294
    %v300 = vpack.c.b16 %v297, %v296
    %v305 = vsel %vm197, %v277, 0
    %v308 = vsel %vm197, %v278, 0
    %310 = vmatprep.subr.bf16.mxu0 0
    %311 = vmatpush1.bf16.msra.mxu0 0
    %312 = vmatprep.subr.bf16.mxu0 0
    %313 = vmatpush1.bf16.msra.mxu0 0
    %314 = vmatprep.subr.bf16.mxu0 0
    %315 = vmatpush1.bf16.msra.mxu0 0
    %316 = vmatprep.subr.bf16.mxu0 0
    %317 = vmatpush1.bf16.msra.mxu0 0
    %318 = vmatprep.subr.bf16.mxu0 0
    %319 = vmatpush1.bf16.msra.mxu0 0
    %320 = vmatprep.subr.bf16.mxu0 0
    %321 = vmatpush1.bf16.msra.mxu0 %v300
    %322 = vmatprep.subr.bf16.mxu0 0
    %323 = vmatpush1.bf16.msra.mxu0 %v299
    %324 = vmatprep.subr.bf16.mxu0 0
    %325 = vmatpush1.bf16.msra.mxu0 %v298
    %326 = vmatprep.subr.bf16.mxu0 0
    %327 = vmatpush2.bf16.msra.mxu0 0
    %328 = vmatprep.subr.bf16.mxu0 0
    %329 = vmatpush2.bf16.msra.mxu0 0
    %330 = vmatprep.subr.bf16.mxu0 0
    %331 = vmatpush2.bf16.msra.mxu0 0
    %332 = vmatprep.subr.bf16.mxu0 0
    %333 = vmatpush2.bf16.msra.mxu0 0
    %334 = vmatprep.subr.bf16.mxu0 0
    %335 = vmatpush2.bf16.msra.mxu0 0
    %336 = vmatprep.subr.bf16.mxu0 0
    %337 = vmatpush2.bf16.msra.mxu0 0
    %338 = vmatprep.subr.bf16.mxu0 0
    %339 = vmatpush2.bf16.msra.mxu0 0
    %340 = vmatprep.subr.bf16.mxu0 0
    %341 = vmatpush2.bf16.msra.mxu0 0
    %342 = vmatprep.mubr.bf16.mxu0 0
    %343 = vmatmul.mubr.bf16.gmra.mxu0 %v305
    %v344 = vpop.f32.mrf.mxu0
    %v345 = vadd.f32 %v284, %v344
    %v346 = vpop.f32.mrf.mxu0
    %v347 = vpop.f32.mrf.mxu0
    %v348 = vadd.f32 %v284, %v347
    %v349 = vpop.f32.mrf.mxu0
    %350 = vmatprep.mubr.bf16.mxu0 0
    %351 = vmatmul.mubr.bf16.gmra.mxu0 %v308
    %v352 = vpop.f32.mrf.mxu0
    %v353 = vadd.f32 %v284, %v352
    %v354 = vpop.f32.mrf.mxu0
    %v355 = vpop.f32.mrf.mxu0
    %v356 = vadd.f32 %v284, %v355
    %v357 = vpop.f32.mrf.mxu0
    %358 = vdwg.mxu0
    %v359 = vld [vmem:[%s39] sm:$0xf]
    %v360 = vld [vmem:[%s39 + $0x4] sm:$0xf]
    %v361 = vld [vmem:[%s39 + $0x8] sm:$0xf]
    %v362 = vld [vmem:[%s39 + $0xc] sm:$0xf]
    %v363 = vld [vmem:[%s39 + $0x10] sm:$0xf]
    %v364 = vld [vmem:[%s39 + $0x14] sm:$0xf]
    %v365 = vld [vmem:[%s11] sm:$0x1]
    %v367 = vlaneseq
    %v368 = vshrl.u32 %v367, 7
    %v369 = vsub.s32 0, %v368
    %v370 = vrot.slane %v365, %v369
    %v378 = vunpack.c.l.b16 %v359
    %v379 = vunpack.c.l.b16 %v360
    %v380 = vunpack.c.l.b16 %v361
    %v381 = vunpack.c.l.b16 %v362
    %v382 = vunpack.c.l.b16 %v363
    %v383 = vunpack.c.l.b16 %v364
    %v384 = vpack.c.b16 %v379, %v378
    %v385 = vpack.c.b16 %v381, %v380
    %v386 = vpack.c.b16 %v383, %v382
    %390 = vmatprep.subr.bf16.mxu0 0
    %391 = vmatpush1.bf16.msra.mxu0 0
    %392 = vmatprep.subr.bf16.mxu0 0
    %393 = vmatpush1.bf16.msra.mxu0 0
    %394 = vmatprep.subr.bf16.mxu0 0
    %395 = vmatpush1.bf16.msra.mxu0 0
    %396 = vmatprep.subr.bf16.mxu0 0
    %397 = vmatpush1.bf16.msra.mxu0 0
    %398 = vmatprep.subr.bf16.mxu0 0
    %399 = vmatpush1.bf16.msra.mxu0 0
    %400 = vmatprep.subr.bf16.mxu0 0
    %401 = vmatpush1.bf16.msra.mxu0 %v386
    %402 = vmatprep.subr.bf16.mxu0 0
    %403 = vmatpush1.bf16.msra.mxu0 %v385
    %404 = vmatprep.subr.bf16.mxu0 0
    %405 = vmatpush1.bf16.msra.mxu0 %v384
    %406 = vmatprep.subr.bf16.mxu0 0
    %407 = vmatpush2.bf16.msra.mxu0 0
    %408 = vmatprep.subr.bf16.mxu0 0
    %409 = vmatpush2.bf16.msra.mxu0 0
    %410 = vmatprep.subr.bf16.mxu0 0
    %411 = vmatpush2.bf16.msra.mxu0 0
    %412 = vmatprep.subr.bf16.mxu0 0
    %413 = vmatpush2.bf16.msra.mxu0 0
    %414 = vmatprep.subr.bf16.mxu0 0
    %415 = vmatpush2.bf16.msra.mxu0 0
    %416 = vmatprep.subr.bf16.mxu0 0
    %417 = vmatpush2.bf16.msra.mxu0 0
    %418 = vmatprep.subr.bf16.mxu0 0
    %419 = vmatpush2.bf16.msra.mxu0 0
    %420 = vmatprep.subr.bf16.mxu0 0
    %421 = vmatpush2.bf16.msra.mxu0 0
    %422 = vmatprep.mubr.bf16.mxu0 0
    %423 = vmatmul.mubr.bf16.gmra.mxu0 %v305
    %v424 = vpop.f32.mrf.mxu0
    %v425 = vadd.f32 %v370, %v424
    %v426 = vpop.f32.mrf.mxu0
    %v427 = vpop.f32.mrf.mxu0
    %v428 = vadd.f32 %v370, %v427
    %v429 = vpop.f32.mrf.mxu0
    %430 = vmatprep.mubr.bf16.mxu0 0
    %431 = vmatmul.mubr.bf16.gmra.mxu0 %v308
    %v432 = vpop.f32.mrf.mxu0
    %v433 = vadd.f32 %v370, %v432
    %v434 = vpop.f32.mrf.mxu0
    %v435 = vpop.f32.mrf.mxu0
    %v436 = vadd.f32 %v370, %v435
    %v437 = vpop.f32.mrf.mxu0
    %438 = vdwg.mxu0
    %v439 = vld [vmem:[%s45] sm:$0xf]
    %v440 = vld [vmem:[%s45 + $0x4] sm:$0xf]
    %v441 = vld [vmem:[%s45 + $0x8] sm:$0xf]
    %v442 = vld [vmem:[%s45 + $0xc] sm:$0xf]
    %v443 = vld [vmem:[%s45 + $0x10] sm:$0xf]
    %v444 = vld [vmem:[%s45 + $0x14] sm:$0xf]
    %v445 = vld [vmem:[%s17] sm:$0x1]
    %v447 = vlaneseq
    %v448 = vshrl.u32 %v447, 7
    %v449 = vsub.s32 0, %v448
    %v450 = vrot.slane %v445, %v449
    %v458 = vunpack.c.l.b16 %v439
    %v459 = vunpack.c.l.b16 %v440
    %v460 = vunpack.c.l.b16 %v441
    %v461 = vunpack.c.l.b16 %v442
    %v462 = vunpack.c.l.b16 %v443
    %v463 = vunpack.c.l.b16 %v444
    %v464 = vpack.c.b16 %v459, %v458
    %v465 = vpack.c.b16 %v461, %v460
    %v466 = vpack.c.b16 %v463, %v462
    %470 = vmatprep.subr.bf16.mxu0 0
    %471 = vmatpush1.bf16.msra.mxu0 0
    %472 = vmatprep.subr.bf16.mxu0 0
    %473 = vmatpush1.bf16.msra.mxu0 0
    %474 = vmatprep.subr.bf16.mxu0 0
    %475 = vmatpush1.bf16.msra.mxu0 0
    %476 = vmatprep.subr.bf16.mxu0 0
    %477 = vmatpush1.bf16.msra.mxu0 0
    %478 = vmatprep.subr.bf16.mxu0 0
    %479 = vmatpush1.bf16.msra.mxu0 0
    %480 = vmatprep.subr.bf16.mxu0 0
    %481 = vmatpush1.bf16.msra.mxu0 %v466
    %482 = vmatprep.subr.bf16.mxu0 0
    %483 = vmatpush1.bf16.msra.mxu0 %v465
    %484 = vmatprep.subr.bf16.mxu0 0
    %485 = vmatpush1.bf16.msra.mxu0 %v464
    %486 = vmatprep.subr.bf16.mxu0 0
    %487 = vmatpush2.bf16.msra.mxu0 0
    %488 = vmatprep.subr.bf16.mxu0 0
    %489 = vmatpush2.bf16.msra.mxu0 0
    %490 = vmatprep.subr.bf16.mxu0 0
    %491 = vmatpush2.bf16.msra.mxu0 0
    %492 = vmatprep.subr.bf16.mxu0 0
    %493 = vmatpush2.bf16.msra.mxu0 0
    %494 = vmatprep.subr.bf16.mxu0 0
    %495 = vmatpush2.bf16.msra.mxu0 0
    %496 = vmatprep.subr.bf16.mxu0 0
    %497 = vmatpush2.bf16.msra.mxu0 0
    %498 = vmatprep.subr.bf16.mxu0 0
    %499 = vmatpush2.bf16.msra.mxu0 0
    %500 = vmatprep.subr.bf16.mxu0 0
    %501 = vmatpush2.bf16.msra.mxu0 0
    %502 = vmatprep.mubr.bf16.mxu0 0
    %503 = vmatmul.mubr.bf16.gmra.mxu0 %v305
    %v504 = vpop.f32.mrf.mxu0
    %v505 = vadd.f32 %v450, %v504
    %v506 = vpop.f32.mrf.mxu0
    %v507 = vpop.f32.mrf.mxu0
    %v508 = vadd.f32 %v450, %v507
    %v509 = vpop.f32.mrf.mxu0
    %510 = vmatprep.mubr.bf16.mxu0 0
    %511 = vmatmul.mubr.bf16.gmra.mxu0 %v308
    %v512 = vpop.f32.mrf.mxu0
    %v513 = vadd.f32 %v450, %v512
    %v514 = vpop.f32.mrf.mxu0
    %v515 = vpop.f32.mrf.mxu0
    %v516 = vadd.f32 %v450, %v515
    %v517 = vpop.f32.mrf.mxu0
    %518 = vdwg.mxu0
    %v519 = vpack.c.bf16 %v348, %v345
    %v520 = vpack.c.bf16 %v428, %v425
    %vm521 = vcmask 97280
    %v523 = vsel %vm521, %v519, 0
    %v526 = vsel %vm521, %v520, 0
    %528 = vmatprep.subr.bf16.mxu0 0
    %529 = vmatpush1.bf16.xpose.msra.mxu0 0
    %530 = vmatprep.subr.bf16.mxu0 0
    %531 = vmatpush1.bf16.xpose.msra.mxu0 0
    %532 = vmatprep.subr.bf16.mxu0 0
    %533 = vmatpush1.bf16.xpose.msra.mxu0 0
    %534 = vmatprep.subr.bf16.mxu0 0
    %535 = vmatpush1.bf16.xpose.msra.mxu0 0
    %536 = vmatprep.subr.bf16.mxu0 0
    %537 = vmatpush1.bf16.xpose.msra.mxu0 0
    %538 = vmatprep.subr.bf16.mxu0 0
    %539 = vmatpush1.bf16.xpose.msra.mxu0 0
    %540 = vmatprep.subr.bf16.mxu0 0
    %541 = vmatpush1.bf16.xpose.msra.mxu0 0
    %542 = vmatprep.subr.bf16.mxu0 0
    %543 = vmatpush1.bf16.xpose.msra.mxu0 %v526
    %544 = vmatprep.subr.bf16.mxu0 0
    %545 = vmatpush2.bf16.xpose.msra.mxu0 0
    %546 = vmatprep.subr.bf16.mxu0 0
    %547 = vmatpush2.bf16.xpose.msra.mxu0 0
    %548 = vmatprep.subr.bf16.mxu0 0
    %549 = vmatpush2.bf16.xpose.msra.mxu0 0
    %550 = vmatprep.subr.bf16.mxu0 0
    %551 = vmatpush2.bf16.xpose.msra.mxu0 0
    %552 = vmatprep.subr.bf16.mxu0 0
    %553 = vmatpush2.bf16.xpose.msra.mxu0 0
    %554 = vmatprep.subr.bf16.mxu0 0
    %555 = vmatpush2.bf16.xpose.msra.mxu0 0
    %556 = vmatprep.subr.bf16.mxu0 0
    %557 = vmatpush2.bf16.xpose.msra.mxu0 0
    %558 = vmatprep.subr.bf16.mxu0 0
    %559 = vmatpush2.bf16.xpose.msra.mxu0 0
    %560 = vmatprep.mubr.bf16.mxu0 0
    %561 = vmatmul.mubr.bf16.gmra.mxu0 %v523
    %v562 = vpop.f32.mrf.mxu0
    %v563 = vadd.f32 0.0, %v562
    %v564 = vpop.f32.mrf.mxu0
    %v565 = vpop.f32.mrf.mxu0
    %v566 = vadd.f32 0.0, %v565
    %v567 = vpop.f32.mrf.mxu0
    %568 = vdwg.mxu0
    %vm569 = vcmask 130048
    %v570 = vsel %vm569, %v563, -inf
    %571 = vmax.xlane.f32.xlu0 %v570
    %v572 = vpop.xlane.xlu0 %571
    %v573 = vsel %vm569, %v566, -inf
    %574 = vmax.xlane.f32.xlu0 %v573
    %v575 = vpop.xlane.xlu0 %574
    %v576 = vsub.f32 %v563, %v572
    %v577 = vsub.f32 %v566, %v575
    %v578 = vmul.f32 %v576, 1.442695
    %v579 = vpow.pop %v578
    %v580 = vmul.f32 %v577, 1.442695
    %v581 = vpow.pop %v580
    %v582 = vsel %vm569, %v579, 0.0
    %583 = vadd.xlane.f32.xlu0 %v582
    %v584 = vpop.xlane.xlu0 %583
    %v585 = vsel %vm569, %v581, 0.0
    %586 = vadd.xlane.f32.xlu0 %v585
    %v587 = vpop.xlane.xlu0 %586
    %v588 = vrcp.pop %v584
    %v589 = vrcp.pop %v587
    %v590 = vmul.f32 %v579, %v588
    %v591 = vmul.f32 %v581, %v589
    %v592 = vpack.c.bf16 %v591, %v590
    %v593 = vpack.c.bf16 %v508, %v505
    %v595 = vsel %vm569, %v592, 0
    %597 = vmatprep.subr.bf16.mxu0 0
    %598 = vmatpush1.bf16.msra.mxu0 0
    %599 = vmatprep.subr.bf16.mxu0 0
    %600 = vmatpush1.bf16.msra.mxu0 0
    %601 = vmatprep.subr.bf16.mxu0 0
    %602 = vmatpush1.bf16.msra.mxu0 0
    %603 = vmatprep.subr.bf16.mxu0 0
    %604 = vmatpush1.bf16.msra.mxu0 0
    %605 = vmatprep.subr.bf16.mxu0 0
    %606 = vmatpush1.bf16.msra.mxu0 0
    %607 = vmatprep.subr.bf16.mxu0 0
    %608 = vmatpush1.bf16.msra.mxu0 0
    %609 = vmatprep.subr.bf16.mxu0 0
    %610 = vmatpush1.bf16.msra.mxu0 0
    %611 = vmatprep.subr.bf16.mxu0 0
    %612 = vmatpush1.bf16.msra.mxu0 %v593
    %613 = vmatprep.subr.bf16.mxu0 0
    %614 = vmatpush2.bf16.msra.mxu0 0
    %615 = vmatprep.subr.bf16.mxu0 0
    %616 = vmatpush2.bf16.msra.mxu0 0
    %617 = vmatprep.subr.bf16.mxu0 0
    %618 = vmatpush2.bf16.msra.mxu0 0
    %619 = vmatprep.subr.bf16.mxu0 0
    %620 = vmatpush2.bf16.msra.mxu0 0
    %621 = vmatprep.subr.bf16.mxu0 0
    %622 = vmatpush2.bf16.msra.mxu0 0
    %623 = vmatprep.subr.bf16.mxu0 0
    %624 = vmatpush2.bf16.msra.mxu0 0
    %625 = vmatprep.subr.bf16.mxu0 0
    %626 = vmatpush2.bf16.msra.mxu0 0
    %627 = vmatprep.subr.bf16.mxu0 0
    %628 = vmatpush2.bf16.msra.mxu0 0
    %629 = vmatprep.mubr.bf16.mxu0 0
    %630 = vmatmul.mubr.bf16.gmra.mxu0 %v595
    %v631 = vpop.f32.mrf.mxu0
    %v632 = vadd.f32 0.0, %v631
    %v633 = vpop.f32.mrf.mxu0
    %v634 = vpop.f32.mrf.mxu0
    %v635 = vadd.f32 0.0, %v634
    %v636 = vpop.f32.mrf.mxu0
    %637 = vdwg.mxu0
    %v638 = vpack.c.bf16 %v356, %v353
    %v639 = vpack.c.bf16 %v436, %v433
    %v641 = vsel %vm521, %v638, 0
    %v644 = vsel %vm521, %v639, 0
    %646 = vmatprep.subr.bf16.mxu0 0
    %647 = vmatpush1.bf16.xpose.msra.mxu0 0
    %648 = vmatprep.subr.bf16.mxu0 0
    %649 = vmatpush1.bf16.xpose.msra.mxu0 0
    %650 = vmatprep.subr.bf16.mxu0 0
    %651 = vmatpush1.bf16.xpose.msra.mxu0 0
    %652 = vmatprep.subr.bf16.mxu0 0
    %653 = vmatpush1.bf16.xpose.msra.mxu0 0
    %654 = vmatprep.subr.bf16.mxu0 0
    %655 = vmatpush1.bf16.xpose.msra.mxu0 0
    %656 = vmatprep.subr.bf16.mxu0 0
    %657 = vmatpush1.bf16.xpose.msra.mxu0 0
    %658 = vmatprep.subr.bf16.mxu0 0
    %659 = vmatpush1.bf16.xpose.msra.mxu0 0
    %660 = vmatprep.subr.bf16.mxu0 0
    %661 = vmatpush1.bf16.xpose.msra.mxu0 %v644
    %662 = vmatprep.subr.bf16.mxu0 0
    %663 = vmatpush2.bf16.xpose.msra.mxu0 0
    %664 = vmatprep.subr.bf16.mxu0 0
    %665 = vmatpush2.bf16.xpose.msra.mxu0 0
    %666 = vmatprep.subr.bf16.mxu0 0
    %667 = vmatpush2.bf16.xpose.msra.mxu0 0
    %668 = vmatprep.subr.bf16.mxu0 0
    %669 = vmatpush2.bf16.xpose.msra.mxu0 0
    %670 = vmatprep.subr.bf16.mxu0 0
    %671 = vmatpush2.bf16.xpose.msra.mxu0 0
    %672 = vmatprep.subr.bf16.mxu0 0
    %673 = vmatpush2.bf16.xpose.msra.mxu0 0
    %674 = vmatprep.subr.bf16.mxu0 0
    %675 = vmatpush2.bf16.xpose.msra.mxu0 0
    %676 = vmatprep.subr.bf16.mxu0 0
    %677 = vmatpush2.bf16.xpose.msra.mxu0 0
    %678 = vmatprep.mubr.bf16.mxu0 0
    %679 = vmatmul.mubr.bf16.gmra.mxu0 %v641
    %v680 = vpop.f32.mrf.mxu0
    %v681 = vadd.f32 0.0, %v680
    %v682 = vpop.f32.mrf.mxu0
    %v683 = vpop.f32.mrf.mxu0
    %v684 = vadd.f32 0.0, %v683
    %v685 = vpop.f32.mrf.mxu0
    %686 = vdwg.mxu0
    %v687 = vsel %vm569, %v681, -inf
    %688 = vmax.xlane.f32.xlu0 %v687
    %v689 = vpop.xlane.xlu0 %688
    %v690 = vsel %vm569, %v684, -inf
    %691 = vmax.xlane.f32.xlu0 %v690
    %v692 = vpop.xlane.xlu0 %691
    %v693 = vsub.f32 %v681, %v689
    %v694 = vsub.f32 %v684, %v692
    %v695 = vmul.f32 %v693, 1.442695
    %v696 = vpow.pop %v695
    %v697 = vmul.f32 %v694, 1.442695
    %v698 = vpow.pop %v697
    %v699 = vsel %vm569, %v696, 0.0
    %700 = vadd.xlane.f32.xlu0 %v699
    %v701 = vpop.xlane.xlu0 %700
    %v702 = vsel %vm569, %v698, 0.0
    %703 = vadd.xlane.f32.xlu0 %v702
    %v704 = vpop.xlane.xlu0 %703
    %v705 = vrcp.pop %v701
    %v706 = vrcp.pop %v704
    %v707 = vmul.f32 %v696, %v705
    %v708 = vmul.f32 %v698, %v706
    %v709 = vpack.c.bf16 %v708, %v707
    %v710 = vpack.c.bf16 %v516, %v513
    %v712 = vsel %vm569, %v709, 0
    %714 = vmatprep.subr.bf16.mxu0 0
    %715 = vmatpush1.bf16.msra.mxu0 0
    %716 = vmatprep.subr.bf16.mxu0 0
    %717 = vmatpush1.bf16.msra.mxu0 0
    %718 = vmatprep.subr.bf16.mxu0 0
    %719 = vmatpush1.bf16.msra.mxu0 0
    %720 = vmatprep.subr.bf16.mxu0 0
    %721 = vmatpush1.bf16.msra.mxu0 0
    %722 = vmatprep.subr.bf16.mxu0 0
    %723 = vmatpush1.bf16.msra.mxu0 0
    %724 = vmatprep.subr.bf16.mxu0 0
    %725 = vmatpush1.bf16.msra.mxu0 0
    %726 = vmatprep.subr.bf16.mxu0 0
    %727 = vmatpush1.bf16.msra.mxu0 0
    %728 = vmatprep.subr.bf16.mxu0 0
    %729 = vmatpush1.bf16.msra.mxu0 %v710
    %730 = vmatprep.subr.bf16.mxu0 0
    %731 = vmatpush2.bf16.msra.mxu0 0
    %732 = vmatprep.subr.bf16.mxu0 0
    %733 = vmatpush2.bf16.msra.mxu0 0
    %734 = vmatprep.subr.bf16.mxu0 0
    %735 = vmatpush2.bf16.msra.mxu0 0
    %736 = vmatprep.subr.bf16.mxu0 0
    %737 = vmatpush2.bf16.msra.mxu0 0
    %738 = vmatprep.subr.bf16.mxu0 0
    %739 = vmatpush2.bf16.msra.mxu0 0
    %740 = vmatprep.subr.bf16.mxu0 0
    %741 = vmatpush2.bf16.msra.mxu0 0
    %742 = vmatprep.subr.bf16.mxu0 0
    %743 = vmatpush2.bf16.msra.mxu0 0
    %744 = vmatprep.subr.bf16.mxu0 0
    %745 = vmatpush2.bf16.msra.mxu0 0
    %746 = vmatprep.mubr.bf16.mxu0 0
    %747 = vmatmul.mubr.bf16.gmra.mxu0 %v712
    %v748 = vpop.f32.mrf.mxu0
    %v749 = vadd.f32 0.0, %v748
    %v750 = vpop.f32.mrf.mxu0
    %v751 = vpop.f32.mrf.mxu0
    %v752 = vadd.f32 0.0, %v751
    %v753 = vpop.f32.mrf.mxu0
    %754 = vdwg.mxu0
    %v755 = vld [vmem:[%s41] sm:$0xf]
    %v756 = vld [vmem:[%s41 + $0x4] sm:$0x3]
    %v757 = vpack.c.bf16 %v635, %v632
    %v758 = vpack.c.bf16 %v752, %v749
    %s759 = scalar_lea.vmem %s43, 24
    %v760 = vld [vmem:[%s759] sm:$0xf]
    %v761 = vld [vmem:[%s759 + $0x4] sm:$0xf]
    %v762 = vld [vmem:[%s759 + $0x8] sm:$0xf]
    %v763 = vld [vmem:[%s759 + $0xc] sm:$0xf]
    %v764 = vld [vmem:[%s759 + $0x10] sm:$0xf]
    %v765 = vld [vmem:[%s759 + $0x14] sm:$0xf]
    %s766 = scalar_lea.vmem %s15, 1
    %v767 = vld [vmem:[%s766] sm:$0x1]
    %v769 = vlaneseq
    %v770 = vshrl.u32 %v769, 7
    %v771 = vsub.s32 0, %v770
    %v772 = vrot.slane %v767, %v771
    %v780 = vunpack.c.l.b16 %v760
    %v781 = vunpack.c.l.b16 %v761
    %v782 = vunpack.c.l.b16 %v762
    %v783 = vunpack.c.l.b16 %v763
    %v784 = vunpack.c.l.b16 %v764
    %v785 = vunpack.c.l.b16 %v765
    %v786 = vpack.c.b16 %v781, %v780
    %v787 = vpack.c.b16 %v783, %v782
    %v788 = vpack.c.b16 %v785, %v784
    %792 = vmatprep.subr.bf16.mxu0 0
    %793 = vmatpush1.bf16.msra.mxu0 0
    %794 = vmatprep.subr.bf16.mxu0 0
    %795 = vmatpush1.bf16.msra.mxu0 0
    %796 = vmatprep.subr.bf16.mxu0 0
    %797 = vmatpush1.bf16.msra.mxu0 0
    %798 = vmatprep.subr.bf16.mxu0 0
    %799 = vmatpush1.bf16.msra.mxu0 0
    %800 = vmatprep.subr.bf16.mxu0 0
    %801 = vmatpush1.bf16.msra.mxu0 0
    %802 = vmatprep.subr.bf16.mxu0 0
    %803 = vmatpush1.bf16.msra.mxu0 %v788
    %804 = vmatprep.subr.bf16.mxu0 0
    %805 = vmatpush1.bf16.msra.mxu0 %v787
    %806 = vmatprep.subr.bf16.mxu0 0
    %807 = vmatpush1.bf16.msra.mxu0 %v786
    %808 = vmatprep.subr.bf16.mxu0 0
    %809 = vmatpush2.bf16.msra.mxu0 0
    %810 = vmatprep.subr.bf16.mxu0 0
    %811 = vmatpush2.bf16.msra.mxu0 0
    %812 = vmatprep.subr.bf16.mxu0 0
    %813 = vmatpush2.bf16.msra.mxu0 0
    %814 = vmatprep.subr.bf16.mxu0 0
    %815 = vmatpush2.bf16.msra.mxu0 0
    %816 = vmatprep.subr.bf16.mxu0 0
    %817 = vmatpush2.bf16.msra.mxu0 0
    %818 = vmatprep.subr.bf16.mxu0 0
    %819 = vmatpush2.bf16.msra.mxu0 0
    %820 = vmatprep.subr.bf16.mxu0 0
    %821 = vmatpush2.bf16.msra.mxu0 0
    %822 = vmatprep.subr.bf16.mxu0 0
    %823 = vmatpush2.bf16.msra.mxu0 0
    %824 = vmatprep.mubr.bf16.mxu0 0
    %825 = vmatmul.mubr.bf16.gmra.mxu0 %v305
    %v826 = vpop.f32.mrf.mxu0
    %v827 = vadd.f32 %v772, %v826
    %v828 = vpop.f32.mrf.mxu0
    %v829 = vpop.f32.mrf.mxu0
    %v830 = vadd.f32 %v772, %v829
    %v831 = vpop.f32.mrf.mxu0
    %832 = vmatprep.mubr.bf16.mxu0 0
    %833 = vmatmul.mubr.bf16.gmra.mxu0 %v308
    %v834 = vpop.f32.mrf.mxu0
    %v835 = vadd.f32 %v772, %v834
    %v836 = vpop.f32.mrf.mxu0
    %v837 = vpop.f32.mrf.mxu0
    %v838 = vadd.f32 %v772, %v837
    %v839 = vpop.f32.mrf.mxu0
    %840 = vdwg.mxu0
    %s841 = scalar_lea.vmem %s39, 24
    %v842 = vld [vmem:[%s841] sm:$0xf]
    %v843 = vld [vmem:[%s841 + $0x4] sm:$0xf]
    %v844 = vld [vmem:[%s841 + $0x8] sm:$0xf]
    %v845 = vld [vmem:[%s841 + $0xc] sm:$0xf]
    %v846 = vld [vmem:[%s841 + $0x10] sm:$0xf]
    %v847 = vld [vmem:[%s841 + $0x14] sm:$0xf]
    %s848 = scalar_lea.vmem %s11, 1
    %v849 = vld [vmem:[%s848] sm:$0x1]
    %v851 = vlaneseq
    %v852 = vshrl.u32 %v851, 7
    %v853 = vsub.s32 0, %v852
    %v854 = vrot.slane %v849, %v853
    %v862 = vunpack.c.l.b16 %v842
    %v863 = vunpack.c.l.b16 %v843
    %v864 = vunpack.c.l.b16 %v844
    %v865 = vunpack.c.l.b16 %v845
    %v866 = vunpack.c.l.b16 %v846
    %v867 = vunpack.c.l.b16 %v847
    %v868 = vpack.c.b16 %v863, %v862
    %v869 = vpack.c.b16 %v865, %v864
    %v870 = vpack.c.b16 %v867, %v866
    %874 = vmatprep.subr.bf16.mxu0 0
    %875 = vmatpush1.bf16.msra.mxu0 0
    %876 = vmatprep.subr.bf16.mxu0 0
    %877 = vmatpush1.bf16.msra.mxu0 0
    %878 = vmatprep.subr.bf16.mxu0 0
    %879 = vmatpush1.bf16.msra.mxu0 0
    %880 = vmatprep.subr.bf16.mxu0 0
    %881 = vmatpush1.bf16.msra.mxu0 0
    %882 = vmatprep.subr.bf16.mxu0 0
    %883 = vmatpush1.bf16.msra.mxu0 0
    %884 = vmatprep.subr.bf16.mxu0 0
    %885 = vmatpush1.bf16.msra.mxu0 %v870
    %886 = vmatprep.subr.bf16.mxu0 0
    %887 = vmatpush1.bf16.msra.mxu0 %v869
    %888 = vmatprep.subr.bf16.mxu0 0
    %889 = vmatpush1.bf16.msra.mxu0 %v868
    %890 = vmatprep.subr.bf16.mxu0 0
    %891 = vmatpush2.bf16.msra.mxu0 0
    %892 = vmatprep.subr.bf16.mxu0 0
    %893 = vmatpush2.bf16.msra.mxu0 0
    %894 = vmatprep.subr.bf16.mxu0 0
    %895 = vmatpush2.bf16.msra.mxu0 0
    %896 = vmatprep.subr.bf16.mxu0 0
    %897 = vmatpush2.bf16.msra.mxu0 0
    %898 = vmatprep.subr.bf16.mxu0 0
    %899 = vmatpush2.bf16.msra.mxu0 0
    %900 = vmatprep.subr.bf16.mxu0 0
    %901 = vmatpush2.bf16.msra.mxu0 0
    %902 = vmatprep.subr.bf16.mxu0 0
    %903 = vmatpush2.bf16.msra.mxu0 0
    %904 = vmatprep.subr.bf16.mxu0 0
    %905 = vmatpush2.bf16.msra.mxu0 0
    %906 = vmatprep.mubr.bf16.mxu0 0
    %907 = vmatmul.mubr.bf16.gmra.mxu0 %v305
    %v908 = vpop.f32.mrf.mxu0
    %v909 = vadd.f32 %v854, %v908
    %v910 = vpop.f32.mrf.mxu0
    %v911 = vpop.f32.mrf.mxu0
    %v912 = vadd.f32 %v854, %v911
    %v913 = vpop.f32.mrf.mxu0
    %914 = vmatprep.mubr.bf16.mxu0 0
    %915 = vmatmul.mubr.bf16.gmra.mxu0 %v308
    %v916 = vpop.f32.mrf.mxu0
    %v917 = vadd.f32 %v854, %v916
    %v918 = vpop.f32.mrf.mxu0
    %v919 = vpop.f32.mrf.mxu0
    %v920 = vadd.f32 %v854, %v919
    %v921 = vpop.f32.mrf.mxu0
    %922 = vdwg.mxu0
    %s923 = scalar_lea.vmem %s45, 24
    %v924 = vld [vmem:[%s923] sm:$0xf]
    %v925 = vld [vmem:[%s923 + $0x4] sm:$0xf]
    %v926 = vld [vmem:[%s923 + $0x8] sm:$0xf]
    %v927 = vld [vmem:[%s923 + $0xc] sm:$0xf]
    %v928 = vld [vmem:[%s923 + $0x10] sm:$0xf]
    %v929 = vld [vmem:[%s923 + $0x14] sm:$0xf]
    %s930 = scalar_lea.vmem %s17, 1
    %v931 = vld [vmem:[%s930] sm:$0x1]
    %v933 = vlaneseq
    %v934 = vshrl.u32 %v933, 7
    %v935 = vsub.s32 0, %v934
    %v936 = vrot.slane %v931, %v935
    %v944 = vunpack.c.l.b16 %v924
    %v945 = vunpack.c.l.b16 %v925
    %v946 = vunpack.c.l.b16 %v926
    %v947 = vunpack.c.l.b16 %v927
    %v948 = vunpack.c.l.b16 %v928
    %v949 = vunpack.c.l.b16 %v929
    %v950 = vpack.c.b16 %v945, %v944
    %v951 = vpack.c.b16 %v947, %v946
    %v952 = vpack.c.b16 %v949, %v948
    %956 = vmatprep.subr.bf16.mxu0 0
    %957 = vmatpush1.bf16.msra.mxu0 0
    %958 = vmatprep.subr.bf16.mxu0 0
    %959 = vmatpush1.bf16.msra.mxu0 0
    %960 = vmatprep.subr.bf16.mxu0 0
    %961 = vmatpush1.bf16.msra.mxu0 0
    %962 = vmatprep.subr.bf16.mxu0 0
    %963 = vmatpush1.bf16.msra.mxu0 0
    %964 = vmatprep.subr.bf16.mxu0 0
    %965 = vmatpush1.bf16.msra.mxu0 0
    %966 = vmatprep.subr.bf16.mxu0 0
    %967 = vmatpush1.bf16.msra.mxu0 %v952
    %968 = vmatprep.subr.bf16.mxu0 0
    %969 = vmatpush1.bf16.msra.mxu0 %v951
    %970 = vmatprep.subr.bf16.mxu0 0
    %971 = vmatpush1.bf16.msra.mxu0 %v950
    %972 = vmatprep.subr.bf16.mxu0 0
    %973 = vmatpush2.bf16.msra.mxu0 0
    %974 = vmatprep.subr.bf16.mxu0 0
    %975 = vmatpush2.bf16.msra.mxu0 0
    %976 = vmatprep.subr.bf16.mxu0 0
    %977 = vmatpush2.bf16.msra.mxu0 0
    %978 = vmatprep.subr.bf16.mxu0 0
    %979 = vmatpush2.bf16.msra.mxu0 0
    %980 = vmatprep.subr.bf16.mxu0 0
    %981 = vmatpush2.bf16.msra.mxu0 0
    %982 = vmatprep.subr.bf16.mxu0 0
    %983 = vmatpush2.bf16.msra.mxu0 0
    %984 = vmatprep.subr.bf16.mxu0 0
    %985 = vmatpush2.bf16.msra.mxu0 0
    %986 = vmatprep.subr.bf16.mxu0 0
    %987 = vmatpush2.bf16.msra.mxu0 0
    %988 = vmatprep.mubr.bf16.mxu0 0
    %989 = vmatmul.mubr.bf16.gmra.mxu0 %v305
    %v990 = vpop.f32.mrf.mxu0
    %v991 = vadd.f32 %v936, %v990
    %v992 = vpop.f32.mrf.mxu0
    %v993 = vpop.f32.mrf.mxu0
    %v994 = vadd.f32 %v936, %v993
    %v995 = vpop.f32.mrf.mxu0
    %996 = vmatprep.mubr.bf16.mxu0 0
    %997 = vmatmul.mubr.bf16.gmra.mxu0 %v308
    %v998 = vpop.f32.mrf.mxu0
    %v999 = vadd.f32 %v936, %v998
    %v1000 = vpop.f32.mrf.mxu0
    %v1001 = vpop.f32.mrf.mxu0
    %v1002 = vadd.f32 %v936, %v1001
    %v1003 = vpop.f32.mrf.mxu0
    %1004 = vdwg.mxu0
    %v1005 = vpack.c.bf16 %v830, %v827
    %v1006 = vpack.c.bf16 %v912, %v909
    %v1008 = vsel %vm521, %v1005, 0
    %v1011 = vsel %vm521, %v1006, 0
    %1013 = vmatprep.subr.bf16.mxu0 0
    %1014 = vmatpush1.bf16.xpose.msra.mxu0 0
    %1015 = vmatprep.subr.bf16.mxu0 0
    %1016 = vmatpush1.bf16.xpose.msra.mxu0 0
    %1017 = vmatprep.subr.bf16.mxu0 0
    %1018 = vmatpush1.bf16.xpose.msra.mxu0 0
    %1019 = vmatprep.subr.bf16.mxu0 0
    %1020 = vmatpush1.bf16.xpose.msra.mxu0 0
    %1021 = vmatprep.subr.bf16.mxu0 0
    %1022 = vmatpush1.bf16.xpose.msra.mxu0 0
    %1023 = vmatprep.subr.bf16.mxu0 0
    %1024 = vmatpush1.bf16.xpose.msra.mxu0 0
    %1025 = vmatprep.subr.bf16.mxu0 0
    %1026 = vmatpush1.bf16.xpose.msra.mxu0 0
    %1027 = vmatprep.subr.bf16.mxu0 0
    %1028 = vmatpush1.bf16.xpose.msra.mxu0 %v1011
    %1029 = vmatprep.subr.bf16.mxu0 0
    %1030 = vmatpush2.bf16.xpose.msra.mxu0 0
    %1031 = vmatprep.subr.bf16.mxu0 0
    %1032 = vmatpush2.bf16.xpose.msra.mxu0 0
    %1033 = vmatprep.subr.bf16.mxu0 0
    %1034 = vmatpush2.bf16.xpose.msra.mxu0 0
    %1035 = vmatprep.subr.bf16.mxu0 0
    %1036 = vmatpush2.bf16.xpose.msra.mxu0 0
    %1037 = vmatprep.subr.bf16.mxu0 0
    %1038 = vmatpush2.bf16.xpose.msra.mxu0 0
    %1039 = vmatprep.subr.bf16.mxu0 0
    %1040 = vmatpush2.bf16.xpose.msra.mxu0 0
    %1041 = vmatprep.subr.bf16.mxu0 0
    %1042 = vmatpush2.bf16.xpose.msra.mxu0 0
    %1043 = vmatprep.subr.bf16.mxu0 0
    %1044 = vmatpush2.bf16.xpose.msra.mxu0 0
    %1045 = vmatprep.mubr.bf16.mxu0 0
    %1046 = vmatmul.mubr.bf16.gmra.mxu0 %v1008
    %v1047 = vpop.f32.mrf.mxu0
    %v1048 = vadd.f32 0.0, %v1047
    %v1049 = vpop.f32.mrf.mxu0
    %v1050 = vpop.f32.mrf.mxu0
    %v1051 = vadd.f32 0.0, %v1050
    %v1052 = vpop.f32.mrf.mxu0
    %1053 = vdwg.mxu0
    %v1054 = vsel %vm569, %v1048, -inf
    %1055 = vmax.xlane.f32.xlu0 %v1054
    %v1056 = vpop.xlane.xlu0 %1055
    %v1057 = vsel %vm569, %v1051, -inf
    %1058 = vmax.xlane.f32.xlu0 %v1057
    %v1059 = vpop.xlane.xlu0 %1058
    %v1060 = vsub.f32 %v1048, %v1056
    %v1061 = vsub.f32 %v1051, %v1059
    %v1062 = vmul.f32 %v1060, 1.442695
    %v1063 = vpow.pop %v1062
    %v1064 = vmul.f32 %v1061, 1.442695
    %v1065 = vpow.pop %v1064
    %v1066 = vsel %vm569, %v1063, 0.0
    %1067 = vadd.xlane.f32.xlu0 %v1066
    %v1068 = vpop.xlane.xlu0 %1067
    %v1069 = vsel %vm569, %v1065, 0.0
    %1070 = vadd.xlane.f32.xlu0 %v1069
    %v1071 = vpop.xlane.xlu0 %1070
    %v1072 = vrcp.pop %v1068
    %v1073 = vrcp.pop %v1071
    %v1074 = vmul.f32 %v1063, %v1072
    %v1075 = vmul.f32 %v1065, %v1073
    %v1076 = vpack.c.bf16 %v1075, %v1074
    %v1077 = vpack.c.bf16 %v994, %v991
    %v1079 = vsel %vm569, %v1076, 0
    %1081 = vmatprep.subr.bf16.mxu0 0
    %1082 = vmatpush1.bf16.msra.mxu0 0
    %1083 = vmatprep.subr.bf16.mxu0 0
    %1084 = vmatpush1.bf16.msra.mxu0 0
    %1085 = vmatprep.subr.bf16.mxu0 0
    %1086 = vmatpush1.bf16.msra.mxu0 0
    %1087 = vmatprep.subr.bf16.mxu0 0
    %1088 = vmatpush1.bf16.msra.mxu0 0
    %1089 = vmatprep.subr.bf16.mxu0 0
    %1090 = vmatpush1.bf16.msra.mxu0 0
    %1091 = vmatprep.subr.bf16.mxu0 0
    %1092 = vmatpush1.bf16.msra.mxu0 0
    %1093 = vmatprep.subr.bf16.mxu0 0
    %1094 = vmatpush1.bf16.msra.mxu0 0
    %1095 = vmatprep.subr.bf16.mxu0 0
    %1096 = vmatpush1.bf16.msra.mxu0 %v1077
    %1097 = vmatprep.subr.bf16.mxu0 0
    %1098 = vmatpush2.bf16.msra.mxu0 0
    %1099 = vmatprep.subr.bf16.mxu0 0
    %1100 = vmatpush2.bf16.msra.mxu0 0
    %1101 = vmatprep.subr.bf16.mxu0 0
    %1102 = vmatpush2.bf16.msra.mxu0 0
    %1103 = vmatprep.subr.bf16.mxu0 0
    %1104 = vmatpush2.bf16.msra.mxu0 0
    %1105 = vmatprep.subr.bf16.mxu0 0
    %1106 = vmatpush2.bf16.msra.mxu0 0
    %1107 = vmatprep.subr.bf16.mxu0 0
    %1108 = vmatpush2.bf16.msra.mxu0 0
    %1109 = vmatprep.subr.bf16.mxu0 0
    %1110 = vmatpush2.bf16.msra.mxu0 0
    %1111 = vmatprep.subr.bf16.mxu0 0
    %1112 = vmatpush2.bf16.msra.mxu0 0
    %1113 = vmatprep.mubr.bf16.mxu0 0
    %1114 = vmatmul.mubr.bf16.gmra.mxu0 %v1079
    %v1115 = vpop.f32.mrf.mxu0
    %v1116 = vadd.f32 0.0, %v1115
    %v1117 = vpop.f32.mrf.mxu0
    %v1118 = vpop.f32.mrf.mxu0
    %v1119 = vadd.f32 0.0, %v1118
    %v1120 = vpop.f32.mrf.mxu0
    %1121 = vdwg.mxu0
    %v1122 = vpack.c.bf16 %v838, %v835
    %v1123 = vpack.c.bf16 %v920, %v917
    %v1125 = vsel %vm521, %v1122, 0
    %v1128 = vsel %vm521, %v1123, 0
    %1130 = vmatprep.subr.bf16.mxu0 0
    %1131 = vmatpush1.bf16.xpose.msra.mxu0 0
    %1132 = vmatprep.subr.bf16.mxu0 0
    %1133 = vmatpush1.bf16.xpose.msra.mxu0 0
    %1134 = vmatprep.subr.bf16.mxu0 0
    %1135 = vmatpush1.bf16.xpose.msra.mxu0 0
    %1136 = vmatprep.subr.bf16.mxu0 0
    %1137 = vmatpush1.bf16.xpose.msra.mxu0 0
    %1138 = vmatprep.subr.bf16.mxu0 0
    %1139 = vmatpush1.bf16.xpose.msra.mxu0 0
    %1140 = vmatprep.subr.bf16.mxu0 0
    %1141 = vmatpush1.bf16.xpose.msra.mxu0 0
    %1142 = vmatprep.subr.bf16.mxu0 0
    %1143 = vmatpush1.bf16.xpose.msra.mxu0 0
    %1144 = vmatprep.subr.bf16.mxu0 0
    %1145 = vmatpush1.bf16.xpose.msra.mxu0 %v1128
    %1146 = vmatprep.subr.bf16.mxu0 0
    %1147 = vmatpush2.bf16.xpose.msra.mxu0 0
    %1148 = vmatprep.subr.bf16.mxu0 0
    %1149 = vmatpush2.bf16.xpose.msra.mxu0 0
    %1150 = vmatprep.subr.bf16.mxu0 0
    %1151 = vmatpush2.bf16.xpose.msra.mxu0 0
    %1152 = vmatprep.subr.bf16.mxu0 0
    %1153 = vmatpush2.bf16.xpose.msra.mxu0 0
    %1154 = vmatprep.subr.bf16.mxu0 0
    %1155 = vmatpush2.bf16.xpose.msra.mxu0 0
    %1156 = vmatprep.subr.bf16.mxu0 0
    %1157 = vmatpush2.bf16.xpose.msra.mxu0 0
    %1158 = vmatprep.subr.bf16.mxu0 0
    %1159 = vmatpush2.bf16.xpose.msra.mxu0 0
    %1160 = vmatprep.subr.bf16.mxu0 0
    %1161 = vmatpush2.bf16.xpose.msra.mxu0 0
    %1162 = vmatprep.mubr.bf16.mxu0 0
    %1163 = vmatmul.mubr.bf16.gmra.mxu0 %v1125
    %v1164 = vpop.f32.mrf.mxu0
    %v1165 = vadd.f32 0.0, %v1164
    %v1166 = vpop.f32.mrf.mxu0
    %v1167 = vpop.f32.mrf.mxu0
    %v1168 = vadd.f32 0.0, %v1167
    %v1169 = vpop.f32.mrf.mxu0
    %1170 = vdwg.mxu0
    %v1171 = vsel %vm569, %v1165, -inf
    %1172 = vmax.xlane.f32.xlu0 %v1171
    %v1173 = vpop.xlane.xlu0 %1172
    %v1174 = vsel %vm569, %v1168, -inf
    %1175 = vmax.xlane.f32.xlu0 %v1174
    %v1176 = vpop.xlane.xlu0 %1175
    %v1177 = vsub.f32 %v1165, %v1173
    %v1178 = vsub.f32 %v1168, %v1176
    %v1179 = vmul.f32 %v1177, 1.442695
    %v1180 = vpow.pop %v1179
    %v1181 = vmul.f32 %v1178, 1.442695
    %v1182 = vpow.pop %v1181
    %v1183 = vsel %vm569, %v1180, 0.0
    %1184 = vadd.xlane.f32.xlu0 %v1183
    %v1185 = vpop.xlane.xlu0 %1184
    %v1186 = vsel %vm569, %v1182, 0.0
    %1187 = vadd.xlane.f32.xlu0 %v1186
    %v1188 = vpop.xlane.xlu0 %1187
    %v1189 = vrcp.pop %v1185
    %v1190 = vrcp.pop %v1188
    %v1191 = vmul.f32 %v1180, %v1189
    %v1192 = vmul.f32 %v1182, %v1190
    %v1193 = vpack.c.bf16 %v1192, %v1191
    %v1194 = vpack.c.bf16 %v1002, %v999
    %v1196 = vsel %vm569, %v1193, 0
    %1198 = vmatprep.subr.bf16.mxu0 0
    %1199 = vmatpush1.bf16.msra.mxu0 0
    %1200 = vmatprep.subr.bf16.mxu0 0
    %1201 = vmatpush1.bf16.msra.mxu0 0
    %1202 = vmatprep.subr.bf16.mxu0 0
    %1203 = vmatpush1.bf16.msra.mxu0 0
    %1204 = vmatprep.subr.bf16.mxu0 0
    %1205 = vmatpush1.bf16.msra.mxu0 0
    %1206 = vmatprep.subr.bf16.mxu0 0
    %1207 = vmatpush1.bf16.msra.mxu0 0
    %1208 = vmatprep.subr.bf16.mxu0 0
    %1209 = vmatpush1.bf16.msra.mxu0 0
    %1210 = vmatprep.subr.bf16.mxu0 0
    %1211 = vmatpush1.bf16.msra.mxu0 0
    %1212 = vmatprep.subr.bf16.mxu0 0
    %1213 = vmatpush1.bf16.msra.mxu0 %v1194
    %1214 = vmatprep.subr.bf16.mxu0 0
    %1215 = vmatpush2.bf16.msra.mxu0 0
    %1216 = vmatprep.subr.bf16.mxu0 0
    %1217 = vmatpush2.bf16.msra.mxu0 0
    %1218 = vmatprep.subr.bf16.mxu0 0
    %1219 = vmatpush2.bf16.msra.mxu0 0
    %1220 = vmatprep.subr.bf16.mxu0 0
    %1221 = vmatpush2.bf16.msra.mxu0 0
    %1222 = vmatprep.subr.bf16.mxu0 0
    %1223 = vmatpush2.bf16.msra.mxu0 0
    %1224 = vmatprep.subr.bf16.mxu0 0
    %1225 = vmatpush2.bf16.msra.mxu0 0
    %1226 = vmatprep.subr.bf16.mxu0 0
    %1227 = vmatpush2.bf16.msra.mxu0 0
    %1228 = vmatprep.subr.bf16.mxu0 0
    %1229 = vmatpush2.bf16.msra.mxu0 0
    %1230 = vmatprep.mubr.bf16.mxu0 0
    %1231 = vmatmul.mubr.bf16.gmra.mxu0 %v1196
    %v1232 = vpop.f32.mrf.mxu0
    %v1233 = vadd.f32 0.0, %v1232
    %v1234 = vpop.f32.mrf.mxu0
    %v1235 = vpop.f32.mrf.mxu0
    %v1236 = vadd.f32 0.0, %v1235
    %v1237 = vpop.f32.mrf.mxu0
    %1238 = vdwg.mxu0
    %s1239 = scalar_lea.vmem %s41, 8
    %v1240 = vld [vmem:[%s1239] sm:$0xf]
    %v1241 = vld [vmem:[%s1239 + $0x4] sm:$0x3]
    %v1242 = vpack.c.bf16 %v1119, %v1116
    %v1243 = vpack.c.bf16 %v1236, %v1233
    %v1246 = vunpack.c.l.b16 %v1240
    %v1247 = vunpack.c.l.b16 %v1241
    %v1248 = vpack.c.b16 %v1247, %v1246
    %v1250 = vsel %vm521, %v1242, 0
    %v1253 = vsel %vm521, %v1243, 0
    %vm1255 = vcmask 1045504
    %v1257 = vsel %vm1255, %v1248, 0
    %1259 = vmatprep.subr.bf16.mxu0 0
    %1260 = vmatpush1.bf16.msra.mxu0 0
    %1261 = vmatprep.subr.bf16.mxu0 0
    %1262 = vmatpush1.bf16.msra.mxu0 0
    %1263 = vmatprep.subr.bf16.mxu0 0
    %1264 = vmatpush1.bf16.msra.mxu0 0
    %1265 = vmatprep.subr.bf16.mxu0 0
    %1266 = vmatpush1.bf16.msra.mxu0 0
    %1267 = vmatprep.subr.bf16.mxu0 0
    %1268 = vmatpush1.bf16.msra.mxu0 0
    %1269 = vmatprep.subr.bf16.mxu0 0
    %1270 = vmatpush1.bf16.msra.mxu0 0
    %1271 = vmatprep.subr.bf16.mxu0 0
    %1272 = vmatpush1.bf16.msra.mxu0 0
    %1273 = vmatprep.subr.bf16.mxu0 0
    %1274 = vmatpush1.bf16.msra.mxu0 %v1257
    %1275 = vmatprep.subr.bf16.mxu0 0
    %1276 = vmatpush2.bf16.msra.mxu0 0
    %1277 = vmatprep.subr.bf16.mxu0 0
    %1278 = vmatpush2.bf16.msra.mxu0 0
    %1279 = vmatprep.subr.bf16.mxu0 0
    %1280 = vmatpush2.bf16.msra.mxu0 0
    %1281 = vmatprep.subr.bf16.mxu0 0
    %1282 = vmatpush2.bf16.msra.mxu0 0
    %1283 = vmatprep.subr.bf16.mxu0 0
    %1284 = vmatpush2.bf16.msra.mxu0 0
    %1285 = vmatprep.subr.bf16.mxu0 0
    %1286 = vmatpush2.bf16.msra.mxu0 0
    %1287 = vmatprep.subr.bf16.mxu0 0
    %1288 = vmatpush2.bf16.msra.mxu0 0
    %1289 = vmatprep.subr.bf16.mxu0 0
    %1290 = vmatpush2.bf16.msra.mxu0 0
    %1291 = vmatprep.mubr.bf16.mxu0 0
    %1292 = vmatmul.mubr.bf16.gmra.mxu0 %v1250
    %v1293 = vpop.f32.mrf.mxu0
    %v1294 = vadd.f32 0.0, %v1293
    %v1295 = vpop.f32.mrf.mxu0
    %v1296 = vpop.f32.mrf.mxu0
    %v1297 = vadd.f32 0.0, %v1296
    %v1298 = vpop.f32.mrf.mxu0
    %1299 = vmatprep.mubr.bf16.mxu0 0
    %1300 = vmatmul.mubr.bf16.gmra.mxu0 %v1253
    %v1301 = vpop.f32.mrf.mxu0
    %v1302 = vadd.f32 0.0, %v1301
    %v1303 = vpop.f32.mrf.mxu0
    %v1304 = vpop.f32.mrf.mxu0
    %v1305 = vadd.f32 0.0, %v1304
    %v1306 = vpop.f32.mrf.mxu0
    %1307 = vdwg.mxu0
    %v1310 = vunpack.c.l.b16 %v755
    %v1311 = vunpack.c.l.b16 %v756
    %v1312 = vpack.c.b16 %v1311, %v1310
    %v1314 = vsel %vm521, %v757, 0
    %v1317 = vsel %vm521, %v758, 0
    %v1320 = vsel %vm1255, %v1312, 0
    %1322 = vmatprep.subr.bf16.mxu0 0
    %1323 = vmatpush1.bf16.msra.mxu0 0
    %1324 = vmatprep.subr.bf16.mxu0 0
    %1325 = vmatpush1.bf16.msra.mxu0 0
    %1326 = vmatprep.subr.bf16.mxu0 0
    %1327 = vmatpush1.bf16.msra.mxu0 0
    %1328 = vmatprep.subr.bf16.mxu0 0
    %1329 = vmatpush1.bf16.msra.mxu0 0
    %1330 = vmatprep.subr.bf16.mxu0 0
    %1331 = vmatpush1.bf16.msra.mxu0 0
    %1332 = vmatprep.subr.bf16.mxu0 0
    %1333 = vmatpush1.bf16.msra.mxu0 0
    %1334 = vmatprep.subr.bf16.mxu0 0
    %1335 = vmatpush1.bf16.msra.mxu0 0
    %1336 = vmatprep.subr.bf16.mxu0 0
    %1337 = vmatpush1.bf16.msra.mxu0 %v1320
    %1338 = vmatprep.subr.bf16.mxu0 0
    %1339 = vmatpush2.bf16.msra.mxu0 0
    %1340 = vmatprep.subr.bf16.mxu0 0
    %1341 = vmatpush2.bf16.msra.mxu0 0
    %1342 = vmatprep.subr.bf16.mxu0 0
    %1343 = vmatpush2.bf16.msra.mxu0 0
    %1344 = vmatprep.subr.bf16.mxu0 0
    %1345 = vmatpush2.bf16.msra.mxu0 0
    %1346 = vmatprep.subr.bf16.mxu0 0
    %1347 = vmatpush2.bf16.msra.mxu0 0
    %1348 = vmatprep.subr.bf16.mxu0 0
    %1349 = vmatpush2.bf16.msra.mxu0 0
    %1350 = vmatprep.subr.bf16.mxu0 0
    %1351 = vmatpush2.bf16.msra.mxu0 0
    %1352 = vmatprep.subr.bf16.mxu0 0
    %1353 = vmatpush2.bf16.msra.mxu0 0
    %1354 = vmatprep.mubr.bf16.mxu0 0
    %1355 = vmatmul.mubr.bf16.gmra.mxu0 %v1314
    %v1356 = vpop.f32.mrf.mxu0
    %v1357 = vadd.f32 %v1294, %v1356
    %v1358 = vpop.f32.mrf.mxu0
    %v1359 = vpop.f32.mrf.mxu0
    %v1360 = vadd.f32 %v1297, %v1359
    %v1361 = vpop.f32.mrf.mxu0
    %1362 = vmatprep.mubr.bf16.mxu0 0
    %1363 = vmatmul.mubr.bf16.gmra.mxu0 %v1317
    %v1364 = vpop.f32.mrf.mxu0
    %v1365 = vadd.f32 %v1302, %v1364
    %v1366 = vpop.f32.mrf.mxu0
    %v1367 = vpop.f32.mrf.mxu0
    %v1368 = vadd.f32 %v1305, %v1367
    %v1369 = vpop.f32.mrf.mxu0
    %1370 = vdwg.mxu0
    %s1371 = scalar_lea.vmem %s43, 48
    %v1372 = vld [vmem:[%s1371] sm:$0xf]
    %v1373 = vld [vmem:[%s1371 + $0x4] sm:$0xf]
    %v1374 = vld [vmem:[%s1371 + $0x8] sm:$0xf]
    %v1375 = vld [vmem:[%s1371 + $0xc] sm:$0xf]
    %v1376 = vld [vmem:[%s1371 + $0x10] sm:$0xf]
    %v1377 = vld [vmem:[%s1371 + $0x14] sm:$0xf]
    %s1378 = scalar_lea.vmem %s15, 2
    %v1379 = vld [vmem:[%s1378] sm:$0x1]
    %v1381 = vlaneseq
    %v1382 = vshrl.u32 %v1381, 7
    %v1383 = vsub.s32 0, %v1382
    %v1384 = vrot.slane %v1379, %v1383
    %v1392 = vunpack.c.l.b16 %v1372
    %v1393 = vunpack.c.l.b16 %v1373
    %v1394 = vunpack.c.l.b16 %v1374
    %v1395 = vunpack.c.l.b16 %v1375
    %v1396 = vunpack.c.l.b16 %v1376
    %v1397 = vunpack.c.l.b16 %v1377
    %v1398 = vpack.c.b16 %v1393, %v1392
    %v1399 = vpack.c.b16 %v1395, %v1394
    %v1400 = vpack.c.b16 %v1397, %v1396
    %1404 = vmatprep.subr.bf16.mxu0 0
    %1405 = vmatpush1.bf16.msra.mxu0 0
    %1406 = vmatprep.subr.bf16.mxu0 0
    %1407 = vmatpush1.bf16.msra.mxu0 0
    %1408 = vmatprep.subr.bf16.mxu0 0
    %1409 = vmatpush1.bf16.msra.mxu0 0
    %1410 = vmatprep.subr.bf16.mxu0 0
    %1411 = vmatpush1.bf16.msra.mxu0 0
    %1412 = vmatprep.subr.bf16.mxu0 0
    %1413 = vmatpush1.bf16.msra.mxu0 0
    %1414 = vmatprep.subr.bf16.mxu0 0
    %1415 = vmatpush1.bf16.msra.mxu0 %v1400
    %1416 = vmatprep.subr.bf16.mxu0 0
    %1417 = vmatpush1.bf16.msra.mxu0 %v1399
    %1418 = vmatprep.subr.bf16.mxu0 0
    %1419 = vmatpush1.bf16.msra.mxu0 %v1398
    %1420 = vmatprep.subr.bf16.mxu0 0
    %1421 = vmatpush2.bf16.msra.mxu0 0
    %1422 = vmatprep.subr.bf16.mxu0 0
    %1423 = vmatpush2.bf16.msra.mxu0 0
    %1424 = vmatprep.subr.bf16.mxu0 0
    %1425 = vmatpush2.bf16.msra.mxu0 0
    %1426 = vmatprep.subr.bf16.mxu0 0
    %1427 = vmatpush2.bf16.msra.mxu0 0
    %1428 = vmatprep.subr.bf16.mxu0 0
    %1429 = vmatpush2.bf16.msra.mxu0 0
    %1430 = vmatprep.subr.bf16.mxu0 0
    %1431 = vmatpush2.bf16.msra.mxu0 0
    %1432 = vmatprep.subr.bf16.mxu0 0
    %1433 = vmatpush2.bf16.msra.mxu0 0
    %1434 = vmatprep.subr.bf16.mxu0 0
    %1435 = vmatpush2.bf16.msra.mxu0 0
    %1436 = vmatprep.mubr.bf16.mxu0 0
    %1437 = vmatmul.mubr.bf16.gmra.mxu0 %v305
    %v1438 = vpop.f32.mrf.mxu0
    %v1439 = vadd.f32 %v1384, %v1438
    %v1440 = vpop.f32.mrf.mxu0
    %v1441 = vpop.f32.mrf.mxu0
    %v1442 = vadd.f32 %v1384, %v1441
    %v1443 = vpop.f32.mrf.mxu0
    %1444 = vmatprep.mubr.bf16.mxu0 0
    %1445 = vmatmul.mubr.bf16.gmra.mxu0 %v308
    %v1446 = vpop.f32.mrf.mxu0
    %v1447 = vadd.f32 %v1384, %v1446
    %v1448 = vpop.f32.mrf.mxu0
    %v1449 = vpop.f32.mrf.mxu0
    %v1450 = vadd.f32 %v1384, %v1449
    %v1451 = vpop.f32.mrf.mxu0
    %1452 = vdwg.mxu0
    %s1453 = scalar_lea.vmem %s39, 48
    %v1454 = vld [vmem:[%s1453] sm:$0xf]
    %v1455 = vld [vmem:[%s1453 + $0x4] sm:$0xf]
    %v1456 = vld [vmem:[%s1453 + $0x8] sm:$0xf]
    %v1457 = vld [vmem:[%s1453 + $0xc] sm:$0xf]
    %v1458 = vld [vmem:[%s1453 + $0x10] sm:$0xf]
    %v1459 = vld [vmem:[%s1453 + $0x14] sm:$0xf]
    %s1460 = scalar_lea.vmem %s11, 2
    %v1461 = vld [vmem:[%s1460] sm:$0x1]
    %v1463 = vlaneseq
    %v1464 = vshrl.u32 %v1463, 7
    %v1465 = vsub.s32 0, %v1464
    %v1466 = vrot.slane %v1461, %v1465
    %v1474 = vunpack.c.l.b16 %v1454
    %v1475 = vunpack.c.l.b16 %v1455
    %v1476 = vunpack.c.l.b16 %v1456
    %v1477 = vunpack.c.l.b16 %v1457
    %v1478 = vunpack.c.l.b16 %v1458
    %v1479 = vunpack.c.l.b16 %v1459
    %v1480 = vpack.c.b16 %v1475, %v1474
    %v1481 = vpack.c.b16 %v1477, %v1476
    %v1482 = vpack.c.b16 %v1479, %v1478
    %1486 = vmatprep.subr.bf16.mxu0 0
    %1487 = vmatpush1.bf16.msra.mxu0 0
    %1488 = vmatprep.subr.bf16.mxu0 0
    %1489 = vmatpush1.bf16.msra.mxu0 0
    %1490 = vmatprep.subr.bf16.mxu0 0
    %1491 = vmatpush1.bf16.msra.mxu0 0
    %1492 = vmatprep.subr.bf16.mxu0 0
    %1493 = vmatpush1.bf16.msra.mxu0 0
    %1494 = vmatprep.subr.bf16.mxu0 0
    %1495 = vmatpush1.bf16.msra.mxu0 0
    %1496 = vmatprep.subr.bf16.mxu0 0
    %1497 = vmatpush1.bf16.msra.mxu0 %v1482
    %1498 = vmatprep.subr.bf16.mxu0 0
    %1499 = vmatpush1.bf16.msra.mxu0 %v1481
    %1500 = vmatprep.subr.bf16.mxu0 0
    %1501 = vmatpush1.bf16.msra.mxu0 %v1480
    %1502 = vmatprep.subr.bf16.mxu0 0
    %1503 = vmatpush2.bf16.msra.mxu0 0
    %1504 = vmatprep.subr.bf16.mxu0 0
    %1505 = vmatpush2.bf16.msra.mxu0 0
    %1506 = vmatprep.subr.bf16.mxu0 0
    %1507 = vmatpush2.bf16.msra.mxu0 0
    %1508 = vmatprep.subr.bf16.mxu0 0
    %1509 = vmatpush2.bf16.msra.mxu0 0
    %1510 = vmatprep.subr.bf16.mxu0 0
    %1511 = vmatpush2.bf16.msra.mxu0 0
    %1512 = vmatprep.subr.bf16.mxu0 0
    %1513 = vmatpush2.bf16.msra.mxu0 0
    %1514 = vmatprep.subr.bf16.mxu0 0
    %1515 = vmatpush2.bf16.msra.mxu0 0
    %1516 = vmatprep.subr.bf16.mxu0 0
    %1517 = vmatpush2.bf16.msra.mxu0 0
    %1518 = vmatprep.mubr.bf16.mxu0 0
    %1519 = vmatmul.mubr.bf16.gmra.mxu0 %v305
    %v1520 = vpop.f32.mrf.mxu0
    %v1521 = vadd.f32 %v1466, %v1520
    %v1522 = vpop.f32.mrf.mxu0
    %v1523 = vpop.f32.mrf.mxu0
    %v1524 = vadd.f32 %v1466, %v1523
    %v1525 = vpop.f32.mrf.mxu0
    %1526 = vmatprep.mubr.bf16.mxu0 0
    %1527 = vmatmul.mubr.bf16.gmra.mxu0 %v308
    %v1528 = vpop.f32.mrf.mxu0
    %v1529 = vadd.f32 %v1466, %v1528
    %v1530 = vpop.f32.mrf.mxu0
    %v1531 = vpop.f32.mrf.mxu0
    %v1532 = vadd.f32 %v1466, %v1531
    %v1533 = vpop.f32.mrf.mxu0
    %1534 = vdwg.mxu0
    %s1535 = scalar_lea.vmem %s45, 48
    %v1536 = vld [vmem:[%s1535] sm:$0xf]
    %v1537 = vld [vmem:[%s1535 + $0x4] sm:$0xf]
    %v1538 = vld [vmem:[%s1535 + $0x8] sm:$0xf]
    %v1539 = vld [vmem:[%s1535 + $0xc] sm:$0xf]
    %v1540 = vld [vmem:[%s1535 + $0x10] sm:$0xf]
    %v1541 = vld [vmem:[%s1535 + $0x14] sm:$0xf]
    %s1542 = scalar_lea.vmem %s17, 2
    %v1543 = vld [vmem:[%s1542] sm:$0x1]
    %v1545 = vlaneseq
    %v1546 = vshrl.u32 %v1545, 7
    %v1547 = vsub.s32 0, %v1546
    %v1548 = vrot.slane %v1543, %v1547
    %v1556 = vunpack.c.l.b16 %v1536
    %v1557 = vunpack.c.l.b16 %v1537
    %v1558 = vunpack.c.l.b16 %v1538
    %v1559 = vunpack.c.l.b16 %v1539
    %v1560 = vunpack.c.l.b16 %v1540
    %v1561 = vunpack.c.l.b16 %v1541
    %v1562 = vpack.c.b16 %v1557, %v1556
    %v1563 = vpack.c.b16 %v1559, %v1558
    %v1564 = vpack.c.b16 %v1561, %v1560
    %1568 = vmatprep.subr.bf16.mxu0 0
    %1569 = vmatpush1.bf16.msra.mxu0 0
    %1570 = vmatprep.subr.bf16.mxu0 0
    %1571 = vmatpush1.bf16.msra.mxu0 0
    %1572 = vmatprep.subr.bf16.mxu0 0
    %1573 = vmatpush1.bf16.msra.mxu0 0
    %1574 = vmatprep.subr.bf16.mxu0 0
    %1575 = vmatpush1.bf16.msra.mxu0 0
    %1576 = vmatprep.subr.bf16.mxu0 0
    %1577 = vmatpush1.bf16.msra.mxu0 0
    %1578 = vmatprep.subr.bf16.mxu0 0
    %1579 = vmatpush1.bf16.msra.mxu0 %v1564
    %1580 = vmatprep.subr.bf16.mxu0 0
    %1581 = vmatpush1.bf16.msra.mxu0 %v1563
    %1582 = vmatprep.subr.bf16.mxu0 0
    %1583 = vmatpush1.bf16.msra.mxu0 %v1562
    %1584 = vmatprep.subr.bf16.mxu0 0
    %1585 = vmatpush2.bf16.msra.mxu0 0
    %1586 = vmatprep.subr.bf16.mxu0 0
    %1587 = vmatpush2.bf16.msra.mxu0 0
    %1588 = vmatprep.subr.bf16.mxu0 0
    %1589 = vmatpush2.bf16.msra.mxu0 0
    %1590 = vmatprep.subr.bf16.mxu0 0
    %1591 = vmatpush2.bf16.msra.mxu0 0
    %1592 = vmatprep.subr.bf16.mxu0 0
    %1593 = vmatpush2.bf16.msra.mxu0 0
    %1594 = vmatprep.subr.bf16.mxu0 0
    %1595 = vmatpush2.bf16.msra.mxu0 0
    %1596 = vmatprep.subr.bf16.mxu0 0
    %1597 = vmatpush2.bf16.msra.mxu0 0
    %1598 = vmatprep.subr.bf16.mxu0 0
    %1599 = vmatpush2.bf16.msra.mxu0 0
    %1600 = vmatprep.mubr.bf16.mxu0 0
    %1601 = vmatmul.mubr.bf16.gmra.mxu0 %v305
    %v1602 = vpop.f32.mrf.mxu0
    %v1603 = vadd.f32 %v1548, %v1602
    %v1604 = vpop.f32.mrf.mxu0
    %v1605 = vpop.f32.mrf.mxu0
    %v1606 = vadd.f32 %v1548, %v1605
    %v1607 = vpop.f32.mrf.mxu0
    %1608 = vmatprep.mubr.bf16.mxu0 0
    %1609 = vmatmul.mubr.bf16.gmra.mxu0 %v308
    %v1610 = vpop.f32.mrf.mxu0
    %v1611 = vadd.f32 %v1548, %v1610
    %v1612 = vpop.f32.mrf.mxu0
    %v1613 = vpop.f32.mrf.mxu0
    %v1614 = vadd.f32 %v1548, %v1613
    %v1615 = vpop.f32.mrf.mxu0
    %1616 = vdwg.mxu0
    %v1617 = vpack.c.bf16 %v1442, %v1439
    %v1618 = vpack.c.bf16 %v1524, %v1521
    %v1620 = vsel %vm521, %v1617, 0
    %v1623 = vsel %vm521, %v1618, 0
    %1625 = vmatprep.subr.bf16.mxu0 0
    %1626 = vmatpush1.bf16.xpose.msra.mxu0 0
    %1627 = vmatprep.subr.bf16.mxu0 0
    %1628 = vmatpush1.bf16.xpose.msra.mxu0 0
    %1629 = vmatprep.subr.bf16.mxu0 0
    %1630 = vmatpush1.bf16.xpose.msra.mxu0 0
    %1631 = vmatprep.subr.bf16.mxu0 0
    %1632 = vmatpush1.bf16.xpose.msra.mxu0 0
    %1633 = vmatprep.subr.bf16.mxu0 0
    %1634 = vmatpush1.bf16.xpose.msra.mxu0 0
    %1635 = vmatprep.subr.bf16.mxu0 0
    %1636 = vmatpush1.bf16.xpose.msra.mxu0 0
    %1637 = vmatprep.subr.bf16.mxu0 0
    %1638 = vmatpush1.bf16.xpose.msra.mxu0 0
    %1639 = vmatprep.subr.bf16.mxu0 0
    %1640 = vmatpush1.bf16.xpose.msra.mxu0 %v1623
    %1641 = vmatprep.subr.bf16.mxu0 0
    %1642 = vmatpush2.bf16.xpose.msra.mxu0 0
    %1643 = vmatprep.subr.bf16.mxu0 0
    %1644 = vmatpush2.bf16.xpose.msra.mxu0 0
    %1645 = vmatprep.subr.bf16.mxu0 0
    %1646 = vmatpush2.bf16.xpose.msra.mxu0 0
    %1647 = vmatprep.subr.bf16.mxu0 0
    %1648 = vmatpush2.bf16.xpose.msra.mxu0 0
    %1649 = vmatprep.subr.bf16.mxu0 0
    %1650 = vmatpush2.bf16.xpose.msra.mxu0 0
    %1651 = vmatprep.subr.bf16.mxu0 0
    %1652 = vmatpush2.bf16.xpose.msra.mxu0 0
    %1653 = vmatprep.subr.bf16.mxu0 0
    %1654 = vmatpush2.bf16.xpose.msra.mxu0 0
    %1655 = vmatprep.subr.bf16.mxu0 0
    %1656 = vmatpush2.bf16.xpose.msra.mxu0 0
    %1657 = vmatprep.mubr.bf16.mxu0 0
    %1658 = vmatmul.mubr.bf16.gmra.mxu0 %v1620
    %v1659 = vpop.f32.mrf.mxu0
    %v1660 = vadd.f32 0.0, %v1659
    %v1661 = vpop.f32.mrf.mxu0
    %v1662 = vpop.f32.mrf.mxu0
    %v1663 = vadd.f32 0.0, %v1662
    %v1664 = vpop.f32.mrf.mxu0
    %1665 = vdwg.mxu0
    %v1666 = vsel %vm569, %v1660, -inf
    %1667 = vmax.xlane.f32.xlu0 %v1666
    %v1668 = vpop.xlane.xlu0 %1667
    %v1669 = vsel %vm569, %v1663, -inf
    %1670 = vmax.xlane.f32.xlu0 %v1669
    %v1671 = vpop.xlane.xlu0 %1670
    %v1672 = vsub.f32 %v1660, %v1668
    %v1673 = vsub.f32 %v1663, %v1671
    %v1674 = vmul.f32 %v1672, 1.442695
    %v1675 = vpow.pop %v1674
    %v1676 = vmul.f32 %v1673, 1.442695
    %v1677 = vpow.pop %v1676
    %v1678 = vsel %vm569, %v1675, 0.0
    %1679 = vadd.xlane.f32.xlu0 %v1678
    %v1680 = vpop.xlane.xlu0 %1679
    %v1681 = vsel %vm569, %v1677, 0.0
    %1682 = vadd.xlane.f32.xlu0 %v1681
    %v1683 = vpop.xlane.xlu0 %1682
    %v1684 = vrcp.pop %v1680
    %v1685 = vrcp.pop %v1683
    %v1686 = vmul.f32 %v1675, %v1684
    %v1687 = vmul.f32 %v1677, %v1685
    %v1688 = vpack.c.bf16 %v1687, %v1686
    %v1689 = vpack.c.bf16 %v1606, %v1603
    %v1691 = vsel %vm569, %v1688, 0
    %1693 = vmatprep.subr.bf16.mxu0 0
    %1694 = vmatpush1.bf16.msra.mxu0 0
    %1695 = vmatprep.subr.bf16.mxu0 0
    %1696 = vmatpush1.bf16.msra.mxu0 0
    %1697 = vmatprep.subr.bf16.mxu0 0
    %1698 = vmatpush1.bf16.msra.mxu0 0
    %1699 = vmatprep.subr.bf16.mxu0 0
    %1700 = vmatpush1.bf16.msra.mxu0 0
    %1701 = vmatprep.subr.bf16.mxu0 0
    %1702 = vmatpush1.bf16.msra.mxu0 0
    %1703 = vmatprep.subr.bf16.mxu0 0
    %1704 = vmatpush1.bf16.msra.mxu0 0
    %1705 = vmatprep.subr.bf16.mxu0 0
    %1706 = vmatpush1.bf16.msra.mxu0 0
    %1707 = vmatprep.subr.bf16.mxu0 0
    %1708 = vmatpush1.bf16.msra.mxu0 %v1689
    %1709 = vmatprep.subr.bf16.mxu0 0
    %1710 = vmatpush2.bf16.msra.mxu0 0
    %1711 = vmatprep.subr.bf16.mxu0 0
    %1712 = vmatpush2.bf16.msra.mxu0 0
    %1713 = vmatprep.subr.bf16.mxu0 0
    %1714 = vmatpush2.bf16.msra.mxu0 0
    %1715 = vmatprep.subr.bf16.mxu0 0
    %1716 = vmatpush2.bf16.msra.mxu0 0
    %1717 = vmatprep.subr.bf16.mxu0 0
    %1718 = vmatpush2.bf16.msra.mxu0 0
    %1719 = vmatprep.subr.bf16.mxu0 0
    %1720 = vmatpush2.bf16.msra.mxu0 0
    %1721 = vmatprep.subr.bf16.mxu0 0
    %1722 = vmatpush2.bf16.msra.mxu0 0
    %1723 = vmatprep.subr.bf16.mxu0 0
    %1724 = vmatpush2.bf16.msra.mxu0 0
    %1725 = vmatprep.mubr.bf16.mxu0 0
    %1726 = vmatmul.mubr.bf16.gmra.mxu0 %v1691
    %v1727 = vpop.f32.mrf.mxu0
    %v1728 = vadd.f32 0.0, %v1727
    %v1729 = vpop.f32.mrf.mxu0
    %v1730 = vpop.f32.mrf.mxu0
    %v1731 = vadd.f32 0.0, %v1730
    %v1732 = vpop.f32.mrf.mxu0
    %1733 = vdwg.mxu0
    %v1734 = vpack.c.bf16 %v1450, %v1447
    %v1735 = vpack.c.bf16 %v1532, %v1529
    %v1737 = vsel %vm521, %v1734, 0
    %v1740 = vsel %vm521, %v1735, 0
    %1742 = vmatprep.subr.bf16.mxu0 0
    %1743 = vmatpush1.bf16.xpose.msra.mxu0 0
    %1744 = vmatprep.subr.bf16.mxu0 0
    %1745 = vmatpush1.bf16.xpose.msra.mxu0 0
    %1746 = vmatprep.subr.bf16.mxu0 0
    %1747 = vmatpush1.bf16.xpose.msra.mxu0 0
    %1748 = vmatprep.subr.bf16.mxu0 0
    %1749 = vmatpush1.bf16.xpose.msra.mxu0 0
    %1750 = vmatprep.subr.bf16.mxu0 0
    %1751 = vmatpush1.bf16.xpose.msra.mxu0 0
    %1752 = vmatprep.subr.bf16.mxu0 0
    %1753 = vmatpush1.bf16.xpose.msra.mxu0 0
    %1754 = vmatprep.subr.bf16.mxu0 0
    %1755 = vmatpush1.bf16.xpose.msra.mxu0 0
    %1756 = vmatprep.subr.bf16.mxu0 0
    %1757 = vmatpush1.bf16.xpose.msra.mxu0 %v1740
    %1758 = vmatprep.subr.bf16.mxu0 0
    %1759 = vmatpush2.bf16.xpose.msra.mxu0 0
    %1760 = vmatprep.subr.bf16.mxu0 0
    %1761 = vmatpush2.bf16.xpose.msra.mxu0 0
    %1762 = vmatprep.subr.bf16.mxu0 0
    %1763 = vmatpush2.bf16.xpose.msra.mxu0 0
    %1764 = vmatprep.subr.bf16.mxu0 0
    %1765 = vmatpush2.bf16.xpose.msra.mxu0 0
    %1766 = vmatprep.subr.bf16.mxu0 0
    %1767 = vmatpush2.bf16.xpose.msra.mxu0 0
    %1768 = vmatprep.subr.bf16.mxu0 0
    %1769 = vmatpush2.bf16.xpose.msra.mxu0 0
    %1770 = vmatprep.subr.bf16.mxu0 0
    %1771 = vmatpush2.bf16.xpose.msra.mxu0 0
    %1772 = vmatprep.subr.bf16.mxu0 0
    %1773 = vmatpush2.bf16.xpose.msra.mxu0 0
    %1774 = vmatprep.mubr.bf16.mxu0 0
    %1775 = vmatmul.mubr.bf16.gmra.mxu0 %v1737
    %v1776 = vpop.f32.mrf.mxu0
    %v1777 = vadd.f32 0.0, %v1776
    %v1778 = vpop.f32.mrf.mxu0
    %v1779 = vpop.f32.mrf.mxu0
    %v1780 = vadd.f32 0.0, %v1779
    %v1781 = vpop.f32.mrf.mxu0
    %1782 = vdwg.mxu0
    %v1783 = vsel %vm569, %v1777, -inf
    %1784 = vmax.xlane.f32.xlu0 %v1783
    %v1785 = vpop.xlane.xlu0 %1784
    %v1786 = vsel %vm569, %v1780, -inf
    %1787 = vmax.xlane.f32.xlu0 %v1786
    %v1788 = vpop.xlane.xlu0 %1787
    %v1789 = vsub.f32 %v1777, %v1785
    %v1790 = vsub.f32 %v1780, %v1788
    %v1791 = vmul.f32 %v1789, 1.442695
    %v1792 = vpow.pop %v1791
    %v1793 = vmul.f32 %v1790, 1.442695
    %v1794 = vpow.pop %v1793
    %v1795 = vsel %vm569, %v1792, 0.0
    %1796 = vadd.xlane.f32.xlu0 %v1795
    %v1797 = vpop.xlane.xlu0 %1796
    %v1798 = vsel %vm569, %v1794, 0.0
    %1799 = vadd.xlane.f32.xlu0 %v1798
    %v1800 = vpop.xlane.xlu0 %1799
    %v1801 = vrcp.pop %v1797
    %v1802 = vrcp.pop %v1800
    %v1803 = vmul.f32 %v1792, %v1801
    %v1804 = vmul.f32 %v1794, %v1802
    %v1805 = vpack.c.bf16 %v1804, %v1803
    %v1806 = vpack.c.bf16 %v1614, %v1611
    %v1808 = vsel %vm569, %v1805, 0
    %1810 = vmatprep.subr.bf16.mxu0 0
    %1811 = vmatpush1.bf16.msra.mxu0 0
    %1812 = vmatprep.subr.bf16.mxu0 0
    %1813 = vmatpush1.bf16.msra.mxu0 0
    %1814 = vmatprep.subr.bf16.mxu0 0
    %1815 = vmatpush1.bf16.msra.mxu0 0
    %1816 = vmatprep.subr.bf16.mxu0 0
    %1817 = vmatpush1.bf16.msra.mxu0 0
    %1818 = vmatprep.subr.bf16.mxu0 0
    %1819 = vmatpush1.bf16.msra.mxu0 0
    %1820 = vmatprep.subr.bf16.mxu0 0
    %1821 = vmatpush1.bf16.msra.mxu0 0
    %1822 = vmatprep.subr.bf16.mxu0 0
    %1823 = vmatpush1.bf16.msra.mxu0 0
    %1824 = vmatprep.subr.bf16.mxu0 0
    %1825 = vmatpush1.bf16.msra.mxu0 %v1806
    %1826 = vmatprep.subr.bf16.mxu0 0
    %1827 = vmatpush2.bf16.msra.mxu0 0
    %1828 = vmatprep.subr.bf16.mxu0 0
    %1829 = vmatpush2.bf16.msra.mxu0 0
    %1830 = vmatprep.subr.bf16.mxu0 0
    %1831 = vmatpush2.bf16.msra.mxu0 0
    %1832 = vmatprep.subr.bf16.mxu0 0
    %1833 = vmatpush2.bf16.msra.mxu0 0
    %1834 = vmatprep.subr.bf16.mxu0 0
    %1835 = vmatpush2.bf16.msra.mxu0 0
    %1836 = vmatprep.subr.bf16.mxu0 0
    %1837 = vmatpush2.bf16.msra.mxu0 0
    %1838 = vmatprep.subr.bf16.mxu0 0
    %1839 = vmatpush2.bf16.msra.mxu0 0
    %1840 = vmatprep.subr.bf16.mxu0 0
    %1841 = vmatpush2.bf16.msra.mxu0 0
    %1842 = vmatprep.mubr.bf16.mxu0 0
    %1843 = vmatmul.mubr.bf16.gmra.mxu0 %v1808
    %v1844 = vpop.f32.mrf.mxu0
    %v1845 = vadd.f32 0.0, %v1844
    %v1846 = vpop.f32.mrf.mxu0
    %v1847 = vpop.f32.mrf.mxu0
    %v1848 = vadd.f32 0.0, %v1847
    %v1849 = vpop.f32.mrf.mxu0
    %1850 = vdwg.mxu0
    %s1851 = scalar_lea.vmem %s41, 16
    %v1852 = vld [vmem:[%s1851] sm:$0xf]
    %v1853 = vld [vmem:[%s1851 + $0x4] sm:$0x3]
    %v1854 = vpack.c.bf16 %v1731, %v1728
    %v1855 = vpack.c.bf16 %v1848, %v1845
    %v1858 = vunpack.c.l.b16 %v1852
    %v1859 = vunpack.c.l.b16 %v1853
    %v1860 = vpack.c.b16 %v1859, %v1858
    %v1862 = vsel %vm521, %v1854, 0
    %v1865 = vsel %vm521, %v1855, 0
    %v1868 = vsel %vm1255, %v1860, 0
    %1870 = vmatprep.subr.bf16.mxu0 0
    %1871 = vmatpush1.bf16.msra.mxu0 0
    %1872 = vmatprep.subr.bf16.mxu0 0
    %1873 = vmatpush1.bf16.msra.mxu0 0
    %1874 = vmatprep.subr.bf16.mxu0 0
    %1875 = vmatpush1.bf16.msra.mxu0 0
    %1876 = vmatprep.subr.bf16.mxu0 0
    %1877 = vmatpush1.bf16.msra.mxu0 0
    %1878 = vmatprep.subr.bf16.mxu0 0
    %1879 = vmatpush1.bf16.msra.mxu0 0
    %1880 = vmatprep.subr.bf16.mxu0 0
    %1881 = vmatpush1.bf16.msra.mxu0 0
    %1882 = vmatprep.subr.bf16.mxu0 0
    %1883 = vmatpush1.bf16.msra.mxu0 0
    %1884 = vmatprep.subr.bf16.mxu0 0
    %1885 = vmatpush1.bf16.msra.mxu0 %v1868
    %1886 = vmatprep.subr.bf16.mxu0 0
    %1887 = vmatpush2.bf16.msra.mxu0 0
    %1888 = vmatprep.subr.bf16.mxu0 0
    %1889 = vmatpush2.bf16.msra.mxu0 0
    %1890 = vmatprep.subr.bf16.mxu0 0
    %1891 = vmatpush2.bf16.msra.mxu0 0
    %1892 = vmatprep.subr.bf16.mxu0 0
    %1893 = vmatpush2.bf16.msra.mxu0 0
    %1894 = vmatprep.subr.bf16.mxu0 0
    %1895 = vmatpush2.bf16.msra.mxu0 0
    %1896 = vmatprep.subr.bf16.mxu0 0
    %1897 = vmatpush2.bf16.msra.mxu0 0
    %1898 = vmatprep.subr.bf16.mxu0 0
    %1899 = vmatpush2.bf16.msra.mxu0 0
    %1900 = vmatprep.subr.bf16.mxu0 0
    %1901 = vmatpush2.bf16.msra.mxu0 0
    %1902 = vmatprep.mubr.bf16.mxu0 0
    %1903 = vmatmul.mubr.bf16.gmra.mxu0 %v1862
    %v1904 = vpop.f32.mrf.mxu0
    %v1905 = vadd.f32 0.0, %v1904
    %v1906 = vpop.f32.mrf.mxu0
    %v1907 = vpop.f32.mrf.mxu0
    %v1908 = vadd.f32 0.0, %v1907
    %v1909 = vpop.f32.mrf.mxu0
    %1910 = vmatprep.mubr.bf16.mxu0 0
    %1911 = vmatmul.mubr.bf16.gmra.mxu0 %v1865
    %v1912 = vpop.f32.mrf.mxu0
    %v1913 = vadd.f32 0.0, %v1912
    %v1914 = vpop.f32.mrf.mxu0
    %v1915 = vpop.f32.mrf.mxu0
    %v1916 = vadd.f32 0.0, %v1915
    %v1917 = vpop.f32.mrf.mxu0
    %1918 = vdwg.mxu0
    %v1919 = vadd.f32 %v1357, %v1905
    %v1920 = vadd.f32 %v1360, %v1908
    %v1921 = vadd.f32 %v1365, %v1913
    %v1922 = vadd.f32 %v1368, %v1916
    %s1923 = scalar_lea.vmem %s43, 72
    %v1924 = vld [vmem:[%s1923] sm:$0xf]
    %v1925 = vld [vmem:[%s1923 + $0x4] sm:$0xf]
    %v1926 = vld [vmem:[%s1923 + $0x8] sm:$0xf]
    %v1927 = vld [vmem:[%s1923 + $0xc] sm:$0xf]
    %v1928 = vld [vmem:[%s1923 + $0x10] sm:$0xf]
    %v1929 = vld [vmem:[%s1923 + $0x14] sm:$0xf]
    %s1930 = scalar_lea.vmem %s15, 3
    %v1931 = vld [vmem:[%s1930] sm:$0x1]
    %v1933 = vlaneseq
    %v1934 = vshrl.u32 %v1933, 7
    %v1935 = vsub.s32 0, %v1934
    %v1936 = vrot.slane %v1931, %v1935
    %v1944 = vunpack.c.l.b16 %v1924
    %v1945 = vunpack.c.l.b16 %v1925
    %v1946 = vunpack.c.l.b16 %v1926
    %v1947 = vunpack.c.l.b16 %v1927
    %v1948 = vunpack.c.l.b16 %v1928
    %v1949 = vunpack.c.l.b16 %v1929
    %v1950 = vpack.c.b16 %v1945, %v1944
    %v1951 = vpack.c.b16 %v1947, %v1946
    %v1952 = vpack.c.b16 %v1949, %v1948
    %1956 = vmatprep.subr.bf16.mxu0 0
    %1957 = vmatpush1.bf16.msra.mxu0 0
    %1958 = vmatprep.subr.bf16.mxu0 0
    %1959 = vmatpush1.bf16.msra.mxu0 0
    %1960 = vmatprep.subr.bf16.mxu0 0
    %1961 = vmatpush1.bf16.msra.mxu0 0
    %1962 = vmatprep.subr.bf16.mxu0 0
    %1963 = vmatpush1.bf16.msra.mxu0 0
    %1964 = vmatprep.subr.bf16.mxu0 0
    %1965 = vmatpush1.bf16.msra.mxu0 0
    %1966 = vmatprep.subr.bf16.mxu0 0
    %1967 = vmatpush1.bf16.msra.mxu0 %v1952
    %1968 = vmatprep.subr.bf16.mxu0 0
    %1969 = vmatpush1.bf16.msra.mxu0 %v1951
    %1970 = vmatprep.subr.bf16.mxu0 0
    %1971 = vmatpush1.bf16.msra.mxu0 %v1950
    %1972 = vmatprep.subr.bf16.mxu0 0
    %1973 = vmatpush2.bf16.msra.mxu0 0
    %1974 = vmatprep.subr.bf16.mxu0 0
    %1975 = vmatpush2.bf16.msra.mxu0 0
    %1976 = vmatprep.subr.bf16.mxu0 0
    %1977 = vmatpush2.bf16.msra.mxu0 0
    %1978 = vmatprep.subr.bf16.mxu0 0
    %1979 = vmatpush2.bf16.msra.mxu0 0
    %1980 = vmatprep.subr.bf16.mxu0 0
    %1981 = vmatpush2.bf16.msra.mxu0 0
    %1982 = vmatprep.subr.bf16.mxu0 0
    %1983 = vmatpush2.bf16.msra.mxu0 0
    %1984 = vmatprep.subr.bf16.mxu0 0
    %1985 = vmatpush2.bf16.msra.mxu0 0
    %1986 = vmatprep.subr.bf16.mxu0 0
    %1987 = vmatpush2.bf16.msra.mxu0 0
    %1988 = vmatprep.mubr.bf16.mxu0 0
    %1989 = vmatmul.mubr.bf16.gmra.mxu0 %v305
    %v1990 = vpop.f32.mrf.mxu0
    %v1991 = vadd.f32 %v1936, %v1990
    %v1992 = vpop.f32.mrf.mxu0
    %v1993 = vpop.f32.mrf.mxu0
    %v1994 = vadd.f32 %v1936, %v1993
    %v1995 = vpop.f32.mrf.mxu0
    %1996 = vmatprep.mubr.bf16.mxu0 0
    %1997 = vmatmul.mubr.bf16.gmra.mxu0 %v308
    %v1998 = vpop.f32.mrf.mxu0
    %v1999 = vadd.f32 %v1936, %v1998
    %v2000 = vpop.f32.mrf.mxu0
    %v2001 = vpop.f32.mrf.mxu0
    %v2002 = vadd.f32 %v1936, %v2001
    %v2003 = vpop.f32.mrf.mxu0
    %2004 = vdwg.mxu0
    %s2005 = scalar_lea.vmem %s39, 72
    %v2006 = vld [vmem:[%s2005] sm:$0xf]
    %v2007 = vld [vmem:[%s2005 + $0x4] sm:$0xf]
    %v2008 = vld [vmem:[%s2005 + $0x8] sm:$0xf]
    %v2009 = vld [vmem:[%s2005 + $0xc] sm:$0xf]
    %v2010 = vld [vmem:[%s2005 + $0x10] sm:$0xf]
    %v2011 = vld [vmem:[%s2005 + $0x14] sm:$0xf]
    %s2012 = scalar_lea.vmem %s11, 3
    %v2013 = vld [vmem:[%s2012] sm:$0x1]
    %v2015 = vlaneseq
    %v2016 = vshrl.u32 %v2015, 7
    %v2017 = vsub.s32 0, %v2016
    %v2018 = vrot.slane %v2013, %v2017
    %v2026 = vunpack.c.l.b16 %v2006
    %v2027 = vunpack.c.l.b16 %v2007
    %v2028 = vunpack.c.l.b16 %v2008
    %v2029 = vunpack.c.l.b16 %v2009
    %v2030 = vunpack.c.l.b16 %v2010
    %v2031 = vunpack.c.l.b16 %v2011
    %v2032 = vpack.c.b16 %v2027, %v2026
    %v2033 = vpack.c.b16 %v2029, %v2028
    %v2034 = vpack.c.b16 %v2031, %v2030
    %2038 = vmatprep.subr.bf16.mxu0 0
    %2039 = vmatpush1.bf16.msra.mxu0 0
    %2040 = vmatprep.subr.bf16.mxu0 0
    %2041 = vmatpush1.bf16.msra.mxu0 0
    %2042 = vmatprep.subr.bf16.mxu0 0
    %2043 = vmatpush1.bf16.msra.mxu0 0
    %2044 = vmatprep.subr.bf16.mxu0 0
    %2045 = vmatpush1.bf16.msra.mxu0 0
    %2046 = vmatprep.subr.bf16.mxu0 0
    %2047 = vmatpush1.bf16.msra.mxu0 0
    %2048 = vmatprep.subr.bf16.mxu0 0
    %2049 = vmatpush1.bf16.msra.mxu0 %v2034
    %2050 = vmatprep.subr.bf16.mxu0 0
    %2051 = vmatpush1.bf16.msra.mxu0 %v2033
    %2052 = vmatprep.subr.bf16.mxu0 0
    %2053 = vmatpush1.bf16.msra.mxu0 %v2032
    %2054 = vmatprep.subr.bf16.mxu0 0
    %2055 = vmatpush2.bf16.msra.mxu0 0
    %2056 = vmatprep.subr.bf16.mxu0 0
    %2057 = vmatpush2.bf16.msra.mxu0 0
    %2058 = vmatprep.subr.bf16.mxu0 0
    %2059 = vmatpush2.bf16.msra.mxu0 0
    %2060 = vmatprep.subr.bf16.mxu0 0
    %2061 = vmatpush2.bf16.msra.mxu0 0
    %2062 = vmatprep.subr.bf16.mxu0 0
    %2063 = vmatpush2.bf16.msra.mxu0 0
    %2064 = vmatprep.subr.bf16.mxu0 0
    %2065 = vmatpush2.bf16.msra.mxu0 0
    %2066 = vmatprep.subr.bf16.mxu0 0
    %2067 = vmatpush2.bf16.msra.mxu0 0
    %2068 = vmatprep.subr.bf16.mxu0 0
    %2069 = vmatpush2.bf16.msra.mxu0 0
    %2070 = vmatprep.mubr.bf16.mxu0 0
    %2071 = vmatmul.mubr.bf16.gmra.mxu0 %v305
    %v2072 = vpop.f32.mrf.mxu0
    %v2073 = vadd.f32 %v2018, %v2072
    %v2074 = vpop.f32.mrf.mxu0
    %v2075 = vpop.f32.mrf.mxu0
    %v2076 = vadd.f32 %v2018, %v2075
    %v2077 = vpop.f32.mrf.mxu0
    %2078 = vmatprep.mubr.bf16.mxu0 0
    %2079 = vmatmul.mubr.bf16.gmra.mxu0 %v308
    %v2080 = vpop.f32.mrf.mxu0
    %v2081 = vadd.f32 %v2018, %v2080
    %v2082 = vpop.f32.mrf.mxu0
    %v2083 = vpop.f32.mrf.mxu0
    %v2084 = vadd.f32 %v2018, %v2083
    %v2085 = vpop.f32.mrf.mxu0
    %2086 = vdwg.mxu0
    %s2087 = scalar_lea.vmem %s45, 72
    %v2088 = vld [vmem:[%s2087] sm:$0xf]
    %v2089 = vld [vmem:[%s2087 + $0x4] sm:$0xf]
    %v2090 = vld [vmem:[%s2087 + $0x8] sm:$0xf]
    %v2091 = vld [vmem:[%s2087 + $0xc] sm:$0xf]
    %v2092 = vld [vmem:[%s2087 + $0x10] sm:$0xf]
    %v2093 = vld [vmem:[%s2087 + $0x14] sm:$0xf]
    %s2094 = scalar_lea.vmem %s17, 3
    %v2095 = vld [vmem:[%s2094] sm:$0x1]
    %v2097 = vlaneseq
    %v2098 = vshrl.u32 %v2097, 7
    %v2099 = vsub.s32 0, %v2098
    %v2100 = vrot.slane %v2095, %v2099
    %v2108 = vunpack.c.l.b16 %v2088
    %v2109 = vunpack.c.l.b16 %v2089
    %v2110 = vunpack.c.l.b16 %v2090
    %v2111 = vunpack.c.l.b16 %v2091
    %v2112 = vunpack.c.l.b16 %v2092
    %v2113 = vunpack.c.l.b16 %v2093
    %v2114 = vpack.c.b16 %v2109, %v2108
    %v2115 = vpack.c.b16 %v2111, %v2110
    %v2116 = vpack.c.b16 %v2113, %v2112
    %2120 = vmatprep.subr.bf16.mxu0 0
    %2121 = vmatpush1.bf16.msra.mxu0 0
    %2122 = vmatprep.subr.bf16.mxu0 0
    %2123 = vmatpush1.bf16.msra.mxu0 0
    %2124 = vmatprep.subr.bf16.mxu0 0
    %2125 = vmatpush1.bf16.msra.mxu0 0
    %2126 = vmatprep.subr.bf16.mxu0 0
    %2127 = vmatpush1.bf16.msra.mxu0 0
    %2128 = vmatprep.subr.bf16.mxu0 0
    %2129 = vmatpush1.bf16.msra.mxu0 0
    %2130 = vmatprep.subr.bf16.mxu0 0
    %2131 = vmatpush1.bf16.msra.mxu0 %v2116
    %2132 = vmatprep.subr.bf16.mxu0 0
    %2133 = vmatpush1.bf16.msra.mxu0 %v2115
    %2134 = vmatprep.subr.bf16.mxu0 0
    %2135 = vmatpush1.bf16.msra.mxu0 %v2114
    %2136 = vmatprep.subr.bf16.mxu0 0
    %2137 = vmatpush2.bf16.msra.mxu0 0
    %2138 = vmatprep.subr.bf16.mxu0 0
    %2139 = vmatpush2.bf16.msra.mxu0 0
    %2140 = vmatprep.subr.bf16.mxu0 0
    %2141 = vmatpush2.bf16.msra.mxu0 0
    %2142 = vmatprep.subr.bf16.mxu0 0
    %2143 = vmatpush2.bf16.msra.mxu0 0
    %2144 = vmatprep.subr.bf16.mxu0 0
    %2145 = vmatpush2.bf16.msra.mxu0 0
    %2146 = vmatprep.subr.bf16.mxu0 0
    %2147 = vmatpush2.bf16.msra.mxu0 0
    %2148 = vmatprep.subr.bf16.mxu0 0
    %2149 = vmatpush2.bf16.msra.mxu0 0
    %2150 = vmatprep.subr.bf16.mxu0 0
    %2151 = vmatpush2.bf16.msra.mxu0 0
    %2152 = vmatprep.mubr.bf16.mxu0 0
    %2153 = vmatmul.mubr.bf16.gmra.mxu0 %v305
    %v2154 = vpop.f32.mrf.mxu0
    %v2155 = vadd.f32 %v2100, %v2154
    %v2156 = vpop.f32.mrf.mxu0
    %v2157 = vpop.f32.mrf.mxu0
    %v2158 = vadd.f32 %v2100, %v2157
    %v2159 = vpop.f32.mrf.mxu0
    %2160 = vmatprep.mubr.bf16.mxu0 0
    %2161 = vmatmul.mubr.bf16.gmra.mxu0 %v308
    %v2162 = vpop.f32.mrf.mxu0
    %v2163 = vadd.f32 %v2100, %v2162
    %v2164 = vpop.f32.mrf.mxu0
    %v2165 = vpop.f32.mrf.mxu0
    %v2166 = vadd.f32 %v2100, %v2165
    %v2167 = vpop.f32.mrf.mxu0
    %2168 = vdwg.mxu0
    %v2169 = vpack.c.bf16 %v1994, %v1991
    %v2170 = vpack.c.bf16 %v2076, %v2073
    %v2172 = vsel %vm521, %v2169, 0
    %v2175 = vsel %vm521, %v2170, 0
    %2177 = vmatprep.subr.bf16.mxu0 0
    %2178 = vmatpush1.bf16.xpose.msra.mxu0 0
    %2179 = vmatprep.subr.bf16.mxu0 0
    %2180 = vmatpush1.bf16.xpose.msra.mxu0 0
    %2181 = vmatprep.subr.bf16.mxu0 0
    %2182 = vmatpush1.bf16.xpose.msra.mxu0 0
    %2183 = vmatprep.subr.bf16.mxu0 0
    %2184 = vmatpush1.bf16.xpose.msra.mxu0 0
    %2185 = vmatprep.subr.bf16.mxu0 0
    %2186 = vmatpush1.bf16.xpose.msra.mxu0 0
    %2187 = vmatprep.subr.bf16.mxu0 0
    %2188 = vmatpush1.bf16.xpose.msra.mxu0 0
    %2189 = vmatprep.subr.bf16.mxu0 0
    %2190 = vmatpush1.bf16.xpose.msra.mxu0 0
    %2191 = vmatprep.subr.bf16.mxu0 0
    %2192 = vmatpush1.bf16.xpose.msra.mxu0 %v2175
    %2193 = vmatprep.subr.bf16.mxu0 0
    %2194 = vmatpush2.bf16.xpose.msra.mxu0 0
    %2195 = vmatprep.subr.bf16.mxu0 0
    %2196 = vmatpush2.bf16.xpose.msra.mxu0 0
    %2197 = vmatprep.subr.bf16.mxu0 0
    %2198 = vmatpush2.bf16.xpose.msra.mxu0 0
    %2199 = vmatprep.subr.bf16.mxu0 0
    %2200 = vmatpush2.bf16.xpose.msra.mxu0 0
    %2201 = vmatprep.subr.bf16.mxu0 0
    %2202 = vmatpush2.bf16.xpose.msra.mxu0 0
    %2203 = vmatprep.subr.bf16.mxu0 0
    %2204 = vmatpush2.bf16.xpose.msra.mxu0 0
    %2205 = vmatprep.subr.bf16.mxu0 0
    %2206 = vmatpush2.bf16.xpose.msra.mxu0 0
    %2207 = vmatprep.subr.bf16.mxu0 0
    %2208 = vmatpush2.bf16.xpose.msra.mxu0 0
    %2209 = vmatprep.mubr.bf16.mxu0 0
    %2210 = vmatmul.mubr.bf16.gmra.mxu0 %v2172
    %v2211 = vpop.f32.mrf.mxu0
    %v2212 = vadd.f32 0.0, %v2211
    %v2213 = vpop.f32.mrf.mxu0
    %v2214 = vpop.f32.mrf.mxu0
    %v2215 = vadd.f32 0.0, %v2214
    %v2216 = vpop.f32.mrf.mxu0
    %2217 = vdwg.mxu0
    %v2218 = vsel %vm569, %v2212, -inf
    %2219 = vmax.xlane.f32.xlu0 %v2218
    %v2220 = vpop.xlane.xlu0 %2219
    %v2221 = vsel %vm569, %v2215, -inf
    %2222 = vmax.xlane.f32.xlu0 %v2221
    %v2223 = vpop.xlane.xlu0 %2222
    %v2224 = vsub.f32 %v2212, %v2220
    %v2225 = vsub.f32 %v2215, %v2223
    %v2226 = vmul.f32 %v2224, 1.442695
    %v2227 = vpow.pop %v2226
    %v2228 = vmul.f32 %v2225, 1.442695
    %v2229 = vpow.pop %v2228
    %v2230 = vsel %vm569, %v2227, 0.0
    %2231 = vadd.xlane.f32.xlu0 %v2230
    %v2232 = vpop.xlane.xlu0 %2231
    %v2233 = vsel %vm569, %v2229, 0.0
    %2234 = vadd.xlane.f32.xlu0 %v2233
    %v2235 = vpop.xlane.xlu0 %2234
    %v2236 = vrcp.pop %v2232
    %v2237 = vrcp.pop %v2235
    %v2238 = vmul.f32 %v2227, %v2236
    %v2239 = vmul.f32 %v2229, %v2237
    %v2240 = vpack.c.bf16 %v2239, %v2238
    %v2241 = vpack.c.bf16 %v2158, %v2155
    %v2243 = vsel %vm569, %v2240, 0
    %2245 = vmatprep.subr.bf16.mxu0 0
    %2246 = vmatpush1.bf16.msra.mxu0 0
    %2247 = vmatprep.subr.bf16.mxu0 0
    %2248 = vmatpush1.bf16.msra.mxu0 0
    %2249 = vmatprep.subr.bf16.mxu0 0
    %2250 = vmatpush1.bf16.msra.mxu0 0
    %2251 = vmatprep.subr.bf16.mxu0 0
    %2252 = vmatpush1.bf16.msra.mxu0 0
    %2253 = vmatprep.subr.bf16.mxu0 0
    %2254 = vmatpush1.bf16.msra.mxu0 0
    %2255 = vmatprep.subr.bf16.mxu0 0
    %2256 = vmatpush1.bf16.msra.mxu0 0
    %2257 = vmatprep.subr.bf16.mxu0 0
    %2258 = vmatpush1.bf16.msra.mxu0 0
    %2259 = vmatprep.subr.bf16.mxu0 0
    %2260 = vmatpush1.bf16.msra.mxu0 %v2241
    %2261 = vmatprep.subr.bf16.mxu0 0
    %2262 = vmatpush2.bf16.msra.mxu0 0
    %2263 = vmatprep.subr.bf16.mxu0 0
    %2264 = vmatpush2.bf16.msra.mxu0 0
    %2265 = vmatprep.subr.bf16.mxu0 0
    %2266 = vmatpush2.bf16.msra.mxu0 0
    %2267 = vmatprep.subr.bf16.mxu0 0
    %2268 = vmatpush2.bf16.msra.mxu0 0
    %2269 = vmatprep.subr.bf16.mxu0 0
    %2270 = vmatpush2.bf16.msra.mxu0 0
    %2271 = vmatprep.subr.bf16.mxu0 0
    %2272 = vmatpush2.bf16.msra.mxu0 0
    %2273 = vmatprep.subr.bf16.mxu0 0
    %2274 = vmatpush2.bf16.msra.mxu0 0
    %2275 = vmatprep.subr.bf16.mxu0 0
    %2276 = vmatpush2.bf16.msra.mxu0 0
    %2277 = vmatprep.mubr.bf16.mxu0 0
    %2278 = vmatmul.mubr.bf16.gmra.mxu0 %v2243
    %v2279 = vpop.f32.mrf.mxu0
    %v2280 = vadd.f32 0.0, %v2279
    %v2281 = vpop.f32.mrf.mxu0
    %v2282 = vpop.f32.mrf.mxu0
    %v2283 = vadd.f32 0.0, %v2282
    %v2284 = vpop.f32.mrf.mxu0
    %2285 = vdwg.mxu0
    %v2286 = vpack.c.bf16 %v2002, %v1999
    %v2287 = vpack.c.bf16 %v2084, %v2081
    %v2289 = vsel %vm521, %v2286, 0
    %v2292 = vsel %vm521, %v2287, 0
    %2294 = vmatprep.subr.bf16.mxu0 0
    %2295 = vmatpush1.bf16.xpose.msra.mxu0 0
    %2296 = vmatprep.subr.bf16.mxu0 0
    %2297 = vmatpush1.bf16.xpose.msra.mxu0 0
    %2298 = vmatprep.subr.bf16.mxu0 0
    %2299 = vmatpush1.bf16.xpose.msra.mxu0 0
    %2300 = vmatprep.subr.bf16.mxu0 0
    %2301 = vmatpush1.bf16.xpose.msra.mxu0 0
    %2302 = vmatprep.subr.bf16.mxu0 0
    %2303 = vmatpush1.bf16.xpose.msra.mxu0 0
    %2304 = vmatprep.subr.bf16.mxu0 0
    %2305 = vmatpush1.bf16.xpose.msra.mxu0 0
    %2306 = vmatprep.subr.bf16.mxu0 0
    %2307 = vmatpush1.bf16.xpose.msra.mxu0 0
    %2308 = vmatprep.subr.bf16.mxu0 0
    %2309 = vmatpush1.bf16.xpose.msra.mxu0 %v2292
    %2310 = vmatprep.subr.bf16.mxu0 0
    %2311 = vmatpush2.bf16.xpose.msra.mxu0 0
    %2312 = vmatprep.subr.bf16.mxu0 0
    %2313 = vmatpush2.bf16.xpose.msra.mxu0 0
    %2314 = vmatprep.subr.bf16.mxu0 0
    %2315 = vmatpush2.bf16.xpose.msra.mxu0 0
    %2316 = vmatprep.subr.bf16.mxu0 0
    %2317 = vmatpush2.bf16.xpose.msra.mxu0 0
    %2318 = vmatprep.subr.bf16.mxu0 0
    %2319 = vmatpush2.bf16.xpose.msra.mxu0 0
    %2320 = vmatprep.subr.bf16.mxu0 0
    %2321 = vmatpush2.bf16.xpose.msra.mxu0 0
    %2322 = vmatprep.subr.bf16.mxu0 0
    %2323 = vmatpush2.bf16.xpose.msra.mxu0 0
    %2324 = vmatprep.subr.bf16.mxu0 0
    %2325 = vmatpush2.bf16.xpose.msra.mxu0 0
    %2326 = vmatprep.mubr.bf16.mxu0 0
    %2327 = vmatmul.mubr.bf16.gmra.mxu0 %v2289
    %v2328 = vpop.f32.mrf.mxu0
    %v2329 = vadd.f32 0.0, %v2328
    %v2330 = vpop.f32.mrf.mxu0
    %v2331 = vpop.f32.mrf.mxu0
    %v2332 = vadd.f32 0.0, %v2331
    %v2333 = vpop.f32.mrf.mxu0
    %2334 = vdwg.mxu0
    %v2335 = vsel %vm569, %v2329, -inf
    %2336 = vmax.xlane.f32.xlu0 %v2335
    %v2337 = vpop.xlane.xlu0 %2336
    %v2338 = vsel %vm569, %v2332, -inf
    %2339 = vmax.xlane.f32.xlu0 %v2338
    %v2340 = vpop.xlane.xlu0 %2339
    %v2341 = vsub.f32 %v2329, %v2337
    %v2342 = vsub.f32 %v2332, %v2340
    %v2343 = vmul.f32 %v2341, 1.442695
    %v2344 = vpow.pop %v2343
    %v2345 = vmul.f32 %v2342, 1.442695
    %v2346 = vpow.pop %v2345
    %v2347 = vsel %vm569, %v2344, 0.0
    %2348 = vadd.xlane.f32.xlu0 %v2347
    %v2349 = vpop.xlane.xlu0 %2348
    %v2350 = vsel %vm569, %v2346, 0.0
    %2351 = vadd.xlane.f32.xlu0 %v2350
    %v2352 = vpop.xlane.xlu0 %2351
    %v2353 = vrcp.pop %v2349
    %v2354 = vrcp.pop %v2352
    %v2355 = vmul.f32 %v2344, %v2353
    %v2356 = vmul.f32 %v2346, %v2354
    %v2357 = vpack.c.bf16 %v2356, %v2355
    %v2358 = vpack.c.bf16 %v2166, %v2163
    %v2360 = vsel %vm569, %v2357, 0
    %2362 = vmatprep.subr.bf16.mxu0 0
    %2363 = vmatpush1.bf16.msra.mxu0 0
    %2364 = vmatprep.subr.bf16.mxu0 0
    %2365 = vmatpush1.bf16.msra.mxu0 0
    %2366 = vmatprep.subr.bf16.mxu0 0
    %2367 = vmatpush1.bf16.msra.mxu0 0
    %2368 = vmatprep.subr.bf16.mxu0 0
    %2369 = vmatpush1.bf16.msra.mxu0 0
    %2370 = vmatprep.subr.bf16.mxu0 0
    %2371 = vmatpush1.bf16.msra.mxu0 0
    %2372 = vmatprep.subr.bf16.mxu0 0
    %2373 = vmatpush1.bf16.msra.mxu0 0
    %2374 = vmatprep.subr.bf16.mxu0 0
    %2375 = vmatpush1.bf16.msra.mxu0 0
    %2376 = vmatprep.subr.bf16.mxu0 0
    %2377 = vmatpush1.bf16.msra.mxu0 %v2358
    %2378 = vmatprep.subr.bf16.mxu0 0
    %2379 = vmatpush2.bf16.msra.mxu0 0
    %2380 = vmatprep.subr.bf16.mxu0 0
    %2381 = vmatpush2.bf16.msra.mxu0 0
    %2382 = vmatprep.subr.bf16.mxu0 0
    %2383 = vmatpush2.bf16.msra.mxu0 0
    %2384 = vmatprep.subr.bf16.mxu0 0
    %2385 = vmatpush2.bf16.msra.mxu0 0
    %2386 = vmatprep.subr.bf16.mxu0 0
    %2387 = vmatpush2.bf16.msra.mxu0 0
    %2388 = vmatprep.subr.bf16.mxu0 0
    %2389 = vmatpush2.bf16.msra.mxu0 0
    %2390 = vmatprep.subr.bf16.mxu0 0
    %2391 = vmatpush2.bf16.msra.mxu0 0
    %2392 = vmatprep.subr.bf16.mxu0 0
    %2393 = vmatpush2.bf16.msra.mxu0 0
    %2394 = vmatprep.mubr.bf16.mxu0 0
    %2395 = vmatmul.mubr.bf16.gmra.mxu0 %v2360
    %v2396 = vpop.f32.mrf.mxu0
    %v2397 = vadd.f32 0.0, %v2396
    %v2398 = vpop.f32.mrf.mxu0
    %v2399 = vpop.f32.mrf.mxu0
    %v2400 = vadd.f32 0.0, %v2399
    %v2401 = vpop.f32.mrf.mxu0
    %2402 = vdwg.mxu0
    %s2403 = scalar_lea.vmem %s41, 24
    %v2404 = vld [vmem:[%s2403] sm:$0xf]
    %v2405 = vld [vmem:[%s2403 + $0x4] sm:$0x3]
    %v2406 = vpack.c.bf16 %v2283, %v2280
    %v2407 = vpack.c.bf16 %v2400, %v2397
    %v2410 = vunpack.c.l.b16 %v2404
    %v2411 = vunpack.c.l.b16 %v2405
    %v2412 = vpack.c.b16 %v2411, %v2410
    %v2414 = vsel %vm521, %v2406, 0
    %v2417 = vsel %vm521, %v2407, 0
    %v2420 = vsel %vm1255, %v2412, 0
    %2422 = vmatprep.subr.bf16.mxu0 0
    %2423 = vmatpush1.bf16.msra.mxu0 0
    %2424 = vmatprep.subr.bf16.mxu0 0
    %2425 = vmatpush1.bf16.msra.mxu0 0
    %2426 = vmatprep.subr.bf16.mxu0 0
    %2427 = vmatpush1.bf16.msra.mxu0 0
    %2428 = vmatprep.subr.bf16.mxu0 0
    %2429 = vmatpush1.bf16.msra.mxu0 0
    %2430 = vmatprep.subr.bf16.mxu0 0
    %2431 = vmatpush1.bf16.msra.mxu0 0
    %2432 = vmatprep.subr.bf16.mxu0 0
    %2433 = vmatpush1.bf16.msra.mxu0 0
    %2434 = vmatprep.subr.bf16.mxu0 0
    %2435 = vmatpush1.bf16.msra.mxu0 0
    %2436 = vmatprep.subr.bf16.mxu0 0
    %2437 = vmatpush1.bf16.msra.mxu0 %v2420
    %2438 = vmatprep.subr.bf16.mxu0 0
    %2439 = vmatpush2.bf16.msra.mxu0 0
    %2440 = vmatprep.subr.bf16.mxu0 0
    %2441 = vmatpush2.bf16.msra.mxu0 0
    %2442 = vmatprep.subr.bf16.mxu0 0
    %2443 = vmatpush2.bf16.msra.mxu0 0
    %2444 = vmatprep.subr.bf16.mxu0 0
    %2445 = vmatpush2.bf16.msra.mxu0 0
    %2446 = vmatprep.subr.bf16.mxu0 0
    %2447 = vmatpush2.bf16.msra.mxu0 0
    %2448 = vmatprep.subr.bf16.mxu0 0
    %2449 = vmatpush2.bf16.msra.mxu0 0
    %2450 = vmatprep.subr.bf16.mxu0 0
    %2451 = vmatpush2.bf16.msra.mxu0 0
    %2452 = vmatprep.subr.bf16.mxu0 0
    %2453 = vmatpush2.bf16.msra.mxu0 0
    %2454 = vmatprep.mubr.bf16.mxu0 0
    %2455 = vmatmul.mubr.bf16.gmra.mxu0 %v2414
    %v2456 = vpop.f32.mrf.mxu0
    %v2457 = vadd.f32 0.0, %v2456
    %v2458 = vpop.f32.mrf.mxu0
    %v2459 = vpop.f32.mrf.mxu0
    %v2460 = vadd.f32 0.0, %v2459
    %v2461 = vpop.f32.mrf.mxu0
    %2462 = vmatprep.mubr.bf16.mxu0 0
    %2463 = vmatmul.mubr.bf16.gmra.mxu0 %v2417
    %v2464 = vpop.f32.mrf.mxu0
    %v2465 = vadd.f32 0.0, %v2464
    %v2466 = vpop.f32.mrf.mxu0
    %v2467 = vpop.f32.mrf.mxu0
    %v2468 = vadd.f32 0.0, %v2467
    %v2469 = vpop.f32.mrf.mxu0
    %2470 = vdwg.mxu0
    %v2471 = vadd.f32 %v1919, %v2457
    %v2472 = vadd.f32 %v1920, %v2460
    %v2473 = vadd.f32 %v1921, %v2465
    %v2474 = vadd.f32 %v1922, %v2468
    %v2475 = vld [vmem:[%s13] sm:$0x1]
    %v2477 = vlaneseq
    %v2478 = vshrl.u32 %v2477, 7
    %v2479 = vsub.s32 0, %v2478
    %v2480 = vrot.slane %v2475, %v2479
    %v2482 = vadd.f32 %v2471, %v2480
    %v2483 = vadd.f32 %v2472, %v2480
    %v2484 = vadd.f32 %v2473, %v2480
    %v2485 = vadd.f32 %v2474, %v2480
    %v2486 = vadd.f32 %v267, %v2482
    %v2487 = vadd.f32 %v268, %v2483
    %v2488 = vadd.f32 %v269, %v2484
    %v2489 = vadd.f32 %v270, %v2485
    %v2490 = vld [vmem:[%s25] sm:$0x1]
    %v2491 = vld [vmem:[%s23] sm:$0x1]
    %v2492 = vsel %vm197, %v2486, 0.0
    %2493 = vadd.xlane.f32.xlu0 %v2492
    %v2494 = vpop.xlane.xlu0 %2493
    %v2495 = vsel %vm197, %v2487, 0.0
    %2496 = vadd.xlane.f32.xlu0 %v2495
    %v2497 = vpop.xlane.xlu0 %2496
    %v2498 = vsel %vm197, %v2488, 0.0
    %2499 = vadd.xlane.f32.xlu0 %v2498
    %v2500 = vpop.xlane.xlu0 %2499
    %v2501 = vsel %vm197, %v2489, 0.0
    %2502 = vadd.xlane.f32.xlu0 %v2501
    %v2503 = vpop.xlane.xlu0 %2502
    %v2504 = vmul.f32 %v2494, %v210
    %v2505 = vmul.f32 %v2497, %v210
    %v2506 = vmul.f32 %v2500, %v210
    %v2507 = vmul.f32 %v2503, %v210
    %v2508 = vsub.f32 %v2486, %v2504
    %v2509 = vsub.f32 %v2487, %v2505
    %v2510 = vsub.f32 %v2488, %v2506
    %v2511 = vsub.f32 %v2489, %v2507
    %v2512 = vmul.f32 %v2508, %v2508
    %v2513 = vmul.f32 %v2509, %v2509
    %v2514 = vmul.f32 %v2510, %v2510
    %v2515 = vmul.f32 %v2511, %v2511
    %v2516 = vsel %vm197, %v2512, 0.0
    %2517 = vadd.xlane.f32.xlu0 %v2516
    %v2518 = vpop.xlane.xlu0 %2517
    %v2519 = vsel %vm197, %v2513, 0.0
    %2520 = vadd.xlane.f32.xlu0 %v2519
    %v2521 = vpop.xlane.xlu0 %2520
    %v2522 = vsel %vm197, %v2514, 0.0
    %2523 = vadd.xlane.f32.xlu0 %v2522
    %v2524 = vpop.xlane.xlu0 %2523
    %v2525 = vsel %vm197, %v2515, 0.0
    %2526 = vadd.xlane.f32.xlu0 %v2525
    %v2527 = vpop.xlane.xlu0 %2526
    %v2528 = vmul.f32 %v2518, %v210
    %v2529 = vmul.f32 %v2521, %v210
    %v2530 = vmul.f32 %v2524, %v210
    %v2531 = vmul.f32 %v2527, %v210
    %v2532 = vadd.f32 %v2528, 1e-05
    %v2533 = vadd.f32 %v2529, 1e-05
    %v2534 = vadd.f32 %v2530, 1e-05
    %v2535 = vadd.f32 %v2531, 1e-05
    %v2536 = vrsqrt.pop %v2532
    %v2537 = vrsqrt.pop %v2533
    %v2538 = vrsqrt.pop %v2534
    %v2539 = vrsqrt.pop %v2535
    %v2540 = vmul.f32 %v2508, %v2536
    %v2541 = vmul.f32 %v2509, %v2537
    %v2542 = vmul.f32 %v2510, %v2538
    %v2543 = vmul.f32 %v2511, %v2539
    %v2545 = vlaneseq
    %v2546 = vshrl.u32 %v2545, 7
    %v2547 = vsub.s32 0, %v2546
    %v2548 = vrot.slane %v2490, %v2547
    %v2550 = vmul.f32 %v2540, %v2548
    %v2551 = vmul.f32 %v2541, %v2548
    %v2552 = vmul.f32 %v2542, %v2548
    %v2553 = vmul.f32 %v2543, %v2548
    %v2555 = vlaneseq
    %v2556 = vshrl.u32 %v2555, 7
    %v2557 = vsub.s32 0, %v2556
    %v2558 = vrot.slane %v2491, %v2557
    %v2560 = vadd.f32 %v2550, %v2558
    %v2561 = vadd.f32 %v2551, %v2558
    %v2562 = vadd.f32 %v2552, %v2558
    %v2563 = vadd.f32 %v2553, %v2558
    %v2564 = vld [vmem:[%s35] sm:$0xf]
    %v2565 = vld [vmem:[%s35 + $0x4] sm:$0xf]
    %v2566 = vld [vmem:[%s35 + $0x8] sm:$0xf]
    %v2567 = vld [vmem:[%s35 + $0xc] sm:$0xf]
    %v2568 = vld [vmem:[%s35 + $0x10] sm:$0xf]
    %v2569 = vld [vmem:[%s35 + $0x14] sm:$0xf]
    %v2570 = vpack.c.bf16 %v2561, %v2560
    %v2571 = vpack.c.bf16 %v2563, %v2562
    %v2572 = vld [vmem:[%s7] sm:$0x1]
    %v2574 = vlaneseq
    %v2575 = vshrl.u32 %v2574, 7
    %v2576 = vsub.s32 0, %v2575
    %v2577 = vrot.slane %v2572, %v2576
    %v2585 = vunpack.c.l.b16 %v2564
    %v2586 = vunpack.c.l.b16 %v2565
    %v2587 = vunpack.c.l.b16 %v2566
    %v2588 = vunpack.c.l.b16 %v2567
    %v2589 = vunpack.c.l.b16 %v2568
    %v2590 = vunpack.c.l.b16 %v2569
    %v2591 = vpack.c.b16 %v2586, %v2585
    %v2592 = vpack.c.b16 %v2588, %v2587
    %v2593 = vpack.c.b16 %v2590, %v2589
    %v2598 = vsel %vm197, %v2570, 0
    %v2601 = vsel %vm197, %v2571, 0
    %2603 = vmatprep.subr.bf16.mxu0 0
    %2604 = vmatpush1.bf16.msra.mxu0 0
    %2605 = vmatprep.subr.bf16.mxu0 0
    %2606 = vmatpush1.bf16.msra.mxu0 0
    %2607 = vmatprep.subr.bf16.mxu0 0
    %2608 = vmatpush1.bf16.msra.mxu0 0
    %2609 = vmatprep.subr.bf16.mxu0 0
    %2610 = vmatpush1.bf16.msra.mxu0 0
    %2611 = vmatprep.subr.bf16.mxu0 0
    %2612 = vmatpush1.bf16.msra.mxu0 0
    %2613 = vmatprep.subr.bf16.mxu0 0
    %2614 = vmatpush1.bf16.msra.mxu0 %v2593
    %2615 = vmatprep.subr.bf16.mxu0 0
    %2616 = vmatpush1.bf16.msra.mxu0 %v2592
    %2617 = vmatprep.subr.bf16.mxu0 0
    %2618 = vmatpush1.bf16.msra.mxu0 %v2591
    %2619 = vmatprep.subr.bf16.mxu0 0
    %2620 = vmatpush2.bf16.msra.mxu0 0
    %2621 = vmatprep.subr.bf16.mxu0 0
    %2622 = vmatpush2.bf16.msra.mxu0 0
    %2623 = vmatprep.subr.bf16.mxu0 0
    %2624 = vmatpush2.bf16.msra.mxu0 0
    %2625 = vmatprep.subr.bf16.mxu0 0
    %2626 = vmatpush2.bf16.msra.mxu0 0
    %2627 = vmatprep.subr.bf16.mxu0 0
    %2628 = vmatpush2.bf16.msra.mxu0 0
    %2629 = vmatprep.subr.bf16.mxu0 0
    %2630 = vmatpush2.bf16.msra.mxu0 0
    %2631 = vmatprep.subr.bf16.mxu0 0
    %2632 = vmatpush2.bf16.msra.mxu0 0
    %2633 = vmatprep.subr.bf16.mxu0 0
    %2634 = vmatpush2.bf16.msra.mxu0 0
    %2635 = vmatprep.mubr.bf16.mxu0 0
    %2636 = vmatmul.mubr.bf16.gmra.mxu0 %v2598
    %v2637 = vpop.f32.mrf.mxu0
    %v2638 = vadd.f32 %v2577, %v2637
    %v2639 = vpop.f32.mrf.mxu0
    %v2640 = vpop.f32.mrf.mxu0
    %v2641 = vadd.f32 %v2577, %v2640
    %v2642 = vpop.f32.mrf.mxu0
    %2643 = vmatprep.mubr.bf16.mxu0 0
    %2644 = vmatmul.mubr.bf16.gmra.mxu0 %v2601
    %v2645 = vpop.f32.mrf.mxu0
    %v2646 = vadd.f32 %v2577, %v2645
    %v2647 = vpop.f32.mrf.mxu0
    %v2648 = vpop.f32.mrf.mxu0
    %v2649 = vadd.f32 %v2577, %v2648
    %v2650 = vpop.f32.mrf.mxu0
    %2651 = vdwg.mxu0
    %v2652 = vmax.f32 %v2638, 0.0
    %v2653 = vmax.f32 %v2641, 0.0
    %v2654 = vmax.f32 %v2646, 0.0
    %v2655 = vmax.f32 %v2649, 0.0
    %v2656 = vld [vmem:[%s37] sm:$0xf]
    %v2657 = vld [vmem:[%s37 + $0x4] sm:$0xf]
    %v2658 = vld [vmem:[%s37 + $0x8] sm:$0xf]
    %v2659 = vld [vmem:[%s37 + $0xc] sm:$0xf]
    %v2660 = vld [vmem:[%s37 + $0x10] sm:$0xf]
    %v2661 = vld [vmem:[%s37 + $0x14] sm:$0xf]
    %v2662 = vpack.c.bf16 %v2653, %v2652
    %v2663 = vpack.c.bf16 %v2655, %v2654
    %v2664 = vld [vmem:[%s9] sm:$0x1]
    %v2666 = vlaneseq
    %v2667 = vshrl.u32 %v2666, 7
    %v2668 = vsub.s32 0, %v2667
    %v2669 = vrot.slane %v2664, %v2668
    %v2677 = vunpack.c.l.b16 %v2656
    %v2678 = vunpack.c.l.b16 %v2657
    %v2679 = vunpack.c.l.b16 %v2658
    %v2680 = vunpack.c.l.b16 %v2659
    %v2681 = vunpack.c.l.b16 %v2660
    %v2682 = vunpack.c.l.b16 %v2661
    %v2683 = vpack.c.b16 %v2678, %v2677
    %v2684 = vpack.c.b16 %v2680, %v2679
    %v2685 = vpack.c.b16 %v2682, %v2681
    %v2690 = vsel %vm197, %v2662, 0
    %v2693 = vsel %vm197, %v2663, 0
    %2695 = vmatprep.subr.bf16.mxu0 0
    %2696 = vmatpush1.bf16.msra.mxu0 0
    %2697 = vmatprep.subr.bf16.mxu0 0
    %2698 = vmatpush1.bf16.msra.mxu0 0
    %2699 = vmatprep.subr.bf16.mxu0 0
    %2700 = vmatpush1.bf16.msra.mxu0 0
    %2701 = vmatprep.subr.bf16.mxu0 0
    %2702 = vmatpush1.bf16.msra.mxu0 0
    %2703 = vmatprep.subr.bf16.mxu0 0
    %2704 = vmatpush1.bf16.msra.mxu0 0
    %2705 = vmatprep.subr.bf16.mxu0 0
    %2706 = vmatpush1.bf16.msra.mxu0 %v2685
    %2707 = vmatprep.subr.bf16.mxu0 0
    %2708 = vmatpush1.bf16.msra.mxu0 %v2684
    %2709 = vmatprep.subr.bf16.mxu0 0
    %2710 = vmatpush1.bf16.msra.mxu0 %v2683
    %2711 = vmatprep.subr.bf16.mxu0 0
    %2712 = vmatpush2.bf16.msra.mxu0 0
    %2713 = vmatprep.subr.bf16.mxu0 0
    %2714 = vmatpush2.bf16.msra.mxu0 0
    %2715 = vmatprep.subr.bf16.mxu0 0
    %2716 = vmatpush2.bf16.msra.mxu0 0
    %2717 = vmatprep.subr.bf16.mxu0 0
    %2718 = vmatpush2.bf16.msra.mxu0 0
    %2719 = vmatprep.subr.bf16.mxu0 0
    %2720 = vmatpush2.bf16.msra.mxu0 0
    %2721 = vmatprep.subr.bf16.mxu0 0
    %2722 = vmatpush2.bf16.msra.mxu0 0
    %2723 = vmatprep.subr.bf16.mxu0 0
    %2724 = vmatpush2.bf16.msra.mxu0 0
    %2725 = vmatprep.subr.bf16.mxu0 0
    %2726 = vmatpush2.bf16.msra.mxu0 0
    %2727 = vmatprep.mubr.bf16.mxu0 0
    %2728 = vmatmul.mubr.bf16.gmra.mxu0 %v2690
    %v2729 = vpop.f32.mrf.mxu0
    %v2730 = vadd.f32 %v2669, %v2729
    %v2731 = vpop.f32.mrf.mxu0
    %v2732 = vpop.f32.mrf.mxu0
    %v2733 = vpop.f32.mrf.mxu0
    %2734 = vmatprep.mubr.bf16.mxu0 0
    %2735 = vmatmul.mubr.bf16.gmra.mxu0 %v2693
    %v2736 = vpop.f32.mrf.mxu0
    %v2737 = vadd.f32 %v2669, %v2736
    %v2738 = vpop.f32.mrf.mxu0
    %v2739 = vpop.f32.mrf.mxu0
    %v2740 = vpop.f32.mrf.mxu0
    %2741 = vdwg.mxu0
    %v2742 = vadd.f32 %v2560, %v2730
    %v2743 = vadd.f32 %v2562, %v2737
    %v2744 = vld [vmem:[%s29] sm:$0x1]
    %v2745 = vld [vmem:[%s27] sm:$0x1]
    %v2746 = vsel %vm197, %v2742, 0.0
    %2747 = vadd.xlane.f32.xlu0 %v2746
    %v2748 = vpop.xlane.xlu0 %2747
    %v2749 = vsel %vm197, %v2743, 0.0
    %2750 = vadd.xlane.f32.xlu0 %v2749
    %v2751 = vpop.xlane.xlu0 %2750
    %v2752 = vmul.f32 %v2748, %v210
    %v2753 = vmul.f32 %v2751, %v210
    %v2754 = vsub.f32 %v2742, %v2752
    %v2755 = vsub.f32 %v2743, %v2753
    %v2756 = vmul.f32 %v2754, %v2754
    %v2757 = vmul.f32 %v2755, %v2755
    %v2758 = vsel %vm197, %v2756, 0.0
    %2759 = vadd.xlane.f32.xlu0 %v2758
    %v2760 = vpop.xlane.xlu0 %2759
    %v2761 = vsel %vm197, %v2757, 0.0
    %2762 = vadd.xlane.f32.xlu0 %v2761
    %v2763 = vpop.xlane.xlu0 %2762
    %v2764 = vmul.f32 %v2760, %v210
    %v2765 = vmul.f32 %v2763, %v210
    %v2766 = vadd.f32 %v2764, 1e-05
    %v2767 = vadd.f32 %v2765, 1e-05
    %v2768 = vrsqrt.pop %v2766
    %v2769 = vrsqrt.pop %v2767
    %v2770 = vmul.f32 %v2754, %v2768
    %v2771 = vmul.f32 %v2755, %v2769
    %v2773 = vlaneseq
    %v2774 = vshrl.u32 %v2773, 7
    %v2775 = vsub.s32 0, %v2774
    %v2776 = vrot.slane %v2744, %v2775
    %v2778 = vmul.f32 %v2770, %v2776
    %v2779 = vmul.f32 %v2771, %v2776
    %v2781 = vlaneseq
    %v2782 = vshrl.u32 %v2781, 7
    %v2783 = vsub.s32 0, %v2782
    %v2784 = vrot.slane %v2745, %v2783
    %v2786 = vadd.f32 %v2778, %v2784
    %v2787 = vadd.f32 %v2779, %v2784
    %v2789 = vrot.slane %v2787, 7
    %vm2791 = vcmask 1040384
    %v2792 = vsel %vm2791, %v2786, %v2789
    %v2793 = vld [vmem:[%s33] sm:$0xf]
    %v2794 = vld [vmem:[%s33 + $0x4] sm:$0xf]
    %v2795 = vld [vmem:[%s33 + $0x8] sm:$0xf]
    %v2796 = vld [vmem:[%s33 + $0xc] sm:$0xf]
    %v2797 = vld [vmem:[%s33 + $0x10] sm:$0xf]
    %v2798 = vld [vmem:[%s33 + $0x14] sm:$0xf]
    %v2799 = vpack.c.bf16 %v2792, %v2792
    %v2800 = vld [vmem:[%s31] sm:$0x1]
    %v2802 = vlaneseq
    %v2803 = vshrl.u32 %v2802, 7
    %v2804 = vsub.s32 0, %v2803
    %v2805 = vrot.slane %v2800, %v2804
    %v2813 = vunpack.c.l.b16 %v2793
    %v2814 = vunpack.c.l.b16 %v2794
    %v2815 = vunpack.c.l.b16 %v2795
    %v2816 = vunpack.c.l.b16 %v2796
    %v2817 = vunpack.c.l.b16 %v2797
    %v2818 = vunpack.c.l.b16 %v2798
    %v2819 = vpack.c.b16 %v2814, %v2813
    %v2820 = vpack.c.b16 %v2816, %v2815
    %v2821 = vpack.c.b16 %v2818, %v2817
    %v2826 = vsel %vm197, %v2799, 0
    %2828 = vmatprep.subr.bf16.mxu0 0
    %2829 = vmatpush1.bf16.msra.mxu0 0
    %2830 = vmatprep.subr.bf16.mxu0 0
    %2831 = vmatpush1.bf16.msra.mxu0 0
    %2832 = vmatprep.subr.bf16.mxu0 0
    %2833 = vmatpush1.bf16.msra.mxu0 0
    %2834 = vmatprep.subr.bf16.mxu0 0
    %2835 = vmatpush1.bf16.msra.mxu0 0
    %2836 = vmatprep.subr.bf16.mxu0 0
    %2837 = vmatpush1.bf16.msra.mxu0 0
    %2838 = vmatprep.subr.bf16.mxu0 0
    %2839 = vmatpush1.bf16.msra.mxu0 %v2821
    %2840 = vmatprep.subr.bf16.mxu0 0
    %2841 = vmatpush1.bf16.msra.mxu0 %v2820
    %2842 = vmatprep.subr.bf16.mxu0 0
    %2843 = vmatpush1.bf16.msra.mxu0 %v2819
    %2844 = vmatprep.subr.bf16.mxu0 0
    %2845 = vmatpush2.bf16.msra.mxu0 0
    %2846 = vmatprep.subr.bf16.mxu0 0
    %2847 = vmatpush2.bf16.msra.mxu0 0
    %2848 = vmatprep.subr.bf16.mxu0 0
    %2849 = vmatpush2.bf16.msra.mxu0 0
    %2850 = vmatprep.subr.bf16.mxu0 0
    %2851 = vmatpush2.bf16.msra.mxu0 0
    %2852 = vmatprep.subr.bf16.mxu0 0
    %2853 = vmatpush2.bf16.msra.mxu0 0
    %2854 = vmatprep.subr.bf16.mxu0 0
    %2855 = vmatpush2.bf16.msra.mxu0 0
    %2856 = vmatprep.subr.bf16.mxu0 0
    %2857 = vmatpush2.bf16.msra.mxu0 0
    %2858 = vmatprep.subr.bf16.mxu0 0
    %2859 = vmatpush2.bf16.msra.mxu0 0
    %2860 = vmatprep.mubr.bf16.mxu0 0
    %2861 = vmatmul.mubr.bf16.gmra.mxu0 %v2826
    %v2862 = vpop.f32.mrf.mxu0
    %v2863 = vadd.f32 %v2805, %v2862
    %v2864 = vpop.f32.mrf.mxu0
    %v2865 = vpop.f32.mrf.mxu0
    %v2866 = vpop.f32.mrf.mxu0
    %2867 = vdwg.mxu0
    %v2868 = vtanh.pop %v2863
    %vm2869 = vcmask 386048
    %2870 = vst.msk [vmem:[#allocation6] sm:$0x3] %vm2869, %v2868
    %v2871 = vld [vmem:[%s49] sm:$0xf]
    %v2872 = vld [vmem:[%s49 + $0x4] sm:$0xf]
    %v2873 = vld [vmem:[%s49 + $0x8] sm:$0xf]
    %v2874 = vld [vmem:[%s49 + $0xc] sm:$0xf]
    %v2875 = vld [vmem:[%s49 + $0x10] sm:$0xf]
    %v2876 = vld [vmem:[%s49 + $0x14] sm:$0xf]
    %v2877 = vpack.c.bf16 %v2787, %v2786
    %v2878 = vld [vmem:[%s47] sm:$0x1]
    %v2880 = vlaneseq
    %v2881 = vshrl.u32 %v2880, 7
    %v2882 = vsub.s32 0, %v2881
    %v2883 = vrot.slane %v2878, %v2882
    %v2891 = vunpack.c.l.b16 %v2871
    %v2892 = vunpack.c.l.b16 %v2872
    %v2893 = vunpack.c.l.b16 %v2873
    %v2894 = vunpack.c.l.b16 %v2874
    %v2895 = vunpack.c.l.b16 %v2875
    %v2896 = vunpack.c.l.b16 %v2876
    %v2897 = vpack.c.b16 %v2892, %v2891
    %v2898 = vpack.c.b16 %v2894, %v2893
    %v2899 = vpack.c.b16 %v2896, %v2895
    %v2904 = vsel %vm197, %v2877, 0
    %2906 = vmatprep.subr.bf16.mxu0 0
    %2907 = vmatpush1.bf16.msra.mxu0 0
    %2908 = vmatprep.subr.bf16.mxu0 0
    %2909 = vmatpush1.bf16.msra.mxu0 0
    %2910 = vmatprep.subr.bf16.mxu0 0
    %2911 = vmatpush1.bf16.msra.mxu0 0
    %2912 = vmatprep.subr.bf16.mxu0 0
    %2913 = vmatpush1.bf16.msra.mxu0 0
    %2914 = vmatprep.subr.bf16.mxu0 0
    %2915 = vmatpush1.bf16.msra.mxu0 0
    %2916 = vmatprep.subr.bf16.mxu0 0
    %2917 = vmatpush1.bf16.msra.mxu0 %v2899
    %2918 = vmatprep.subr.bf16.mxu0 0
    %2919 = vmatpush1.bf16.msra.mxu0 %v2898
    %2920 = vmatprep.subr.bf16.mxu0 0
    %2921 = vmatpush1.bf16.msra.mxu0 %v2897
    %2922 = vmatprep.subr.bf16.mxu0 0
    %2923 = vmatpush2.bf16.msra.mxu0 0
    %2924 = vmatprep.subr.bf16.mxu0 0
    %2925 = vmatpush2.bf16.msra.mxu0 0
    %2926 = vmatprep.subr.bf16.mxu0 0
    %2927 = vmatpush2.bf16.msra.mxu0 0
    %2928 = vmatprep.subr.bf16.mxu0 0
    %2929 = vmatpush2.bf16.msra.mxu0 0
    %2930 = vmatprep.subr.bf16.mxu0 0
    %2931 = vmatpush2.bf16.msra.mxu0 0
    %2932 = vmatprep.subr.bf16.mxu0 0
    %2933 = vmatpush2.bf16.msra.mxu0 0
    %2934 = vmatprep.subr.bf16.mxu0 0
    %2935 = vmatpush2.bf16.msra.mxu0 0
    %2936 = vmatprep.subr.bf16.mxu0 0
    %2937 = vmatpush2.bf16.msra.mxu0 0
    %2938 = vmatprep.mubr.bf16.mxu0 0
    %2939 = vmatmul.mubr.bf16.gmra.mxu0 %v2904
    %v2940 = vpop.f32.mrf.mxu0
    %v2941 = vadd.f32 %v2883, %v2940
    %v2942 = vpop.f32.mrf.mxu0
    %v2943 = vpop.f32.mrf.mxu0
    %v2944 = vadd.f32 %v2883, %v2943
    %v2945 = vpop.f32.mrf.mxu0
    %2946 = vdwg.mxu0
    %vm2947 = vcmask 261120
    %2948 = vst.msk [vmem:[#allocation8] sm:$0xff] %vm2947, %v2941
    %2949 = vst.msk [vmem:[#allocation8 + $0x8] sm:$0xff] %vm2947, %v2944
    %v2950 = vlaneseq
    %v2951 = vand.u32 %v2950, 127
    %v2952 = vld [vmem:[%s5] sm:$0xff]
    %vm2953 = vcmp.eq.f32.partialorder %v2952, 0.0
    %s2954 = sld [smem:[#allocation2]]
    %v2955 = vstv %s2954
    %vm2956 = vcmp.ge.s32.totalorder %v2951, %v2955
    %vm2957 = vmor %vm2953, %vm2956
    %v2958 = vsel %vm2957, -1e+09, 0.0
    %s2959 = scalar_lea.vmem %s5, 8
    %v2960 = vld [vmem:[%s2959] sm:$0xff]
    %vm2961 = vcmp.eq.f32.partialorder %v2960, 0.0
    %s2962 = sld [smem:[#allocation2 + $0x1]]
    %v2963 = vstv %s2962
    %vm2964 = vcmp.ge.s32.totalorder %v2951, %v2963
    %vm2965 = vmor %vm2961, %vm2964
    %v2966 = vsel %vm2965, -1e+09, 0.0
    %v2967 = vld [vmem:[%s79] sm:$0xf]
    %v2968 = vld [vmem:[%s79 + $0x4] sm:$0xf]
    %v2969 = vld [vmem:[%s79 + $0x8] sm:$0xf]
    %v2970 = vld [vmem:[%s79 + $0xc] sm:$0xf]
    %v2971 = vpack.c.bf16 %v2944, %v2941
    %v2972 = vld [vmem:[%s59] sm:$0x1]
    %v2974 = vlaneseq
    %v2975 = vshrl.u32 %v2974, 7
    %v2976 = vsub.s32 0, %v2975
    %v2977 = vrot.slane %v2972, %v2976
    %v2983 = vunpack.c.l.b16 %v2967
    %v2984 = vunpack.c.l.b16 %v2968
    %v2985 = vunpack.c.l.b16 %v2969
    %v2986 = vunpack.c.l.b16 %v2970
    %v2987 = vpack.c.b16 %v2984, %v2983
    %v2988 = vpack.c.b16 %v2986, %v2985
    %v2992 = vsel %vm2947, %v2971, 0
    %2994 = vmatprep.subr.bf16.mxu0 0
    %2995 = vmatpush1.bf16.msra.mxu0 0
    %2996 = vmatprep.subr.bf16.mxu0 0
    %2997 = vmatpush1.bf16.msra.mxu0 0
    %2998 = vmatprep.subr.bf16.mxu0 0
    %2999 = vmatpush1.bf16.msra.mxu0 0
    %3000 = vmatprep.subr.bf16.mxu0 0
    %3001 = vmatpush1.bf16.msra.mxu0 0
    %3002 = vmatprep.subr.bf16.mxu0 0
    %3003 = vmatpush1.bf16.msra.mxu0 0
    %3004 = vmatprep.subr.bf16.mxu0 0
    %3005 = vmatpush1.bf16.msra.mxu0 0
    %3006 = vmatprep.subr.bf16.mxu0 0
    %3007 = vmatpush1.bf16.msra.mxu0 %v2988
    %3008 = vmatprep.subr.bf16.mxu0 0
    %3009 = vmatpush1.bf16.msra.mxu0 %v2987
    %3010 = vmatprep.subr.bf16.mxu0 0
    %3011 = vmatpush2.bf16.msra.mxu0 0
    %3012 = vmatprep.subr.bf16.mxu0 0
    %3013 = vmatpush2.bf16.msra.mxu0 0
    %3014 = vmatprep.subr.bf16.mxu0 0
    %3015 = vmatpush2.bf16.msra.mxu0 0
    %3016 = vmatprep.subr.bf16.mxu0 0
    %3017 = vmatpush2.bf16.msra.mxu0 0
    %3018 = vmatprep.subr.bf16.mxu0 0
    %3019 = vmatpush2.bf16.msra.mxu0 0
    %3020 = vmatprep.subr.bf16.mxu0 0
    %3021 = vmatpush2.bf16.msra.mxu0 0
    %3022 = vmatprep.subr.bf16.mxu0 0
    %3023 = vmatpush2.bf16.msra.mxu0 0
    %3024 = vmatprep.subr.bf16.mxu0 0
    %3025 = vmatpush2.bf16.msra.mxu0 0
    %3026 = vmatprep.mubr.bf16.mxu0 0
    %3027 = vmatmul.mubr.bf16.gmra.mxu0 %v2992
    %v3028 = vpop.f32.mrf.mxu0
    %v3029 = vadd.f32 %v2977, %v3028
    %v3030 = vpop.f32.mrf.mxu0
    %v3031 = vpop.f32.mrf.mxu0
    %v3032 = vadd.f32 %v2977, %v3031
    %v3033 = vpop.f32.mrf.mxu0
    %3034 = vdwg.mxu0
    %v3035 = vld [vmem:[%s75] sm:$0xf]
    %v3036 = vld [vmem:[%s75 + $0x4] sm:$0xf]
    %v3037 = vld [vmem:[%s75 + $0x8] sm:$0xf]
    %v3038 = vld [vmem:[%s75 + $0xc] sm:$0xf]
    %v3039 = vld [vmem:[%s55] sm:$0x1]
    %v3041 = vlaneseq
    %v3042 = vshrl.u32 %v3041, 7
    %v3043 = vsub.s32 0, %v3042
    %v3044 = vrot.slane %v3039, %v3043
    %v3050 = vunpack.c.l.b16 %v3035
    %v3051 = vunpack.c.l.b16 %v3036
    %v3052 = vunpack.c.l.b16 %v3037
    %v3053 = vunpack.c.l.b16 %v3038
    %v3054 = vpack.c.b16 %v3051, %v3050
    %v3055 = vpack.c.b16 %v3053, %v3052
    %3058 = vmatprep.subr.bf16.mxu0 0
    %3059 = vmatpush1.bf16.msra.mxu0 0
    %3060 = vmatprep.subr.bf16.mxu0 0
    %3061 = vmatpush1.bf16.msra.mxu0 0
    %3062 = vmatprep.subr.bf16.mxu0 0
    %3063 = vmatpush1.bf16.msra.mxu0 0
    %3064 = vmatprep.subr.bf16.mxu0 0
    %3065 = vmatpush1.bf16.msra.mxu0 0
    %3066 = vmatprep.subr.bf16.mxu0 0
    %3067 = vmatpush1.bf16.msra.mxu0 0
    %3068 = vmatprep.subr.bf16.mxu0 0
    %3069 = vmatpush1.bf16.msra.mxu0 0
    %3070 = vmatprep.subr.bf16.mxu0 0
    %3071 = vmatpush1.bf16.msra.mxu0 %v3055
    %3072 = vmatprep.subr.bf16.mxu0 0
    %3073 = vmatpush1.bf16.msra.mxu0 %v3054
    %3074 = vmatprep.subr.bf16.mxu0 0
    %3075 = vmatpush2.bf16.msra.mxu0 0
    %3076 = vmatprep.subr.bf16.mxu0 0
    %3077 = vmatpush2.bf16.msra.mxu0 0
    %3078 = vmatprep.subr.bf16.mxu0 0
    %3079 = vmatpush2.bf16.msra.mxu0 0
    %3080 = vmatprep.subr.bf16.mxu0 0
    %3081 = vmatpush2.bf16.msra.mxu0 0
    %3082 = vmatprep.subr.bf16.mxu0 0
    %3083 = vmatpush2.bf16.msra.mxu0 0
    %3084 = vmatprep.subr.bf16.mxu0 0
    %3085 = vmatpush2.bf16.msra.mxu0 0
    %3086 = vmatprep.subr.bf16.mxu0 0
    %3087 = vmatpush2.bf16.msra.mxu0 0
    %3088 = vmatprep.subr.bf16.mxu0 0
    %3089 = vmatpush2.bf16.msra.mxu0 0
    %3090 = vmatprep.mubr.bf16.mxu0 0
    %3091 = vmatmul.mubr.bf16.gmra.mxu0 %v2992
    %v3092 = vpop.f32.mrf.mxu0
    %v3093 = vadd.f32 %v3044, %v3092
    %v3094 = vpop.f32.mrf.mxu0
    %v3095 = vpop.f32.mrf.mxu0
    %v3096 = vadd.f32 %v3044, %v3095
    %v3097 = vpop.f32.mrf.mxu0
    %3098 = vdwg.mxu0
    %v3099 = vld [vmem:[%s81] sm:$0xf]
    %v3100 = vld [vmem:[%s81 + $0x4] sm:$0xf]
    %v3101 = vld [vmem:[%s81 + $0x8] sm:$0xf]
    %v3102 = vld [vmem:[%s81 + $0xc] sm:$0xf]
    %v3103 = vld [vmem:[%s61] sm:$0x1]
    %v3105 = vlaneseq
    %v3106 = vshrl.u32 %v3105, 7
    %v3107 = vsub.s32 0, %v3106
    %v3108 = vrot.slane %v3103, %v3107
    %v3114 = vunpack.c.l.b16 %v3099
    %v3115 = vunpack.c.l.b16 %v3100
    %v3116 = vunpack.c.l.b16 %v3101
    %v3117 = vunpack.c.l.b16 %v3102
    %v3118 = vpack.c.b16 %v3115, %v3114
    %v3119 = vpack.c.b16 %v3117, %v3116
    %3122 = vmatprep.subr.bf16.mxu0 0
    %3123 = vmatpush1.bf16.msra.mxu0 0
    %3124 = vmatprep.subr.bf16.mxu0 0
    %3125 = vmatpush1.bf16.msra.mxu0 0
    %3126 = vmatprep.subr.bf16.mxu0 0
    %3127 = vmatpush1.bf16.msra.mxu0 0
    %3128 = vmatprep.subr.bf16.mxu0 0
    %3129 = vmatpush1.bf16.msra.mxu0 0
    %3130 = vmatprep.subr.bf16.mxu0 0
    %3131 = vmatpush1.bf16.msra.mxu0 0
    %3132 = vmatprep.subr.bf16.mxu0 0
    %3133 = vmatpush1.bf16.msra.mxu0 0
    %3134 = vmatprep.subr.bf16.mxu0 0
    %3135 = vmatpush1.bf16.msra.mxu0 %v3119
    %3136 = vmatprep.subr.bf16.mxu0 0
    %3137 = vmatpush1.bf16.msra.mxu0 %v3118
    %3138 = vmatprep.subr.bf16.mxu0 0
    %3139 = vmatpush2.bf16.msra.mxu0 0
    %3140 = vmatprep.subr.bf16.mxu0 0
    %3141 = vmatpush2.bf16.msra.mxu0 0
    %3142 = vmatprep.subr.bf16.mxu0 0
    %3143 = vmatpush2.bf16.msra.mxu0 0
    %3144 = vmatprep.subr.bf16.mxu0 0
    %3145 = vmatpush2.bf16.msra.mxu0 0
    %3146 = vmatprep.subr.bf16.mxu0 0
    %3147 = vmatpush2.bf16.msra.mxu0 0
    %3148 = vmatprep.subr.bf16.mxu0 0
    %3149 = vmatpush2.bf16.msra.mxu0 0
    %3150 = vmatprep.subr.bf16.mxu0 0
    %3151 = vmatpush2.bf16.msra.mxu0 0
    %3152 = vmatprep.subr.bf16.mxu0 0
    %3153 = vmatpush2.bf16.msra.mxu0 0
    %3154 = vmatprep.mubr.bf16.mxu0 0
    %3155 = vmatmul.mubr.bf16.gmra.mxu0 %v2992
    %v3156 = vpop.f32.mrf.mxu0
    %v3157 = vadd.f32 %v3108, %v3156
    %v3158 = vpop.f32.mrf.mxu0
    %v3159 = vpop.f32.mrf.mxu0
    %v3160 = vadd.f32 %v3108, %v3159
    %v3161 = vpop.f32.mrf.mxu0
    %3162 = vdwg.mxu0
    %v3163 = vpack.c.bf16 %v3029, %v3029
    %v3164 = vpack.c.bf16 %v3093, %v3093
    %vm3165 = vcmask 64512
    %v3167 = vsel %vm3165, %v3163, 0
    %v3170 = vsel %vm3165, %v3164, 0
    %3172 = vmatprep.subr.bf16.mxu0 0
    %3173 = vmatpush1.bf16.xpose.msra.mxu0 0
    %3174 = vmatprep.subr.bf16.mxu0 0
    %3175 = vmatpush1.bf16.xpose.msra.mxu0 0
    %3176 = vmatprep.subr.bf16.mxu0 0
    %3177 = vmatpush1.bf16.xpose.msra.mxu0 0
    %3178 = vmatprep.subr.bf16.mxu0 0
    %3179 = vmatpush1.bf16.xpose.msra.mxu0 0
    %3180 = vmatprep.subr.bf16.mxu0 0
    %3181 = vmatpush1.bf16.xpose.msra.mxu0 0
    %3182 = vmatprep.subr.bf16.mxu0 0
    %3183 = vmatpush1.bf16.xpose.msra.mxu0 0
    %3184 = vmatprep.subr.bf16.mxu0 0
    %3185 = vmatpush1.bf16.xpose.msra.mxu0 0
    %3186 = vmatprep.subr.bf16.mxu0 0
    %3187 = vmatpush1.bf16.xpose.msra.mxu0 %v3170
    %3188 = vmatprep.subr.bf16.mxu0 0
    %3189 = vmatpush2.bf16.xpose.msra.mxu0 0
    %3190 = vmatprep.subr.bf16.mxu0 0
    %3191 = vmatpush2.bf16.xpose.msra.mxu0 0
    %3192 = vmatprep.subr.bf16.mxu0 0
    %3193 = vmatpush2.bf16.xpose.msra.mxu0 0
    %3194 = vmatprep.subr.bf16.mxu0 0
    %3195 = vmatpush2.bf16.xpose.msra.mxu0 0
    %3196 = vmatprep.subr.bf16.mxu0 0
    %3197 = vmatpush2.bf16.xpose.msra.mxu0 0
    %3198 = vmatprep.subr.bf16.mxu0 0
    %3199 = vmatpush2.bf16.xpose.msra.mxu0 0
    %3200 = vmatprep.subr.bf16.mxu0 0
    %3201 = vmatpush2.bf16.xpose.msra.mxu0 0
    %3202 = vmatprep.subr.bf16.mxu0 0
    %3203 = vmatpush2.bf16.xpose.msra.mxu0 0
    %3204 = vmatprep.mubr.bf16.mxu0 0
    %3205 = vmatmul.mubr.bf16.gmra.mxu0 %v3167
    %v3206 = vpop.f32.mrf.mxu0
    %v3207 = vadd.f32 %v2958, %v3206
    %v3208 = vpop.f32.mrf.mxu0
    %v3209 = vpop.f32.mrf.mxu0
    %v3210 = vpop.f32.mrf.mxu0
    %3211 = vdwg.mxu0
    %v3212 = vsel %vm3165, %v3207, -inf
    %3213 = vmax.xlane.f32.xlu0 %v3212
    %v3214 = vpop.xlane.xlu0 %3213
    %v3215 = vsub.f32 %v3207, %v3214
    %v3216 = vmul.f32 %v3215, 1.442695
    %v3217 = vpow.pop %v3216
    %v3218 = vsel %vm3165, %v3217, 0.0
    %3219 = vadd.xlane.f32.xlu0 %v3218
    %v3220 = vpop.xlane.xlu0 %3219
    %v3221 = vrcp.pop %v3220
    %v3222 = vmul.f32 %v3217, %v3221
    %v3223 = vpack.c.bf16 %v3222, %v3222
    %v3224 = vpack.c.bf16 %v3157, %v3157
    %v3226 = vsel %vm3165, %v3223, 0
    %vm3228 = vcmask 1043456
    %v3230 = vsel %vm3228, %v3224, 0
    %3232 = vmatprep.subr.bf16.mxu0 0
    %3233 = vmatpush1.bf16.msra.mxu0 0
    %3234 = vmatprep.subr.bf16.mxu0 0
    %3235 = vmatpush1.bf16.msra.mxu0 0
    %3236 = vmatprep.subr.bf16.mxu0 0
    %3237 = vmatpush1.bf16.msra.mxu0 0
    %3238 = vmatprep.subr.bf16.mxu0 0
    %3239 = vmatpush1.bf16.msra.mxu0 0
    %3240 = vmatprep.subr.bf16.mxu0 0
    %3241 = vmatpush1.bf16.msra.mxu0 0
    %3242 = vmatprep.subr.bf16.mxu0 0
    %3243 = vmatpush1.bf16.msra.mxu0 0
    %3244 = vmatprep.subr.bf16.mxu0 0
    %3245 = vmatpush1.bf16.msra.mxu0 0
    %3246 = vmatprep.subr.bf16.mxu0 0
    %3247 = vmatpush1.bf16.msra.mxu0 %v3230
    %3248 = vmatprep.subr.bf16.mxu0 0
    %3249 = vmatpush2.bf16.msra.mxu0 0
    %3250 = vmatprep.subr.bf16.mxu0 0
    %3251 = vmatpush2.bf16.msra.mxu0 0
    %3252 = vmatprep.subr.bf16.mxu0 0
    %3253 = vmatpush2.bf16.msra.mxu0 0
    %3254 = vmatprep.subr.bf16.mxu0 0
    %3255 = vmatpush2.bf16.msra.mxu0 0
    %3256 = vmatprep.subr.bf16.mxu0 0
    %3257 = vmatpush2.bf16.msra.mxu0 0
    %3258 = vmatprep.subr.bf16.mxu0 0
    %3259 = vmatpush2.bf16.msra.mxu0 0
    %3260 = vmatprep.subr.bf16.mxu0 0
    %3261 = vmatpush2.bf16.msra.mxu0 0
    %3262 = vmatprep.subr.bf16.mxu0 0
    %3263 = vmatpush2.bf16.msra.mxu0 0
    %3264 = vmatprep.mubr.bf16.mxu0 0
    %3265 = vmatmul.mubr.bf16.gmra.mxu0 %v3226
    %v3266 = vpop.f32.mrf.mxu0
    %v3267 = vadd.f32 0.0, %v3266
    %v3268 = vpop.f32.mrf.mxu0
    %v3269 = vpop.f32.mrf.mxu0
    %v3270 = vpop.f32.mrf.mxu0
    %3271 = vdwg.mxu0
    %v3272 = vpack.c.bf16 %v3032, %v3032
    %v3273 = vpack.c.bf16 %v3096, %v3096
    %v3275 = vsel %vm3165, %v3272, 0
    %v3278 = vsel %vm3165, %v3273, 0
    %3280 = vmatprep.subr.bf16.mxu0 0
    %3281 = vmatpush1.bf16.xpose.msra.mxu0 0
    %3282 = vmatprep.subr.bf16.mxu0 0
    %3283 = vmatpush1.bf16.xpose.msra.mxu0 0
    %3284 = vmatprep.subr.bf16.mxu0 0
    %3285 = vmatpush1.bf16.xpose.msra.mxu0 0
    %3286 = vmatprep.subr.bf16.mxu0 0
    %3287 = vmatpush1.bf16.xpose.msra.mxu0 0
    %3288 = vmatprep.subr.bf16.mxu0 0
    %3289 = vmatpush1.bf16.xpose.msra.mxu0 0
    %3290 = vmatprep.subr.bf16.mxu0 0
    %3291 = vmatpush1.bf16.xpose.msra.mxu0 0
    %3292 = vmatprep.subr.bf16.mxu0 0
    %3293 = vmatpush1.bf16.xpose.msra.mxu0 0
    %3294 = vmatprep.subr.bf16.mxu0 0
    %3295 = vmatpush1.bf16.xpose.msra.mxu0 %v3278
    %3296 = vmatprep.subr.bf16.mxu0 0
    %3297 = vmatpush2.bf16.xpose.msra.mxu0 0
    %3298 = vmatprep.subr.bf16.mxu0 0
    %3299 = vmatpush2.bf16.xpose.msra.mxu0 0
    %3300 = vmatprep.subr.bf16.mxu0 0
    %3301 = vmatpush2.bf16.xpose.msra.mxu0 0
    %3302 = vmatprep.subr.bf16.mxu0 0
    %3303 = vmatpush2.bf16.xpose.msra.mxu0 0
    %3304 = vmatprep.subr.bf16.mxu0 0
    %3305 = vmatpush2.bf16.xpose.msra.mxu0 0
    %3306 = vmatprep.subr.bf16.mxu0 0
    %3307 = vmatpush2.bf16.xpose.msra.mxu0 0
    %3308 = vmatprep.subr.bf16.mxu0 0
    %3309 = vmatpush2.bf16.xpose.msra.mxu0 0
    %3310 = vmatprep.subr.bf16.mxu0 0
    %3311 = vmatpush2.bf16.xpose.msra.mxu0 0
    %3312 = vmatprep.mubr.bf16.mxu0 0
    %3313 = vmatmul.mubr.bf16.gmra.mxu0 %v3275
    %v3314 = vpop.f32.mrf.mxu0
    %v3315 = vadd.f32 %v2966, %v3314
    %v3316 = vpop.f32.mrf.mxu0
    %v3317 = vpop.f32.mrf.mxu0
    %v3318 = vpop.f32.mrf.mxu0
    %3319 = vdwg.mxu0
    %v3320 = vsel %vm3165, %v3315, -inf
    %3321 = vmax.xlane.f32.xlu0 %v3320
    %v3322 = vpop.xlane.xlu0 %3321
    %v3323 = vsub.f32 %v3315, %v3322
    %v3324 = vmul.f32 %v3323, 1.442695
    %v3325 = vpow.pop %v3324
    %v3326 = vsel %vm3165, %v3325, 0.0
    %3327 = vadd.xlane.f32.xlu0 %v3326
    %v3328 = vpop.xlane.xlu0 %3327
    %v3329 = vrcp.pop %v3328
    %v3330 = vmul.f32 %v3325, %v3329
    %v3331 = vpack.c.bf16 %v3330, %v3330
    %v3332 = vpack.c.bf16 %v3160, %v3160
    %v3334 = vsel %vm3165, %v3331, 0
    %v3337 = vsel %vm3228, %v3332, 0
    %3339 = vmatprep.subr.bf16.mxu0 0
    %3340 = vmatpush1.bf16.msra.mxu0 0
    %3341 = vmatprep.subr.bf16.mxu0 0
    %3342 = vmatpush1.bf16.msra.mxu0 0
    %3343 = vmatprep.subr.bf16.mxu0 0
    %3344 = vmatpush1.bf16.msra.mxu0 0
    %3345 = vmatprep.subr.bf16.mxu0 0
    %3346 = vmatpush1.bf16.msra.mxu0 0
    %3347 = vmatprep.subr.bf16.mxu0 0
    %3348 = vmatpush1.bf16.msra.mxu0 0
    %3349 = vmatprep.subr.bf16.mxu0 0
    %3350 = vmatpush1.bf16.msra.mxu0 0
    %3351 = vmatprep.subr.bf16.mxu0 0
    %3352 = vmatpush1.bf16.msra.mxu0 0
    %3353 = vmatprep.subr.bf16.mxu0 0
    %3354 = vmatpush1.bf16.msra.mxu0 %v3337
    %3355 = vmatprep.subr.bf16.mxu0 0
    %3356 = vmatpush2.bf16.msra.mxu0 0
    %3357 = vmatprep.subr.bf16.mxu0 0
    %3358 = vmatpush2.bf16.msra.mxu0 0
    %3359 = vmatprep.subr.bf16.mxu0 0
    %3360 = vmatpush2.bf16.msra.mxu0 0
    %3361 = vmatprep.subr.bf16.mxu0 0
    %3362 = vmatpush2.bf16.msra.mxu0 0
    %3363 = vmatprep.subr.bf16.mxu0 0
    %3364 = vmatpush2.bf16.msra.mxu0 0
    %3365 = vmatprep.subr.bf16.mxu0 0
    %3366 = vmatpush2.bf16.msra.mxu0 0
    %3367 = vmatprep.subr.bf16.mxu0 0
    %3368 = vmatpush2.bf16.msra.mxu0 0
    %3369 = vmatprep.subr.bf16.mxu0 0
    %3370 = vmatpush2.bf16.msra.mxu0 0
    %3371 = vmatprep.mubr.bf16.mxu0 0
    %3372 = vmatmul.mubr.bf16.gmra.mxu0 %v3334
    %v3373 = vpop.f32.mrf.mxu0
    %v3374 = vadd.f32 0.0, %v3373
    %v3375 = vpop.f32.mrf.mxu0
    %v3376 = vpop.f32.mrf.mxu0
    %v3377 = vpop.f32.mrf.mxu0
    %3378 = vdwg.mxu0
    %v3379 = vld [vmem:[%s77] sm:$0xf]
    %v3380 = vpack.c.bf16 %v3374, %v3267
    %s3381 = scalar_lea.vmem %s79, 16
    %v3382 = vld [vmem:[%s3381] sm:$0xf]
    %v3383 = vld [vmem:[%s3381 + $0x4] sm:$0xf]
    %v3384 = vld [vmem:[%s3381 + $0x8] sm:$0xf]
    %v3385 = vld [vmem:[%s3381 + $0xc] sm:$0xf]
    %s3386 = scalar_lea.vmem %s59, 1
    %v3387 = vld [vmem:[%s3386] sm:$0x1]
    %v3389 = vlaneseq
    %v3390 = vshrl.u32 %v3389, 7
    %v3391 = vsub.s32 0, %v3390
    %v3392 = vrot.slane %v3387, %v3391
    %v3398 = vunpack.c.l.b16 %v3382
    %v3399 = vunpack.c.l.b16 %v3383
    %v3400 = vunpack.c.l.b16 %v3384
    %v3401 = vunpack.c.l.b16 %v3385
    %v3402 = vpack.c.b16 %v3399, %v3398
    %v3403 = vpack.c.b16 %v3401, %v3400
    %3406 = vmatprep.subr.bf16.mxu0 0
    %3407 = vmatpush1.bf16.msra.mxu0 0
    %3408 = vmatprep.subr.bf16.mxu0 0
    %3409 = vmatpush1.bf16.msra.mxu0 0
    %3410 = vmatprep.subr.bf16.mxu0 0
    %3411 = vmatpush1.bf16.msra.mxu0 0
    %3412 = vmatprep.subr.bf16.mxu0 0
    %3413 = vmatpush1.bf16.msra.mxu0 0
    %3414 = vmatprep.subr.bf16.mxu0 0
    %3415 = vmatpush1.bf16.msra.mxu0 0
    %3416 = vmatprep.subr.bf16.mxu0 0
    %3417 = vmatpush1.bf16.msra.mxu0 0
    %3418 = vmatprep.subr.bf16.mxu0 0
    %3419 = vmatpush1.bf16.msra.mxu0 %v3403
    %3420 = vmatprep.subr.bf16.mxu0 0
    %3421 = vmatpush1.bf16.msra.mxu0 %v3402
    %3422 = vmatprep.subr.bf16.mxu0 0
    %3423 = vmatpush2.bf16.msra.mxu0 0
    %3424 = vmatprep.subr.bf16.mxu0 0
    %3425 = vmatpush2.bf16.msra.mxu0 0
    %3426 = vmatprep.subr.bf16.mxu0 0
    %3427 = vmatpush2.bf16.msra.mxu0 0
    %3428 = vmatprep.subr.bf16.mxu0 0
    %3429 = vmatpush2.bf16.msra.mxu0 0
    %3430 = vmatprep.subr.bf16.mxu0 0
    %3431 = vmatpush2.bf16.msra.mxu0 0
    %3432 = vmatprep.subr.bf16.mxu0 0
    %3433 = vmatpush2.bf16.msra.mxu0 0
    %3434 = vmatprep.subr.bf16.mxu0 0
    %3435 = vmatpush2.bf16.msra.mxu0 0
    %3436 = vmatprep.subr.bf16.mxu0 0
    %3437 = vmatpush2.bf16.msra.mxu0 0
    %3438 = vmatprep.mubr.bf16.mxu0 0
    %3439 = vmatmul.mubr.bf16.gmra.mxu0 %v2992
    %v3440 = vpop.f32.mrf.mxu0
    %v3441 = vadd.f32 %v3392, %v3440
    %v3442 = vpop.f32.mrf.mxu0
    %v3443 = vpop.f32.mrf.mxu0
    %v3444 = vadd.f32 %v3392, %v3443
    %v3445 = vpop.f32.mrf.mxu0
    %3446 = vdwg.mxu0
    %s3447 = scalar_lea.vmem %s75, 16
    %v3448 = vld [vmem:[%s3447] sm:$0xf]
    %v3449 = vld [vmem:[%s3447 + $0x4] sm:$0xf]
    %v3450 = vld [vmem:[%s3447 + $0x8] sm:$0xf]
    %v3451 = vld [vmem:[%s3447 + $0xc] sm:$0xf]
    %s3452 = scalar_lea.vmem %s55, 1
    %v3453 = vld [vmem:[%s3452] sm:$0x1]
    %v3455 = vlaneseq
    %v3456 = vshrl.u32 %v3455, 7
    %v3457 = vsub.s32 0, %v3456
    %v3458 = vrot.slane %v3453, %v3457
    %v3464 = vunpack.c.l.b16 %v3448
    %v3465 = vunpack.c.l.b16 %v3449
    %v3466 = vunpack.c.l.b16 %v3450
    %v3467 = vunpack.c.l.b16 %v3451
    %v3468 = vpack.c.b16 %v3465, %v3464
    %v3469 = vpack.c.b16 %v3467, %v3466
    %3472 = vmatprep.subr.bf16.mxu0 0
    %3473 = vmatpush1.bf16.msra.mxu0 0
    %3474 = vmatprep.subr.bf16.mxu0 0
    %3475 = vmatpush1.bf16.msra.mxu0 0
    %3476 = vmatprep.subr.bf16.mxu0 0
    %3477 = vmatpush1.bf16.msra.mxu0 0
    %3478 = vmatprep.subr.bf16.mxu0 0
    %3479 = vmatpush1.bf16.msra.mxu0 0
    %3480 = vmatprep.subr.bf16.mxu0 0
    %3481 = vmatpush1.bf16.msra.mxu0 0
    %3482 = vmatprep.subr.bf16.mxu0 0
    %3483 = vmatpush1.bf16.msra.mxu0 0
    %3484 = vmatprep.subr.bf16.mxu0 0
    %3485 = vmatpush1.bf16.msra.mxu0 %v3469
    %3486 = vmatprep.subr.bf16.mxu0 0
    %3487 = vmatpush1.bf16.msra.mxu0 %v3468
    %3488 = vmatprep.subr.bf16.mxu0 0
    %3489 = vmatpush2.bf16.msra.mxu0 0
    %3490 = vmatprep.subr.bf16.mxu0 0
    %3491 = vmatpush2.bf16.msra.mxu0 0
    %3492 = vmatprep.subr.bf16.mxu0 0
    %3493 = vmatpush2.bf16.msra.mxu0 0
    %3494 = vmatprep.subr.bf16.mxu0 0
    %3495 = vmatpush2.bf16.msra.mxu0 0
    %3496 = vmatprep.subr.bf16.mxu0 0
    %3497 = vmatpush2.bf16.msra.mxu0 0
    %3498 = vmatprep.subr.bf16.mxu0 0
    %3499 = vmatpush2.bf16.msra.mxu0 0
    %3500 = vmatprep.subr.bf16.mxu0 0
    %3501 = vmatpush2.bf16.msra.mxu0 0
    %3502 = vmatprep.subr.bf16.mxu0 0
    %3503 = vmatpush2.bf16.msra.mxu0 0
    %3504 = vmatprep.mubr.bf16.mxu0 0
    %3505 = vmatmul.mubr.bf16.gmra.mxu0 %v2992
    %v3506 = vpop.f32.mrf.mxu0
    %v3507 = vadd.f32 %v3458, %v3506
    %v3508 = vpop.f32.mrf.mxu0
    %v3509 = vpop.f32.mrf.mxu0
    %v3510 = vadd.f32 %v3458, %v3509
    %v3511 = vpop.f32.mrf.mxu0
    %3512 = vdwg.mxu0
    %s3513 = scalar_lea.vmem %s81, 16
    %v3514 = vld [vmem:[%s3513] sm:$0xf]
    %v3515 = vld [vmem:[%s3513 + $0x4] sm:$0xf]
    %v3516 = vld [vmem:[%s3513 + $0x8] sm:$0xf]
    %v3517 = vld [vmem:[%s3513 + $0xc] sm:$0xf]
    %s3518 = scalar_lea.vmem %s61, 1
    %v3519 = vld [vmem:[%s3518] sm:$0x1]
    %v3521 = vlaneseq
    %v3522 = vshrl.u32 %v3521, 7
    %v3523 = vsub.s32 0, %v3522
    %v3524 = vrot.slane %v3519, %v3523
    %v3530 = vunpack.c.l.b16 %v3514
    %v3531 = vunpack.c.l.b16 %v3515
    %v3532 = vunpack.c.l.b16 %v3516
    %v3533 = vunpack.c.l.b16 %v3517
    %v3534 = vpack.c.b16 %v3531, %v3530
    %v3535 = vpack.c.b16 %v3533, %v3532
    %3538 = vmatprep.subr.bf16.mxu0 0
    %3539 = vmatpush1.bf16.msra.mxu0 0
    %3540 = vmatprep.subr.bf16.mxu0 0
    %3541 = vmatpush1.bf16.msra.mxu0 0
    %3542 = vmatprep.subr.bf16.mxu0 0
    %3543 = vmatpush1.bf16.msra.mxu0 0
    %3544 = vmatprep.subr.bf16.mxu0 0
    %3545 = vmatpush1.bf16.msra.mxu0 0
    %3546 = vmatprep.subr.bf16.mxu0 0
    %3547 = vmatpush1.bf16.msra.mxu0 0
    %3548 = vmatprep.subr.bf16.mxu0 0
    %3549 = vmatpush1.bf16.msra.mxu0 0
    %3550 = vmatprep.subr.bf16.mxu0 0
    %3551 = vmatpush1.bf16.msra.mxu0 %v3535
    %3552 = vmatprep.subr.bf16.mxu0 0
    %3553 = vmatpush1.bf16.msra.mxu0 %v3534
    %3554 = vmatprep.subr.bf16.mxu0 0
    %3555 = vmatpush2.bf16.msra.mxu0 0
    %3556 = vmatprep.subr.bf16.mxu0 0
    %3557 = vmatpush2.bf16.msra.mxu0 0
    %3558 = vmatprep.subr.bf16.mxu0 0
    %3559 = vmatpush2.bf16.msra.mxu0 0
    %3560 = vmatprep.subr.bf16.mxu0 0
    %3561 = vmatpush2.bf16.msra.mxu0 0
    %3562 = vmatprep.subr.bf16.mxu0 0
    %3563 = vmatpush2.bf16.msra.mxu0 0
    %3564 = vmatprep.subr.bf16.mxu0 0
    %3565 = vmatpush2.bf16.msra.mxu0 0
    %3566 = vmatprep.subr.bf16.mxu0 0
    %3567 = vmatpush2.bf16.msra.mxu0 0
    %3568 = vmatprep.subr.bf16.mxu0 0
    %3569 = vmatpush2.bf16.msra.mxu0 0
    %3570 = vmatprep.mubr.bf16.mxu0 0
    %3571 = vmatmul.mubr.bf16.gmra.mxu0 %v2992
    %v3572 = vpop.f32.mrf.mxu0
    %v3573 = vadd.f32 %v3524, %v3572
    %v3574 = vpop.f32.mrf.mxu0
    %v3575 = vpop.f32.mrf.mxu0
    %v3576 = vadd.f32 %v3524, %v3575
    %v3577 = vpop.f32.mrf.mxu0
    %3578 = vdwg.mxu0
    %v3579 = vpack.c.bf16 %v3441, %v3441
    %v3580 = vpack.c.bf16 %v3507, %v3507
    %v3582 = vsel %vm3165, %v3579, 0
    %v3585 = vsel %vm3165, %v3580, 0
    %3587 = vmatprep.subr.bf16.mxu0 0
    %3588 = vmatpush1.bf16.xpose.msra.mxu0 0
    %3589 = vmatprep.subr.bf16.mxu0 0
    %3590 = vmatpush1.bf16.xpose.msra.mxu0 0
    %3591 = vmatprep.subr.bf16.mxu0 0
    %3592 = vmatpush1.bf16.xpose.msra.mxu0 0
    %3593 = vmatprep.subr.bf16.mxu0 0
    %3594 = vmatpush1.bf16.xpose.msra.mxu0 0
    %3595 = vmatprep.subr.bf16.mxu0 0
    %3596 = vmatpush1.bf16.xpose.msra.mxu0 0
    %3597 = vmatprep.subr.bf16.mxu0 0
    %3598 = vmatpush1.bf16.xpose.msra.mxu0 0
    %3599 = vmatprep.subr.bf16.mxu0 0
    %3600 = vmatpush1.bf16.xpose.msra.mxu0 0
    %3601 = vmatprep.subr.bf16.mxu0 0
    %3602 = vmatpush1.bf16.xpose.msra.mxu0 %v3585
    %3603 = vmatprep.subr.bf16.mxu0 0
    %3604 = vmatpush2.bf16.xpose.msra.mxu0 0
    %3605 = vmatprep.subr.bf16.mxu0 0
    %3606 = vmatpush2.bf16.xpose.msra.mxu0 0
    %3607 = vmatprep.subr.bf16.mxu0 0
    %3608 = vmatpush2.bf16.xpose.msra.mxu0 0
    %3609 = vmatprep.subr.bf16.mxu0 0
    %3610 = vmatpush2.bf16.xpose.msra.mxu0 0
    %3611 = vmatprep.subr.bf16.mxu0 0
    %3612 = vmatpush2.bf16.xpose.msra.mxu0 0
    %3613 = vmatprep.subr.bf16.mxu0 0
    %3614 = vmatpush2.bf16.xpose.msra.mxu0 0
    %3615 = vmatprep.subr.bf16.mxu0 0
    %3616 = vmatpush2.bf16.xpose.msra.mxu0 0
    %3617 = vmatprep.subr.bf16.mxu0 0
    %3618 = vmatpush2.bf16.xpose.msra.mxu0 0
    %3619 = vmatprep.mubr.bf16.mxu0 0
    %3620 = vmatmul.mubr.bf16.gmra.mxu0 %v3582
    %v3621 = vpop.f32.mrf.mxu0
    %v3622 = vadd.f32 %v2958, %v3621
    %v3623 = vpop.f32.mrf.mxu0
    %v3624 = vpop.f32.mrf.mxu0
    %v3625 = vpop.f32.mrf.mxu0
    %3626 = vdwg.mxu0
    %v3627 = vsel %vm3165, %v3622, -inf
    %3628 = vmax.xlane.f32.xlu0 %v3627
    %v3629 = vpop.xlane.xlu0 %3628
    %v3630 = vsub.f32 %v3622, %v3629
    %v3631 = vmul.f32 %v3630, 1.442695
    %v3632 = vpow.pop %v3631
    %v3633 = vsel %vm3165, %v3632, 0.0
    %3634 = vadd.xlane.f32.xlu0 %v3633
    %v3635 = vpop.xlane.xlu0 %3634
    %v3636 = vrcp.pop %v3635
    %v3637 = vmul.f32 %v3632, %v3636
    %v3638 = vpack.c.bf16 %v3637, %v3637
    %v3639 = vpack.c.bf16 %v3573, %v3573
    %v3641 = vsel %vm3165, %v3638, 0
    %v3644 = vsel %vm3228, %v3639, 0
    %3646 = vmatprep.subr.bf16.mxu0 0
    %3647 = vmatpush1.bf16.msra.mxu0 0
    %3648 = vmatprep.subr.bf16.mxu0 0
    %3649 = vmatpush1.bf16.msra.mxu0 0
    %3650 = vmatprep.subr.bf16.mxu0 0
    %3651 = vmatpush1.bf16.msra.mxu0 0
    %3652 = vmatprep.subr.bf16.mxu0 0
    %3653 = vmatpush1.bf16.msra.mxu0 0
    %3654 = vmatprep.subr.bf16.mxu0 0
    %3655 = vmatpush1.bf16.msra.mxu0 0
    %3656 = vmatprep.subr.bf16.mxu0 0
    %3657 = vmatpush1.bf16.msra.mxu0 0
    %3658 = vmatprep.subr.bf16.mxu0 0
    %3659 = vmatpush1.bf16.msra.mxu0 0
    %3660 = vmatprep.subr.bf16.mxu0 0
    %3661 = vmatpush1.bf16.msra.mxu0 %v3644
    %3662 = vmatprep.subr.bf16.mxu0 0
    %3663 = vmatpush2.bf16.msra.mxu0 0
    %3664 = vmatprep.subr.bf16.mxu0 0
    %3665 = vmatpush2.bf16.msra.mxu0 0
    %3666 = vmatprep.subr.bf16.mxu0 0
    %3667 = vmatpush2.bf16.msra.mxu0 0
    %3668 = vmatprep.subr.bf16.mxu0 0
    %3669 = vmatpush2.bf16.msra.mxu0 0
    %3670 = vmatprep.subr.bf16.mxu0 0
    %3671 = vmatpush2.bf16.msra.mxu0 0
    %3672 = vmatprep.subr.bf16.mxu0 0
    %3673 = vmatpush2.bf16.msra.mxu0 0
    %3674 = vmatprep.subr.bf16.mxu0 0
    %3675 = vmatpush2.bf16.msra.mxu0 0
    %3676 = vmatprep.subr.bf16.mxu0 0
    %3677 = vmatpush2.bf16.msra.mxu0 0
    %3678 = vmatprep.mubr.bf16.mxu0 0
    %3679 = vmatmul.mubr.bf16.gmra.mxu0 %v3641
    %v3680 = vpop.f32.mrf.mxu0
    %v3681 = vadd.f32 0.0, %v3680
    %v3682 = vpop.f32.mrf.mxu0
    %v3683 = vpop.f32.mrf.mxu0
    %v3684 = vpop.f32.mrf.mxu0
    %3685 = vdwg.mxu0
    %v3686 = vpack.c.bf16 %v3444, %v3444
    %v3687 = vpack.c.bf16 %v3510, %v3510
    %v3689 = vsel %vm3165, %v3686, 0
    %v3692 = vsel %vm3165, %v3687, 0
    %3694 = vmatprep.subr.bf16.mxu0 0
    %3695 = vmatpush1.bf16.xpose.msra.mxu0 0
    %3696 = vmatprep.subr.bf16.mxu0 0
    %3697 = vmatpush1.bf16.xpose.msra.mxu0 0
    %3698 = vmatprep.subr.bf16.mxu0 0
    %3699 = vmatpush1.bf16.xpose.msra.mxu0 0
    %3700 = vmatprep.subr.bf16.mxu0 0
    %3701 = vmatpush1.bf16.xpose.msra.mxu0 0
    %3702 = vmatprep.subr.bf16.mxu0 0
    %3703 = vmatpush1.bf16.xpose.msra.mxu0 0
    %3704 = vmatprep.subr.bf16.mxu0 0
    %3705 = vmatpush1.bf16.xpose.msra.mxu0 0
    %3706 = vmatprep.subr.bf16.mxu0 0
    %3707 = vmatpush1.bf16.xpose.msra.mxu0 0
    %3708 = vmatprep.subr.bf16.mxu0 0
    %3709 = vmatpush1.bf16.xpose.msra.mxu0 %v3692
    %3710 = vmatprep.subr.bf16.mxu0 0
    %3711 = vmatpush2.bf16.xpose.msra.mxu0 0
    %3712 = vmatprep.subr.bf16.mxu0 0
    %3713 = vmatpush2.bf16.xpose.msra.mxu0 0
    %3714 = vmatprep.subr.bf16.mxu0 0
    %3715 = vmatpush2.bf16.xpose.msra.mxu0 0
    %3716 = vmatprep.subr.bf16.mxu0 0
    %3717 = vmatpush2.bf16.xpose.msra.mxu0 0
    %3718 = vmatprep.subr.bf16.mxu0 0
    %3719 = vmatpush2.bf16.xpose.msra.mxu0 0
    %3720 = vmatprep.subr.bf16.mxu0 0
    %3721 = vmatpush2.bf16.xpose.msra.mxu0 0
    %3722 = vmatprep.subr.bf16.mxu0 0
    %3723 = vmatpush2.bf16.xpose.msra.mxu0 0
    %3724 = vmatprep.subr.bf16.mxu0 0
    %3725 = vmatpush2.bf16.xpose.msra.mxu0 0
    %3726 = vmatprep.mubr.bf16.mxu0 0
    %3727 = vmatmul.mubr.bf16.gmra.mxu0 %v3689
    %v3728 = vpop.f32.mrf.mxu0
    %v3729 = vadd.f32 %v2966, %v3728
    %v3730 = vpop.f32.mrf.mxu0
    %v3731 = vpop.f32.mrf.mxu0
    %v3732 = vpop.f32.mrf.mxu0
    %3733 = vdwg.mxu0
    %v3734 = vsel %vm3165, %v3729, -inf
    %3735 = vmax.xlane.f32.xlu0 %v3734
    %v3736 = vpop.xlane.xlu0 %3735
    %v3737 = vsub.f32 %v3729, %v3736
    %v3738 = vmul.f32 %v3737, 1.442695
    %v3739 = vpow.pop %v3738
    %v3740 = vsel %vm3165, %v3739, 0.0
    %3741 = vadd.xlane.f32.xlu0 %v3740
    %v3742 = vpop.xlane.xlu0 %3741
    %v3743 = vrcp.pop %v3742
    %v3744 = vmul.f32 %v3739, %v3743
    %v3745 = vpack.c.bf16 %v3744, %v3744
    %v3746 = vpack.c.bf16 %v3576, %v3576
    %v3748 = vsel %vm3165, %v3745, 0
    %v3751 = vsel %vm3228, %v3746, 0
    %3753 = vmatprep.subr.bf16.mxu0 0
    %3754 = vmatpush1.bf16.msra.mxu0 0
    %3755 = vmatprep.subr.bf16.mxu0 0
    %3756 = vmatpush1.bf16.msra.mxu0 0
    %3757 = vmatprep.subr.bf16.mxu0 0
    %3758 = vmatpush1.bf16.msra.mxu0 0
    %3759 = vmatprep.subr.bf16.mxu0 0
    %3760 = vmatpush1.bf16.msra.mxu0 0
    %3761 = vmatprep.subr.bf16.mxu0 0
    %3762 = vmatpush1.bf16.msra.mxu0 0
    %3763 = vmatprep.subr.bf16.mxu0 0
    %3764 = vmatpush1.bf16.msra.mxu0 0
    %3765 = vmatprep.subr.bf16.mxu0 0
    %3766 = vmatpush1.bf16.msra.mxu0 0
    %3767 = vmatprep.subr.bf16.mxu0 0
    %3768 = vmatpush1.bf16.msra.mxu0 %v3751
    %3769 = vmatprep.subr.bf16.mxu0 0
    %3770 = vmatpush2.bf16.msra.mxu0 0
    %3771 = vmatprep.subr.bf16.mxu0 0
    %3772 = vmatpush2.bf16.msra.mxu0 0
    %3773 = vmatprep.subr.bf16.mxu0 0
    %3774 = vmatpush2.bf16.msra.mxu0 0
    %3775 = vmatprep.subr.bf16.mxu0 0
    %3776 = vmatpush2.bf16.msra.mxu0 0
    %3777 = vmatprep.subr.bf16.mxu0 0
    %3778 = vmatpush2.bf16.msra.mxu0 0
    %3779 = vmatprep.subr.bf16.mxu0 0
    %3780 = vmatpush2.bf16.msra.mxu0 0
    %3781 = vmatprep.subr.bf16.mxu0 0
    %3782 = vmatpush2.bf16.msra.mxu0 0
    %3783 = vmatprep.subr.bf16.mxu0 0
    %3784 = vmatpush2.bf16.msra.mxu0 0
    %3785 = vmatprep.mubr.bf16.mxu0 0
    %3786 = vmatmul.mubr.bf16.gmra.mxu0 %v3748
    %v3787 = vpop.f32.mrf.mxu0
    %v3788 = vadd.f32 0.0, %v3787
    %v3789 = vpop.f32.mrf.mxu0
    %v3790 = vpop.f32.mrf.mxu0
    %v3791 = vpop.f32.mrf.mxu0
    %3792 = vdwg.mxu0
    %s3793 = scalar_lea.vmem %s77, 4
    %v3794 = vld [vmem:[%s3793] sm:$0xf]
    %v3795 = vpack.c.bf16 %v3788, %v3681
    %v3797 = vsel %vm3165, %v3795, 0
    %v3800 = vsel %vm3228, %v3794, 0
    %3802 = vmatprep.subr.bf16.mxu0 0
    %3803 = vmatpush1.bf16.msra.mxu0 0
    %3804 = vmatprep.subr.bf16.mxu0 0
    %3805 = vmatpush1.bf16.msra.mxu0 0
    %3806 = vmatprep.subr.bf16.mxu0 0
    %3807 = vmatpush1.bf16.msra.mxu0 0
    %3808 = vmatprep.subr.bf16.mxu0 0
    %3809 = vmatpush1.bf16.msra.mxu0 0
    %3810 = vmatprep.subr.bf16.mxu0 0
    %3811 = vmatpush1.bf16.msra.mxu0 0
    %3812 = vmatprep.subr.bf16.mxu0 0
    %3813 = vmatpush1.bf16.msra.mxu0 0
    %3814 = vmatprep.subr.bf16.mxu0 0
    %3815 = vmatpush1.bf16.msra.mxu0 0
    %3816 = vmatprep.subr.bf16.mxu0 0
    %3817 = vmatpush1.bf16.msra.mxu0 %v3800
    %3818 = vmatprep.subr.bf16.mxu0 0
    %3819 = vmatpush2.bf16.msra.mxu0 0
    %3820 = vmatprep.subr.bf16.mxu0 0
    %3821 = vmatpush2.bf16.msra.mxu0 0
    %3822 = vmatprep.subr.bf16.mxu0 0
    %3823 = vmatpush2.bf16.msra.mxu0 0
    %3824 = vmatprep.subr.bf16.mxu0 0
    %3825 = vmatpush2.bf16.msra.mxu0 0
    %3826 = vmatprep.subr.bf16.mxu0 0
    %3827 = vmatpush2.bf16.msra.mxu0 0
    %3828 = vmatprep.subr.bf16.mxu0 0
    %3829 = vmatpush2.bf16.msra.mxu0 0
    %3830 = vmatprep.subr.bf16.mxu0 0
    %3831 = vmatpush2.bf16.msra.mxu0 0
    %3832 = vmatprep.subr.bf16.mxu0 0
    %3833 = vmatpush2.bf16.msra.mxu0 0
    %3834 = vmatprep.mubr.bf16.mxu0 0
    %3835 = vmatmul.mubr.bf16.gmra.mxu0 %v3797
    %v3836 = vpop.f32.mrf.mxu0
    %v3837 = vadd.f32 0.0, %v3836
    %v3838 = vpop.f32.mrf.mxu0
    %v3839 = vpop.f32.mrf.mxu0
    %v3840 = vadd.f32 0.0, %v3839
    %v3841 = vpop.f32.mrf.mxu0
    %3842 = vdwg.mxu0
    %v3844 = vsel %vm3165, %v3380, 0
    %v3847 = vsel %vm3228, %v3379, 0
    %3849 = vmatprep.subr.bf16.mxu0 0
    %3850 = vmatpush1.bf16.msra.mxu0 0
    %3851 = vmatprep.subr.bf16.mxu0 0
    %3852 = vmatpush1.bf16.msra.mxu0 0
    %3853 = vmatprep.subr.bf16.mxu0 0
    %3854 = vmatpush1.bf16.msra.mxu0 0
    %3855 = vmatprep.subr.bf16.mxu0 0
    %3856 = vmatpush1.bf16.msra.mxu0 0
    %3857 = vmatprep.subr.bf16.mxu0 0
    %3858 = vmatpush1.bf16.msra.mxu0 0
    %3859 = vmatprep.subr.bf16.mxu0 0
    %3860 = vmatpush1.bf16.msra.mxu0 0
    %3861 = vmatprep.subr.bf16.mxu0 0
    %3862 = vmatpush1.bf16.msra.mxu0 0
    %3863 = vmatprep.subr.bf16.mxu0 0
    %3864 = vmatpush1.bf16.msra.mxu0 %v3847
    %3865 = vmatprep.subr.bf16.mxu0 0
    %3866 = vmatpush2.bf16.msra.mxu0 0
    %3867 = vmatprep.subr.bf16.mxu0 0
    %3868 = vmatpush2.bf16.msra.mxu0 0
    %3869 = vmatprep.subr.bf16.mxu0 0
    %3870 = vmatpush2.bf16.msra.mxu0 0
    %3871 = vmatprep.subr.bf16.mxu0 0
    %3872 = vmatpush2.bf16.msra.mxu0 0
    %3873 = vmatprep.subr.bf16.mxu0 0
    %3874 = vmatpush2.bf16.msra.mxu0 0
    %3875 = vmatprep.subr.bf16.mxu0 0
    %3876 = vmatpush2.bf16.msra.mxu0 0
    %3877 = vmatprep.subr.bf16.mxu0 0
    %3878 = vmatpush2.bf16.msra.mxu0 0
    %3879 = vmatprep.subr.bf16.mxu0 0
    %3880 = vmatpush2.bf16.msra.mxu0 0
    %3881 = vmatprep.mubr.bf16.mxu0 0
    %3882 = vmatmul.mubr.bf16.gmra.mxu0 %v3844
    %v3883 = vpop.f32.mrf.mxu0
    %v3884 = vadd.f32 %v3837, %v3883
    %v3885 = vpop.f32.mrf.mxu0
    %v3886 = vpop.f32.mrf.mxu0
    %v3887 = vadd.f32 %v3840, %v3886
    %v3888 = vpop.f32.mrf.mxu0
    %3889 = vdwg.mxu0
    %s3890 = scalar_lea.vmem %s79, 32
    %v3891 = vld [vmem:[%s3890] sm:$0xf]
    %v3892 = vld [vmem:[%s3890 + $0x4] sm:$0xf]
    %v3893 = vld [vmem:[%s3890 + $0x8] sm:$0xf]
    %v3894 = vld [vmem:[%s3890 + $0xc] sm:$0xf]
    %s3895 = scalar_lea.vmem %s59, 2
    %v3896 = vld [vmem:[%s3895] sm:$0x1]
    %v3898 = vlaneseq
    %v3899 = vshrl.u32 %v3898, 7
    %v3900 = vsub.s32 0, %v3899
    %v3901 = vrot.slane %v3896, %v3900
    %v3907 = vunpack.c.l.b16 %v3891
    %v3908 = vunpack.c.l.b16 %v3892
    %v3909 = vunpack.c.l.b16 %v3893
    %v3910 = vunpack.c.l.b16 %v3894
    %v3911 = vpack.c.b16 %v3908, %v3907
    %v3912 = vpack.c.b16 %v3910, %v3909
    %3915 = vmatprep.subr.bf16.mxu0 0
    %3916 = vmatpush1.bf16.msra.mxu0 0
    %3917 = vmatprep.subr.bf16.mxu0 0
    %3918 = vmatpush1.bf16.msra.mxu0 0
    %3919 = vmatprep.subr.bf16.mxu0 0
    %3920 = vmatpush1.bf16.msra.mxu0 0
    %3921 = vmatprep.subr.bf16.mxu0 0
    %3922 = vmatpush1.bf16.msra.mxu0 0
    %3923 = vmatprep.subr.bf16.mxu0 0
    %3924 = vmatpush1.bf16.msra.mxu0 0
    %3925 = vmatprep.subr.bf16.mxu0 0
    %3926 = vmatpush1.bf16.msra.mxu0 0
    %3927 = vmatprep.subr.bf16.mxu0 0
    %3928 = vmatpush1.bf16.msra.mxu0 %v3912
    %3929 = vmatprep.subr.bf16.mxu0 0
    %3930 = vmatpush1.bf16.msra.mxu0 %v3911
    %3931 = vmatprep.subr.bf16.mxu0 0
    %3932 = vmatpush2.bf16.msra.mxu0 0
    %3933 = vmatprep.subr.bf16.mxu0 0
    %3934 = vmatpush2.bf16.msra.mxu0 0
    %3935 = vmatprep.subr.bf16.mxu0 0
    %3936 = vmatpush2.bf16.msra.mxu0 0
    %3937 = vmatprep.subr.bf16.mxu0 0
    %3938 = vmatpush2.bf16.msra.mxu0 0
    %3939 = vmatprep.subr.bf16.mxu0 0
    %3940 = vmatpush2.bf16.msra.mxu0 0
    %3941 = vmatprep.subr.bf16.mxu0 0
    %3942 = vmatpush2.bf16.msra.mxu0 0
    %3943 = vmatprep.subr.bf16.mxu0 0
    %3944 = vmatpush2.bf16.msra.mxu0 0
    %3945 = vmatprep.subr.bf16.mxu0 0
    %3946 = vmatpush2.bf16.msra.mxu0 0
    %3947 = vmatprep.mubr.bf16.mxu0 0
    %3948 = vmatmul.mubr.bf16.gmra.mxu0 %v2992
    %v3949 = vpop.f32.mrf.mxu0
    %v3950 = vadd.f32 %v3901, %v3949
    %v3951 = vpop.f32.mrf.mxu0
    %v3952 = vpop.f32.mrf.mxu0
    %v3953 = vadd.f32 %v3901, %v3952
    %v3954 = vpop.f32.mrf.mxu0
    %3955 = vdwg.mxu0
    %s3956 = scalar_lea.vmem %s75, 32
    %v3957 = vld [vmem:[%s3956] sm:$0xf]
    %v3958 = vld [vmem:[%s3956 + $0x4] sm:$0xf]
    %v3959 = vld [vmem:[%s3956 + $0x8] sm:$0xf]
    %v3960 = vld [vmem:[%s3956 + $0xc] sm:$0xf]
    %s3961 = scalar_lea.vmem %s55, 2
    %v3962 = vld [vmem:[%s3961] sm:$0x1]
    %v3964 = vlaneseq
    %v3965 = vshrl.u32 %v3964, 7
    %v3966 = vsub.s32 0, %v3965
    %v3967 = vrot.slane %v3962, %v3966
    %v3973 = vunpack.c.l.b16 %v3957
    %v3974 = vunpack.c.l.b16 %v3958
    %v3975 = vunpack.c.l.b16 %v3959
    %v3976 = vunpack.c.l.b16 %v3960
    %v3977 = vpack.c.b16 %v3974, %v3973
    %v3978 = vpack.c.b16 %v3976, %v3975
    %3981 = vmatprep.subr.bf16.mxu0 0
    %3982 = vmatpush1.bf16.msra.mxu0 0
    %3983 = vmatprep.subr.bf16.mxu0 0
    %3984 = vmatpush1.bf16.msra.mxu0 0
    %3985 = vmatprep.subr.bf16.mxu0 0
    %3986 = vmatpush1.bf16.msra.mxu0 0
    %3987 = vmatprep.subr.bf16.mxu0 0
    %3988 = vmatpush1.bf16.msra.mxu0 0
    %3989 = vmatprep.subr.bf16.mxu0 0
    %3990 = vmatpush1.bf16.msra.mxu0 0
    %3991 = vmatprep.subr.bf16.mxu0 0
    %3992 = vmatpush1.bf16.msra.mxu0 0
    %3993 = vmatprep.subr.bf16.mxu0 0
    %3994 = vmatpush1.bf16.msra.mxu0 %v3978
    %3995 = vmatprep.subr.bf16.mxu0 0
    %3996 = vmatpush1.bf16.msra.mxu0 %v3977
    %3997 = vmatprep.subr.bf16.mxu0 0
    %3998 = vmatpush2.bf16.msra.mxu0 0
    %3999 = vmatprep.subr.bf16.mxu0 0
    %4000 = vmatpush2.bf16.msra.mxu0 0
    %4001 = vmatprep.subr.bf16.mxu0 0
    %4002 = vmatpush2.bf16.msra.mxu0 0
    %4003 = vmatprep.subr.bf16.mxu0 0
    %4004 = vmatpush2.bf16.msra.mxu0 0
    %4005 = vmatprep.subr.bf16.mxu0 0
    %4006 = vmatpush2.bf16.msra.mxu0 0
    %4007 = vmatprep.subr.bf16.mxu0 0
    %4008 = vmatpush2.bf16.msra.mxu0 0
    %4009 = vmatprep.subr.bf16.mxu0 0
    %4010 = vmatpush2.bf16.msra.mxu0 0
    %4011 = vmatprep.subr.bf16.mxu0 0
    %4012 = vmatpush2.bf16.msra.mxu0 0
    %4013 = vmatprep.mubr.bf16.mxu0 0
    %4014 = vmatmul.mubr.bf16.gmra.mxu0 %v2992
    %v4015 = vpop.f32.mrf.mxu0
    %v4016 = vadd.f32 %v3967, %v4015
    %v4017 = vpop.f32.mrf.mxu0
    %v4018 = vpop.f32.mrf.mxu0
    %v4019 = vadd.f32 %v3967, %v4018
    %v4020 = vpop.f32.mrf.mxu0
    %4021 = vdwg.mxu0
    %s4022 = scalar_lea.vmem %s81, 32
    %v4023 = vld [vmem:[%s4022] sm:$0xf]
    %v4024 = vld [vmem:[%s4022 + $0x4] sm:$0xf]
    %v4025 = vld [vmem:[%s4022 + $0x8] sm:$0xf]
    %v4026 = vld [vmem:[%s4022 + $0xc] sm:$0xf]
    %s4027 = scalar_lea.vmem %s61, 2
    %v4028 = vld [vmem:[%s4027] sm:$0x1]
    %v4030 = vlaneseq
    %v4031 = vshrl.u32 %v4030, 7
    %v4032 = vsub.s32 0, %v4031
    %v4033 = vrot.slane %v4028, %v4032
    %v4039 = vunpack.c.l.b16 %v4023
    %v4040 = vunpack.c.l.b16 %v4024
    %v4041 = vunpack.c.l.b16 %v4025
    %v4042 = vunpack.c.l.b16 %v4026
    %v4043 = vpack.c.b16 %v4040, %v4039
    %v4044 = vpack.c.b16 %v4042, %v4041
    %4047 = vmatprep.subr.bf16.mxu0 0
    %4048 = vmatpush1.bf16.msra.mxu0 0
    %4049 = vmatprep.subr.bf16.mxu0 0
    %4050 = vmatpush1.bf16.msra.mxu0 0
    %4051 = vmatprep.subr.bf16.mxu0 0
    %4052 = vmatpush1.bf16.msra.mxu0 0
    %4053 = vmatprep.subr.bf16.mxu0 0
    %4054 = vmatpush1.bf16.msra.mxu0 0
    %4055 = vmatprep.subr.bf16.mxu0 0
    %4056 = vmatpush1.bf16.msra.mxu0 0
    %4057 = vmatprep.subr.bf16.mxu0 0
    %4058 = vmatpush1.bf16.msra.mxu0 0
    %4059 = vmatprep.subr.bf16.mxu0 0
    %4060 = vmatpush1.bf16.msra.mxu0 %v4044
    %4061 = vmatprep.subr.bf16.mxu0 0
    %4062 = vmatpush1.bf16.msra.mxu0 %v4043
    %4063 = vmatprep.subr.bf16.mxu0 0
    %4064 = vmatpush2.bf16.msra.mxu0 0
    %4065 = vmatprep.subr.bf16.mxu0 0
    %4066 = vmatpush2.bf16.msra.mxu0 0
    %4067 = vmatprep.subr.bf16.mxu0 0
    %4068 = vmatpush2.bf16.msra.mxu0 0
    %4069 = vmatprep.subr.bf16.mxu0 0
    %4070 = vmatpush2.bf16.msra.mxu0 0
    %4071 = vmatprep.subr.bf16.mxu0 0
    %4072 = vmatpush2.bf16.msra.mxu0 0
    %4073 = vmatprep.subr.bf16.mxu0 0
    %4074 = vmatpush2.bf16.msra.mxu0 0
    %4075 = vmatprep.subr.bf16.mxu0 0
    %4076 = vmatpush2.bf16.msra.mxu0 0
    %4077 = vmatprep.subr.bf16.mxu0 0
    %4078 = vmatpush2.bf16.msra.mxu0 0
    %4079 = vmatprep.mubr.bf16.mxu0 0
    %4080 = vmatmul.mubr.bf16.gmra.mxu0 %v2992
    %v4081 = vpop.f32.mrf.mxu0
    %v4082 = vadd.f32 %v4033, %v4081
    %v4083 = vpop.f32.mrf.mxu0
    %v4084 = vpop.f32.mrf.mxu0
    %v4085 = vadd.f32 %v4033, %v4084
    %v4086 = vpop.f32.mrf.mxu0
    %4087 = vdwg.mxu0
    %v4088 = vpack.c.bf16 %v3950, %v3950
    %v4089 = vpack.c.bf16 %v4016, %v4016
    %v4091 = vsel %vm3165, %v4088, 0
    %v4094 = vsel %vm3165, %v4089, 0
    %4096 = vmatprep.subr.bf16.mxu0 0
    %4097 = vmatpush1.bf16.xpose.msra.mxu0 0
    %4098 = vmatprep.subr.bf16.mxu0 0
    %4099 = vmatpush1.bf16.xpose.msra.mxu0 0
    %4100 = vmatprep.subr.bf16.mxu0 0
    %4101 = vmatpush1.bf16.xpose.msra.mxu0 0
    %4102 = vmatprep.subr.bf16.mxu0 0
    %4103 = vmatpush1.bf16.xpose.msra.mxu0 0
    %4104 = vmatprep.subr.bf16.mxu0 0
    %4105 = vmatpush1.bf16.xpose.msra.mxu0 0
    %4106 = vmatprep.subr.bf16.mxu0 0
    %4107 = vmatpush1.bf16.xpose.msra.mxu0 0
    %4108 = vmatprep.subr.bf16.mxu0 0
    %4109 = vmatpush1.bf16.xpose.msra.mxu0 0
    %4110 = vmatprep.subr.bf16.mxu0 0
    %4111 = vmatpush1.bf16.xpose.msra.mxu0 %v4094
    %4112 = vmatprep.subr.bf16.mxu0 0
    %4113 = vmatpush2.bf16.xpose.msra.mxu0 0
    %4114 = vmatprep.subr.bf16.mxu0 0
    %4115 = vmatpush2.bf16.xpose.msra.mxu0 0
    %4116 = vmatprep.subr.bf16.mxu0 0
    %4117 = vmatpush2.bf16.xpose.msra.mxu0 0
    %4118 = vmatprep.subr.bf16.mxu0 0
    %4119 = vmatpush2.bf16.xpose.msra.mxu0 0
    %4120 = vmatprep.subr.bf16.mxu0 0
    %4121 = vmatpush2.bf16.xpose.msra.mxu0 0
    %4122 = vmatprep.subr.bf16.mxu0 0
    %4123 = vmatpush2.bf16.xpose.msra.mxu0 0
    %4124 = vmatprep.subr.bf16.mxu0 0
    %4125 = vmatpush2.bf16.xpose.msra.mxu0 0
    %4126 = vmatprep.subr.bf16.mxu0 0
    %4127 = vmatpush2.bf16.xpose.msra.mxu0 0
    %4128 = vmatprep.mubr.bf16.mxu0 0
    %4129 = vmatmul.mubr.bf16.gmra.mxu0 %v4091
    %v4130 = vpop.f32.mrf.mxu0
    %v4131 = vadd.f32 %v2958, %v4130
    %v4132 = vpop.f32.mrf.mxu0
    %v4133 = vpop.f32.mrf.mxu0
    %v4134 = vpop.f32.mrf.mxu0
    %4135 = vdwg.mxu0
    %v4136 = vsel %vm3165, %v4131, -inf
    %4137 = vmax.xlane.f32.xlu0 %v4136
    %v4138 = vpop.xlane.xlu0 %4137
    %v4139 = vsub.f32 %v4131, %v4138
    %v4140 = vmul.f32 %v4139, 1.442695
    %v4141 = vpow.pop %v4140
    %v4142 = vsel %vm3165, %v4141, 0.0
    %4143 = vadd.xlane.f32.xlu0 %v4142
    %v4144 = vpop.xlane.xlu0 %4143
    %v4145 = vrcp.pop %v4144
    %v4146 = vmul.f32 %v4141, %v4145
    %v4147 = vpack.c.bf16 %v4146, %v4146
    %v4148 = vpack.c.bf16 %v4082, %v4082
    %v4150 = vsel %vm3165, %v4147, 0
    %v4153 = vsel %vm3228, %v4148, 0
    %4155 = vmatprep.subr.bf16.mxu0 0
    %4156 = vmatpush1.bf16.msra.mxu0 0
    %4157 = vmatprep.subr.bf16.mxu0 0
    %4158 = vmatpush1.bf16.msra.mxu0 0
    %4159 = vmatprep.subr.bf16.mxu0 0
    %4160 = vmatpush1.bf16.msra.mxu0 0
    %4161 = vmatprep.subr.bf16.mxu0 0
    %4162 = vmatpush1.bf16.msra.mxu0 0
    %4163 = vmatprep.subr.bf16.mxu0 0
    %4164 = vmatpush1.bf16.msra.mxu0 0
    %4165 = vmatprep.subr.bf16.mxu0 0
    %4166 = vmatpush1.bf16.msra.mxu0 0
    %4167 = vmatprep.subr.bf16.mxu0 0
    %4168 = vmatpush1.bf16.msra.mxu0 0
    %4169 = vmatprep.subr.bf16.mxu0 0
    %4170 = vmatpush1.bf16.msra.mxu0 %v4153
    %4171 = vmatprep.subr.bf16.mxu0 0
    %4172 = vmatpush2.bf16.msra.mxu0 0
    %4173 = vmatprep.subr.bf16.mxu0 0
    %4174 = vmatpush2.bf16.msra.mxu0 0
    %4175 = vmatprep.subr.bf16.mxu0 0
    %4176 = vmatpush2.bf16.msra.mxu0 0
    %4177 = vmatprep.subr.bf16.mxu0 0
    %4178 = vmatpush2.bf16.msra.mxu0 0
    %4179 = vmatprep.subr.bf16.mxu0 0
    %4180 = vmatpush2.bf16.msra.mxu0 0
    %4181 = vmatprep.subr.bf16.mxu0 0
    %4182 = vmatpush2.bf16.msra.mxu0 0
    %4183 = vmatprep.subr.bf16.mxu0 0
    %4184 = vmatpush2.bf16.msra.mxu0 0
    %4185 = vmatprep.subr.bf16.mxu0 0
    %4186 = vmatpush2.bf16.msra.mxu0 0
    %4187 = vmatprep.mubr.bf16.mxu0 0
    %4188 = vmatmul.mubr.bf16.gmra.mxu0 %v4150
    %v4189 = vpop.f32.mrf.mxu0
    %v4190 = vadd.f32 0.0, %v4189
    %v4191 = vpop.f32.mrf.mxu0
    %v4192 = vpop.f32.mrf.mxu0
    %v4193 = vpop.f32.mrf.mxu0
    %4194 = vdwg.mxu0
    %v4195 = vpack.c.bf16 %v3953, %v3953
    %v4196 = vpack.c.bf16 %v4019, %v4019
    %v4198 = vsel %vm3165, %v4195, 0
    %v4201 = vsel %vm3165, %v4196, 0
    %4203 = vmatprep.subr.bf16.mxu0 0
    %4204 = vmatpush1.bf16.xpose.msra.mxu0 0
    %4205 = vmatprep.subr.bf16.mxu0 0
    %4206 = vmatpush1.bf16.xpose.msra.mxu0 0
    %4207 = vmatprep.subr.bf16.mxu0 0
    %4208 = vmatpush1.bf16.xpose.msra.mxu0 0
    %4209 = vmatprep.subr.bf16.mxu0 0
    %4210 = vmatpush1.bf16.xpose.msra.mxu0 0
    %4211 = vmatprep.subr.bf16.mxu0 0
    %4212 = vmatpush1.bf16.xpose.msra.mxu0 0
    %4213 = vmatprep.subr.bf16.mxu0 0
    %4214 = vmatpush1.bf16.xpose.msra.mxu0 0
    %4215 = vmatprep.subr.bf16.mxu0 0
    %4216 = vmatpush1.bf16.xpose.msra.mxu0 0
    %4217 = vmatprep.subr.bf16.mxu0 0
    %4218 = vmatpush1.bf16.xpose.msra.mxu0 %v4201
    %4219 = vmatprep.subr.bf16.mxu0 0
    %4220 = vmatpush2.bf16.xpose.msra.mxu0 0
    %4221 = vmatprep.subr.bf16.mxu0 0
    %4222 = vmatpush2.bf16.xpose.msra.mxu0 0
    %4223 = vmatprep.subr.bf16.mxu0 0
    %4224 = vmatpush2.bf16.xpose.msra.mxu0 0
    %4225 = vmatprep.subr.bf16.mxu0 0
    %4226 = vmatpush2.bf16.xpose.msra.mxu0 0
    %4227 = vmatprep.subr.bf16.mxu0 0
    %4228 = vmatpush2.bf16.xpose.msra.mxu0 0
    %4229 = vmatprep.subr.bf16.mxu0 0
    %4230 = vmatpush2.bf16.xpose.msra.mxu0 0
    %4231 = vmatprep.subr.bf16.mxu0 0
    %4232 = vmatpush2.bf16.xpose.msra.mxu0 0
    %4233 = vmatprep.subr.bf16.mxu0 0
    %4234 = vmatpush2.bf16.xpose.msra.mxu0 0
    %4235 = vmatprep.mubr.bf16.mxu0 0
    %4236 = vmatmul.mubr.bf16.gmra.mxu0 %v4198
    %v4237 = vpop.f32.mrf.mxu0
    %v4238 = vadd.f32 %v2966, %v4237
    %v4239 = vpop.f32.mrf.mxu0
    %v4240 = vpop.f32.mrf.mxu0
    %v4241 = vpop.f32.mrf.mxu0
    %4242 = vdwg.mxu0
    %v4243 = vsel %vm3165, %v4238, -inf
    %4244 = vmax.xlane.f32.xlu0 %v4243
    %v4245 = vpop.xlane.xlu0 %4244
    %v4246 = vsub.f32 %v4238, %v4245
    %v4247 = vmul.f32 %v4246, 1.442695
    %v4248 = vpow.pop %v4247
    %v4249 = vsel %vm3165, %v4248, 0.0
    %4250 = vadd.xlane.f32.xlu0 %v4249
    %v4251 = vpop.xlane.xlu0 %4250
    %v4252 = vrcp.pop %v4251
    %v4253 = vmul.f32 %v4248, %v4252
    %v4254 = vpack.c.bf16 %v4253, %v4253
    %v4255 = vpack.c.bf16 %v4085, %v4085
    %v4257 = vsel %vm3165, %v4254, 0
    %v4260 = vsel %vm3228, %v4255, 0
    %4262 = vmatprep.subr.bf16.mxu0 0
    %4263 = vmatpush1.bf16.msra.mxu0 0
    %4264 = vmatprep.subr.bf16.mxu0 0
    %4265 = vmatpush1.bf16.msra.mxu0 0
    %4266 = vmatprep.subr.bf16.mxu0 0
    %4267 = vmatpush1.bf16.msra.mxu0 0
    %4268 = vmatprep.subr.bf16.mxu0 0
    %4269 = vmatpush1.bf16.msra.mxu0 0
    %4270 = vmatprep.subr.bf16.mxu0 0
    %4271 = vmatpush1.bf16.msra.mxu0 0
    %4272 = vmatprep.subr.bf16.mxu0 0
    %4273 = vmatpush1.bf16.msra.mxu0 0
    %4274 = vmatprep.subr.bf16.mxu0 0
    %4275 = vmatpush1.bf16.msra.mxu0 0
    %4276 = vmatprep.subr.bf16.mxu0 0
    %4277 = vmatpush1.bf16.msra.mxu0 %v4260
    %4278 = vmatprep.subr.bf16.mxu0 0
    %4279 = vmatpush2.bf16.msra.mxu0 0
    %4280 = vmatprep.subr.bf16.mxu0 0
    %4281 = vmatpush2.bf16.msra.mxu0 0
    %4282 = vmatprep.subr.bf16.mxu0 0
    %4283 = vmatpush2.bf16.msra.mxu0 0
    %4284 = vmatprep.subr.bf16.mxu0 0
    %4285 = vmatpush2.bf16.msra.mxu0 0
    %4286 = vmatprep.subr.bf16.mxu0 0
    %4287 = vmatpush2.bf16.msra.mxu0 0
    %4288 = vmatprep.subr.bf16.mxu0 0
    %4289 = vmatpush2.bf16.msra.mxu0 0
    %4290 = vmatprep.subr.bf16.mxu0 0
    %4291 = vmatpush2.bf16.msra.mxu0 0
    %4292 = vmatprep.subr.bf16.mxu0 0
    %4293 = vmatpush2.bf16.msra.mxu0 0
    %4294 = vmatprep.mubr.bf16.mxu0 0
    %4295 = vmatmul.mubr.bf16.gmra.mxu0 %v4257
    %v4296 = vpop.f32.mrf.mxu0
    %v4297 = vadd.f32 0.0, %v4296
    %v4298 = vpop.f32.mrf.mxu0
    %v4299 = vpop.f32.mrf.mxu0
    %v4300 = vpop.f32.mrf.mxu0
    %4301 = vdwg.mxu0
    %s4302 = scalar_lea.vmem %s77, 8
    %v4303 = vld [vmem:[%s4302] sm:$0xf]
    %v4304 = vpack.c.bf16 %v4297, %v4190
    %v4306 = vsel %vm3165, %v4304, 0
    %v4309 = vsel %vm3228, %v4303, 0
    %4311 = vmatprep.subr.bf16.mxu0 0
    %4312 = vmatpush1.bf16.msra.mxu0 0
    %4313 = vmatprep.subr.bf16.mxu0 0
    %4314 = vmatpush1.bf16.msra.mxu0 0
    %4315 = vmatprep.subr.bf16.mxu0 0
    %4316 = vmatpush1.bf16.msra.mxu0 0
    %4317 = vmatprep.subr.bf16.mxu0 0
    %4318 = vmatpush1.bf16.msra.mxu0 0
    %4319 = vmatprep.subr.bf16.mxu0 0
    %4320 = vmatpush1.bf16.msra.mxu0 0
    %4321 = vmatprep.subr.bf16.mxu0 0
    %4322 = vmatpush1.bf16.msra.mxu0 0
    %4323 = vmatprep.subr.bf16.mxu0 0
    %4324 = vmatpush1.bf16.msra.mxu0 0
    %4325 = vmatprep.subr.bf16.mxu0 0
    %4326 = vmatpush1.bf16.msra.mxu0 %v4309
    %4327 = vmatprep.subr.bf16.mxu0 0
    %4328 = vmatpush2.bf16.msra.mxu0 0
    %4329 = vmatprep.subr.bf16.mxu0 0
    %4330 = vmatpush2.bf16.msra.mxu0 0
    %4331 = vmatprep.subr.bf16.mxu0 0
    %4332 = vmatpush2.bf16.msra.mxu0 0
    %4333 = vmatprep.subr.bf16.mxu0 0
    %4334 = vmatpush2.bf16.msra.mxu0 0
    %4335 = vmatprep.subr.bf16.mxu0 0
    %4336 = vmatpush2.bf16.msra.mxu0 0
    %4337 = vmatprep.subr.bf16.mxu0 0
    %4338 = vmatpush2.bf16.msra.mxu0 0
    %4339 = vmatprep.subr.bf16.mxu0 0
    %4340 = vmatpush2.bf16.msra.mxu0 0
    %4341 = vmatprep.subr.bf16.mxu0 0
    %4342 = vmatpush2.bf16.msra.mxu0 0
    %4343 = vmatprep.mubr.bf16.mxu0 0
    %4344 = vmatmul.mubr.bf16.gmra.mxu0 %v4306
    %v4345 = vpop.f32.mrf.mxu0
    %v4346 = vadd.f32 0.0, %v4345
    %v4347 = vpop.f32.mrf.mxu0
    %v4348 = vpop.f32.mrf.mxu0
    %v4349 = vadd.f32 0.0, %v4348
    %v4350 = vpop.f32.mrf.mxu0
    %4351 = vdwg.mxu0
    %v4352 = vadd.f32 %v3884, %v4346
    %v4353 = vadd.f32 %v3887, %v4349
    %s4354 = scalar_lea.vmem %s79, 48
    %v4355 = vld [vmem:[%s4354] sm:$0xf]
    %v4356 = vld [vmem:[%s4354 + $0x4] sm:$0xf]
    %v4357 = vld [vmem:[%s4354 + $0x8] sm:$0xf]
    %v4358 = vld [vmem:[%s4354 + $0xc] sm:$0xf]
    %s4359 = scalar_lea.vmem %s59, 3
    %v4360 = vld [vmem:[%s4359] sm:$0x1]
    %v4362 = vlaneseq
    %v4363 = vshrl.u32 %v4362, 7
    %v4364 = vsub.s32 0, %v4363
    %v4365 = vrot.slane %v4360, %v4364
    %v4371 = vunpack.c.l.b16 %v4355
    %v4372 = vunpack.c.l.b16 %v4356
    %v4373 = vunpack.c.l.b16 %v4357
    %v4374 = vunpack.c.l.b16 %v4358
    %v4375 = vpack.c.b16 %v4372, %v4371
    %v4376 = vpack.c.b16 %v4374, %v4373
    %4379 = vmatprep.subr.bf16.mxu0 0
    %4380 = vmatpush1.bf16.msra.mxu0 0
    %4381 = vmatprep.subr.bf16.mxu0 0
    %4382 = vmatpush1.bf16.msra.mxu0 0
    %4383 = vmatprep.subr.bf16.mxu0 0
    %4384 = vmatpush1.bf16.msra.mxu0 0
    %4385 = vmatprep.subr.bf16.mxu0 0
    %4386 = vmatpush1.bf16.msra.mxu0 0
    %4387 = vmatprep.subr.bf16.mxu0 0
    %4388 = vmatpush1.bf16.msra.mxu0 0
    %4389 = vmatprep.subr.bf16.mxu0 0
    %4390 = vmatpush1.bf16.msra.mxu0 0
    %4391 = vmatprep.subr.bf16.mxu0 0
    %4392 = vmatpush1.bf16.msra.mxu0 %v4376
    %4393 = vmatprep.subr.bf16.mxu0 0
    %4394 = vmatpush1.bf16.msra.mxu0 %v4375
    %4395 = vmatprep.subr.bf16.mxu0 0
    %4396 = vmatpush2.bf16.msra.mxu0 0
    %4397 = vmatprep.subr.bf16.mxu0 0
    %4398 = vmatpush2.bf16.msra.mxu0 0
    %4399 = vmatprep.subr.bf16.mxu0 0
    %4400 = vmatpush2.bf16.msra.mxu0 0
    %4401 = vmatprep.subr.bf16.mxu0 0
    %4402 = vmatpush2.bf16.msra.mxu0 0
    %4403 = vmatprep.subr.bf16.mxu0 0
    %4404 = vmatpush2.bf16.msra.mxu0 0
    %4405 = vmatprep.subr.bf16.mxu0 0
    %4406 = vmatpush2.bf16.msra.mxu0 0
    %4407 = vmatprep.subr.bf16.mxu0 0
    %4408 = vmatpush2.bf16.msra.mxu0 0
    %4409 = vmatprep.subr.bf16.mxu0 0
    %4410 = vmatpush2.bf16.msra.mxu0 0
    %4411 = vmatprep.mubr.bf16.mxu0 0
    %4412 = vmatmul.mubr.bf16.gmra.mxu0 %v2992
    %v4413 = vpop.f32.mrf.mxu0
    %v4414 = vadd.f32 %v4365, %v4413
    %v4415 = vpop.f32.mrf.mxu0
    %v4416 = vpop.f32.mrf.mxu0
    %v4417 = vadd.f32 %v4365, %v4416
    %v4418 = vpop.f32.mrf.mxu0
    %4419 = vdwg.mxu0
    %s4420 = scalar_lea.vmem %s75, 48
    %v4421 = vld [vmem:[%s4420] sm:$0xf]
    %v4422 = vld [vmem:[%s4420 + $0x4] sm:$0xf]
    %v4423 = vld [vmem:[%s4420 + $0x8] sm:$0xf]
    %v4424 = vld [vmem:[%s4420 + $0xc] sm:$0xf]
    %s4425 = scalar_lea.vmem %s55, 3
    %v4426 = vld [vmem:[%s4425] sm:$0x1]
    %v4428 = vlaneseq
    %v4429 = vshrl.u32 %v4428, 7
    %v4430 = vsub.s32 0, %v4429
    %v4431 = vrot.slane %v4426, %v4430
    %v4437 = vunpack.c.l.b16 %v4421
    %v4438 = vunpack.c.l.b16 %v4422
    %v4439 = vunpack.c.l.b16 %v4423
    %v4440 = vunpack.c.l.b16 %v4424
    %v4441 = vpack.c.b16 %v4438, %v4437
    %v4442 = vpack.c.b16 %v4440, %v4439
    %4445 = vmatprep.subr.bf16.mxu0 0
    %4446 = vmatpush1.bf16.msra.mxu0 0
    %4447 = vmatprep.subr.bf16.mxu0 0
    %4448 = vmatpush1.bf16.msra.mxu0 0
    %4449 = vmatprep.subr.bf16.mxu0 0
    %4450 = vmatpush1.bf16.msra.mxu0 0
    %4451 = vmatprep.subr.bf16.mxu0 0
    %4452 = vmatpush1.bf16.msra.mxu0 0
    %4453 = vmatprep.subr.bf16.mxu0 0
    %4454 = vmatpush1.bf16.msra.mxu0 0
    %4455 = vmatprep.subr.bf16.mxu0 0
    %4456 = vmatpush1.bf16.msra.mxu0 0
    %4457 = vmatprep.subr.bf16.mxu0 0
    %4458 = vmatpush1.bf16.msra.mxu0 %v4442
    %4459 = vmatprep.subr.bf16.mxu0 0
    %4460 = vmatpush1.bf16.msra.mxu0 %v4441
    %4461 = vmatprep.subr.bf16.mxu0 0
    %4462 = vmatpush2.bf16.msra.mxu0 0
    %4463 = vmatprep.subr.bf16.mxu0 0
    %4464 = vmatpush2.bf16.msra.mxu0 0
    %4465 = vmatprep.subr.bf16.mxu0 0
    %4466 = vmatpush2.bf16.msra.mxu0 0
    %4467 = vmatprep.subr.bf16.mxu0 0
    %4468 = vmatpush2.bf16.msra.mxu0 0
    %4469 = vmatprep.subr.bf16.mxu0 0
    %4470 = vmatpush2.bf16.msra.mxu0 0
    %4471 = vmatprep.subr.bf16.mxu0 0
    %4472 = vmatpush2.bf16.msra.mxu0 0
    %4473 = vmatprep.subr.bf16.mxu0 0
    %4474 = vmatpush2.bf16.msra.mxu0 0
    %4475 = vmatprep.subr.bf16.mxu0 0
    %4476 = vmatpush2.bf16.msra.mxu0 0
    %4477 = vmatprep.mubr.bf16.mxu0 0
    %4478 = vmatmul.mubr.bf16.gmra.mxu0 %v2992
    %v4479 = vpop.f32.mrf.mxu0
    %v4480 = vadd.f32 %v4431, %v4479
    %v4481 = vpop.f32.mrf.mxu0
    %v4482 = vpop.f32.mrf.mxu0
    %v4483 = vadd.f32 %v4431, %v4482
    %v4484 = vpop.f32.mrf.mxu0
    %4485 = vdwg.mxu0
    %s4486 = scalar_lea.vmem %s81, 48
    %v4487 = vld [vmem:[%s4486] sm:$0xf]
    %v4488 = vld [vmem:[%s4486 + $0x4] sm:$0xf]
    %v4489 = vld [vmem:[%s4486 + $0x8] sm:$0xf]
    %v4490 = vld [vmem:[%s4486 + $0xc] sm:$0xf]
    %s4491 = scalar_lea.vmem %s61, 3
    %v4492 = vld [vmem:[%s4491] sm:$0x1]
    %v4494 = vlaneseq
    %v4495 = vshrl.u32 %v4494, 7
    %v4496 = vsub.s32 0, %v4495
    %v4497 = vrot.slane %v4492, %v4496
    %v4503 = vunpack.c.l.b16 %v4487
    %v4504 = vunpack.c.l.b16 %v4488
    %v4505 = vunpack.c.l.b16 %v4489
    %v4506 = vunpack.c.l.b16 %v4490
    %v4507 = vpack.c.b16 %v4504, %v4503
    %v4508 = vpack.c.b16 %v4506, %v4505
    %4511 = vmatprep.subr.bf16.mxu0 0
    %4512 = vmatpush1.bf16.msra.mxu0 0
    %4513 = vmatprep.subr.bf16.mxu0 0
    %4514 = vmatpush1.bf16.msra.mxu0 0
    %4515 = vmatprep.subr.bf16.mxu0 0
    %4516 = vmatpush1.bf16.msra.mxu0 0
    %4517 = vmatprep.subr.bf16.mxu0 0
    %4518 = vmatpush1.bf16.msra.mxu0 0
    %4519 = vmatprep.subr.bf16.mxu0 0
    %4520 = vmatpush1.bf16.msra.mxu0 0
    %4521 = vmatprep.subr.bf16.mxu0 0
    %4522 = vmatpush1.bf16.msra.mxu0 0
    %4523 = vmatprep.subr.bf16.mxu0 0
    %4524 = vmatpush1.bf16.msra.mxu0 %v4508
    %4525 = vmatprep.subr.bf16.mxu0 0
    %4526 = vmatpush1.bf16.msra.mxu0 %v4507
    %4527 = vmatprep.subr.bf16.mxu0 0
    %4528 = vmatpush2.bf16.msra.mxu0 0
    %4529 = vmatprep.subr.bf16.mxu0 0
    %4530 = vmatpush2.bf16.msra.mxu0 0
    %4531 = vmatprep.subr.bf16.mxu0 0
    %4532 = vmatpush2.bf16.msra.mxu0 0
    %4533 = vmatprep.subr.bf16.mxu0 0
    %4534 = vmatpush2.bf16.msra.mxu0 0
    %4535 = vmatprep.subr.bf16.mxu0 0
    %4536 = vmatpush2.bf16.msra.mxu0 0
    %4537 = vmatprep.subr.bf16.mxu0 0
    %4538 = vmatpush2.bf16.msra.mxu0 0
    %4539 = vmatprep.subr.bf16.mxu0 0
    %4540 = vmatpush2.bf16.msra.mxu0 0
    %4541 = vmatprep.subr.bf16.mxu0 0
    %4542 = vmatpush2.bf16.msra.mxu0 0
    %4543 = vmatprep.mubr.bf16.mxu0 0
    %4544 = vmatmul.mubr.bf16.gmra.mxu0 %v2992
    %v4545 = vpop.f32.mrf.mxu0
    %v4546 = vadd.f32 %v4497, %v4545
    %v4547 = vpop.f32.mrf.mxu0
    %v4548 = vpop.f32.mrf.mxu0
    %v4549 = vadd.f32 %v4497, %v4548
    %v4550 = vpop.f32.mrf.mxu0
    %4551 = vdwg.mxu0
    %v4552 = vpack.c.bf16 %v4414, %v4414
    %v4553 = vpack.c.bf16 %v4480, %v4480
    %v4555 = vsel %vm3165, %v4552, 0
    %v4558 = vsel %vm3165, %v4553, 0
    %4560 = vmatprep.subr.bf16.mxu0 0
    %4561 = vmatpush1.bf16.xpose.msra.mxu0 0
    %4562 = vmatprep.subr.bf16.mxu0 0
    %4563 = vmatpush1.bf16.xpose.msra.mxu0 0
    %4564 = vmatprep.subr.bf16.mxu0 0
    %4565 = vmatpush1.bf16.xpose.msra.mxu0 0
    %4566 = vmatprep.subr.bf16.mxu0 0
    %4567 = vmatpush1.bf16.xpose.msra.mxu0 0
    %4568 = vmatprep.subr.bf16.mxu0 0
    %4569 = vmatpush1.bf16.xpose.msra.mxu0 0
    %4570 = vmatprep.subr.bf16.mxu0 0
    %4571 = vmatpush1.bf16.xpose.msra.mxu0 0
    %4572 = vmatprep.subr.bf16.mxu0 0
    %4573 = vmatpush1.bf16.xpose.msra.mxu0 0
    %4574 = vmatprep.subr.bf16.mxu0 0
    %4575 = vmatpush1.bf16.xpose.msra.mxu0 %v4558
    %4576 = vmatprep.subr.bf16.mxu0 0
    %4577 = vmatpush2.bf16.xpose.msra.mxu0 0
    %4578 = vmatprep.subr.bf16.mxu0 0
    %4579 = vmatpush2.bf16.xpose.msra.mxu0 0
    %4580 = vmatprep.subr.bf16.mxu0 0
    %4581 = vmatpush2.bf16.xpose.msra.mxu0 0
    %4582 = vmatprep.subr.bf16.mxu0 0
    %4583 = vmatpush2.bf16.xpose.msra.mxu0 0
    %4584 = vmatprep.subr.bf16.mxu0 0
    %4585 = vmatpush2.bf16.xpose.msra.mxu0 0
    %4586 = vmatprep.subr.bf16.mxu0 0
    %4587 = vmatpush2.bf16.xpose.msra.mxu0 0
    %4588 = vmatprep.subr.bf16.mxu0 0
    %4589 = vmatpush2.bf16.xpose.msra.mxu0 0
    %4590 = vmatprep.subr.bf16.mxu0 0
    %4591 = vmatpush2.bf16.xpose.msra.mxu0 0
    %4592 = vmatprep.mubr.bf16.mxu0 0
    %4593 = vmatmul.mubr.bf16.gmra.mxu0 %v4555
    %v4594 = vpop.f32.mrf.mxu0
    %v4595 = vadd.f32 %v2958, %v4594
    %v4596 = vpop.f32.mrf.mxu0
    %v4597 = vpop.f32.mrf.mxu0
    %v4598 = vpop.f32.mrf.mxu0
    %4599 = vdwg.mxu0
    %v4600 = vsel %vm3165, %v4595, -inf
    %4601 = vmax.xlane.f32.xlu0 %v4600
    %v4602 = vpop.xlane.xlu0 %4601
    %v4603 = vsub.f32 %v4595, %v4602
    %v4604 = vmul.f32 %v4603, 1.442695
    %v4605 = vpow.pop %v4604
    %v4606 = vsel %vm3165, %v4605, 0.0
    %4607 = vadd.xlane.f32.xlu0 %v4606
    %v4608 = vpop.xlane.xlu0 %4607
    %v4609 = vrcp.pop %v4608
    %v4610 = vmul.f32 %v4605, %v4609
    %v4611 = vpack.c.bf16 %v4610, %v4610
    %v4612 = vpack.c.bf16 %v4546, %v4546
    %v4614 = vsel %vm3165, %v4611, 0
    %v4617 = vsel %vm3228, %v4612, 0
    %4619 = vmatprep.subr.bf16.mxu0 0
    %4620 = vmatpush1.bf16.msra.mxu0 0
    %4621 = vmatprep.subr.bf16.mxu0 0
    %4622 = vmatpush1.bf16.msra.mxu0 0
    %4623 = vmatprep.subr.bf16.mxu0 0
    %4624 = vmatpush1.bf16.msra.mxu0 0
    %4625 = vmatprep.subr.bf16.mxu0 0
    %4626 = vmatpush1.bf16.msra.mxu0 0
    %4627 = vmatprep.subr.bf16.mxu0 0
    %4628 = vmatpush1.bf16.msra.mxu0 0
    %4629 = vmatprep.subr.bf16.mxu0 0
    %4630 = vmatpush1.bf16.msra.mxu0 0
    %4631 = vmatprep.subr.bf16.mxu0 0
    %4632 = vmatpush1.bf16.msra.mxu0 0
    %4633 = vmatprep.subr.bf16.mxu0 0
    %4634 = vmatpush1.bf16.msra.mxu0 %v4617
    %4635 = vmatprep.subr.bf16.mxu0 0
    %4636 = vmatpush2.bf16.msra.mxu0 0
    %4637 = vmatprep.subr.bf16.mxu0 0
    %4638 = vmatpush2.bf16.msra.mxu0 0
    %4639 = vmatprep.subr.bf16.mxu0 0
    %4640 = vmatpush2.bf16.msra.mxu0 0
    %4641 = vmatprep.subr.bf16.mxu0 0
    %4642 = vmatpush2.bf16.msra.mxu0 0
    %4643 = vmatprep.subr.bf16.mxu0 0
    %4644 = vmatpush2.bf16.msra.mxu0 0
    %4645 = vmatprep.subr.bf16.mxu0 0
    %4646 = vmatpush2.bf16.msra.mxu0 0
    %4647 = vmatprep.subr.bf16.mxu0 0
    %4648 = vmatpush2.bf16.msra.mxu0 0
    %4649 = vmatprep.subr.bf16.mxu0 0
    %4650 = vmatpush2.bf16.msra.mxu0 0
    %4651 = vmatprep.mubr.bf16.mxu0 0
    %4652 = vmatmul.mubr.bf16.gmra.mxu0 %v4614
    %v4653 = vpop.f32.mrf.mxu0
    %v4654 = vadd.f32 0.0, %v4653
    %v4655 = vpop.f32.mrf.mxu0
    %v4656 = vpop.f32.mrf.mxu0
    %v4657 = vpop.f32.mrf.mxu0
    %4658 = vdwg.mxu0
    %v4659 = vpack.c.bf16 %v4417, %v4417
    %v4660 = vpack.c.bf16 %v4483, %v4483
    %v4662 = vsel %vm3165, %v4659, 0
    %v4665 = vsel %vm3165, %v4660, 0
    %4667 = vmatprep.subr.bf16.mxu0 0
    %4668 = vmatpush1.bf16.xpose.msra.mxu0 0
    %4669 = vmatprep.subr.bf16.mxu0 0
    %4670 = vmatpush1.bf16.xpose.msra.mxu0 0
    %4671 = vmatprep.subr.bf16.mxu0 0
    %4672 = vmatpush1.bf16.xpose.msra.mxu0 0
    %4673 = vmatprep.subr.bf16.mxu0 0
    %4674 = vmatpush1.bf16.xpose.msra.mxu0 0
    %4675 = vmatprep.subr.bf16.mxu0 0
    %4676 = vmatpush1.bf16.xpose.msra.mxu0 0
    %4677 = vmatprep.subr.bf16.mxu0 0
    %4678 = vmatpush1.bf16.xpose.msra.mxu0 0
    %4679 = vmatprep.subr.bf16.mxu0 0
    %4680 = vmatpush1.bf16.xpose.msra.mxu0 0
    %4681 = vmatprep.subr.bf16.mxu0 0
    %4682 = vmatpush1.bf16.xpose.msra.mxu0 %v4665
    %4683 = vmatprep.subr.bf16.mxu0 0
    %4684 = vmatpush2.bf16.xpose.msra.mxu0 0
    %4685 = vmatprep.subr.bf16.mxu0 0
    %4686 = vmatpush2.bf16.xpose.msra.mxu0 0
    %4687 = vmatprep.subr.bf16.mxu0 0
    %4688 = vmatpush2.bf16.xpose.msra.mxu0 0
    %4689 = vmatprep.subr.bf16.mxu0 0
    %4690 = vmatpush2.bf16.xpose.msra.mxu0 0
    %4691 = vmatprep.subr.bf16.mxu0 0
    %4692 = vmatpush2.bf16.xpose.msra.mxu0 0
    %4693 = vmatprep.subr.bf16.mxu0 0
    %4694 = vmatpush2.bf16.xpose.msra.mxu0 0
    %4695 = vmatprep.subr.bf16.mxu0 0
    %4696 = vmatpush2.bf16.xpose.msra.mxu0 0
    %4697 = vmatprep.subr.bf16.mxu0 0
    %4698 = vmatpush2.bf16.xpose.msra.mxu0 0
    %4699 = vmatprep.mubr.bf16.mxu0 0
    %4700 = vmatmul.mubr.bf16.gmra.mxu0 %v4662
    %v4701 = vpop.f32.mrf.mxu0
    %v4702 = vadd.f32 %v2966, %v4701
    %v4703 = vpop.f32.mrf.mxu0
    %v4704 = vpop.f32.mrf.mxu0
    %v4705 = vpop.f32.mrf.mxu0
    %4706 = vdwg.mxu0
    %v4707 = vsel %vm3165, %v4702, -inf
    %4708 = vmax.xlane.f32.xlu0 %v4707
    %v4709 = vpop.xlane.xlu0 %4708
    %v4710 = vsub.f32 %v4702, %v4709
    %v4711 = vmul.f32 %v4710, 1.442695
    %v4712 = vpow.pop %v4711
    %v4713 = vsel %vm3165, %v4712, 0.0
    %4714 = vadd.xlane.f32.xlu0 %v4713
    %v4715 = vpop.xlane.xlu0 %4714
    %v4716 = vrcp.pop %v4715
    %v4717 = vmul.f32 %v4712, %v4716
    %v4718 = vpack.c.bf16 %v4717, %v4717
    %v4719 = vpack.c.bf16 %v4549, %v4549
    %v4721 = vsel %vm3165, %v4718, 0
    %v4724 = vsel %vm3228, %v4719, 0
    %4726 = vmatprep.subr.bf16.mxu0 0
    %4727 = vmatpush1.bf16.msra.mxu0 0
    %4728 = vmatprep.subr.bf16.mxu0 0
    %4729 = vmatpush1.bf16.msra.mxu0 0
    %4730 = vmatprep.subr.bf16.mxu0 0
    %4731 = vmatpush1.bf16.msra.mxu0 0
    %4732 = vmatprep.subr.bf16.mxu0 0
    %4733 = vmatpush1.bf16.msra.mxu0 0
    %4734 = vmatprep.subr.bf16.mxu0 0
    %4735 = vmatpush1.bf16.msra.mxu0 0
    %4736 = vmatprep.subr.bf16.mxu0 0
    %4737 = vmatpush1.bf16.msra.mxu0 0
    %4738 = vmatprep.subr.bf16.mxu0 0
    %4739 = vmatpush1.bf16.msra.mxu0 0
    %4740 = vmatprep.subr.bf16.mxu0 0
    %4741 = vmatpush1.bf16.msra.mxu0 %v4724
    %4742 = vmatprep.subr.bf16.mxu0 0
    %4743 = vmatpush2.bf16.msra.mxu0 0
    %4744 = vmatprep.subr.bf16.mxu0 0
    %4745 = vmatpush2.bf16.msra.mxu0 0
    %4746 = vmatprep.subr.bf16.mxu0 0
    %4747 = vmatpush2.bf16.msra.mxu0 0
    %4748 = vmatprep.subr.bf16.mxu0 0
    %4749 = vmatpush2.bf16.msra.mxu0 0
    %4750 = vmatprep.subr.bf16.mxu0 0
    %4751 = vmatpush2.bf16.msra.mxu0 0
    %4752 = vmatprep.subr.bf16.mxu0 0
    %4753 = vmatpush2.bf16.msra.mxu0 0
    %4754 = vmatprep.subr.bf16.mxu0 0
    %4755 = vmatpush2.bf16.msra.mxu0 0
    %4756 = vmatprep.subr.bf16.mxu0 0
    %4757 = vmatpush2.bf16.msra.mxu0 0
    %4758 = vmatprep.mubr.bf16.mxu0 0
    %4759 = vmatmul.mubr.bf16.gmra.mxu0 %v4721
    %v4760 = vpop.f32.mrf.mxu0
    %v4761 = vadd.f32 0.0, %v4760
    %v4762 = vpop.f32.mrf.mxu0
    %v4763 = vpop.f32.mrf.mxu0
    %v4764 = vpop.f32.mrf.mxu0
    %4765 = vdwg.mxu0
    %s4766 = scalar_lea.vmem %s77, 12
    %v4767 = vld [vmem:[%s4766] sm:$0xf]
    %v4768 = vpack.c.bf16 %v4761, %v4654
    %v4770 = vsel %vm3165, %v4768, 0
    %v4773 = vsel %vm3228, %v4767, 0
    %4775 = vmatprep.subr.bf16.mxu0 0
    %4776 = vmatpush1.bf16.msra.mxu0 0
    %4777 = vmatprep.subr.bf16.mxu0 0
    %4778 = vmatpush1.bf16.msra.mxu0 0
    %4779 = vmatprep.subr.bf16.mxu0 0
    %4780 = vmatpush1.bf16.msra.mxu0 0
    %4781 = vmatprep.subr.bf16.mxu0 0
    %4782 = vmatpush1.bf16.msra.mxu0 0
    %4783 = vmatprep.subr.bf16.mxu0 0
    %4784 = vmatpush1.bf16.msra.mxu0 0
    %4785 = vmatprep.subr.bf16.mxu0 0
    %4786 = vmatpush1.bf16.msra.mxu0 0
    %4787 = vmatprep.subr.bf16.mxu0 0
    %4788 = vmatpush1.bf16.msra.mxu0 0
    %4789 = vmatprep.subr.bf16.mxu0 0
    %4790 = vmatpush1.bf16.msra.mxu0 %v4773
    %4791 = vmatprep.subr.bf16.mxu0 0
    %4792 = vmatpush2.bf16.msra.mxu0 0
    %4793 = vmatprep.subr.bf16.mxu0 0
    %4794 = vmatpush2.bf16.msra.mxu0 0
    %4795 = vmatprep.subr.bf16.mxu0 0
    %4796 = vmatpush2.bf16.msra.mxu0 0
    %4797 = vmatprep.subr.bf16.mxu0 0
    %4798 = vmatpush2.bf16.msra.mxu0 0
    %4799 = vmatprep.subr.bf16.mxu0 0
    %4800 = vmatpush2.bf16.msra.mxu0 0
    %4801 = vmatprep.subr.bf16.mxu0 0
    %4802 = vmatpush2.bf16.msra.mxu0 0
    %4803 = vmatprep.subr.bf16.mxu0 0
    %4804 = vmatpush2.bf16.msra.mxu0 0
    %4805 = vmatprep.subr.bf16.mxu0 0
    %4806 = vmatpush2.bf16.msra.mxu0 0
    %4807 = vmatprep.mubr.bf16.mxu0 0
    %4808 = vmatmul.mubr.bf16.gmra.mxu0 %v4770
    %v4809 = vpop.f32.mrf.mxu0
    %v4810 = vadd.f32 0.0, %v4809
    %v4811 = vpop.f32.mrf.mxu0
    %v4812 = vpop.f32.mrf.mxu0
    %v4813 = vadd.f32 0.0, %v4812
    %v4814 = vpop.f32.mrf.mxu0
    %4815 = vdwg.mxu0
    %v4816 = vadd.f32 %v4352, %v4810
    %v4817 = vadd.f32 %v4353, %v4813
    %v4818 = vld [vmem:[%s57] sm:$0x1]
    %v4820 = vlaneseq
    %v4821 = vshrl.u32 %v4820, 7
    %v4822 = vsub.s32 0, %v4821
    %v4823 = vrot.slane %v4818, %v4822
    %v4825 = vadd.f32 %v4816, %v4823
    %v4826 = vadd.f32 %v4817, %v4823
    %v4827 = vadd.f32 %v2941, %v4825
    %v4828 = vadd.f32 %v2944, %v4826
    %v4829 = vld [vmem:[%s65] sm:$0x1]
    %v4830 = vld [vmem:[%s63] sm:$0x1]
    %v4831 = vsel %vm2947, %v4827, 0.0
    %4832 = vadd.xlane.f32.xlu0 %v4831
    %v4833 = vpop.xlane.xlu0 %4832
    %v4834 = vsel %vm2947, %v4828, 0.0
    %4835 = vadd.xlane.f32.xlu0 %v4834
    %v4836 = vpop.xlane.xlu0 %4835
    %v4837 = vrcp.pop 32.0
    %v4838 = vmul.f32 %v4833, %v4837
    %v4839 = vmul.f32 %v4836, %v4837
    %v4840 = vsub.f32 %v4827, %v4838
    %v4841 = vsub.f32 %v4828, %v4839
    %v4842 = vmul.f32 %v4840, %v4840
    %v4843 = vmul.f32 %v4841, %v4841
    %v4844 = vsel %vm2947, %v4842, 0.0
    %4845 = vadd.xlane.f32.xlu0 %v4844
    %v4846 = vpop.xlane.xlu0 %4845
    %v4847 = vsel %vm2947, %v4843, 0.0
    %4848 = vadd.xlane.f32.xlu0 %v4847
    %v4849 = vpop.xlane.xlu0 %4848
    %v4850 = vmul.f32 %v4846, %v4837
    %v4851 = vmul.f32 %v4849, %v4837
    %v4852 = vadd.f32 %v4850, 1e-05
    %v4853 = vadd.f32 %v4851, 1e-05
    %v4854 = vrsqrt.pop %v4852
    %v4855 = vrsqrt.pop %v4853
    %v4856 = vmul.f32 %v4840, %v4854
    %v4857 = vmul.f32 %v4841, %v4855
    %v4859 = vlaneseq
    %v4860 = vshrl.u32 %v4859, 7
    %v4861 = vsub.s32 0, %v4860
    %v4862 = vrot.slane %v4829, %v4861
    %v4864 = vmul.f32 %v4856, %v4862
    %v4865 = vmul.f32 %v4857, %v4862
    %v4867 = vlaneseq
    %v4868 = vshrl.u32 %v4867, 7
    %v4869 = vsub.s32 0, %v4868
    %v4870 = vrot.slane %v4830, %v4869
    %v4872 = vadd.f32 %v4864, %v4870
    %v4873 = vadd.f32 %v4865, %v4870
    %v4874 = vld [vmem:[%s71] sm:$0xf]
    %v4875 = vld [vmem:[%s71 + $0x4] sm:$0xf]
    %v4876 = vld [vmem:[%s71 + $0x8] sm:$0xf]
    %v4877 = vld [vmem:[%s71 + $0xc] sm:$0xf]
    %v4878 = vpack.c.bf16 %v4873, %v4872
    %v4879 = vld [vmem:[%s51] sm:$0x1]
    %v4881 = vlaneseq
    %v4882 = vshrl.u32 %v4881, 7
    %v4883 = vsub.s32 0, %v4882
    %v4884 = vrot.slane %v4879, %v4883
    %v4890 = vunpack.c.l.b16 %v4874
    %v4891 = vunpack.c.l.b16 %v4875
    %v4892 = vunpack.c.l.b16 %v4876
    %v4893 = vunpack.c.l.b16 %v4877
    %v4894 = vpack.c.b16 %v4891, %v4890
    %v4895 = vpack.c.b16 %v4893, %v4892
    %v4899 = vsel %vm2947, %v4878, 0
    %4901 = vmatprep.subr.bf16.mxu0 0
    %4902 = vmatpush1.bf16.msra.mxu0 0
    %4903 = vmatprep.subr.bf16.mxu0 0
    %4904 = vmatpush1.bf16.msra.mxu0 0
    %4905 = vmatprep.subr.bf16.mxu0 0
    %4906 = vmatpush1.bf16.msra.mxu0 0
    %4907 = vmatprep.subr.bf16.mxu0 0
    %4908 = vmatpush1.bf16.msra.mxu0 0
    %4909 = vmatprep.subr.bf16.mxu0 0
    %4910 = vmatpush1.bf16.msra.mxu0 0
    %4911 = vmatprep.subr.bf16.mxu0 0
    %4912 = vmatpush1.bf16.msra.mxu0 0
    %4913 = vmatprep.subr.bf16.mxu0 0
    %4914 = vmatpush1.bf16.msra.mxu0 %v4895
    %4915 = vmatprep.subr.bf16.mxu0 0
    %4916 = vmatpush1.bf16.msra.mxu0 %v4894
    %4917 = vmatprep.subr.bf16.mxu0 0
    %4918 = vmatpush2.bf16.msra.mxu0 0
    %4919 = vmatprep.subr.bf16.mxu0 0
    %4920 = vmatpush2.bf16.msra.mxu0 0
    %4921 = vmatprep.subr.bf16.mxu0 0
    %4922 = vmatpush2.bf16.msra.mxu0 0
    %4923 = vmatprep.subr.bf16.mxu0 0
    %4924 = vmatpush2.bf16.msra.mxu0 0
    %4925 = vmatprep.subr.bf16.mxu0 0
    %4926 = vmatpush2.bf16.msra.mxu0 0
    %4927 = vmatprep.subr.bf16.mxu0 0
    %4928 = vmatpush2.bf16.msra.mxu0 0
    %4929 = vmatprep.subr.bf16.mxu0 0
    %4930 = vmatpush2.bf16.msra.mxu0 0
    %4931 = vmatprep.subr.bf16.mxu0 0
    %4932 = vmatpush2.bf16.msra.mxu0 0
    %4933 = vmatprep.mubr.bf16.mxu0 0
    %4934 = vmatmul.mubr.bf16.gmra.mxu0 %v4899
    %v4935 = vpop.f32.mrf.mxu0
    %v4936 = vadd.f32 %v4884, %v4935
    %v4937 = vpop.f32.mrf.mxu0
    %v4938 = vpop.f32.mrf.mxu0
    %v4939 = vadd.f32 %v4884, %v4938
    %v4940 = vpop.f32.mrf.mxu0
    %4941 = vdwg.mxu0
    %v4942 = vmax.f32 %v4936, 0.0
    %v4943 = vmax.f32 %v4939, 0.0
    %v4944 = vld [vmem:[%s73] sm:$0xf]
    %v4945 = vld [vmem:[%s73 + $0x4] sm:$0xf]
    %v4946 = vld [vmem:[%s73 + $0x8] sm:$0xf]
    %v4947 = vld [vmem:[%s73 + $0xc] sm:$0xf]
    %v4948 = vld [vmem:[%s73 + $0x10] sm:$0xf]
    %v4949 = vld [vmem:[%s73 + $0x14] sm:$0xf]
    %v4950 = vpack.c.bf16 %v4943, %v4942
    %v4951 = vld [vmem:[%s53] sm:$0x1]
    %v4953 = vlaneseq
    %v4954 = vshrl.u32 %v4953, 7
    %v4955 = vsub.s32 0, %v4954
    %v4956 = vrot.slane %v4951, %v4955
    %v4964 = vunpack.c.l.b16 %v4944
    %v4965 = vunpack.c.l.b16 %v4945
    %v4966 = vunpack.c.l.b16 %v4946
    %v4967 = vunpack.c.l.b16 %v4947
    %v4968 = vunpack.c.l.b16 %v4948
    %v4969 = vunpack.c.l.b16 %v4949
    %v4970 = vpack.c.b16 %v4965, %v4964
    %v4971 = vpack.c.b16 %v4967, %v4966
    %v4972 = vpack.c.b16 %v4969, %v4968
    %v4977 = vsel %vm197, %v4950, 0
    %4979 = vmatprep.subr.bf16.mxu0 0
    %4980 = vmatpush1.bf16.msra.mxu0 0
    %4981 = vmatprep.subr.bf16.mxu0 0
    %4982 = vmatpush1.bf16.msra.mxu0 0
    %4983 = vmatprep.subr.bf16.mxu0 0
    %4984 = vmatpush1.bf16.msra.mxu0 0
    %4985 = vmatprep.subr.bf16.mxu0 0
    %4986 = vmatpush1.bf16.msra.mxu0 0
    %4987 = vmatprep.subr.bf16.mxu0 0
    %4988 = vmatpush1.bf16.msra.mxu0 0
    %4989 = vmatprep.subr.bf16.mxu0 0
    %4990 = vmatpush1.bf16.msra.mxu0 %v4972
    %4991 = vmatprep.subr.bf16.mxu0 0
    %4992 = vmatpush1.bf16.msra.mxu0 %v4971
    %4993 = vmatprep.subr.bf16.mxu0 0
    %4994 = vmatpush1.bf16.msra.mxu0 %v4970
    %4995 = vmatprep.subr.bf16.mxu0 0
    %4996 = vmatpush2.bf16.msra.mxu0 0
    %4997 = vmatprep.subr.bf16.mxu0 0
    %4998 = vmatpush2.bf16.msra.mxu0 0
    %4999 = vmatprep.subr.bf16.mxu0 0
    %5000 = vmatpush2.bf16.msra.mxu0 0
    %5001 = vmatprep.subr.bf16.mxu0 0
    %5002 = vmatpush2.bf16.msra.mxu0 0
    %5003 = vmatprep.subr.bf16.mxu0 0
    %5004 = vmatpush2.bf16.msra.mxu0 0
    %5005 = vmatprep.subr.bf16.mxu0 0
    %5006 = vmatpush2.bf16.msra.mxu0 0
    %5007 = vmatprep.subr.bf16.mxu0 0
    %5008 = vmatpush2.bf16.msra.mxu0 0
    %5009 = vmatprep.subr.bf16.mxu0 0
    %5010 = vmatpush2.bf16.msra.mxu0 0
    %5011 = vmatprep.mubr.bf16.mxu0 0
    %5012 = vmatmul.mubr.bf16.gmra.mxu0 %v4977
    %v5013 = vpop.f32.mrf.mxu0
    %v5014 = vadd.f32 %v4956, %v5013
    %v5015 = vpop.f32.mrf.mxu0
    %v5016 = vpop.f32.mrf.mxu0
    %v5017 = vadd.f32 %v4956, %v5016
    %v5018 = vpop.f32.mrf.mxu0
    %5019 = vdwg.mxu0
    %v5020 = vadd.f32 %v4872, %v5014
    %v5021 = vadd.f32 %v4873, %v5017
    %v5022 = vld [vmem:[%s69] sm:$0x1]
    %v5023 = vld [vmem:[%s67] sm:$0x1]
    %v5024 = vsel %vm2947, %v5020, 0.0
    %5025 = vadd.xlane.f32.xlu0 %v5024
    %v5026 = vpop.xlane.xlu0 %5025
    %v5027 = vsel %vm2947, %v5021, 0.0
    %5028 = vadd.xlane.f32.xlu0 %v5027
    %v5029 = vpop.xlane.xlu0 %5028
    %v5030 = vmul.f32 %v5026, %v4837
    %v5031 = vmul.f32 %v5029, %v4837
    %v5032 = vsub.f32 %v5020, %v5030
    %v5033 = vsub.f32 %v5021, %v5031
    %v5034 = vmul.f32 %v5032, %v5032
    %v5035 = vmul.f32 %v5033, %v5033
    %v5036 = vsel %vm2947, %v5034, 0.0
    %5037 = vadd.xlane.f32.xlu0 %v5036
    %v5038 = vpop.xlane.xlu0 %5037
    %v5039 = vsel %vm2947, %v5035, 0.0
    %5040 = vadd.xlane.f32.xlu0 %v5039
    %v5041 = vpop.xlane.xlu0 %5040
    %v5042 = vmul.f32 %v5038, %v4837
    %v5043 = vmul.f32 %v5041, %v4837
    %v5044 = vadd.f32 %v5042, 1e-05
    %v5045 = vadd.f32 %v5043, 1e-05
    %v5046 = vrsqrt.pop %v5044
    %v5047 = vrsqrt.pop %v5045
    %v5048 = vmul.f32 %v5032, %v5046
    %v5049 = vmul.f32 %v5033, %v5047
    %v5051 = vlaneseq
    %v5052 = vshrl.u32 %v5051, 7
    %v5053 = vsub.s32 0, %v5052
    %v5054 = vrot.slane %v5022, %v5053
    %v5056 = vmul.f32 %v5048, %v5054
    %v5057 = vmul.f32 %v5049, %v5054
    %v5059 = vlaneseq
    %v5060 = vshrl.u32 %v5059, 7
    %v5061 = vsub.s32 0, %v5060
    %v5062 = vrot.slane %v5023, %v5061
    %v5064 = vadd.f32 %v5056, %v5062
    %v5065 = vadd.f32 %v5057, %v5062
    %s5066 = scalar_lea.vmem %s79, 64
    %v5067 = vld [vmem:[%s5066] sm:$0xf]
    %v5068 = vld [vmem:[%s5066 + $0x4] sm:$0xf]
    %v5069 = vld [vmem:[%s5066 + $0x8] sm:$0xf]
    %v5070 = vld [vmem:[%s5066 + $0xc] sm:$0xf]
    %v5071 = vpack.c.bf16 %v5065, %v5064
    %s5072 = scalar_lea.vmem %s59, 4
    %v5073 = vld [vmem:[%s5072] sm:$0x1]
    %v5075 = vlaneseq
    %v5076 = vshrl.u32 %v5075, 7
    %v5077 = vsub.s32 0, %v5076
    %v5078 = vrot.slane %v5073, %v5077
    %v5084 = vunpack.c.l.b16 %v5067
    %v5085 = vunpack.c.l.b16 %v5068
    %v5086 = vunpack.c.l.b16 %v5069
    %v5087 = vunpack.c.l.b16 %v5070
    %v5088 = vpack.c.b16 %v5085, %v5084
    %v5089 = vpack.c.b16 %v5087, %v5086
    %v5093 = vsel %vm2947, %v5071, 0
    %5095 = vmatprep.subr.bf16.mxu0 0
    %5096 = vmatpush1.bf16.msra.mxu0 0
    %5097 = vmatprep.subr.bf16.mxu0 0
    %5098 = vmatpush1.bf16.msra.mxu0 0
    %5099 = vmatprep.subr.bf16.mxu0 0
    %5100 = vmatpush1.bf16.msra.mxu0 0
    %5101 = vmatprep.subr.bf16.mxu0 0
    %5102 = vmatpush1.bf16.msra.mxu0 0
    %5103 = vmatprep.subr.bf16.mxu0 0
    %5104 = vmatpush1.bf16.msra.mxu0 0
    %5105 = vmatprep.subr.bf16.mxu0 0
    %5106 = vmatpush1.bf16.msra.mxu0 0
    %5107 = vmatprep.subr.bf16.mxu0 0
    %5108 = vmatpush1.bf16.msra.mxu0 %v5089
    %5109 = vmatprep.subr.bf16.mxu0 0
    %5110 = vmatpush1.bf16.msra.mxu0 %v5088
    %5111 = vmatprep.subr.bf16.mxu0 0
    %5112 = vmatpush2.bf16.msra.mxu0 0
    %5113 = vmatprep.subr.bf16.mxu0 0
    %5114 = vmatpush2.bf16.msra.mxu0 0
    %5115 = vmatprep.subr.bf16.mxu0 0
    %5116 = vmatpush2.bf16.msra.mxu0 0
    %5117 = vmatprep.subr.bf16.mxu0 0
    %5118 = vmatpush2.bf16.msra.mxu0 0
    %5119 = vmatprep.subr.bf16.mxu0 0
    %5120 = vmatpush2.bf16.msra.mxu0 0
    %5121 = vmatprep.subr.bf16.mxu0 0
    %5122 = vmatpush2.bf16.msra.mxu0 0
    %5123 = vmatprep.subr.bf16.mxu0 0
    %5124 = vmatpush2.bf16.msra.mxu0 0
    %5125 = vmatprep.subr.bf16.mxu0 0
    %5126 = vmatpush2.bf16.msra.mxu0 0
    %5127 = vmatprep.mubr.bf16.mxu0 0
    %5128 = vmatmul.mubr.bf16.gmra.mxu0 %v5093
    %v5129 = vpop.f32.mrf.mxu0
    %v5130 = vadd.f32 %v5078, %v5129
    %v5131 = vpop.f32.mrf.mxu0
    %v5132 = vpop.f32.mrf.mxu0
    %v5133 = vadd.f32 %v5078, %v5132
    %v5134 = vpop.f32.mrf.mxu0
    %5135 = vdwg.mxu0
    %s5136 = scalar_lea.vmem %s75, 64
    %v5137 = vld [vmem:[%s5136] sm:$0xf]
    %v5138 = vld [vmem:[%s5136 + $0x4] sm:$0xf]
    %v5139 = vld [vmem:[%s5136 + $0x8] sm:$0xf]
    %v5140 = vld [vmem:[%s5136 + $0xc] sm:$0xf]
    %s5141 = scalar_lea.vmem %s55, 4
    %v5142 = vld [vmem:[%s5141] sm:$0x1]
    %v5144 = vlaneseq
    %v5145 = vshrl.u32 %v5144, 7
    %v5146 = vsub.s32 0, %v5145
    %v5147 = vrot.slane %v5142, %v5146
    %v5153 = vunpack.c.l.b16 %v5137
    %v5154 = vunpack.c.l.b16 %v5138
    %v5155 = vunpack.c.l.b16 %v5139
    %v5156 = vunpack.c.l.b16 %v5140
    %v5157 = vpack.c.b16 %v5154, %v5153
    %v5158 = vpack.c.b16 %v5156, %v5155
    %5161 = vmatprep.subr.bf16.mxu0 0
    %5162 = vmatpush1.bf16.msra.mxu0 0
    %5163 = vmatprep.subr.bf16.mxu0 0
    %5164 = vmatpush1.bf16.msra.mxu0 0
    %5165 = vmatprep.subr.bf16.mxu0 0
    %5166 = vmatpush1.bf16.msra.mxu0 0
    %5167 = vmatprep.subr.bf16.mxu0 0
    %5168 = vmatpush1.bf16.msra.mxu0 0
    %5169 = vmatprep.subr.bf16.mxu0 0
    %5170 = vmatpush1.bf16.msra.mxu0 0
    %5171 = vmatprep.subr.bf16.mxu0 0
    %5172 = vmatpush1.bf16.msra.mxu0 0
    %5173 = vmatprep.subr.bf16.mxu0 0
    %5174 = vmatpush1.bf16.msra.mxu0 %v5158
    %5175 = vmatprep.subr.bf16.mxu0 0
    %5176 = vmatpush1.bf16.msra.mxu0 %v5157
    %5177 = vmatprep.subr.bf16.mxu0 0
    %5178 = vmatpush2.bf16.msra.mxu0 0
    %5179 = vmatprep.subr.bf16.mxu0 0
    %5180 = vmatpush2.bf16.msra.mxu0 0
    %5181 = vmatprep.subr.bf16.mxu0 0
    %5182 = vmatpush2.bf16.msra.mxu0 0
    %5183 = vmatprep.subr.bf16.mxu0 0
    %5184 = vmatpush2.bf16.msra.mxu0 0
    %5185 = vmatprep.subr.bf16.mxu0 0
    %5186 = vmatpush2.bf16.msra.mxu0 0
    %5187 = vmatprep.subr.bf16.mxu0 0
    %5188 = vmatpush2.bf16.msra.mxu0 0
    %5189 = vmatprep.subr.bf16.mxu0 0
    %5190 = vmatpush2.bf16.msra.mxu0 0
    %5191 = vmatprep.subr.bf16.mxu0 0
    %5192 = vmatpush2.bf16.msra.mxu0 0
    %5193 = vmatprep.mubr.bf16.mxu0 0
    %5194 = vmatmul.mubr.bf16.gmra.mxu0 %v5093
    %v5195 = vpop.f32.mrf.mxu0
    %v5196 = vadd.f32 %v5147, %v5195
    %v5197 = vpop.f32.mrf.mxu0
    %v5198 = vpop.f32.mrf.mxu0
    %v5199 = vadd.f32 %v5147, %v5198
    %v5200 = vpop.f32.mrf.mxu0
    %5201 = vdwg.mxu0
    %s5202 = scalar_lea.vmem %s81, 64
    %v5203 = vld [vmem:[%s5202] sm:$0xf]
    %v5204 = vld [vmem:[%s5202 + $0x4] sm:$0xf]
    %v5205 = vld [vmem:[%s5202 + $0x8] sm:$0xf]
    %v5206 = vld [vmem:[%s5202 + $0xc] sm:$0xf]
    %s5207 = scalar_lea.vmem %s61, 4
    %v5208 = vld [vmem:[%s5207] sm:$0x1]
    %v5210 = vlaneseq
    %v5211 = vshrl.u32 %v5210, 7
    %v5212 = vsub.s32 0, %v5211
    %v5213 = vrot.slane %v5208, %v5212
    %v5219 = vunpack.c.l.b16 %v5203
    %v5220 = vunpack.c.l.b16 %v5204
    %v5221 = vunpack.c.l.b16 %v5205
    %v5222 = vunpack.c.l.b16 %v5206
    %v5223 = vpack.c.b16 %v5220, %v5219
    %v5224 = vpack.c.b16 %v5222, %v5221
    %5227 = vmatprep.subr.bf16.mxu0 0
    %5228 = vmatpush1.bf16.msra.mxu0 0
    %5229 = vmatprep.subr.bf16.mxu0 0
    %5230 = vmatpush1.bf16.msra.mxu0 0
    %5231 = vmatprep.subr.bf16.mxu0 0
    %5232 = vmatpush1.bf16.msra.mxu0 0
    %5233 = vmatprep.subr.bf16.mxu0 0
    %5234 = vmatpush1.bf16.msra.mxu0 0
    %5235 = vmatprep.subr.bf16.mxu0 0
    %5236 = vmatpush1.bf16.msra.mxu0 0
    %5237 = vmatprep.subr.bf16.mxu0 0
    %5238 = vmatpush1.bf16.msra.mxu0 0
    %5239 = vmatprep.subr.bf16.mxu0 0
    %5240 = vmatpush1.bf16.msra.mxu0 %v5224
    %5241 = vmatprep.subr.bf16.mxu0 0
    %5242 = vmatpush1.bf16.msra.mxu0 %v5223
    %5243 = vmatprep.subr.bf16.mxu0 0
    %5244 = vmatpush2.bf16.msra.mxu0 0
    %5245 = vmatprep.subr.bf16.mxu0 0
    %5246 = vmatpush2.bf16.msra.mxu0 0
    %5247 = vmatprep.subr.bf16.mxu0 0
    %5248 = vmatpush2.bf16.msra.mxu0 0
    %5249 = vmatprep.subr.bf16.mxu0 0
    %5250 = vmatpush2.bf16.msra.mxu0 0
    %5251 = vmatprep.subr.bf16.mxu0 0
    %5252 = vmatpush2.bf16.msra.mxu0 0
    %5253 = vmatprep.subr.bf16.mxu0 0
    %5254 = vmatpush2.bf16.msra.mxu0 0
    %5255 = vmatprep.subr.bf16.mxu0 0
    %5256 = vmatpush2.bf16.msra.mxu0 0
    %5257 = vmatprep.subr.bf16.mxu0 0
    %5258 = vmatpush2.bf16.msra.mxu0 0
    %5259 = vmatprep.mubr.bf16.mxu0 0
    %5260 = vmatmul.mubr.bf16.gmra.mxu0 %v5093
    %v5261 = vpop.f32.mrf.mxu0
    %v5262 = vadd.f32 %v5213, %v5261
    %v5263 = vpop.f32.mrf.mxu0
    %v5264 = vpop.f32.mrf.mxu0
    %v5265 = vadd.f32 %v5213, %v5264
    %v5266 = vpop.f32.mrf.mxu0
    %5267 = vdwg.mxu0
    %v5268 = vpack.c.bf16 %v5130, %v5130
    %v5269 = vpack.c.bf16 %v5196, %v5196
    %v5271 = vsel %vm3165, %v5268, 0
    %v5274 = vsel %vm3165, %v5269, 0
    %5276 = vmatprep.subr.bf16.mxu0 0
    %5277 = vmatpush1.bf16.xpose.msra.mxu0 0
    %5278 = vmatprep.subr.bf16.mxu0 0
    %5279 = vmatpush1.bf16.xpose.msra.mxu0 0
    %5280 = vmatprep.subr.bf16.mxu0 0
    %5281 = vmatpush1.bf16.xpose.msra.mxu0 0
    %5282 = vmatprep.subr.bf16.mxu0 0
    %5283 = vmatpush1.bf16.xpose.msra.mxu0 0
    %5284 = vmatprep.subr.bf16.mxu0 0
    %5285 = vmatpush1.bf16.xpose.msra.mxu0 0
    %5286 = vmatprep.subr.bf16.mxu0 0
    %5287 = vmatpush1.bf16.xpose.msra.mxu0 0
    %5288 = vmatprep.subr.bf16.mxu0 0
    %5289 = vmatpush1.bf16.xpose.msra.mxu0 0
    %5290 = vmatprep.subr.bf16.mxu0 0
    %5291 = vmatpush1.bf16.xpose.msra.mxu0 %v5274
    %5292 = vmatprep.subr.bf16.mxu0 0
    %5293 = vmatpush2.bf16.xpose.msra.mxu0 0
    %5294 = vmatprep.subr.bf16.mxu0 0
    %5295 = vmatpush2.bf16.xpose.msra.mxu0 0
    %5296 = vmatprep.subr.bf16.mxu0 0
    %5297 = vmatpush2.bf16.xpose.msra.mxu0 0
    %5298 = vmatprep.subr.bf16.mxu0 0
    %5299 = vmatpush2.bf16.xpose.msra.mxu0 0
    %5300 = vmatprep.subr.bf16.mxu0 0
    %5301 = vmatpush2.bf16.xpose.msra.mxu0 0
    %5302 = vmatprep.subr.bf16.mxu0 0
    %5303 = vmatpush2.bf16.xpose.msra.mxu0 0
    %5304 = vmatprep.subr.bf16.mxu0 0
    %5305 = vmatpush2.bf16.xpose.msra.mxu0 0
    %5306 = vmatprep.subr.bf16.mxu0 0
    %5307 = vmatpush2.bf16.xpose.msra.mxu0 0
    %5308 = vmatprep.mubr.bf16.mxu0 0
    %5309 = vmatmul.mubr.bf16.gmra.mxu0 %v5271
    %v5310 = vpop.f32.mrf.mxu0
    %v5311 = vadd.f32 %v2958, %v5310
    %v5312 = vpop.f32.mrf.mxu0
    %v5313 = vpop.f32.mrf.mxu0
    %v5314 = vpop.f32.mrf.mxu0
    %5315 = vdwg.mxu0
    %v5316 = vsel %vm3165, %v5311, -inf
    %5317 = vmax.xlane.f32.xlu0 %v5316
    %v5318 = vpop.xlane.xlu0 %5317
    %v5319 = vsub.f32 %v5311, %v5318
    %v5320 = vmul.f32 %v5319, 1.442695
    %v5321 = vpow.pop %v5320
    %v5322 = vsel %vm3165, %v5321, 0.0
    %5323 = vadd.xlane.f32.xlu0 %v5322
    %v5324 = vpop.xlane.xlu0 %5323
    %v5325 = vrcp.pop %v5324
    %v5326 = vmul.f32 %v5321, %v5325
    %v5327 = vpack.c.bf16 %v5326, %v5326
    %v5328 = vpack.c.bf16 %v5262, %v5262
    %v5330 = vsel %vm3165, %v5327, 0
    %v5333 = vsel %vm3228, %v5328, 0
    %5335 = vmatprep.subr.bf16.mxu0 0
    %5336 = vmatpush1.bf16.msra.mxu0 0
    %5337 = vmatprep.subr.bf16.mxu0 0
    %5338 = vmatpush1.bf16.msra.mxu0 0
    %5339 = vmatprep.subr.bf16.mxu0 0
    %5340 = vmatpush1.bf16.msra.mxu0 0
    %5341 = vmatprep.subr.bf16.mxu0 0
    %5342 = vmatpush1.bf16.msra.mxu0 0
    %5343 = vmatprep.subr.bf16.mxu0 0
    %5344 = vmatpush1.bf16.msra.mxu0 0
    %5345 = vmatprep.subr.bf16.mxu0 0
    %5346 = vmatpush1.bf16.msra.mxu0 0
    %5347 = vmatprep.subr.bf16.mxu0 0
    %5348 = vmatpush1.bf16.msra.mxu0 0
    %5349 = vmatprep.subr.bf16.mxu0 0
    %5350 = vmatpush1.bf16.msra.mxu0 %v5333
    %5351 = vmatprep.subr.bf16.mxu0 0
    %5352 = vmatpush2.bf16.msra.mxu0 0
    %5353 = vmatprep.subr.bf16.mxu0 0
    %5354 = vmatpush2.bf16.msra.mxu0 0
    %5355 = vmatprep.subr.bf16.mxu0 0
    %5356 = vmatpush2.bf16.msra.mxu0 0
    %5357 = vmatprep.subr.bf16.mxu0 0
    %5358 = vmatpush2.bf16.msra.mxu0 0
    %5359 = vmatprep.subr.bf16.mxu0 0
    %5360 = vmatpush2.bf16.msra.mxu0 0
    %5361 = vmatprep.subr.bf16.mxu0 0
    %5362 = vmatpush2.bf16.msra.mxu0 0
    %5363 = vmatprep.subr.bf16.mxu0 0
    %5364 = vmatpush2.bf16.msra.mxu0 0
    %5365 = vmatprep.subr.bf16.mxu0 0
    %5366 = vmatpush2.bf16.msra.mxu0 0
    %5367 = vmatprep.mubr.bf16.mxu0 0
    %5368 = vmatmul.mubr.bf16.gmra.mxu0 %v5330
    %v5369 = vpop.f32.mrf.mxu0
    %v5370 = vadd.f32 0.0, %v5369
    %v5371 = vpop.f32.mrf.mxu0
    %v5372 = vpop.f32.mrf.mxu0
    %v5373 = vpop.f32.mrf.mxu0
    %5374 = vdwg.mxu0
    %v5375 = vpack.c.bf16 %v5133, %v5133
    %v5376 = vpack.c.bf16 %v5199, %v5199
    %v5378 = vsel %vm3165, %v5375, 0
    %v5381 = vsel %vm3165, %v5376, 0
    %5383 = vmatprep.subr.bf16.mxu0 0
    %5384 = vmatpush1.bf16.xpose.msra.mxu0 0
    %5385 = vmatprep.subr.bf16.mxu0 0
    %5386 = vmatpush1.bf16.xpose.msra.mxu0 0
    %5387 = vmatprep.subr.bf16.mxu0 0
    %5388 = vmatpush1.bf16.xpose.msra.mxu0 0
    %5389 = vmatprep.subr.bf16.mxu0 0
    %5390 = vmatpush1.bf16.xpose.msra.mxu0 0
    %5391 = vmatprep.subr.bf16.mxu0 0
    %5392 = vmatpush1.bf16.xpose.msra.mxu0 0
    %5393 = vmatprep.subr.bf16.mxu0 0
    %5394 = vmatpush1.bf16.xpose.msra.mxu0 0
    %5395 = vmatprep.subr.bf16.mxu0 0
    %5396 = vmatpush1.bf16.xpose.msra.mxu0 0
    %5397 = vmatprep.subr.bf16.mxu0 0
    %5398 = vmatpush1.bf16.xpose.msra.mxu0 %v5381
    %5399 = vmatprep.subr.bf16.mxu0 0
    %5400 = vmatpush2.bf16.xpose.msra.mxu0 0
    %5401 = vmatprep.subr.bf16.mxu0 0
    %5402 = vmatpush2.bf16.xpose.msra.mxu0 0
    %5403 = vmatprep.subr.bf16.mxu0 0
    %5404 = vmatpush2.bf16.xpose.msra.mxu0 0
    %5405 = vmatprep.subr.bf16.mxu0 0
    %5406 = vmatpush2.bf16.xpose.msra.mxu0 0
    %5407 = vmatprep.subr.bf16.mxu0 0
    %5408 = vmatpush2.bf16.xpose.msra.mxu0 0
    %5409 = vmatprep.subr.bf16.mxu0 0
    %5410 = vmatpush2.bf16.xpose.msra.mxu0 0
    %5411 = vmatprep.subr.bf16.mxu0 0
    %5412 = vmatpush2.bf16.xpose.msra.mxu0 0
    %5413 = vmatprep.subr.bf16.mxu0 0
    %5414 = vmatpush2.bf16.xpose.msra.mxu0 0
    %5415 = vmatprep.mubr.bf16.mxu0 0
    %5416 = vmatmul.mubr.bf16.gmra.mxu0 %v5378
    %v5417 = vpop.f32.mrf.mxu0
    %v5418 = vadd.f32 %v2966, %v5417
    %v5419 = vpop.f32.mrf.mxu0
    %v5420 = vpop.f32.mrf.mxu0
    %v5421 = vpop.f32.mrf.mxu0
    %5422 = vdwg.mxu0
    %v5423 = vsel %vm3165, %v5418, -inf
    %5424 = vmax.xlane.f32.xlu0 %v5423
    %v5425 = vpop.xlane.xlu0 %5424
    %v5426 = vsub.f32 %v5418, %v5425
    %v5427 = vmul.f32 %v5426, 1.442695
    %v5428 = vpow.pop %v5427
    %v5429 = vsel %vm3165, %v5428, 0.0
    %5430 = vadd.xlane.f32.xlu0 %v5429
    %v5431 = vpop.xlane.xlu0 %5430
    %v5432 = vrcp.pop %v5431
    %v5433 = vmul.f32 %v5428, %v5432
    %v5434 = vpack.c.bf16 %v5433, %v5433
    %v5435 = vpack.c.bf16 %v5265, %v5265
    %v5437 = vsel %vm3165, %v5434, 0
    %v5440 = vsel %vm3228, %v5435, 0
    %5442 = vmatprep.subr.bf16.mxu0 0
    %5443 = vmatpush1.bf16.msra.mxu0 0
    %5444 = vmatprep.subr.bf16.mxu0 0
    %5445 = vmatpush1.bf16.msra.mxu0 0
    %5446 = vmatprep.subr.bf16.mxu0 0
    %5447 = vmatpush1.bf16.msra.mxu0 0
    %5448 = vmatprep.subr.bf16.mxu0 0
    %5449 = vmatpush1.bf16.msra.mxu0 0
    %5450 = vmatprep.subr.bf16.mxu0 0
    %5451 = vmatpush1.bf16.msra.mxu0 0
    %5452 = vmatprep.subr.bf16.mxu0 0
    %5453 = vmatpush1.bf16.msra.mxu0 0
    %5454 = vmatprep.subr.bf16.mxu0 0
    %5455 = vmatpush1.bf16.msra.mxu0 0
    %5456 = vmatprep.subr.bf16.mxu0 0
    %5457 = vmatpush1.bf16.msra.mxu0 %v5440
    %5458 = vmatprep.subr.bf16.mxu0 0
    %5459 = vmatpush2.bf16.msra.mxu0 0
    %5460 = vmatprep.subr.bf16.mxu0 0
    %5461 = vmatpush2.bf16.msra.mxu0 0
    %5462 = vmatprep.subr.bf16.mxu0 0
    %5463 = vmatpush2.bf16.msra.mxu0 0
    %5464 = vmatprep.subr.bf16.mxu0 0
    %5465 = vmatpush2.bf16.msra.mxu0 0
    %5466 = vmatprep.subr.bf16.mxu0 0
    %5467 = vmatpush2.bf16.msra.mxu0 0
    %5468 = vmatprep.subr.bf16.mxu0 0
    %5469 = vmatpush2.bf16.msra.mxu0 0
    %5470 = vmatprep.subr.bf16.mxu0 0
    %5471 = vmatpush2.bf16.msra.mxu0 0
    %5472 = vmatprep.subr.bf16.mxu0 0
    %5473 = vmatpush2.bf16.msra.mxu0 0
    %5474 = vmatprep.mubr.bf16.mxu0 0
    %5475 = vmatmul.mubr.bf16.gmra.mxu0 %v5437
    %v5476 = vpop.f32.mrf.mxu0
    %v5477 = vadd.f32 0.0, %v5476
    %v5478 = vpop.f32.mrf.mxu0
    %v5479 = vpop.f32.mrf.mxu0
    %v5480 = vpop.f32.mrf.mxu0
    %5481 = vdwg.mxu0
    %s5482 = scalar_lea.vmem %s77, 16
    %v5483 = vld [vmem:[%s5482] sm:$0xf]
    %v5484 = vpack.c.bf16 %v5477, %v5370
    %s5485 = scalar_lea.vmem %s79, 80
    %v5486 = vld [vmem:[%s5485] sm:$0xf]
    %v5487 = vld [vmem:[%s5485 + $0x4] sm:$0xf]
    %v5488 = vld [vmem:[%s5485 + $0x8] sm:$0xf]
    %v5489 = vld [vmem:[%s5485 + $0xc] sm:$0xf]
    %s5490 = scalar_lea.vmem %s59, 5
    %v5491 = vld [vmem:[%s5490] sm:$0x1]
    %v5493 = vlaneseq
    %v5494 = vshrl.u32 %v5493, 7
    %v5495 = vsub.s32 0, %v5494
    %v5496 = vrot.slane %v5491, %v5495
    %v5502 = vunpack.c.l.b16 %v5486
    %v5503 = vunpack.c.l.b16 %v5487
    %v5504 = vunpack.c.l.b16 %v5488
    %v5505 = vunpack.c.l.b16 %v5489
    %v5506 = vpack.c.b16 %v5503, %v5502
    %v5507 = vpack.c.b16 %v5505, %v5504
    %5510 = vmatprep.subr.bf16.mxu0 0
    %5511 = vmatpush1.bf16.msra.mxu0 0
    %5512 = vmatprep.subr.bf16.mxu0 0
    %5513 = vmatpush1.bf16.msra.mxu0 0
    %5514 = vmatprep.subr.bf16.mxu0 0
    %5515 = vmatpush1.bf16.msra.mxu0 0
    %5516 = vmatprep.subr.bf16.mxu0 0
    %5517 = vmatpush1.bf16.msra.mxu0 0
    %5518 = vmatprep.subr.bf16.mxu0 0
    %5519 = vmatpush1.bf16.msra.mxu0 0
    %5520 = vmatprep.subr.bf16.mxu0 0
    %5521 = vmatpush1.bf16.msra.mxu0 0
    %5522 = vmatprep.subr.bf16.mxu0 0
    %5523 = vmatpush1.bf16.msra.mxu0 %v5507
    %5524 = vmatprep.subr.bf16.mxu0 0
    %5525 = vmatpush1.bf16.msra.mxu0 %v5506
    %5526 = vmatprep.subr.bf16.mxu0 0
    %5527 = vmatpush2.bf16.msra.mxu0 0
    %5528 = vmatprep.subr.bf16.mxu0 0
    %5529 = vmatpush2.bf16.msra.mxu0 0
    %5530 = vmatprep.subr.bf16.mxu0 0
    %5531 = vmatpush2.bf16.msra.mxu0 0
    %5532 = vmatprep.subr.bf16.mxu0 0
    %5533 = vmatpush2.bf16.msra.mxu0 0
    %5534 = vmatprep.subr.bf16.mxu0 0
    %5535 = vmatpush2.bf16.msra.mxu0 0
    %5536 = vmatprep.subr.bf16.mxu0 0
    %5537 = vmatpush2.bf16.msra.mxu0 0
    %5538 = vmatprep.subr.bf16.mxu0 0
    %5539 = vmatpush2.bf16.msra.mxu0 0
    %5540 = vmatprep.subr.bf16.mxu0 0
    %5541 = vmatpush2.bf16.msra.mxu0 0
    %5542 = vmatprep.mubr.bf16.mxu0 0
    %5543 = vmatmul.mubr.bf16.gmra.mxu0 %v5093
    %v5544 = vpop.f32.mrf.mxu0
    %v5545 = vadd.f32 %v5496, %v5544
    %v5546 = vpop.f32.mrf.mxu0
    %v5547 = vpop.f32.mrf.mxu0
    %v5548 = vadd.f32 %v5496, %v5547
    %v5549 = vpop.f32.mrf.mxu0
    %5550 = vdwg.mxu0
    %s5551 = scalar_lea.vmem %s75, 80
    %v5552 = vld [vmem:[%s5551] sm:$0xf]
    %v5553 = vld [vmem:[%s5551 + $0x4] sm:$0xf]
    %v5554 = vld [vmem:[%s5551 + $0x8] sm:$0xf]
    %v5555 = vld [vmem:[%s5551 + $0xc] sm:$0xf]
    %s5556 = scalar_lea.vmem %s55, 5
    %v5557 = vld [vmem:[%s5556] sm:$0x1]
    %v5559 = vlaneseq
    %v5560 = vshrl.u32 %v5559, 7
    %v5561 = vsub.s32 0, %v5560
    %v5562 = vrot.slane %v5557, %v5561
    %v5568 = vunpack.c.l.b16 %v5552
    %v5569 = vunpack.c.l.b16 %v5553
    %v5570 = vunpack.c.l.b16 %v5554
    %v5571 = vunpack.c.l.b16 %v5555
    %v5572 = vpack.c.b16 %v5569, %v5568
    %v5573 = vpack.c.b16 %v5571, %v5570
    %5576 = vmatprep.subr.bf16.mxu0 0
    %5577 = vmatpush1.bf16.msra.mxu0 0
    %5578 = vmatprep.subr.bf16.mxu0 0
    %5579 = vmatpush1.bf16.msra.mxu0 0
    %5580 = vmatprep.subr.bf16.mxu0 0
    %5581 = vmatpush1.bf16.msra.mxu0 0
    %5582 = vmatprep.subr.bf16.mxu0 0
    %5583 = vmatpush1.bf16.msra.mxu0 0
    %5584 = vmatprep.subr.bf16.mxu0 0
    %5585 = vmatpush1.bf16.msra.mxu0 0
    %5586 = vmatprep.subr.bf16.mxu0 0
    %5587 = vmatpush1.bf16.msra.mxu0 0
    %5588 = vmatprep.subr.bf16.mxu0 0
    %5589 = vmatpush1.bf16.msra.mxu0 %v5573
    %5590 = vmatprep.subr.bf16.mxu0 0
    %5591 = vmatpush1.bf16.msra.mxu0 %v5572
    %5592 = vmatprep.subr.bf16.mxu0 0
    %5593 = vmatpush2.bf16.msra.mxu0 0
    %5594 = vmatprep.subr.bf16.mxu0 0
    %5595 = vmatpush2.bf16.msra.mxu0 0
    %5596 = vmatprep.subr.bf16.mxu0 0
    %5597 = vmatpush2.bf16.msra.mxu0 0
    %5598 = vmatprep.subr.bf16.mxu0 0
    %5599 = vmatpush2.bf16.msra.mxu0 0
    %5600 = vmatprep.subr.bf16.mxu0 0
    %5601 = vmatpush2.bf16.msra.mxu0 0
    %5602 = vmatprep.subr.bf16.mxu0 0
    %5603 = vmatpush2.bf16.msra.mxu0 0
    %5604 = vmatprep.subr.bf16.mxu0 0
    %5605 = vmatpush2.bf16.msra.mxu0 0
    %5606 = vmatprep.subr.bf16.mxu0 0
    %5607 = vmatpush2.bf16.msra.mxu0 0
    %5608 = vmatprep.mubr.bf16.mxu0 0
    %5609 = vmatmul.mubr.bf16.gmra.mxu0 %v5093
    %v5610 = vpop.f32.mrf.mxu0
    %v5611 = vadd.f32 %v5562, %v5610
    %v5612 = vpop.f32.mrf.mxu0
    %v5613 = vpop.f32.mrf.mxu0
    %v5614 = vadd.f32 %v5562, %v5613
    %v5615 = vpop.f32.mrf.mxu0
    %5616 = vdwg.mxu0
    %s5617 = scalar_lea.vmem %s81, 80
    %v5618 = vld [vmem:[%s5617] sm:$0xf]
    %v5619 = vld [vmem:[%s5617 + $0x4] sm:$0xf]
    %v5620 = vld [vmem:[%s5617 + $0x8] sm:$0xf]
    %v5621 = vld [vmem:[%s5617 + $0xc] sm:$0xf]
    %s5622 = scalar_lea.vmem %s61, 5
    %v5623 = vld [vmem:[%s5622] sm:$0x1]
    %v5625 = vlaneseq
    %v5626 = vshrl.u32 %v5625, 7
    %v5627 = vsub.s32 0, %v5626
    %v5628 = vrot.slane %v5623, %v5627
    %v5634 = vunpack.c.l.b16 %v5618
    %v5635 = vunpack.c.l.b16 %v5619
    %v5636 = vunpack.c.l.b16 %v5620
    %v5637 = vunpack.c.l.b16 %v5621
    %v5638 = vpack.c.b16 %v5635, %v5634
    %v5639 = vpack.c.b16 %v5637, %v5636
    %5642 = vmatprep.subr.bf16.mxu0 0
    %5643 = vmatpush1.bf16.msra.mxu0 0
    %5644 = vmatprep.subr.bf16.mxu0 0
    %5645 = vmatpush1.bf16.msra.mxu0 0
    %5646 = vmatprep.subr.bf16.mxu0 0
    %5647 = vmatpush1.bf16.msra.mxu0 0
    %5648 = vmatprep.subr.bf16.mxu0 0
    %5649 = vmatpush1.bf16.msra.mxu0 0
    %5650 = vmatprep.subr.bf16.mxu0 0
    %5651 = vmatpush1.bf16.msra.mxu0 0
    %5652 = vmatprep.subr.bf16.mxu0 0
    %5653 = vmatpush1.bf16.msra.mxu0 0
    %5654 = vmatprep.subr.bf16.mxu0 0
    %5655 = vmatpush1.bf16.msra.mxu0 %v5639
    %5656 = vmatprep.subr.bf16.mxu0 0
    %5657 = vmatpush1.bf16.msra.mxu0 %v5638
    %5658 = vmatprep.subr.bf16.mxu0 0
    %5659 = vmatpush2.bf16.msra.mxu0 0
    %5660 = vmatprep.subr.bf16.mxu0 0
    %5661 = vmatpush2.bf16.msra.mxu0 0
    %5662 = vmatprep.subr.bf16.mxu0 0
    %5663 = vmatpush2.bf16.msra.mxu0 0
    %5664 = vmatprep.subr.bf16.mxu0 0
    %5665 = vmatpush2.bf16.msra.mxu0 0
    %5666 = vmatprep.subr.bf16.mxu0 0
    %5667 = vmatpush2.bf16.msra.mxu0 0
    %5668 = vmatprep.subr.bf16.mxu0 0
    %5669 = vmatpush2.bf16.msra.mxu0 0
    %5670 = vmatprep.subr.bf16.mxu0 0
    %5671 = vmatpush2.bf16.msra.mxu0 0
    %5672 = vmatprep.subr.bf16.mxu0 0
    %5673 = vmatpush2.bf16.msra.mxu0 0
    %5674 = vmatprep.mubr.bf16.mxu0 0
    %5675 = vmatmul.mubr.bf16.gmra.mxu0 %v5093
    %v5676 = vpop.f32.mrf.mxu0
    %v5677 = vadd.f32 %v5628, %v5676
    %v5678 = vpop.f32.mrf.mxu0
    %v5679 = vpop.f32.mrf.mxu0
    %v5680 = vadd.f32 %v5628, %v5679
    %v5681 = vpop.f32.mrf.mxu0
    %5682 = vdwg.mxu0
    %v5683 = vpack.c.bf16 %v5545, %v5545
    %v5684 = vpack.c.bf16 %v5611, %v5611
    %v5686 = vsel %vm3165, %v5683, 0
    %v5689 = vsel %vm3165, %v5684, 0
    %5691 = vmatprep.subr.bf16.mxu0 0
    %5692 = vmatpush1.bf16.xpose.msra.mxu0 0
    %5693 = vmatprep.subr.bf16.mxu0 0
    %5694 = vmatpush1.bf16.xpose.msra.mxu0 0
    %5695 = vmatprep.subr.bf16.mxu0 0
    %5696 = vmatpush1.bf16.xpose.msra.mxu0 0
    %5697 = vmatprep.subr.bf16.mxu0 0
    %5698 = vmatpush1.bf16.xpose.msra.mxu0 0
    %5699 = vmatprep.subr.bf16.mxu0 0
    %5700 = vmatpush1.bf16.xpose.msra.mxu0 0
    %5701 = vmatprep.subr.bf16.mxu0 0
    %5702 = vmatpush1.bf16.xpose.msra.mxu0 0
    %5703 = vmatprep.subr.bf16.mxu0 0
    %5704 = vmatpush1.bf16.xpose.msra.mxu0 0
    %5705 = vmatprep.subr.bf16.mxu0 0
    %5706 = vmatpush1.bf16.xpose.msra.mxu0 %v5689
    %5707 = vmatprep.subr.bf16.mxu0 0
    %5708 = vmatpush2.bf16.xpose.msra.mxu0 0
    %5709 = vmatprep.subr.bf16.mxu0 0
    %5710 = vmatpush2.bf16.xpose.msra.mxu0 0
    %5711 = vmatprep.subr.bf16.mxu0 0
    %5712 = vmatpush2.bf16.xpose.msra.mxu0 0
    %5713 = vmatprep.subr.bf16.mxu0 0
    %5714 = vmatpush2.bf16.xpose.msra.mxu0 0
    %5715 = vmatprep.subr.bf16.mxu0 0
    %5716 = vmatpush2.bf16.xpose.msra.mxu0 0
    %5717 = vmatprep.subr.bf16.mxu0 0
    %5718 = vmatpush2.bf16.xpose.msra.mxu0 0
    %5719 = vmatprep.subr.bf16.mxu0 0
    %5720 = vmatpush2.bf16.xpose.msra.mxu0 0
    %5721 = vmatprep.subr.bf16.mxu0 0
    %5722 = vmatpush2.bf16.xpose.msra.mxu0 0
    %5723 = vmatprep.mubr.bf16.mxu0 0
    %5724 = vmatmul.mubr.bf16.gmra.mxu0 %v5686
    %v5725 = vpop.f32.mrf.mxu0
    %v5726 = vadd.f32 %v2958, %v5725
    %v5727 = vpop.f32.mrf.mxu0
    %v5728 = vpop.f32.mrf.mxu0
    %v5729 = vpop.f32.mrf.mxu0
    %5730 = vdwg.mxu0
    %v5731 = vsel %vm3165, %v5726, -inf
    %5732 = vmax.xlane.f32.xlu0 %v5731
    %v5733 = vpop.xlane.xlu0 %5732
    %v5734 = vsub.f32 %v5726, %v5733
    %v5735 = vmul.f32 %v5734, 1.442695
    %v5736 = vpow.pop %v5735
    %v5737 = vsel %vm3165, %v5736, 0.0
    %5738 = vadd.xlane.f32.xlu0 %v5737
    %v5739 = vpop.xlane.xlu0 %5738
    %v5740 = vrcp.pop %v5739
    %v5741 = vmul.f32 %v5736, %v5740
    %v5742 = vpack.c.bf16 %v5741, %v5741
    %v5743 = vpack.c.bf16 %v5677, %v5677
    %v5745 = vsel %vm3165, %v5742, 0
    %v5748 = vsel %vm3228, %v5743, 0
    %5750 = vmatprep.subr.bf16.mxu0 0
    %5751 = vmatpush1.bf16.msra.mxu0 0
    %5752 = vmatprep.subr.bf16.mxu0 0
    %5753 = vmatpush1.bf16.msra.mxu0 0
    %5754 = vmatprep.subr.bf16.mxu0 0
    %5755 = vmatpush1.bf16.msra.mxu0 0
    %5756 = vmatprep.subr.bf16.mxu0 0
    %5757 = vmatpush1.bf16.msra.mxu0 0
    %5758 = vmatprep.subr.bf16.mxu0 0
    %5759 = vmatpush1.bf16.msra.mxu0 0
    %5760 = vmatprep.subr.bf16.mxu0 0
    %5761 = vmatpush1.bf16.msra.mxu0 0
    %5762 = vmatprep.subr.bf16.mxu0 0
    %5763 = vmatpush1.bf16.msra.mxu0 0
    %5764 = vmatprep.subr.bf16.mxu0 0
    %5765 = vmatpush1.bf16.msra.mxu0 %v5748
    %5766 = vmatprep.subr.bf16.mxu0 0
    %5767 = vmatpush2.bf16.msra.mxu0 0
    %5768 = vmatprep.subr.bf16.mxu0 0
    %5769 = vmatpush2.bf16.msra.mxu0 0
    %5770 = vmatprep.subr.bf16.mxu0 0
    %5771 = vmatpush2.bf16.msra.mxu0 0
    %5772 = vmatprep.subr.bf16.mxu0 0
    %5773 = vmatpush2.bf16.msra.mxu0 0
    %5774 = vmatprep.subr.bf16.mxu0 0
    %5775 = vmatpush2.bf16.msra.mxu0 0
    %5776 = vmatprep.subr.bf16.mxu0 0
    %5777 = vmatpush2.bf16.msra.mxu0 0
    %5778 = vmatprep.subr.bf16.mxu0 0
    %5779 = vmatpush2.bf16.msra.mxu0 0
    %5780 = vmatprep.subr.bf16.mxu0 0
    %5781 = vmatpush2.bf16.msra.mxu0 0
    %5782 = vmatprep.mubr.bf16.mxu0 0
    %5783 = vmatmul.mubr.bf16.gmra.mxu0 %v5745
    %v5784 = vpop.f32.mrf.mxu0
    %v5785 = vadd.f32 0.0, %v5784
    %v5786 = vpop.f32.mrf.mxu0
    %v5787 = vpop.f32.mrf.mxu0
    %v5788 = vpop.f32.mrf.mxu0
    %5789 = vdwg.mxu0
    %v5790 = vpack.c.bf16 %v5548, %v5548
    %v5791 = vpack.c.bf16 %v5614, %v5614
    %v5793 = vsel %vm3165, %v5790, 0
    %v5796 = vsel %vm3165, %v5791, 0
    %5798 = vmatprep.subr.bf16.mxu0 0
    %5799 = vmatpush1.bf16.xpose.msra.mxu0 0
    %5800 = vmatprep.subr.bf16.mxu0 0
    %5801 = vmatpush1.bf16.xpose.msra.mxu0 0
    %5802 = vmatprep.subr.bf16.mxu0 0
    %5803 = vmatpush1.bf16.xpose.msra.mxu0 0
    %5804 = vmatprep.subr.bf16.mxu0 0
    %5805 = vmatpush1.bf16.xpose.msra.mxu0 0
    %5806 = vmatprep.subr.bf16.mxu0 0
    %5807 = vmatpush1.bf16.xpose.msra.mxu0 0
    %5808 = vmatprep.subr.bf16.mxu0 0
    %5809 = vmatpush1.bf16.xpose.msra.mxu0 0
    %5810 = vmatprep.subr.bf16.mxu0 0
    %5811 = vmatpush1.bf16.xpose.msra.mxu0 0
    %5812 = vmatprep.subr.bf16.mxu0 0
    %5813 = vmatpush1.bf16.xpose.msra.mxu0 %v5796
    %5814 = vmatprep.subr.bf16.mxu0 0
    %5815 = vmatpush2.bf16.xpose.msra.mxu0 0
    %5816 = vmatprep.subr.bf16.mxu0 0
    %5817 = vmatpush2.bf16.xpose.msra.mxu0 0
    %5818 = vmatprep.subr.bf16.mxu0 0
    %5819 = vmatpush2.bf16.xpose.msra.mxu0 0
    %5820 = vmatprep.subr.bf16.mxu0 0
    %5821 = vmatpush2.bf16.xpose.msra.mxu0 0
    %5822 = vmatprep.subr.bf16.mxu0 0
    %5823 = vmatpush2.bf16.xpose.msra.mxu0 0
    %5824 = vmatprep.subr.bf16.mxu0 0
    %5825 = vmatpush2.bf16.xpose.msra.mxu0 0
    %5826 = vmatprep.subr.bf16.mxu0 0
    %5827 = vmatpush2.bf16.xpose.msra.mxu0 0
    %5828 = vmatprep.subr.bf16.mxu0 0
    %5829 = vmatpush2.bf16.xpose.msra.mxu0 0
    %5830 = vmatprep.mubr.bf16.mxu0 0
    %5831 = vmatmul.mubr.bf16.gmra.mxu0 %v5793
    %v5832 = vpop.f32.mrf.mxu0
    %v5833 = vadd.f32 %v2966, %v5832
    %v5834 = vpop.f32.mrf.mxu0
    %v5835 = vpop.f32.mrf.mxu0
    %v5836 = vpop.f32.mrf.mxu0
    %5837 = vdwg.mxu0
    %v5838 = vsel %vm3165, %v5833, -inf
    %5839 = vmax.xlane.f32.xlu0 %v5838
    %v5840 = vpop.xlane.xlu0 %5839
    %v5841 = vsub.f32 %v5833, %v5840
    %v5842 = vmul.f32 %v5841, 1.442695
    %v5843 = vpow.pop %v5842
    %v5844 = vsel %vm3165, %v5843, 0.0
    %5845 = vadd.xlane.f32.xlu0 %v5844
    %v5846 = vpop.xlane.xlu0 %5845
    %v5847 = vrcp.pop %v5846
    %v5848 = vmul.f32 %v5843, %v5847
    %v5849 = vpack.c.bf16 %v5848, %v5848
    %v5850 = vpack.c.bf16 %v5680, %v5680
    %v5852 = vsel %vm3165, %v5849, 0
    %v5855 = vsel %vm3228, %v5850, 0
    %5857 = vmatprep.subr.bf16.mxu0 0
    %5858 = vmatpush1.bf16.msra.mxu0 0
    %5859 = vmatprep.subr.bf16.mxu0 0
    %5860 = vmatpush1.bf16.msra.mxu0 0
    %5861 = vmatprep.subr.bf16.mxu0 0
    %5862 = vmatpush1.bf16.msra.mxu0 0
    %5863 = vmatprep.subr.bf16.mxu0 0
    %5864 = vmatpush1.bf16.msra.mxu0 0
    %5865 = vmatprep.subr.bf16.mxu0 0
    %5866 = vmatpush1.bf16.msra.mxu0 0
    %5867 = vmatprep.subr.bf16.mxu0 0
    %5868 = vmatpush1.bf16.msra.mxu0 0
    %5869 = vmatprep.subr.bf16.mxu0 0
    %5870 = vmatpush1.bf16.msra.mxu0 0
    %5871 = vmatprep.subr.bf16.mxu0 0
    %5872 = vmatpush1.bf16.msra.mxu0 %v5855
    %5873 = vmatprep.subr.bf16.mxu0 0
    %5874 = vmatpush2.bf16.msra.mxu0 0
    %5875 = vmatprep.subr.bf16.mxu0 0
    %5876 = vmatpush2.bf16.msra.mxu0 0
    %5877 = vmatprep.subr.bf16.mxu0 0
    %5878 = vmatpush2.bf16.msra.mxu0 0
    %5879 = vmatprep.subr.bf16.mxu0 0
    %5880 = vmatpush2.bf16.msra.mxu0 0
    %5881 = vmatprep.subr.bf16.mxu0 0
    %5882 = vmatpush2.bf16.msra.mxu0 0
    %5883 = vmatprep.subr.bf16.mxu0 0
    %5884 = vmatpush2.bf16.msra.mxu0 0
    %5885 = vmatprep.subr.bf16.mxu0 0
    %5886 = vmatpush2.bf16.msra.mxu0 0
    %5887 = vmatprep.subr.bf16.mxu0 0
    %5888 = vmatpush2.bf16.msra.mxu0 0
    %5889 = vmatprep.mubr.bf16.mxu0 0
    %5890 = vmatmul.mubr.bf16.gmra.mxu0 %v5852
    %v5891 = vpop.f32.mrf.mxu0
    %v5892 = vadd.f32 0.0, %v5891
    %v5893 = vpop.f32.mrf.mxu0
    %v5894 = vpop.f32.mrf.mxu0
    %v5895 = vpop.f32.mrf.mxu0
    %5896 = vdwg.mxu0
    %s5897 = scalar_lea.vmem %s77, 20
    %v5898 = vld [vmem:[%s5897] sm:$0xf]
    %v5899 = vpack.c.bf16 %v5892, %v5785
    %v5901 = vsel %vm3165, %v5899, 0
    %v5904 = vsel %vm3228, %v5898, 0
    %5906 = vmatprep.subr.bf16.mxu0 0
    %5907 = vmatpush1.bf16.msra.mxu0 0
    %5908 = vmatprep.subr.bf16.mxu0 0
    %5909 = vmatpush1.bf16.msra.mxu0 0
    %5910 = vmatprep.subr.bf16.mxu0 0
    %5911 = vmatpush1.bf16.msra.mxu0 0
    %5912 = vmatprep.subr.bf16.mxu0 0
    %5913 = vmatpush1.bf16.msra.mxu0 0
    %5914 = vmatprep.subr.bf16.mxu0 0
    %5915 = vmatpush1.bf16.msra.mxu0 0
    %5916 = vmatprep.subr.bf16.mxu0 0
    %5917 = vmatpush1.bf16.msra.mxu0 0
    %5918 = vmatprep.subr.bf16.mxu0 0
    %5919 = vmatpush1.bf16.msra.mxu0 0
    %5920 = vmatprep.subr.bf16.mxu0 0
    %5921 = vmatpush1.bf16.msra.mxu0 %v5904
    %5922 = vmatprep.subr.bf16.mxu0 0
    %5923 = vmatpush2.bf16.msra.mxu0 0
    %5924 = vmatprep.subr.bf16.mxu0 0
    %5925 = vmatpush2.bf16.msra.mxu0 0
    %5926 = vmatprep.subr.bf16.mxu0 0
    %5927 = vmatpush2.bf16.msra.mxu0 0
    %5928 = vmatprep.subr.bf16.mxu0 0
    %5929 = vmatpush2.bf16.msra.mxu0 0
    %5930 = vmatprep.subr.bf16.mxu0 0
    %5931 = vmatpush2.bf16.msra.mxu0 0
    %5932 = vmatprep.subr.bf16.mxu0 0
    %5933 = vmatpush2.bf16.msra.mxu0 0
    %5934 = vmatprep.subr.bf16.mxu0 0
    %5935 = vmatpush2.bf16.msra.mxu0 0
    %5936 = vmatprep.subr.bf16.mxu0 0
    %5937 = vmatpush2.bf16.msra.mxu0 0
    %5938 = vmatprep.mubr.bf16.mxu0 0
    %5939 = vmatmul.mubr.bf16.gmra.mxu0 %v5901
    %v5940 = vpop.f32.mrf.mxu0
    %v5941 = vadd.f32 0.0, %v5940
    %v5942 = vpop.f32.mrf.mxu0
    %v5943 = vpop.f32.mrf.mxu0
    %v5944 = vadd.f32 0.0, %v5943
    %v5945 = vpop.f32.mrf.mxu0
    %5946 = vdwg.mxu0
    %v5948 = vsel %vm3165, %v5484, 0
    %v5951 = vsel %vm3228, %v5483, 0
    %5953 = vmatprep.subr.bf16.mxu0 0
    %5954 = vmatpush1.bf16.msra.mxu0 0
    %5955 = vmatprep.subr.bf16.mxu0 0
    %5956 = vmatpush1.bf16.msra.mxu0 0
    %5957 = vmatprep.subr.bf16.mxu0 0
    %5958 = vmatpush1.bf16.msra.mxu0 0
    %5959 = vmatprep.subr.bf16.mxu0 0
    %5960 = vmatpush1.bf16.msra.mxu0 0
    %5961 = vmatprep.subr.bf16.mxu0 0
    %5962 = vmatpush1.bf16.msra.mxu0 0
    %5963 = vmatprep.subr.bf16.mxu0 0
    %5964 = vmatpush1.bf16.msra.mxu0 0
    %5965 = vmatprep.subr.bf16.mxu0 0
    %5966 = vmatpush1.bf16.msra.mxu0 0
    %5967 = vmatprep.subr.bf16.mxu0 0
    %5968 = vmatpush1.bf16.msra.mxu0 %v5951
    %5969 = vmatprep.subr.bf16.mxu0 0
    %5970 = vmatpush2.bf16.msra.mxu0 0
    %5971 = vmatprep.subr.bf16.mxu0 0
    %5972 = vmatpush2.bf16.msra.mxu0 0
    %5973 = vmatprep.subr.bf16.mxu0 0
    %5974 = vmatpush2.bf16.msra.mxu0 0
    %5975 = vmatprep.subr.bf16.mxu0 0
    %5976 = vmatpush2.bf16.msra.mxu0 0
    %5977 = vmatprep.subr.bf16.mxu0 0
    %5978 = vmatpush2.bf16.msra.mxu0 0
    %5979 = vmatprep.subr.bf16.mxu0 0
    %5980 = vmatpush2.bf16.msra.mxu0 0
    %5981 = vmatprep.subr.bf16.mxu0 0
    %5982 = vmatpush2.bf16.msra.mxu0 0
    %5983 = vmatprep.subr.bf16.mxu0 0
    %5984 = vmatpush2.bf16.msra.mxu0 0
    %5985 = vmatprep.mubr.bf16.mxu0 0
    %5986 = vmatmul.mubr.bf16.gmra.mxu0 %v5948
    %v5987 = vpop.f32.mrf.mxu0
    %v5988 = vadd.f32 %v5941, %v5987
    %v5989 = vpop.f32.mrf.mxu0
    %v5990 = vpop.f32.mrf.mxu0
    %v5991 = vadd.f32 %v5944, %v5990
    %v5992 = vpop.f32.mrf.mxu0
    %5993 = vdwg.mxu0
    %s5994 = scalar_lea.vmem %s79, 96
    %v5995 = vld [vmem:[%s5994] sm:$0xf]
    %v5996 = vld [vmem:[%s5994 + $0x4] sm:$0xf]
    %v5997 = vld [vmem:[%s5994 + $0x8] sm:$0xf]
    %v5998 = vld [vmem:[%s5994 + $0xc] sm:$0xf]
    %s5999 = scalar_lea.vmem %s59, 6
    %v6000 = vld [vmem:[%s5999] sm:$0x1]
    %v6002 = vlaneseq
    %v6003 = vshrl.u32 %v6002, 7
    %v6004 = vsub.s32 0, %v6003
    %v6005 = vrot.slane %v6000, %v6004
    %v6011 = vunpack.c.l.b16 %v5995
    %v6012 = vunpack.c.l.b16 %v5996
    %v6013 = vunpack.c.l.b16 %v5997
    %v6014 = vunpack.c.l.b16 %v5998
    %v6015 = vpack.c.b16 %v6012, %v6011
    %v6016 = vpack.c.b16 %v6014, %v6013
    %6019 = vmatprep.subr.bf16.mxu0 0
    %6020 = vmatpush1.bf16.msra.mxu0 0
    %6021 = vmatprep.subr.bf16.mxu0 0
    %6022 = vmatpush1.bf16.msra.mxu0 0
    %6023 = vmatprep.subr.bf16.mxu0 0
    %6024 = vmatpush1.bf16.msra.mxu0 0
    %6025 = vmatprep.subr.bf16.mxu0 0
    %6026 = vmatpush1.bf16.msra.mxu0 0
    %6027 = vmatprep.subr.bf16.mxu0 0
    %6028 = vmatpush1.bf16.msra.mxu0 0
    %6029 = vmatprep.subr.bf16.mxu0 0
    %6030 = vmatpush1.bf16.msra.mxu0 0
    %6031 = vmatprep.subr.bf16.mxu0 0
    %6032 = vmatpush1.bf16.msra.mxu0 %v6016
    %6033 = vmatprep.subr.bf16.mxu0 0
    %6034 = vmatpush1.bf16.msra.mxu0 %v6015
    %6035 = vmatprep.subr.bf16.mxu0 0
    %6036 = vmatpush2.bf16.msra.mxu0 0
    %6037 = vmatprep.subr.bf16.mxu0 0
    %6038 = vmatpush2.bf16.msra.mxu0 0
    %6039 = vmatprep.subr.bf16.mxu0 0
    %6040 = vmatpush2.bf16.msra.mxu0 0
    %6041 = vmatprep.subr.bf16.mxu0 0
    %6042 = vmatpush2.bf16.msra.mxu0 0
    %6043 = vmatprep.subr.bf16.mxu0 0
    %6044 = vmatpush2.bf16.msra.mxu0 0
    %6045 = vmatprep.subr.bf16.mxu0 0
    %6046 = vmatpush2.bf16.msra.mxu0 0
    %6047 = vmatprep.subr.bf16.mxu0 0
    %6048 = vmatpush2.bf16.msra.mxu0 0
    %6049 = vmatprep.subr.bf16.mxu0 0
    %6050 = vmatpush2.bf16.msra.mxu0 0
    %6051 = vmatprep.mubr.bf16.mxu0 0
    %6052 = vmatmul.mubr.bf16.gmra.mxu0 %v5093
    %v6053 = vpop.f32.mrf.mxu0
    %v6054 = vadd.f32 %v6005, %v6053
    %v6055 = vpop.f32.mrf.mxu0
    %v6056 = vpop.f32.mrf.mxu0
    %v6057 = vadd.f32 %v6005, %v6056
    %v6058 = vpop.f32.mrf.mxu0
    %6059 = vdwg.mxu0
    %s6060 = scalar_lea.vmem %s75, 96
    %v6061 = vld [vmem:[%s6060] sm:$0xf]
    %v6062 = vld [vmem:[%s6060 + $0x4] sm:$0xf]
    %v6063 = vld [vmem:[%s6060 + $0x8] sm:$0xf]
    %v6064 = vld [vmem:[%s6060 + $0xc] sm:$0xf]
    %s6065 = scalar_lea.vmem %s55, 6
    %v6066 = vld [vmem:[%s6065] sm:$0x1]
    %v6068 = vlaneseq
    %v6069 = vshrl.u32 %v6068, 7
    %v6070 = vsub.s32 0, %v6069
    %v6071 = vrot.slane %v6066, %v6070
    %v6077 = vunpack.c.l.b16 %v6061
    %v6078 = vunpack.c.l.b16 %v6062
    %v6079 = vunpack.c.l.b16 %v6063
    %v6080 = vunpack.c.l.b16 %v6064
    %v6081 = vpack.c.b16 %v6078, %v6077
    %v6082 = vpack.c.b16 %v6080, %v6079
    %6085 = vmatprep.subr.bf16.mxu0 0
    %6086 = vmatpush1.bf16.msra.mxu0 0
    %6087 = vmatprep.subr.bf16.mxu0 0
    %6088 = vmatpush1.bf16.msra.mxu0 0
    %6089 = vmatprep.subr.bf16.mxu0 0
    %6090 = vmatpush1.bf16.msra.mxu0 0
    %6091 = vmatprep.subr.bf16.mxu0 0
    %6092 = vmatpush1.bf16.msra.mxu0 0
    %6093 = vmatprep.subr.bf16.mxu0 0
    %6094 = vmatpush1.bf16.msra.mxu0 0
    %6095 = vmatprep.subr.bf16.mxu0 0
    %6096 = vmatpush1.bf16.msra.mxu0 0
    %6097 = vmatprep.subr.bf16.mxu0 0
    %6098 = vmatpush1.bf16.msra.mxu0 %v6082
    %6099 = vmatprep.subr.bf16.mxu0 0
    %6100 = vmatpush1.bf16.msra.mxu0 %v6081
    %6101 = vmatprep.subr.bf16.mxu0 0
    %6102 = vmatpush2.bf16.msra.mxu0 0
    %6103 = vmatprep.subr.bf16.mxu0 0
    %6104 = vmatpush2.bf16.msra.mxu0 0
    %6105 = vmatprep.subr.bf16.mxu0 0
    %6106 = vmatpush2.bf16.msra.mxu0 0
    %6107 = vmatprep.subr.bf16.mxu0 0
    %6108 = vmatpush2.bf16.msra.mxu0 0
    %6109 = vmatprep.subr.bf16.mxu0 0
    %6110 = vmatpush2.bf16.msra.mxu0 0
    %6111 = vmatprep.subr.bf16.mxu0 0
    %6112 = vmatpush2.bf16.msra.mxu0 0
    %6113 = vmatprep.subr.bf16.mxu0 0
    %6114 = vmatpush2.bf16.msra.mxu0 0
    %6115 = vmatprep.subr.bf16.mxu0 0
    %6116 = vmatpush2.bf16.msra.mxu0 0
    %6117 = vmatprep.mubr.bf16.mxu0 0
    %6118 = vmatmul.mubr.bf16.gmra.mxu0 %v5093
    %v6119 = vpop.f32.mrf.mxu0
    %v6120 = vadd.f32 %v6071, %v6119
    %v6121 = vpop.f32.mrf.mxu0
    %v6122 = vpop.f32.mrf.mxu0
    %v6123 = vadd.f32 %v6071, %v6122
    %v6124 = vpop.f32.mrf.mxu0
    %6125 = vdwg.mxu0
    %s6126 = scalar_lea.vmem %s81, 96
    %v6127 = vld [vmem:[%s6126] sm:$0xf]
    %v6128 = vld [vmem:[%s6126 + $0x4] sm:$0xf]
    %v6129 = vld [vmem:[%s6126 + $0x8] sm:$0xf]
    %v6130 = vld [vmem:[%s6126 + $0xc] sm:$0xf]
    %s6131 = scalar_lea.vmem %s61, 6
    %v6132 = vld [vmem:[%s6131] sm:$0x1]
    %v6134 = vlaneseq
    %v6135 = vshrl.u32 %v6134, 7
    %v6136 = vsub.s32 0, %v6135
    %v6137 = vrot.slane %v6132, %v6136
    %v6143 = vunpack.c.l.b16 %v6127
    %v6144 = vunpack.c.l.b16 %v6128
    %v6145 = vunpack.c.l.b16 %v6129
    %v6146 = vunpack.c.l.b16 %v6130
    %v6147 = vpack.c.b16 %v6144, %v6143
    %v6148 = vpack.c.b16 %v6146, %v6145
    %6151 = vmatprep.subr.bf16.mxu0 0
    %6152 = vmatpush1.bf16.msra.mxu0 0
    %6153 = vmatprep.subr.bf16.mxu0 0
    %6154 = vmatpush1.bf16.msra.mxu0 0
    %6155 = vmatprep.subr.bf16.mxu0 0
    %6156 = vmatpush1.bf16.msra.mxu0 0
    %6157 = vmatprep.subr.bf16.mxu0 0
    %6158 = vmatpush1.bf16.msra.mxu0 0
    %6159 = vmatprep.subr.bf16.mxu0 0
    %6160 = vmatpush1.bf16.msra.mxu0 0
    %6161 = vmatprep.subr.bf16.mxu0 0
    %6162 = vmatpush1.bf16.msra.mxu0 0
    %6163 = vmatprep.subr.bf16.mxu0 0
    %6164 = vmatpush1.bf16.msra.mxu0 %v6148
    %6165 = vmatprep.subr.bf16.mxu0 0
    %6166 = vmatpush1.bf16.msra.mxu0 %v6147
    %6167 = vmatprep.subr.bf16.mxu0 0
    %6168 = vmatpush2.bf16.msra.mxu0 0
    %6169 = vmatprep.subr.bf16.mxu0 0
    %6170 = vmatpush2.bf16.msra.mxu0 0
    %6171 = vmatprep.subr.bf16.mxu0 0
    %6172 = vmatpush2.bf16.msra.mxu0 0
    %6173 = vmatprep.subr.bf16.mxu0 0
    %6174 = vmatpush2.bf16.msra.mxu0 0
    %6175 = vmatprep.subr.bf16.mxu0 0
    %6176 = vmatpush2.bf16.msra.mxu0 0
    %6177 = vmatprep.subr.bf16.mxu0 0
    %6178 = vmatpush2.bf16.msra.mxu0 0
    %6179 = vmatprep.subr.bf16.mxu0 0
    %6180 = vmatpush2.bf16.msra.mxu0 0
    %6181 = vmatprep.subr.bf16.mxu0 0
    %6182 = vmatpush2.bf16.msra.mxu0 0
    %6183 = vmatprep.mubr.bf16.mxu0 0
    %6184 = vmatmul.mubr.bf16.gmra.mxu0 %v5093
    %v6185 = vpop.f32.mrf.mxu0
    %v6186 = vadd.f32 %v6137, %v6185
    %v6187 = vpop.f32.mrf.mxu0
    %v6188 = vpop.f32.mrf.mxu0
    %v6189 = vadd.f32 %v6137, %v6188
    %v6190 = vpop.f32.mrf.mxu0
    %6191 = vdwg.mxu0
    %v6192 = vpack.c.bf16 %v6054, %v6054
    %v6193 = vpack.c.bf16 %v6120, %v6120
    %v6195 = vsel %vm3165, %v6192, 0
    %v6198 = vsel %vm3165, %v6193, 0
    %6200 = vmatprep.subr.bf16.mxu0 0
    %6201 = vmatpush1.bf16.xpose.msra.mxu0 0
    %6202 = vmatprep.subr.bf16.mxu0 0
    %6203 = vmatpush1.bf16.xpose.msra.mxu0 0
    %6204 = vmatprep.subr.bf16.mxu0 0
    %6205 = vmatpush1.bf16.xpose.msra.mxu0 0
    %6206 = vmatprep.subr.bf16.mxu0 0
    %6207 = vmatpush1.bf16.xpose.msra.mxu0 0
    %6208 = vmatprep.subr.bf16.mxu0 0
    %6209 = vmatpush1.bf16.xpose.msra.mxu0 0
    %6210 = vmatprep.subr.bf16.mxu0 0
    %6211 = vmatpush1.bf16.xpose.msra.mxu0 0
    %6212 = vmatprep.subr.bf16.mxu0 0
    %6213 = vmatpush1.bf16.xpose.msra.mxu0 0
    %6214 = vmatprep.subr.bf16.mxu0 0
    %6215 = vmatpush1.bf16.xpose.msra.mxu0 %v6198
    %6216 = vmatprep.subr.bf16.mxu0 0
    %6217 = vmatpush2.bf16.xpose.msra.mxu0 0
    %6218 = vmatprep.subr.bf16.mxu0 0
    %6219 = vmatpush2.bf16.xpose.msra.mxu0 0
    %6220 = vmatprep.subr.bf16.mxu0 0
    %6221 = vmatpush2.bf16.xpose.msra.mxu0 0
    %6222 = vmatprep.subr.bf16.mxu0 0
    %6223 = vmatpush2.bf16.xpose.msra.mxu0 0
    %6224 = vmatprep.subr.bf16.mxu0 0
    %6225 = vmatpush2.bf16.xpose.msra.mxu0 0
    %6226 = vmatprep.subr.bf16.mxu0 0
    %6227 = vmatpush2.bf16.xpose.msra.mxu0 0
    %6228 = vmatprep.subr.bf16.mxu0 0
    %6229 = vmatpush2.bf16.xpose.msra.mxu0 0
    %6230 = vmatprep.subr.bf16.mxu0 0
    %6231 = vmatpush2.bf16.xpose.msra.mxu0 0
    %6232 = vmatprep.mubr.bf16.mxu0 0
    %6233 = vmatmul.mubr.bf16.gmra.mxu0 %v6195
    %v6234 = vpop.f32.mrf.mxu0
    %v6235 = vadd.f32 %v2958, %v6234
    %v6236 = vpop.f32.mrf.mxu0
    %v6237 = vpop.f32.mrf.mxu0
    %v6238 = vpop.f32.mrf.mxu0
    %6239 = vdwg.mxu0
    %v6240 = vsel %vm3165, %v6235, -inf
    %6241 = vmax.xlane.f32.xlu0 %v6240
    %v6242 = vpop.xlane.xlu0 %6241
    %v6243 = vsub.f32 %v6235, %v6242
    %v6244 = vmul.f32 %v6243, 1.442695
    %v6245 = vpow.pop %v6244
    %v6246 = vsel %vm3165, %v6245, 0.0
    %6247 = vadd.xlane.f32.xlu0 %v6246
    %v6248 = vpop.xlane.xlu0 %6247
    %v6249 = vrcp.pop %v6248
    %v6250 = vmul.f32 %v6245, %v6249
    %v6251 = vpack.c.bf16 %v6250, %v6250
    %v6252 = vpack.c.bf16 %v6186, %v6186
    %v6254 = vsel %vm3165, %v6251, 0
    %v6257 = vsel %vm3228, %v6252, 0
    %6259 = vmatprep.subr.bf16.mxu0 0
    %6260 = vmatpush1.bf16.msra.mxu0 0
    %6261 = vmatprep.subr.bf16.mxu0 0
    %6262 = vmatpush1.bf16.msra.mxu0 0
    %6263 = vmatprep.subr.bf16.mxu0 0
    %6264 = vmatpush1.bf16.msra.mxu0 0
    %6265 = vmatprep.subr.bf16.mxu0 0
    %6266 = vmatpush1.bf16.msra.mxu0 0
    %6267 = vmatprep.subr.bf16.mxu0 0
    %6268 = vmatpush1.bf16.msra.mxu0 0
    %6269 = vmatprep.subr.bf16.mxu0 0
    %6270 = vmatpush1.bf16.msra.mxu0 0
    %6271 = vmatprep.subr.bf16.mxu0 0
    %6272 = vmatpush1.bf16.msra.mxu0 0
    %6273 = vmatprep.subr.bf16.mxu0 0
    %6274 = vmatpush1.bf16.msra.mxu0 %v6257
    %6275 = vmatprep.subr.bf16.mxu0 0
    %6276 = vmatpush2.bf16.msra.mxu0 0
    %6277 = vmatprep.subr.bf16.mxu0 0
    %6278 = vmatpush2.bf16.msra.mxu0 0
    %6279 = vmatprep.subr.bf16.mxu0 0
    %6280 = vmatpush2.bf16.msra.mxu0 0
    %6281 = vmatprep.subr.bf16.mxu0 0
    %6282 = vmatpush2.bf16.msra.mxu0 0
    %6283 = vmatprep.subr.bf16.mxu0 0
    %6284 = vmatpush2.bf16.msra.mxu0 0
    %6285 = vmatprep.subr.bf16.mxu0 0
    %6286 = vmatpush2.bf16.msra.mxu0 0
    %6287 = vmatprep.subr.bf16.mxu0 0
    %6288 = vmatpush2.bf16.msra.mxu0 0
    %6289 = vmatprep.subr.bf16.mxu0 0
    %6290 = vmatpush2.bf16.msra.mxu0 0
    %6291 = vmatprep.mubr.bf16.mxu0 0
    %6292 = vmatmul.mubr.bf16.gmra.mxu0 %v6254
    %v6293 = vpop.f32.mrf.mxu0
    %v6294 = vadd.f32 0.0, %v6293
    %v6295 = vpop.f32.mrf.mxu0
    %v6296 = vpop.f32.mrf.mxu0
    %v6297 = vpop.f32.mrf.mxu0
    %6298 = vdwg.mxu0
    %v6299 = vpack.c.bf16 %v6057, %v6057
    %v6300 = vpack.c.bf16 %v6123, %v6123
    %v6302 = vsel %vm3165, %v6299, 0
    %v6305 = vsel %vm3165, %v6300, 0
    %6307 = vmatprep.subr.bf16.mxu0 0
    %6308 = vmatpush1.bf16.xpose.msra.mxu0 0
    %6309 = vmatprep.subr.bf16.mxu0 0
    %6310 = vmatpush1.bf16.xpose.msra.mxu0 0
    %6311 = vmatprep.subr.bf16.mxu0 0
    %6312 = vmatpush1.bf16.xpose.msra.mxu0 0
    %6313 = vmatprep.subr.bf16.mxu0 0
    %6314 = vmatpush1.bf16.xpose.msra.mxu0 0
    %6315 = vmatprep.subr.bf16.mxu0 0
    %6316 = vmatpush1.bf16.xpose.msra.mxu0 0
    %6317 = vmatprep.subr.bf16.mxu0 0
    %6318 = vmatpush1.bf16.xpose.msra.mxu0 0
    %6319 = vmatprep.subr.bf16.mxu0 0
    %6320 = vmatpush1.bf16.xpose.msra.mxu0 0
    %6321 = vmatprep.subr.bf16.mxu0 0
    %6322 = vmatpush1.bf16.xpose.msra.mxu0 %v6305
    %6323 = vmatprep.subr.bf16.mxu0 0
    %6324 = vmatpush2.bf16.xpose.msra.mxu0 0
    %6325 = vmatprep.subr.bf16.mxu0 0
    %6326 = vmatpush2.bf16.xpose.msra.mxu0 0
    %6327 = vmatprep.subr.bf16.mxu0 0
    %6328 = vmatpush2.bf16.xpose.msra.mxu0 0
    %6329 = vmatprep.subr.bf16.mxu0 0
    %6330 = vmatpush2.bf16.xpose.msra.mxu0 0
    %6331 = vmatprep.subr.bf16.mxu0 0
    %6332 = vmatpush2.bf16.xpose.msra.mxu0 0
    %6333 = vmatprep.subr.bf16.mxu0 0
    %6334 = vmatpush2.bf16.xpose.msra.mxu0 0
    %6335 = vmatprep.subr.bf16.mxu0 0
    %6336 = vmatpush2.bf16.xpose.msra.mxu0 0
    %6337 = vmatprep.subr.bf16.mxu0 0
    %6338 = vmatpush2.bf16.xpose.msra.mxu0 0
    %6339 = vmatprep.mubr.bf16.mxu0 0
    %6340 = vmatmul.mubr.bf16.gmra.mxu0 %v6302
    %v6341 = vpop.f32.mrf.mxu0
    %v6342 = vadd.f32 %v2966, %v6341
    %v6343 = vpop.f32.mrf.mxu0
    %v6344 = vpop.f32.mrf.mxu0
    %v6345 = vpop.f32.mrf.mxu0
    %6346 = vdwg.mxu0
    %v6347 = vsel %vm3165, %v6342, -inf
    %6348 = vmax.xlane.f32.xlu0 %v6347
    %v6349 = vpop.xlane.xlu0 %6348
    %v6350 = vsub.f32 %v6342, %v6349
    %v6351 = vmul.f32 %v6350, 1.442695
    %v6352 = vpow.pop %v6351
    %v6353 = vsel %vm3165, %v6352, 0.0
    %6354 = vadd.xlane.f32.xlu0 %v6353
    %v6355 = vpop.xlane.xlu0 %6354
    %v6356 = vrcp.pop %v6355
    %v6357 = vmul.f32 %v6352, %v6356
    %v6358 = vpack.c.bf16 %v6357, %v6357
    %v6359 = vpack.c.bf16 %v6189, %v6189
    %v6361 = vsel %vm3165, %v6358, 0
    %v6364 = vsel %vm3228, %v6359, 0
    %6366 = vmatprep.subr.bf16.mxu0 0
    %6367 = vmatpush1.bf16.msra.mxu0 0
    %6368 = vmatprep.subr.bf16.mxu0 0
    %6369 = vmatpush1.bf16.msra.mxu0 0
    %6370 = vmatprep.subr.bf16.mxu0 0
    %6371 = vmatpush1.bf16.msra.mxu0 0
    %6372 = vmatprep.subr.bf16.mxu0 0
    %6373 = vmatpush1.bf16.msra.mxu0 0
    %6374 = vmatprep.subr.bf16.mxu0 0
    %6375 = vmatpush1.bf16.msra.mxu0 0
    %6376 = vmatprep.subr.bf16.mxu0 0
    %6377 = vmatpush1.bf16.msra.mxu0 0
    %6378 = vmatprep.subr.bf16.mxu0 0
    %6379 = vmatpush1.bf16.msra.mxu0 0
    %6380 = vmatprep.subr.bf16.mxu0 0
    %6381 = vmatpush1.bf16.msra.mxu0 %v6364
    %6382 = vmatprep.subr.bf16.mxu0 0
    %6383 = vmatpush2.bf16.msra.mxu0 0
    %6384 = vmatprep.subr.bf16.mxu0 0
    %6385 = vmatpush2.bf16.msra.mxu0 0
    %6386 = vmatprep.subr.bf16.mxu0 0
    %6387 = vmatpush2.bf16.msra.mxu0 0
    %6388 = vmatprep.subr.bf16.mxu0 0
    %6389 = vmatpush2.bf16.msra.mxu0 0
    %6390 = vmatprep.subr.bf16.mxu0 0
    %6391 = vmatpush2.bf16.msra.mxu0 0
    %6392 = vmatprep.subr.bf16.mxu0 0
    %6393 = vmatpush2.bf16.msra.mxu0 0
    %6394 = vmatprep.subr.bf16.mxu0 0
    %6395 = vmatpush2.bf16.msra.mxu0 0
    %6396 = vmatprep.subr.bf16.mxu0 0
    %6397 = vmatpush2.bf16.msra.mxu0 0
    %6398 = vmatprep.mubr.bf16.mxu0 0
    %6399 = vmatmul.mubr.bf16.gmra.mxu0 %v6361
    %v6400 = vpop.f32.mrf.mxu0
    %v6401 = vadd.f32 0.0, %v6400
    %v6402 = vpop.f32.mrf.mxu0
    %v6403 = vpop.f32.mrf.mxu0
    %v6404 = vpop.f32.mrf.mxu0
    %6405 = vdwg.mxu0
    %s6406 = scalar_lea.vmem %s77, 24
    %v6407 = vld [vmem:[%s6406] sm:$0xf]
    %v6408 = vpack.c.bf16 %v6401, %v6294
    %v6410 = vsel %vm3165, %v6408, 0
    %v6413 = vsel %vm3228, %v6407, 0
    %6415 = vmatprep.subr.bf16.mxu0 0
    %6416 = vmatpush1.bf16.msra.mxu0 0
    %6417 = vmatprep.subr.bf16.mxu0 0
    %6418 = vmatpush1.bf16.msra.mxu0 0
    %6419 = vmatprep.subr.bf16.mxu0 0
    %6420 = vmatpush1.bf16.msra.mxu0 0
    %6421 = vmatprep.subr.bf16.mxu0 0
    %6422 = vmatpush1.bf16.msra.mxu0 0
    %6423 = vmatprep.subr.bf16.mxu0 0
    %6424 = vmatpush1.bf16.msra.mxu0 0
    %6425 = vmatprep.subr.bf16.mxu0 0
    %6426 = vmatpush1.bf16.msra.mxu0 0
    %6427 = vmatprep.subr.bf16.mxu0 0
    %6428 = vmatpush1.bf16.msra.mxu0 0
    %6429 = vmatprep.subr.bf16.mxu0 0
    %6430 = vmatpush1.bf16.msra.mxu0 %v6413
    %6431 = vmatprep.subr.bf16.mxu0 0
    %6432 = vmatpush2.bf16.msra.mxu0 0
    %6433 = vmatprep.subr.bf16.mxu0 0
    %6434 = vmatpush2.bf16.msra.mxu0 0
    %6435 = vmatprep.subr.bf16.mxu0 0
    %6436 = vmatpush2.bf16.msra.mxu0 0
    %6437 = vmatprep.subr.bf16.mxu0 0
    %6438 = vmatpush2.bf16.msra.mxu0 0
    %6439 = vmatprep.subr.bf16.mxu0 0
    %6440 = vmatpush2.bf16.msra.mxu0 0
    %6441 = vmatprep.subr.bf16.mxu0 0
    %6442 = vmatpush2.bf16.msra.mxu0 0
    %6443 = vmatprep.subr.bf16.mxu0 0
    %6444 = vmatpush2.bf16.msra.mxu0 0
    %6445 = vmatprep.subr.bf16.mxu0 0
    %6446 = vmatpush2.bf16.msra.mxu0 0
    %6447 = vmatprep.mubr.bf16.mxu0 0
    %6448 = vmatmul.mubr.bf16.gmra.mxu0 %v6410
    %v6449 = vpop.f32.mrf.mxu0
    %v6450 = vadd.f32 0.0, %v6449
    %v6451 = vpop.f32.mrf.mxu0
    %v6452 = vpop.f32.mrf.mxu0
    %v6453 = vadd.f32 0.0, %v6452
    %v6454 = vpop.f32.mrf.mxu0
    %6455 = vdwg.mxu0
    %v6456 = vadd.f32 %v5988, %v6450
    %v6457 = vadd.f32 %v5991, %v6453
    %s6458 = scalar_lea.vmem %s79, 112
    %v6459 = vld [vmem:[%s6458] sm:$0xf]
    %v6460 = vld [vmem:[%s6458 + $0x4] sm:$0xf]
    %v6461 = vld [vmem:[%s6458 + $0x8] sm:$0xf]
    %v6462 = vld [vmem:[%s6458 + $0xc] sm:$0xf]
    %s6463 = scalar_lea.vmem %s59, 7
    %v6464 = vld [vmem:[%s6463] sm:$0x1]
    %v6466 = vlaneseq
    %v6467 = vshrl.u32 %v6466, 7
    %v6468 = vsub.s32 0, %v6467
    %v6469 = vrot.slane %v6464, %v6468
    %v6475 = vunpack.c.l.b16 %v6459
    %v6476 = vunpack.c.l.b16 %v6460
    %v6477 = vunpack.c.l.b16 %v6461
    %v6478 = vunpack.c.l.b16 %v6462
    %v6479 = vpack.c.b16 %v6476, %v6475
    %v6480 = vpack.c.b16 %v6478, %v6477
    %6483 = vmatprep.subr.bf16.mxu0 0
    %6484 = vmatpush1.bf16.msra.mxu0 0
    %6485 = vmatprep.subr.bf16.mxu0 0
    %6486 = vmatpush1.bf16.msra.mxu0 0
    %6487 = vmatprep.subr.bf16.mxu0 0
    %6488 = vmatpush1.bf16.msra.mxu0 0
    %6489 = vmatprep.subr.bf16.mxu0 0
    %6490 = vmatpush1.bf16.msra.mxu0 0
    %6491 = vmatprep.subr.bf16.mxu0 0
    %6492 = vmatpush1.bf16.msra.mxu0 0
    %6493 = vmatprep.subr.bf16.mxu0 0
    %6494 = vmatpush1.bf16.msra.mxu0 0
    %6495 = vmatprep.subr.bf16.mxu0 0
    %6496 = vmatpush1.bf16.msra.mxu0 %v6480
    %6497 = vmatprep.subr.bf16.mxu0 0
    %6498 = vmatpush1.bf16.msra.mxu0 %v6479
    %6499 = vmatprep.subr.bf16.mxu0 0
    %6500 = vmatpush2.bf16.msra.mxu0 0
    %6501 = vmatprep.subr.bf16.mxu0 0
    %6502 = vmatpush2.bf16.msra.mxu0 0
    %6503 = vmatprep.subr.bf16.mxu0 0
    %6504 = vmatpush2.bf16.msra.mxu0 0
    %6505 = vmatprep.subr.bf16.mxu0 0
    %6506 = vmatpush2.bf16.msra.mxu0 0
    %6507 = vmatprep.subr.bf16.mxu0 0
    %6508 = vmatpush2.bf16.msra.mxu0 0
    %6509 = vmatprep.subr.bf16.mxu0 0
    %6510 = vmatpush2.bf16.msra.mxu0 0
    %6511 = vmatprep.subr.bf16.mxu0 0
    %6512 = vmatpush2.bf16.msra.mxu0 0
    %6513 = vmatprep.subr.bf16.mxu0 0
    %6514 = vmatpush2.bf16.msra.mxu0 0
    %6515 = vmatprep.mubr.bf16.mxu0 0
    %6516 = vmatmul.mubr.bf16.gmra.mxu0 %v5093
    %v6517 = vpop.f32.mrf.mxu0
    %v6518 = vadd.f32 %v6469, %v6517
    %v6519 = vpop.f32.mrf.mxu0
    %v6520 = vpop.f32.mrf.mxu0
    %v6521 = vadd.f32 %v6469, %v6520
    %v6522 = vpop.f32.mrf.mxu0
    %6523 = vdwg.mxu0
    %s6524 = scalar_lea.vmem %s75, 112
    %v6525 = vld [vmem:[%s6524] sm:$0xf]
    %v6526 = vld [vmem:[%s6524 + $0x4] sm:$0xf]
    %v6527 = vld [vmem:[%s6524 + $0x8] sm:$0xf]
    %v6528 = vld [vmem:[%s6524 + $0xc] sm:$0xf]
    %s6529 = scalar_lea.vmem %s55, 7
    %v6530 = vld [vmem:[%s6529] sm:$0x1]
    %v6532 = vlaneseq
    %v6533 = vshrl.u32 %v6532, 7
    %v6534 = vsub.s32 0, %v6533
    %v6535 = vrot.slane %v6530, %v6534
    %v6541 = vunpack.c.l.b16 %v6525
    %v6542 = vunpack.c.l.b16 %v6526
    %v6543 = vunpack.c.l.b16 %v6527
    %v6544 = vunpack.c.l.b16 %v6528
    %v6545 = vpack.c.b16 %v6542, %v6541
    %v6546 = vpack.c.b16 %v6544, %v6543
    %6549 = vmatprep.subr.bf16.mxu0 0
    %6550 = vmatpush1.bf16.msra.mxu0 0
    %6551 = vmatprep.subr.bf16.mxu0 0
    %6552 = vmatpush1.bf16.msra.mxu0 0
    %6553 = vmatprep.subr.bf16.mxu0 0
    %6554 = vmatpush1.bf16.msra.mxu0 0
    %6555 = vmatprep.subr.bf16.mxu0 0
    %6556 = vmatpush1.bf16.msra.mxu0 0
    %6557 = vmatprep.subr.bf16.mxu0 0
    %6558 = vmatpush1.bf16.msra.mxu0 0
    %6559 = vmatprep.subr.bf16.mxu0 0
    %6560 = vmatpush1.bf16.msra.mxu0 0
    %6561 = vmatprep.subr.bf16.mxu0 0
    %6562 = vmatpush1.bf16.msra.mxu0 %v6546
    %6563 = vmatprep.subr.bf16.mxu0 0
    %6564 = vmatpush1.bf16.msra.mxu0 %v6545
    %6565 = vmatprep.subr.bf16.mxu0 0
    %6566 = vmatpush2.bf16.msra.mxu0 0
    %6567 = vmatprep.subr.bf16.mxu0 0
    %6568 = vmatpush2.bf16.msra.mxu0 0
    %6569 = vmatprep.subr.bf16.mxu0 0
    %6570 = vmatpush2.bf16.msra.mxu0 0
    %6571 = vmatprep.subr.bf16.mxu0 0
    %6572 = vmatpush2.bf16.msra.mxu0 0
    %6573 = vmatprep.subr.bf16.mxu0 0
    %6574 = vmatpush2.bf16.msra.mxu0 0
    %6575 = vmatprep.subr.bf16.mxu0 0
    %6576 = vmatpush2.bf16.msra.mxu0 0
    %6577 = vmatprep.subr.bf16.mxu0 0
    %6578 = vmatpush2.bf16.msra.mxu0 0
    %6579 = vmatprep.subr.bf16.mxu0 0
    %6580 = vmatpush2.bf16.msra.mxu0 0
    %6581 = vmatprep.mubr.bf16.mxu0 0
    %6582 = vmatmul.mubr.bf16.gmra.mxu0 %v5093
    %v6583 = vpop.f32.mrf.mxu0
    %v6584 = vadd.f32 %v6535, %v6583
    %v6585 = vpop.f32.mrf.mxu0
    %v6586 = vpop.f32.mrf.mxu0
    %v6587 = vadd.f32 %v6535, %v6586
    %v6588 = vpop.f32.mrf.mxu0
    %6589 = vdwg.mxu0
    %s6590 = scalar_lea.vmem %s81, 112
    %v6591 = vld [vmem:[%s6590] sm:$0xf]
    %v6592 = vld [vmem:[%s6590 + $0x4] sm:$0xf]
    %v6593 = vld [vmem:[%s6590 + $0x8] sm:$0xf]
    %v6594 = vld [vmem:[%s6590 + $0xc] sm:$0xf]
    %s6595 = scalar_lea.vmem %s61, 7
    %v6596 = vld [vmem:[%s6595] sm:$0x1]
    %v6598 = vlaneseq
    %v6599 = vshrl.u32 %v6598, 7
    %v6600 = vsub.s32 0, %v6599
    %v6601 = vrot.slane %v6596, %v6600
    %v6607 = vunpack.c.l.b16 %v6591
    %v6608 = vunpack.c.l.b16 %v6592
    %v6609 = vunpack.c.l.b16 %v6593
    %v6610 = vunpack.c.l.b16 %v6594
    %v6611 = vpack.c.b16 %v6608, %v6607
    %v6612 = vpack.c.b16 %v6610, %v6609
    %6615 = vmatprep.subr.bf16.mxu0 0
    %6616 = vmatpush1.bf16.msra.mxu0 0
    %6617 = vmatprep.subr.bf16.mxu0 0
    %6618 = vmatpush1.bf16.msra.mxu0 0
    %6619 = vmatprep.subr.bf16.mxu0 0
    %6620 = vmatpush1.bf16.msra.mxu0 0
    %6621 = vmatprep.subr.bf16.mxu0 0
    %6622 = vmatpush1.bf16.msra.mxu0 0
    %6623 = vmatprep.subr.bf16.mxu0 0
    %6624 = vmatpush1.bf16.msra.mxu0 0
    %6625 = vmatprep.subr.bf16.mxu0 0
    %6626 = vmatpush1.bf16.msra.mxu0 0
    %6627 = vmatprep.subr.bf16.mxu0 0
    %6628 = vmatpush1.bf16.msra.mxu0 %v6612
    %6629 = vmatprep.subr.bf16.mxu0 0
    %6630 = vmatpush1.bf16.msra.mxu0 %v6611
    %6631 = vmatprep.subr.bf16.mxu0 0
    %6632 = vmatpush2.bf16.msra.mxu0 0
    %6633 = vmatprep.subr.bf16.mxu0 0
    %6634 = vmatpush2.bf16.msra.mxu0 0
    %6635 = vmatprep.subr.bf16.mxu0 0
    %6636 = vmatpush2.bf16.msra.mxu0 0
    %6637 = vmatprep.subr.bf16.mxu0 0
    %6638 = vmatpush2.bf16.msra.mxu0 0
    %6639 = vmatprep.subr.bf16.mxu0 0
    %6640 = vmatpush2.bf16.msra.mxu0 0
    %6641 = vmatprep.subr.bf16.mxu0 0
    %6642 = vmatpush2.bf16.msra.mxu0 0
    %6643 = vmatprep.subr.bf16.mxu0 0
    %6644 = vmatpush2.bf16.msra.mxu0 0
    %6645 = vmatprep.subr.bf16.mxu0 0
    %6646 = vmatpush2.bf16.msra.mxu0 0
    %6647 = vmatprep.mubr.bf16.mxu0 0
    %6648 = vmatmul.mubr.bf16.gmra.mxu0 %v5093
    %v6649 = vpop.f32.mrf.mxu0
    %v6650 = vadd.f32 %v6601, %v6649
    %v6651 = vpop.f32.mrf.mxu0
    %v6652 = vpop.f32.mrf.mxu0
    %v6653 = vadd.f32 %v6601, %v6652
    %v6654 = vpop.f32.mrf.mxu0
    %6655 = vdwg.mxu0
    %v6656 = vpack.c.bf16 %v6518, %v6518
    %v6657 = vpack.c.bf16 %v6584, %v6584
    %v6659 = vsel %vm3165, %v6656, 0
    %v6662 = vsel %vm3165, %v6657, 0
    %6664 = vmatprep.subr.bf16.mxu0 0
    %6665 = vmatpush1.bf16.xpose.msra.mxu0 0
    %6666 = vmatprep.subr.bf16.mxu0 0
    %6667 = vmatpush1.bf16.xpose.msra.mxu0 0
    %6668 = vmatprep.subr.bf16.mxu0 0
    %6669 = vmatpush1.bf16.xpose.msra.mxu0 0
    %6670 = vmatprep.subr.bf16.mxu0 0
    %6671 = vmatpush1.bf16.xpose.msra.mxu0 0
    %6672 = vmatprep.subr.bf16.mxu0 0
    %6673 = vmatpush1.bf16.xpose.msra.mxu0 0
    %6674 = vmatprep.subr.bf16.mxu0 0
    %6675 = vmatpush1.bf16.xpose.msra.mxu0 0
    %6676 = vmatprep.subr.bf16.mxu0 0
    %6677 = vmatpush1.bf16.xpose.msra.mxu0 0
    %6678 = vmatprep.subr.bf16.mxu0 0
    %6679 = vmatpush1.bf16.xpose.msra.mxu0 %v6662
    %6680 = vmatprep.subr.bf16.mxu0 0
    %6681 = vmatpush2.bf16.xpose.msra.mxu0 0
    %6682 = vmatprep.subr.bf16.mxu0 0
    %6683 = vmatpush2.bf16.xpose.msra.mxu0 0
    %6684 = vmatprep.subr.bf16.mxu0 0
    %6685 = vmatpush2.bf16.xpose.msra.mxu0 0
    %6686 = vmatprep.subr.bf16.mxu0 0
    %6687 = vmatpush2.bf16.xpose.msra.mxu0 0
    %6688 = vmatprep.subr.bf16.mxu0 0
    %6689 = vmatpush2.bf16.xpose.msra.mxu0 0
    %6690 = vmatprep.subr.bf16.mxu0 0
    %6691 = vmatpush2.bf16.xpose.msra.mxu0 0
    %6692 = vmatprep.subr.bf16.mxu0 0
    %6693 = vmatpush2.bf16.xpose.msra.mxu0 0
    %6694 = vmatprep.subr.bf16.mxu0 0
    %6695 = vmatpush2.bf16.xpose.msra.mxu0 0
    %6696 = vmatprep.mubr.bf16.mxu0 0
    %6697 = vmatmul.mubr.bf16.gmra.mxu0 %v6659
    %v6698 = vpop.f32.mrf.mxu0
    %v6699 = vadd.f32 %v2958, %v6698
    %v6700 = vpop.f32.mrf.mxu0
    %v6701 = vpop.f32.mrf.mxu0
    %v6702 = vpop.f32.mrf.mxu0
    %6703 = vdwg.mxu0
    %v6704 = vsel %vm3165, %v6699, -inf
    %6705 = vmax.xlane.f32.xlu0 %v6704
    %v6706 = vpop.xlane.xlu0 %6705
    %v6707 = vsub.f32 %v6699, %v6706
    %v6708 = vmul.f32 %v6707, 1.442695
    %v6709 = vpow.pop %v6708
    %v6710 = vsel %vm3165, %v6709, 0.0
    %6711 = vadd.xlane.f32.xlu0 %v6710
    %v6712 = vpop.xlane.xlu0 %6711
    %v6713 = vrcp.pop %v6712
    %v6714 = vmul.f32 %v6709, %v6713
    %v6715 = vpack.c.bf16 %v6714, %v6714
    %v6716 = vpack.c.bf16 %v6650, %v6650
    %v6718 = vsel %vm3165, %v6715, 0
    %v6721 = vsel %vm3228, %v6716, 0
    %6723 = vmatprep.subr.bf16.mxu0 0
    %6724 = vmatpush1.bf16.msra.mxu0 0
    %6725 = vmatprep.subr.bf16.mxu0 0
    %6726 = vmatpush1.bf16.msra.mxu0 0
    %6727 = vmatprep.subr.bf16.mxu0 0
    %6728 = vmatpush1.bf16.msra.mxu0 0
    %6729 = vmatprep.subr.bf16.mxu0 0
    %6730 = vmatpush1.bf16.msra.mxu0 0
    %6731 = vmatprep.subr.bf16.mxu0 0
    %6732 = vmatpush1.bf16.msra.mxu0 0
    %6733 = vmatprep.subr.bf16.mxu0 0
    %6734 = vmatpush1.bf16.msra.mxu0 0
    %6735 = vmatprep.subr.bf16.mxu0 0
    %6736 = vmatpush1.bf16.msra.mxu0 0
    %6737 = vmatprep.subr.bf16.mxu0 0
    %6738 = vmatpush1.bf16.msra.mxu0 %v6721
    %6739 = vmatprep.subr.bf16.mxu0 0
    %6740 = vmatpush2.bf16.msra.mxu0 0
    %6741 = vmatprep.subr.bf16.mxu0 0
    %6742 = vmatpush2.bf16.msra.mxu0 0
    %6743 = vmatprep.subr.bf16.mxu0 0
    %6744 = vmatpush2.bf16.msra.mxu0 0
    %6745 = vmatprep.subr.bf16.mxu0 0
    %6746 = vmatpush2.bf16.msra.mxu0 0
    %6747 = vmatprep.subr.bf16.mxu0 0
    %6748 = vmatpush2.bf16.msra.mxu0 0
    %6749 = vmatprep.subr.bf16.mxu0 0
    %6750 = vmatpush2.bf16.msra.mxu0 0
    %6751 = vmatprep.subr.bf16.mxu0 0
    %6752 = vmatpush2.bf16.msra.mxu0 0
    %6753 = vmatprep.subr.bf16.mxu0 0
    %6754 = vmatpush2.bf16.msra.mxu0 0
    %6755 = vmatprep.mubr.bf16.mxu0 0
    %6756 = vmatmul.mubr.bf16.gmra.mxu0 %v6718
    %v6757 = vpop.f32.mrf.mxu0
    %v6758 = vadd.f32 0.0, %v6757
    %v6759 = vpop.f32.mrf.mxu0
    %v6760 = vpop.f32.mrf.mxu0
    %v6761 = vpop.f32.mrf.mxu0
    %6762 = vdwg.mxu0
    %v6763 = vpack.c.bf16 %v6521, %v6521
    %v6764 = vpack.c.bf16 %v6587, %v6587
    %v6766 = vsel %vm3165, %v6763, 0
    %v6769 = vsel %vm3165, %v6764, 0
    %6771 = vmatprep.subr.bf16.mxu0 0
    %6772 = vmatpush1.bf16.xpose.msra.mxu0 0
    %6773 = vmatprep.subr.bf16.mxu0 0
    %6774 = vmatpush1.bf16.xpose.msra.mxu0 0
    %6775 = vmatprep.subr.bf16.mxu0 0
    %6776 = vmatpush1.bf16.xpose.msra.mxu0 0
    %6777 = vmatprep.subr.bf16.mxu0 0
    %6778 = vmatpush1.bf16.xpose.msra.mxu0 0
    %6779 = vmatprep.subr.bf16.mxu0 0
    %6780 = vmatpush1.bf16.xpose.msra.mxu0 0
    %6781 = vmatprep.subr.bf16.mxu0 0
    %6782 = vmatpush1.bf16.xpose.msra.mxu0 0
    %6783 = vmatprep.subr.bf16.mxu0 0
    %6784 = vmatpush1.bf16.xpose.msra.mxu0 0
    %6785 = vmatprep.subr.bf16.mxu0 0
    %6786 = vmatpush1.bf16.xpose.msra.mxu0 %v6769
    %6787 = vmatprep.subr.bf16.mxu0 0
    %6788 = vmatpush2.bf16.xpose.msra.mxu0 0
    %6789 = vmatprep.subr.bf16.mxu0 0
    %6790 = vmatpush2.bf16.xpose.msra.mxu0 0
    %6791 = vmatprep.subr.bf16.mxu0 0
    %6792 = vmatpush2.bf16.xpose.msra.mxu0 0
    %6793 = vmatprep.subr.bf16.mxu0 0
    %6794 = vmatpush2.bf16.xpose.msra.mxu0 0
    %6795 = vmatprep.subr.bf16.mxu0 0
    %6796 = vmatpush2.bf16.xpose.msra.mxu0 0
    %6797 = vmatprep.subr.bf16.mxu0 0
    %6798 = vmatpush2.bf16.xpose.msra.mxu0 0
    %6799 = vmatprep.subr.bf16.mxu0 0
    %6800 = vmatpush2.bf16.xpose.msra.mxu0 0
    %6801 = vmatprep.subr.bf16.mxu0 0
    %6802 = vmatpush2.bf16.xpose.msra.mxu0 0
    %6803 = vmatprep.mubr.bf16.mxu0 0
    %6804 = vmatmul.mubr.bf16.gmra.mxu0 %v6766
    %v6805 = vpop.f32.mrf.mxu0
    %v6806 = vadd.f32 %v2966, %v6805
    %v6807 = vpop.f32.mrf.mxu0
    %v6808 = vpop.f32.mrf.mxu0
    %v6809 = vpop.f32.mrf.mxu0
    %6810 = vdwg.mxu0
    %v6811 = vsel %vm3165, %v6806, -inf
    %6812 = vmax.xlane.f32.xlu0 %v6811
    %v6813 = vpop.xlane.xlu0 %6812
    %v6814 = vsub.f32 %v6806, %v6813
    %v6815 = vmul.f32 %v6814, 1.442695
    %v6816 = vpow.pop %v6815
    %v6817 = vsel %vm3165, %v6816, 0.0
    %6818 = vadd.xlane.f32.xlu0 %v6817
    %v6819 = vpop.xlane.xlu0 %6818
    %v6820 = vrcp.pop %v6819
    %v6821 = vmul.f32 %v6816, %v6820
    %v6822 = vpack.c.bf16 %v6821, %v6821
    %v6823 = vpack.c.bf16 %v6653, %v6653
    %v6825 = vsel %vm3165, %v6822, 0
    %v6828 = vsel %vm3228, %v6823, 0
    %6830 = vmatprep.subr.bf16.mxu0 0
    %6831 = vmatpush1.bf16.msra.mxu0 0
    %6832 = vmatprep.subr.bf16.mxu0 0
    %6833 = vmatpush1.bf16.msra.mxu0 0
    %6834 = vmatprep.subr.bf16.mxu0 0
    %6835 = vmatpush1.bf16.msra.mxu0 0
    %6836 = vmatprep.subr.bf16.mxu0 0
    %6837 = vmatpush1.bf16.msra.mxu0 0
    %6838 = vmatprep.subr.bf16.mxu0 0
    %6839 = vmatpush1.bf16.msra.mxu0 0
    %6840 = vmatprep.subr.bf16.mxu0 0
    %6841 = vmatpush1.bf16.msra.mxu0 0
    %6842 = vmatprep.subr.bf16.mxu0 0
    %6843 = vmatpush1.bf16.msra.mxu0 0
    %6844 = vmatprep.subr.bf16.mxu0 0
    %6845 = vmatpush1.bf16.msra.mxu0 %v6828
    %6846 = vmatprep.subr.bf16.mxu0 0
    %6847 = vmatpush2.bf16.msra.mxu0 0
    %6848 = vmatprep.subr.bf16.mxu0 0
    %6849 = vmatpush2.bf16.msra.mxu0 0
    %6850 = vmatprep.subr.bf16.mxu0 0
    %6851 = vmatpush2.bf16.msra.mxu0 0
    %6852 = vmatprep.subr.bf16.mxu0 0
    %6853 = vmatpush2.bf16.msra.mxu0 0
    %6854 = vmatprep.subr.bf16.mxu0 0
    %6855 = vmatpush2.bf16.msra.mxu0 0
    %6856 = vmatprep.subr.bf16.mxu0 0
    %6857 = vmatpush2.bf16.msra.mxu0 0
    %6858 = vmatprep.subr.bf16.mxu0 0
    %6859 = vmatpush2.bf16.msra.mxu0 0
    %6860 = vmatprep.subr.bf16.mxu0 0
    %6861 = vmatpush2.bf16.msra.mxu0 0
    %6862 = vmatprep.mubr.bf16.mxu0 0
    %6863 = vmatmul.mubr.bf16.gmra.mxu0 %v6825
    %v6864 = vpop.f32.mrf.mxu0
    %v6865 = vadd.f32 0.0, %v6864
    %v6866 = vpop.f32.mrf.mxu0
    %v6867 = vpop.f32.mrf.mxu0
    %v6868 = vpop.f32.mrf.mxu0
    %6869 = vdwg.mxu0
    %s6870 = scalar_lea.vmem %s77, 28
    %v6871 = vld [vmem:[%s6870] sm:$0xf]
    %v6872 = vpack.c.bf16 %v6865, %v6758
    %v6874 = vsel %vm3165, %v6872, 0
    %v6877 = vsel %vm3228, %v6871, 0
    %6879 = vmatprep.subr.bf16.mxu0 0
    %6880 = vmatpush1.bf16.msra.mxu0 0
    %6881 = vmatprep.subr.bf16.mxu0 0
    %6882 = vmatpush1.bf16.msra.mxu0 0
    %6883 = vmatprep.subr.bf16.mxu0 0
    %6884 = vmatpush1.bf16.msra.mxu0 0
    %6885 = vmatprep.subr.bf16.mxu0 0
    %6886 = vmatpush1.bf16.msra.mxu0 0
    %6887 = vmatprep.subr.bf16.mxu0 0
    %6888 = vmatpush1.bf16.msra.mxu0 0
    %6889 = vmatprep.subr.bf16.mxu0 0
    %6890 = vmatpush1.bf16.msra.mxu0 0
    %6891 = vmatprep.subr.bf16.mxu0 0
    %6892 = vmatpush1.bf16.msra.mxu0 0
    %6893 = vmatprep.subr.bf16.mxu0 0
    %6894 = vmatpush1.bf16.msra.mxu0 %v6877
    %6895 = vmatprep.subr.bf16.mxu0 0
    %6896 = vmatpush2.bf16.msra.mxu0 0
    %6897 = vmatprep.subr.bf16.mxu0 0
    %6898 = vmatpush2.bf16.msra.mxu0 0
    %6899 = vmatprep.subr.bf16.mxu0 0
    %6900 = vmatpush2.bf16.msra.mxu0 0
    %6901 = vmatprep.subr.bf16.mxu0 0
    %6902 = vmatpush2.bf16.msra.mxu0 0
    %6903 = vmatprep.subr.bf16.mxu0 0
    %6904 = vmatpush2.bf16.msra.mxu0 0
    %6905 = vmatprep.subr.bf16.mxu0 0
    %6906 = vmatpush2.bf16.msra.mxu0 0
    %6907 = vmatprep.subr.bf16.mxu0 0
    %6908 = vmatpush2.bf16.msra.mxu0 0
    %6909 = vmatprep.subr.bf16.mxu0 0
    %6910 = vmatpush2.bf16.msra.mxu0 0
    %6911 = vmatprep.mubr.bf16.mxu0 0
    %6912 = vmatmul.mubr.bf16.gmra.mxu0 %v6874
    %v6913 = vpop.f32.mrf.mxu0
    %v6914 = vadd.f32 0.0, %v6913
    %v6915 = vpop.f32.mrf.mxu0
    %v6916 = vpop.f32.mrf.mxu0
    %v6917 = vadd.f32 0.0, %v6916
    %v6918 = vpop.f32.mrf.mxu0
    %6919 = vdwg.mxu0
    %v6920 = vadd.f32 %v6456, %v6914
    %v6921 = vadd.f32 %v6457, %v6917
    %s6922 = scalar_lea.vmem %s57, 1
    %v6923 = vld [vmem:[%s6922] sm:$0x1]
    %v6925 = vlaneseq
    %v6926 = vshrl.u32 %v6925, 7
    %v6927 = vsub.s32 0, %v6926
    %v6928 = vrot.slane %v6923, %v6927
    %v6930 = vadd.f32 %v6920, %v6928
    %v6931 = vadd.f32 %v6921, %v6928
    %v6932 = vadd.f32 %v5064, %v6930
    %v6933 = vadd.f32 %v5065, %v6931
    %s6934 = scalar_lea.vmem %s65, 1
    %v6935 = vld [vmem:[%s6934] sm:$0x1]
    %s6936 = scalar_lea.vmem %s63, 1
    %v6937 = vld [vmem:[%s6936] sm:$0x1]
    %v6938 = vsel %vm2947, %v6932, 0.0
    %6939 = vadd.xlane.f32.xlu0 %v6938
    %v6940 = vpop.xlane.xlu0 %6939
    %v6941 = vsel %vm2947, %v6933, 0.0
    %6942 = vadd.xlane.f32.xlu0 %v6941
    %v6943 = vpop.xlane.xlu0 %6942
    %v6944 = vmul.f32 %v6940, %v4837
    %v6945 = vmul.f32 %v6943, %v4837
    %v6946 = vsub.f32 %v6932, %v6944
    %v6947 = vsub.f32 %v6933, %v6945
    %v6948 = vmul.f32 %v6946, %v6946
    %v6949 = vmul.f32 %v6947, %v6947
    %v6950 = vsel %vm2947, %v6948, 0.0
    %6951 = vadd.xlane.f32.xlu0 %v6950
    %v6952 = vpop.xlane.xlu0 %6951
    %v6953 = vsel %vm2947, %v6949, 0.0
    %6954 = vadd.xlane.f32.xlu0 %v6953
    %v6955 = vpop.xlane.xlu0 %6954
    %v6956 = vmul.f32 %v6952, %v4837
    %v6957 = vmul.f32 %v6955, %v4837
    %v6958 = vadd.f32 %v6956, 1e-05
    %v6959 = vadd.f32 %v6957, 1e-05
    %v6960 = vrsqrt.pop %v6958
    %v6961 = vrsqrt.pop %v6959
    %v6962 = vmul.f32 %v6946, %v6960
    %v6963 = vmul.f32 %v6947, %v6961
    %v6965 = vlaneseq
    %v6966 = vshrl.u32 %v6965, 7
    %v6967 = vsub.s32 0, %v6966
    %v6968 = vrot.slane %v6935, %v6967
    %v6970 = vmul.f32 %v6962, %v6968
    %v6971 = vmul.f32 %v6963, %v6968
    %v6973 = vlaneseq
    %v6974 = vshrl.u32 %v6973, 7
    %v6975 = vsub.s32 0, %v6974
    %v6976 = vrot.slane %v6937, %v6975
    %v6978 = vadd.f32 %v6970, %v6976
    %v6979 = vadd.f32 %v6971, %v6976
    %s6980 = scalar_lea.vmem %s71, 16
    %v6981 = vld [vmem:[%s6980] sm:$0xf]
    %v6982 = vld [vmem:[%s6980 + $0x4] sm:$0xf]
    %v6983 = vld [vmem:[%s6980 + $0x8] sm:$0xf]
    %v6984 = vld [vmem:[%s6980 + $0xc] sm:$0xf]
    %v6985 = vpack.c.bf16 %v6979, %v6978
    %s6986 = scalar_lea.vmem %s51, 1
    %v6987 = vld [vmem:[%s6986] sm:$0x1]
    %v6989 = vlaneseq
    %v6990 = vshrl.u32 %v6989, 7
    %v6991 = vsub.s32 0, %v6990
    %v6992 = vrot.slane %v6987, %v6991
    %v6998 = vunpack.c.l.b16 %v6981
    %v6999 = vunpack.c.l.b16 %v6982
    %v7000 = vunpack.c.l.b16 %v6983
    %v7001 = vunpack.c.l.b16 %v6984
    %v7002 = vpack.c.b16 %v6999, %v6998
    %v7003 = vpack.c.b16 %v7001, %v7000
    %v7007 = vsel %vm2947, %v6985, 0
    %7009 = vmatprep.subr.bf16.mxu0 0
    %7010 = vmatpush1.bf16.msra.mxu0 0
    %7011 = vmatprep.subr.bf16.mxu0 0
    %7012 = vmatpush1.bf16.msra.mxu0 0
    %7013 = vmatprep.subr.bf16.mxu0 0
    %7014 = vmatpush1.bf16.msra.mxu0 0
    %7015 = vmatprep.subr.bf16.mxu0 0
    %7016 = vmatpush1.bf16.msra.mxu0 0
    %7017 = vmatprep.subr.bf16.mxu0 0
    %7018 = vmatpush1.bf16.msra.mxu0 0
    %7019 = vmatprep.subr.bf16.mxu0 0
    %7020 = vmatpush1.bf16.msra.mxu0 0
    %7021 = vmatprep.subr.bf16.mxu0 0
    %7022 = vmatpush1.bf16.msra.mxu0 %v7003
    %7023 = vmatprep.subr.bf16.mxu0 0
    %7024 = vmatpush1.bf16.msra.mxu0 %v7002
    %7025 = vmatprep.subr.bf16.mxu0 0
    %7026 = vmatpush2.bf16.msra.mxu0 0
    %7027 = vmatprep.subr.bf16.mxu0 0
    %7028 = vmatpush2.bf16.msra.mxu0 0
    %7029 = vmatprep.subr.bf16.mxu0 0
    %7030 = vmatpush2.bf16.msra.mxu0 0
    %7031 = vmatprep.subr.bf16.mxu0 0
    %7032 = vmatpush2.bf16.msra.mxu0 0
    %7033 = vmatprep.subr.bf16.mxu0 0
    %7034 = vmatpush2.bf16.msra.mxu0 0
    %7035 = vmatprep.subr.bf16.mxu0 0
    %7036 = vmatpush2.bf16.msra.mxu0 0
    %7037 = vmatprep.subr.bf16.mxu0 0
    %7038 = vmatpush2.bf16.msra.mxu0 0
    %7039 = vmatprep.subr.bf16.mxu0 0
    %7040 = vmatpush2.bf16.msra.mxu0 0
    %7041 = vmatprep.mubr.bf16.mxu0 0
    %7042 = vmatmul.mubr.bf16.gmra.mxu0 %v7007
    %v7043 = vpop.f32.mrf.mxu0
    %v7044 = vadd.f32 %v6992, %v7043
    %v7045 = vpop.f32.mrf.mxu0
    %v7046 = vpop.f32.mrf.mxu0
    %v7047 = vadd.f32 %v6992, %v7046
    %v7048 = vpop.f32.mrf.mxu0
    %7049 = vdwg.mxu0
    %v7050 = vmax.f32 %v7044, 0.0
    %v7051 = vmax.f32 %v7047, 0.0
    %s7052 = scalar_lea.vmem %s73, 24
    %v7053 = vld [vmem:[%s7052] sm:$0xf]
    %v7054 = vld [vmem:[%s7052 + $0x4] sm:$0xf]
    %v7055 = vld [vmem:[%s7052 + $0x8] sm:$0xf]
    %v7056 = vld [vmem:[%s7052 + $0xc] sm:$0xf]
    %v7057 = vld [vmem:[%s7052 + $0x10] sm:$0xf]
    %v7058 = vld [vmem:[%s7052 + $0x14] sm:$0xf]
    %v7059 = vpack.c.bf16 %v7051, %v7050
    %s7060 = scalar_lea.vmem %s53, 1
    %v7061 = vld [vmem:[%s7060] sm:$0x1]
    %v7063 = vlaneseq
    %v7064 = vshrl.u32 %v7063, 7
    %v7065 = vsub.s32 0, %v7064
    %v7066 = vrot.slane %v7061, %v7065
    %v7074 = vunpack.c.l.b16 %v7053
    %v7075 = vunpack.c.l.b16 %v7054
    %v7076 = vunpack.c.l.b16 %v7055
    %v7077 = vunpack.c.l.b16 %v7056
    %v7078 = vunpack.c.l.b16 %v7057
    %v7079 = vunpack.c.l.b16 %v7058
    %v7080 = vpack.c.b16 %v7075, %v7074
    %v7081 = vpack.c.b16 %v7077, %v7076
    %v7082 = vpack.c.b16 %v7079, %v7078
    %v7087 = vsel %vm197, %v7059, 0
    %7089 = vmatprep.subr.bf16.mxu0 0
    %7090 = vmatpush1.bf16.msra.mxu0 0
    %7091 = vmatprep.subr.bf16.mxu0 0
    %7092 = vmatpush1.bf16.msra.mxu0 0
    %7093 = vmatprep.subr.bf16.mxu0 0
    %7094 = vmatpush1.bf16.msra.mxu0 0
    %7095 = vmatprep.subr.bf16.mxu0 0
    %7096 = vmatpush1.bf16.msra.mxu0 0
    %7097 = vmatprep.subr.bf16.mxu0 0
    %7098 = vmatpush1.bf16.msra.mxu0 0
    %7099 = vmatprep.subr.bf16.mxu0 0
    %7100 = vmatpush1.bf16.msra.mxu0 %v7082
    %7101 = vmatprep.subr.bf16.mxu0 0
    %7102 = vmatpush1.bf16.msra.mxu0 %v7081
    %7103 = vmatprep.subr.bf16.mxu0 0
    %7104 = vmatpush1.bf16.msra.mxu0 %v7080
    %7105 = vmatprep.subr.bf16.mxu0 0
    %7106 = vmatpush2.bf16.msra.mxu0 0
    %7107 = vmatprep.subr.bf16.mxu0 0
    %7108 = vmatpush2.bf16.msra.mxu0 0
    %7109 = vmatprep.subr.bf16.mxu0 0
    %7110 = vmatpush2.bf16.msra.mxu0 0
    %7111 = vmatprep.subr.bf16.mxu0 0
    %7112 = vmatpush2.bf16.msra.mxu0 0
    %7113 = vmatprep.subr.bf16.mxu0 0
    %7114 = vmatpush2.bf16.msra.mxu0 0
    %7115 = vmatprep.subr.bf16.mxu0 0
    %7116 = vmatpush2.bf16.msra.mxu0 0
    %7117 = vmatprep.subr.bf16.mxu0 0
    %7118 = vmatpush2.bf16.msra.mxu0 0
    %7119 = vmatprep.subr.bf16.mxu0 0
    %7120 = vmatpush2.bf16.msra.mxu0 0
    %7121 = vmatprep.mubr.bf16.mxu0 0
    %7122 = vmatmul.mubr.bf16.gmra.mxu0 %v7087
    %v7123 = vpop.f32.mrf.mxu0
    %v7124 = vadd.f32 %v7066, %v7123
    %v7125 = vpop.f32.mrf.mxu0
    %v7126 = vpop.f32.mrf.mxu0
    %v7127 = vadd.f32 %v7066, %v7126
    %v7128 = vpop.f32.mrf.mxu0
    %7129 = vdwg.mxu0
    %v7130 = vadd.f32 %v6978, %v7124
    %v7131 = vadd.f32 %v6979, %v7127
    %s7132 = scalar_lea.vmem %s69, 1
    %v7133 = vld [vmem:[%s7132] sm:$0x1]
    %s7134 = scalar_lea.vmem %s67, 1
    %v7135 = vld [vmem:[%s7134] sm:$0x1]
    %v7136 = vsel %vm2947, %v7130, 0.0
    %7137 = vadd.xlane.f32.xlu0 %v7136
    %v7138 = vpop.xlane.xlu0 %7137
    %v7139 = vsel %vm2947, %v7131, 0.0
    %7140 = vadd.xlane.f32.xlu0 %v7139
    %v7141 = vpop.xlane.xlu0 %7140
    %v7142 = vmul.f32 %v7138, %v4837
    %v7143 = vmul.f32 %v7141, %v4837
    %v7144 = vsub.f32 %v7130, %v7142
    %v7145 = vsub.f32 %v7131, %v7143
    %v7146 = vmul.f32 %v7144, %v7144
    %v7147 = vmul.f32 %v7145, %v7145
    %v7148 = vsel %vm2947, %v7146, 0.0
    %7149 = vadd.xlane.f32.xlu0 %v7148
    %v7150 = vpop.xlane.xlu0 %7149
    %v7151 = vsel %vm2947, %v7147, 0.0
    %7152 = vadd.xlane.f32.xlu0 %v7151
    %v7153 = vpop.xlane.xlu0 %7152
    %v7154 = vmul.f32 %v7150, %v4837
    %v7155 = vmul.f32 %v7153, %v4837
    %v7156 = vadd.f32 %v7154, 1e-05
    %v7157 = vadd.f32 %v7155, 1e-05
    %v7158 = vrsqrt.pop %v7156
    %v7159 = vrsqrt.pop %v7157
    %v7160 = vmul.f32 %v7144, %v7158
    %v7161 = vmul.f32 %v7145, %v7159
    %v7163 = vlaneseq
    %v7164 = vshrl.u32 %v7163, 7
    %v7165 = vsub.s32 0, %v7164
    %v7166 = vrot.slane %v7133, %v7165
    %v7168 = vmul.f32 %v7160, %v7166
    %v7169 = vmul.f32 %v7161, %v7166
    %v7171 = vlaneseq
    %v7172 = vshrl.u32 %v7171, 7
    %v7173 = vsub.s32 0, %v7172
    %v7174 = vrot.slane %v7135, %v7173
    %v7176 = vadd.f32 %v7168, %v7174
    %v7177 = vadd.f32 %v7169, %v7174
    %7178 = vst.msk [vmem:[#allocation5] sm:$0xff] %vm2947, %v7176
    %7179 = vst.msk [vmem:[#allocation5 + $0x8] sm:$0xff] %vm2947, %v7177
    // Predicated region
    $region170: #{double_encoder_forward.1} parent=1 // pred_check
      _
    $region171: #{double_encoder_forward.1} parent=1 // pred_check_branch
      %7181 = sbr.rel (0) target = $region173
    $region172: #{double_encoder_forward.1} parent=1 // pred_region
      %s7183 = ssub.s32 256, 256
      %7184 = vsyncadd [#allocation3], %s7183
      %s7185 = sshll.u32 [#allocation5], 4
      %s7186 = int_to_ptr.vmem [resolvable:$true] %s7185
      %7191 = dma.vmem_to_hbm [thread:$0]  %s7186, 256, %s83, [#allocation3], 128, 128, 8
    $region173: #{double_encoder_forward.1} parent=1 // pred_fallthru
      _
    // Predicated region
    $region174: #{double_encoder_forward.1} parent=1 // pred_check
      _
    $region175: #{double_encoder_forward.1} parent=1 // pred_check_branch
      %7193 = sbr.rel (0) target = $region177
    $region176: #{double_encoder_forward.1} parent=1 // pred_region
      %s7195 = ssub.s32 32, 32
      %7196 = vsyncadd [#allocation7], %s7195
      %s7198 = sshll.u32 [#allocation6], 4
      %s7199 = int_to_ptr.vmem [resolvable:$true] %s7198
      %7201 = dma.vmem_to_hbm [thread:$0]  %s7199, 32, %s85, [#allocation7]
    $region177: #{double_encoder_forward.1} parent=1 // pred_fallthru
      _
    // Predicated region
    $region178: #{double_encoder_forward.1} parent=1 // pred_check
      _
    $region179: #{double_encoder_forward.1} parent=1 // pred_check_branch
      %7203 = sbr.rel (0) target = $region181
    $region180: #{double_encoder_forward.1} parent=1 // pred_region
      %s7205 = ssub.s32 256, 256
      %7206 = vsyncadd [#allocation7], %s7205
      %s7207 = sshll.u32 [#allocation8], 4
      %s7208 = int_to_ptr.vmem [resolvable:$true] %s7207
      %7213 = dma.vmem_to_hbm [thread:$0]  %s7208, 256, %s87, [#allocation7], 128, 128, 8
    $region181: #{double_encoder_forward.1} parent=1 // pred_fallthru
      _
    // Predicated region
    $region182: #{double_encoder_forward.1} parent=1 // pred_check
      _
    $region183: #{double_encoder_forward.1} parent=1 // pred_check_branch
      %7215 = sbr.rel (0) target = $region185
    $region184: #{double_encoder_forward.1} parent=1 // pred_region
      %7216 = dma.done [#allocation3], 256
    $region185: #{double_encoder_forward.1} parent=1 // pred_fallthru
      _
    // Predicated region
    $region186: #{double_encoder_forward.1} parent=1 // pred_check
      _
    $region187: #{double_encoder_forward.1} parent=1 // pred_check_branch
      %7218 = sbr.rel (0) target = $region189
    $region188: #{double_encoder_forward.1} parent=1 // pred_region
      %7219 = dma.done [#allocation7], 32
    $region189: #{double_encoder_forward.1} parent=1 // pred_fallthru
      _
    // Predicated region
    $region190: #{double_encoder_forward.1} parent=1 // pred_check
      _
    $region191: #{double_encoder_forward.1} parent=1 // pred_check_branch
      %7221 = sbr.rel (0) target = $region193
    $region192: #{double_encoder_forward.1} parent=1 // pred_region
      %7222 = dma.done [#allocation7], 256
    $region193: #{double_encoder_forward.1} parent=1 // pred_fallthru
      _
    %7223 = vsyncpa [#allocation3], 1
    %7224 = vsyncpa [#allocation7], 1
    %7225 = vsyncpa [#allocation4], 1

</llo_original>
